<compile_context>
chip_gen: v5e
topology: v5e:2x2
jax: 0.10.0
libtpu: 0.0.40
codegen_flags: <defaults>
</compile_context>

<pallas_src>
import functools

import jax
import jax.numpy as jnp
from jax.experimental import pallas as pl
from jax.experimental.pallas import tpu as pltpu

# ----------------------------- model config ---------------------------------
CFG = dict(
    num_enc_lstm_layers=1,   # 1 layer => nn.LSTM inter-layer dropout is a no-op
    embed_size=16,
    enc_input_size=32,
    enc_hidden_size=32,
    local_vocab_size=50,
    vocab_size=200,
    num_dec_lstm_layers=1,
    dec_hidden_size=32,
)
# Scaled-down adaptive-softmax cutoffs (reference uses [50000,125000,500000,1750000]).
CUTOFFS = [40, 80, 120, 160]
DIV_VALUE = 2.0
NUM_HEADS = 4
CONV_KH = 8  # nn.Conv2d kernel_size = (8, embed_size)


def _spec2d(shape):
    return pl.BlockSpec(shape, lambda i: (0, 0))


# ============== Kernel 1: conv + encoder bidirectional LSTM ==================
def _enc_kernel(x_ref, wc_ref, cb_ref, wih_ref, bg_ref, whhf_ref, whhb_ref,
                o_ref, *, T, B, H):
    """x_ref: (B*T, 2*KH*E) im2col rows, batch-major (row = b*T + t).
    wih_ref: (CI, 8H) = [Wih_f^T | Wih_b^T].  Output o_ref: (B*T, 2H) with
    columns [0:H] = forward hidden at t, [H:2H] = backward hidden at t."""
    conv = jnp.dot(x_ref[...], wc_ref[...],
                   preferred_element_type=jnp.float32) + cb_ref[...]      # (B*T, CI)
    gx = jnp.dot(conv, wih_ref[...],
                 preferred_element_type=jnp.float32) + bg_ref[...]        # (B*T, 8H)
    whh_f = whhf_ref[...]
    whh_b = whhb_ref[...]

    def cell(g_row, h, c, whh):
        gates = g_row + jnp.dot(h, whh, preferred_element_type=jnp.float32)
        i_g = jax.nn.sigmoid(gates[:, 0 * H:1 * H])
        f_g = jax.nn.sigmoid(gates[:, 1 * H:2 * H])
        g_g = jnp.tanh(gates[:, 2 * H:3 * H])
        o_g = jax.nn.sigmoid(gates[:, 3 * H:4 * H])
        c = f_g * c + i_g * g_g
        h = o_g * jnp.tanh(c)
        return h, c

    for b in range(B):               # static unroll: B, T tiny
        # forward direction
        h = jnp.zeros((1, H), jnp.float32)
        c = jnp.zeros((1, H), jnp.float32)
        for t in range(T):
            r = b * T + t
            h, c = cell(gx[r:r + 1, 0:4 * H], h, c, whh_f)
            o_ref[r:r + 1, 0:H] = h
        # backward direction
        h = jnp.zeros((1, H), jnp.float32)
        c = jnp.zeros((1, H), jnp.float32)
        for t in range(T - 1, -1, -1):
            r = b * T + t
            h, c = cell(gx[r:r + 1, 4 * H:8 * H], h, c, whh_b)
            o_ref[r:r + 1, H:2 * H] = h


def conv_bilstm(x_col, w_col, conv_b, wih_cat, bg_cat, whh_f_t, whh_b_t,
                *, T, B, H):
    kern = functools.partial(_enc_kernel, T=T, B=B, H=H)
    args = (x_col, w_col, conv_b, wih_cat, bg_cat, whh_f_t, whh_b_t)
    return pl.pallas_call(
        kern,
        out_shape=jax.ShapeDtypeStruct((B * T, 2 * H), jnp.float32),
        grid=(1,),
        in_specs=[_spec2d(a.shape) for a in args],
        out_specs=_spec2d((B * T, 2 * H)),
    )(*args)


# ==== Kernel 2: decoder LSTM + attention (+projections) + adaptive softmax ===
def _dec_attn_kernel(x_ref, wih_ref, b_ref, whh_ref, enc_ref,
                     qw_ref, bq_ref, kvw_ref, bkv_ref, ow_ref, ob_ref,
                     head_ref,
                     t0w1_ref, t0w2_ref, t1w1_ref, t1w2_ref,
                     t2w1_ref, t2w2_ref, t3w1_ref, t3w2_ref,
                     o_ref, dec_sc, attn_sc,
                     *, B, S, Tk, H, num_heads, shortlist):
    # ---- decoder LSTM: x-gates in one matmul, unrolled recurrence ----
    gx = jnp.dot(x_ref[...], wih_ref[...],
                 preferred_element_type=jnp.float32) + b_ref[...]        # (S*B, 4H)
    whh = whh_ref[...]
    h = jnp.zeros((B, H), jnp.float32)
    c = jnp.zeros((B, H), jnp.float32)
    for t in range(S):
        gates = gx[t * B:(t + 1) * B, :] + jnp.dot(
            h, whh, preferred_element_type=jnp.float32)
        i_g = jax.nn.sigmoid(gates[:, 0 * H:1 * H])
        f_g = jax.nn.sigmoid(gates[:, 1 * H:2 * H])
        g_g = jnp.tanh(gates[:, 2 * H:3 * H])
        o_g = jax.nn.sigmoid(gates[:, 3 * H:4 * H])
        c = f_g * c + i_g * g_g
        h = o_g * jnp.tanh(c)
        for b in range(B):           # batch-major scratch layout for attention
            dec_sc[b * S + t:b * S + t + 1, :] = h[b:b + 1, :]

    dec = dec_sc[...]                # (B*S, D)    batch-major
    enc = enc_ref[...]               # (B*Tk, 2EH) batch-major
    D = H
    Dh = D // num_heads
    scale = 1.0 / float(Dh) ** 0.5

    # fused q and [k|v] projections
    q = jnp.dot(dec, qw_ref[...], preferred_element_type=jnp.float32) + bq_ref[...]
    kv = jnp.dot(enc, kvw_ref[...], preferred_element_type=jnp.float32) + bkv_ref[...]
    k = kv[:, :D]
    v = kv[:, D:]
    ow = ow_ref[...]
    ob = ob_ref[...]

    # per-(batch, head) attention; out-projection accumulated per head
    # (ctx_h @ Wout[h*Dh:(h+1)*Dh]) to avoid lane concatenation.
    for b in range(B):
        q_b = q[b * S:(b + 1) * S, :]
        k_b = k[b * Tk:(b + 1) * Tk, :]
        v_b = v[b * Tk:(b + 1) * Tk, :]
        acc = jnp.zeros((S, D), jnp.float32) + ob
        for hh in range(num_heads):
            sl = slice(hh * Dh, (hh + 1) * Dh)
            s_sc = jax.lax.dot_general(
                q_b[:, sl], k_b[:, sl], (((1,), (1,)), ((), ())),
                preferred_element_type=jnp.float32) * scale              # (S, Tk)
            m = jnp.max(s_sc, axis=-1, keepdims=True)
            p = jnp.exp(s_sc - m)
            p = p * pl.reciprocal(jnp.sum(p, axis=-1, keepdims=True), approx=True)
            ctx = jnp.dot(p, v_b[:, sl], preferred_element_type=jnp.float32)
            acc = acc + jnp.dot(ctx, ow[sl, :], preferred_element_type=jnp.float32)
        attn_sc[b * S:(b + 1) * S, :] = acc

    attn = attn_sc[...]              # (B*S, D) attention output (post out-proj)

    # adaptive log-softmax on x = [attn | dec]; concat avoided by splitting
    # every first-layer matmul into attn-part + dec-part.
    def lsm(z):
        m = jnp.max(z, axis=-1, keepdims=True)
        return (z - m) - jnp.log(jnp.sum(jnp.exp(z - m), axis=-1, keepdims=True))

    head_out = (jnp.dot(attn, head_ref[0:D, :], preferred_element_type=jnp.float32)
                + jnp.dot(dec, head_ref[D:2 * D, :], preferred_element_type=jnp.float32))
    head_lp = lsm(head_out)          # (N, shortlist + n_clusters)
    o_ref[:, 0:shortlist] = head_lp[:, 0:shortlist]

    tails = ((t0w1_ref, t0w2_ref), (t1w1_ref, t1w2_ref),
             (t2w1_ref, t2w2_ref), (t3w1_ref, t3w2_ref))
    off = shortlist
    for i, (w1_ref, w2_ref) in enumerate(tails):
        hmid = (jnp.dot(attn, w1_ref[0:D, :], preferred_element_type=jnp.float32)
                + jnp.dot(dec, w1_ref[D:2 * D, :], preferred_element_type=jnp.float32))
        clp = lsm(jnp.dot(hmid, w2_ref[...], preferred_element_type=jnp.float32))
        osz = w2_ref.shape[1]
        o_ref[:, off:off + osz] = clp + head_lp[:, shortlist + i:shortlist + i + 1]
        off += osz


def dec_attn_adasmax(x_dec_tm, wih_t, bias, whh_t, enc2d,
                     qw_t, bq, kvw_t, bkv, ow_t, ob, head_t, tail_flat,
                     *, B, S, Tk, H):
    N = B * S
    V = CFG['vocab_size']
    kern = functools.partial(_dec_attn_kernel, B=B, S=S, Tk=Tk, H=H,
                             num_heads=NUM_HEADS, shortlist=CUTOFFS[0])
    args = [x_dec_tm, wih_t, bias, whh_t, enc2d,
            qw_t, bq, kvw_t, bkv, ow_t, ob, head_t] + list(tail_flat)
    return pl.pallas_call(
        kern,
        out_shape=jax.ShapeDtypeStruct((N, V), jnp.float32),
        grid=(1,),
        in_specs=[_spec2d(a.shape) for a in args],
        out_specs=_spec2d((N, V)),
        scratch_shapes=[pltpu.VMEM((N, H), jnp.float32),   # decoder hidden (batch-major)
                        pltpu.VMEM((N, H), jnp.float32)],  # attention output
    )(*args)


# ------------------------------ parameters -----------------------------------
def init_params(key):
    ks = iter(jax.random.split(key, 64))

    def nrm(shape, scale=0.1):
        return scale * jax.random.normal(next(ks), shape, jnp.float32)

    E = CFG['embed_size']
    CI = CFG['enc_input_size']
    EH = CFG['enc_hidden_size']
    DH = CFG['dec_hidden_size']
    V = CFG['vocab_size']
    LV = CFG['local_vocab_size']

    p = {}
    # encoder
    p['enc_embed'] = nrm((LV, E))
    p['conv_w'] = nrm((CI, 2, CONV_KH, E))
    p['conv_b'] = nrm((CI,))
    for d in ('f', 'b'):  # bidirectional
        p[f'enc_wih_{d}'] = nrm((4 * EH, CI))
        p[f'enc_whh_{d}'] = nrm((4 * EH, EH))
        p[f'enc_bih_{d}'] = nrm((4 * EH,))
        p[f'enc_bhh_{d}'] = nrm((4 * EH,))
    # decoder
    p['dec_embed'] = nrm((LV, E))
    p['dec_wih'] = nrm((4 * DH, 2 * E))
    p['dec_whh'] = nrm((4 * DH, DH))
    p['dec_bih'] = nrm((4 * DH,))
    p['dec_bhh'] = nrm((4 * DH,))
    # multihead attention (kdim = vdim = 2*EH != embed_dim => separate proj weights)
    p['attn_qw'] = nrm((DH, DH))
    p['attn_kw'] = nrm((DH, 2 * EH))
    p['attn_vw'] = nrm((DH, 2 * EH))
    p['attn_in_bias'] = nrm((3 * DH,))
    p['attn_ow'] = nrm((DH, DH))
    p['attn_ob'] = nrm((DH,))
    # adaptive log-softmax: head (no bias) + 2-layer tails (no bias)
    in_feat = 2 * DH
    n_clusters = len(CUTOFFS)
    p['head_w'] = nrm((CUTOFFS[0] + n_clusters, in_feat))
    cutoffs = CUTOFFS + [V]
    tails = []
    for i in range(n_clusters):
        hsz = int(in_feat // (DIV_VALUE ** (i + 1)))
        osz = cutoffs[i + 1] - cutoffs[i]
        tails.append((nrm((hsz, in_feat)), nrm((osz, hsz))))
    p['tail_ws'] = tails
    return p


def prepare_params(p):
    """One-time weight relayout (transposes / concats / casts) hoisted out of
    the per-call forward graph."""
    CI = CFG['enc_input_size']

    def f32(a):
        return a.astype(jnp.float32)

    bq, bk, bv = jnp.split(p['attn_in_bias'], 3)
    prep = {
        'enc_embed': p['enc_embed'],
        'dec_embed': p['dec_embed'],
        'w_col': f32(p['conv_w'].reshape(CI, -1).T),                   # (2*KH*E, CI)
        'conv_b': f32(p['conv_b'].reshape(1, -1)),
        'wih_cat': f32(jnp.concatenate(
            [p['enc_wih_f'].T, p['enc_wih_b'].T], axis=1)),            # (CI, 8*EH)
        'bg_cat': f32(jnp.concatenate(
            [p['enc_bih_f'] + p['enc_bhh_f'],
             p['enc_bih_b'] + p['enc_bhh_b']]).reshape(1, -1)),
        'whh_f_t': f32(p['enc_whh_f'].T),                              # (EH, 4*EH)
        'whh_b_t': f32(p['enc_whh_b'].T),
        'dec_wih_t': f32(p['dec_wih'].T),                              # (2E, 4*DH)
        'dec_b': f32((p['dec_bih'] + p['dec_bhh']).reshape(1, -1)),
        'dec_whh_t': f32(p['dec_whh'].T),
        'attn_qw_t': f32(p['attn_qw'].T),
        'attn_bq': f32(bq.reshape(1, -1)),
        'attn_kvw_t': f32(jnp.concatenate(
            [p['attn_kw'].T, p['attn_vw'].T], axis=1)),                # (2*EH, 2*DH)
        'attn_bkv': f32(jnp.concatenate([bk, bv]).reshape(1, -1)),
        'attn_ow_t': f32(p['attn_ow'].T),
        'attn_ob': f32(p['attn_ob'].reshape(1, -1)),
        'head_t': f32(p['head_w'].T),                                  # (2*DH, 44)
    }
    tail_flat = []
    for (w1, w2) in p['tail_ws']:
        tail_flat += [f32(w1.T), f32(w2.T)]
    prep['tail_flat'] = tuple(tail_flat)
    return prep


# ------------------------------ forward pass ----------------------------------
def model_forward(prep, enc_w2v, dec_w2v, enc_ind, dec_ind, labels):
    B, S_enc, E = enc_w2v.shape
    S_dec = dec_w2v.shape[1]
    EH = CFG['enc_hidden_size']
    DH = CFG['dec_hidden_size']

    # ---- Encoder: embedding + mask, im2col for Conv2d(2->CI, (8,E)) ----
    enc_emb = jnp.take(prep['enc_embed'], enc_ind, axis=0)          # (B, S_enc, E)
    enc_emb = jnp.where(enc_ind[..., None] == 0, 0.0, enc_emb)
    conv_inp = jnp.stack((enc_w2v, enc_emb), axis=1)                # (B, 2, S_enc, E)
    T_out = S_enc - CONV_KH + 1
    win_idx = (jnp.arange(T_out)[:, None] + jnp.arange(CONV_KH)[None, :]).reshape(-1)
    wins = jnp.take(conv_inp, win_idx, axis=2).reshape(B, 2, T_out, CONV_KH, E)
    x_col = wins.transpose(0, 2, 1, 3, 4).reshape(
        B * T_out, 2 * CONV_KH * E).astype(jnp.float32)             # batch-major rows

    # Kernel 1: conv + encoder x-gates + bidirectional recurrence, one launch
    enc2d = conv_bilstm(x_col, prep['w_col'], prep['conv_b'], prep['wih_cat'],
                        prep['bg_cat'], prep['whh_f_t'], prep['whh_b_t'],
                        T=T_out, B=B, H=EH)                         # (B*T_out, 2*EH)

    # ---- Decoder input: embedding concat (time-major rows for the LSTM) ----
    dec_emb = jnp.take(prep['dec_embed'], dec_ind, axis=0)          # (B, S_dec, E)
    lstm_inp = jnp.concatenate([dec_w2v, dec_emb], axis=-1)         # (B, S_dec, 2E)
    x_dec_tm = lstm_inp.transpose(1, 0, 2).reshape(
        S_dec * B, 2 * E).astype(jnp.float32)

    # Kernel 2: decoder LSTM + MultiheadAttention + adaptive log-softmax
    full_lp = dec_attn_adasmax(
        x_dec_tm, prep['dec_wih_t'], prep['dec_b'], prep['dec_whh_t'], enc2d,
        prep['attn_qw_t'], prep['attn_bq'], prep['attn_kvw_t'], prep['attn_bkv'],
        prep['attn_ow_t'], prep['attn_ob'], prep['head_t'], prep['tail_flat'],
        B=B, S=S_dec, Tk=T_out, H=DH)                               # (B*S_dec, V)
    full_lp = full_lp.reshape(B, S_dec, -1).transpose(1, 0, 2)      # (S_dec, B, V)

    labels_t = labels.T                                             # (S_dec, B)
    # predict == argmax of the full log-prob (identical result to .predict)
    preds = jnp.argmax(full_lp, axis=-1)                            # (S_dec, B)

    # per-timestep end-tag masking + loss (faithful to the reference loop:
    # mean per timestep over non-zero labels, averaged over timesteps that
    # have at least one valid label — matches the PyTorch loop's reduction)
    def step(carry, inputs):
        end_tag_mask, loss_acc, cnt = carry
        pred_t, lp_t, lab_t = inputs
        cur_mask = jnp.where(pred_t == 2, 0, 1).astype(jnp.float32)
        cur_out = pred_t.astype(jnp.float32) * end_tag_mask
        end_tag_mask = end_tag_mask * cur_mask
        tgt_lp = jnp.take_along_axis(lp_t, lab_t[:, None], axis=1)[:, 0]
        valid = lab_t != 0
        n_valid = jnp.sum(valid)
        has_valid = n_valid > 0
        t_loss = jnp.sum(jnp.where(valid, -tgt_lp, 0.0)) / jnp.maximum(n_valid, 1)
        loss_acc = loss_acc + jnp.where(has_valid, t_loss, 0.0)
        cnt = cnt + has_valid.astype(jnp.int32)
        return (end_tag_mask, loss_acc, cnt), cur_out

    init = (jnp.ones((B,), jnp.float32), jnp.float32(0.0), jnp.int32(0))
    (_, loss_sum, cnt), out_seq = jax.lax.scan(
        step, init, (preds, full_lp, labels_t))
    overall_loss = loss_sum / cnt.astype(jnp.float32)
    output = out_seq.T.astype(jnp.int32)                            # (B, S_dec)
    return output, overall_loss
    # TODO(synk): the autoregressive generation branch (dec_w2v_embed is None)
    # needs host-side vectorizer/index callbacks and vocab dicts — not translated.


# ---------------------------------- main --------------------------------------
if __name__ == "__main__":
    key = jax.random.PRNGKey(0)
    k_par, k1, k2, k3, k4, k5 = jax.random.split(key, 6)

    B, S_enc, S_dec = 2, 16, 6
    E = CFG['embed_size']

    params = init_params(k_par)
    prep = prepare_params(params)

    enc_w2v = jax.random.normal(k1, (B, S_enc, E), jnp.float32)
    dec_w2v = jax.random.normal(k2, (B, S_dec, E), jnp.float32)
    enc_ind = jax.random.randint(k3, (B, S_enc), 0, CFG['local_vocab_size'])
    dec_ind = jax.random.randint(k4, (B, S_dec), 0, CFG['local_vocab_size'])
    labels = jax.random.randint(k5, (B, S_dec), 0, CFG['vocab_size'])

    fwd = jax.jit(model_forward)
    output, loss = fwd(prep, enc_w2v, dec_w2v, enc_ind, dec_ind, labels)
    jax.block_until_ready((output, loss))
    assert output.shape == (B, S_dec)
    assert loss.shape == ()
    print("KERNEL_OK")
</pallas_src>

<mosaic_0001>
module attributes {stable_mosaic.version = 11 : i64} {
  func.func @_enc_kernel(%arg0: i32, %arg1: memref<18x256xf32, #tpu.memory_space<vmem>>, %arg2: memref<256x32xf32, #tpu.memory_space<vmem>>, %arg3: memref<1x32xf32, #tpu.memory_space<vmem>>, %arg4: memref<32x256xf32, #tpu.memory_space<vmem>>, %arg5: memref<1x256xf32, #tpu.memory_space<vmem>>, %arg6: memref<32x128xf32, #tpu.memory_space<vmem>>, %arg7: memref<32x128xf32, #tpu.memory_space<vmem>>, %arg8: memref<18x64xf32, #tpu.memory_space<vmem>>) attributes {dimension_semantics = [#tpu.dimension_semantics<arbitrary>], iteration_bounds = array<i64: 1>, scalar_prefetch = 0 : i64, scratch_operands = 0 : i64, tpu.core_type = #tpu.core_type<tc>, window_params = [{pipeline_mode = #tpu.pipeline_mode<synchronous>, transform_indices = @transform_0, window_bounds = array<i64: 18, 256>}, {pipeline_mode = #tpu.pipeline_mode<synchronous>, transform_indices = @transform_1, window_bounds = array<i64: 256, 32>}, {pipeline_mode = #tpu.pipeline_mode<synchronous>, transform_indices = @transform_2, window_bounds = array<i64: 1, 32>}, {pipeline_mode = #tpu.pipeline_mode<synchronous>, transform_indices = @transform_3, window_bounds = array<i64: 32, 256>}, {pipeline_mode = #tpu.pipeline_mode<synchronous>, transform_indices = @transform_4, window_bounds = array<i64: 1, 256>}, {pipeline_mode = #tpu.pipeline_mode<synchronous>, transform_indices = @transform_5, window_bounds = array<i64: 32, 128>}, {pipeline_mode = #tpu.pipeline_mode<synchronous>, transform_indices = @transform_6, window_bounds = array<i64: 32, 128>}, {pipeline_mode = #tpu.pipeline_mode<synchronous>, transform_indices = @transform_7, window_bounds = array<i64: 18, 64>}]} {
    %c0 = arith.constant 0 : index
    %c0_0 = arith.constant 0 : index
    %0 = vector.load %arg1[%c0, %c0_0] : memref<18x256xf32, #tpu.memory_space<vmem>>, vector<18x256xf32>
    %c0_1 = arith.constant 0 : index
    %c0_2 = arith.constant 0 : index
    %1 = vector.load %arg2[%c0_1, %c0_2] : memref<256x32xf32, #tpu.memory_space<vmem>>, vector<256x32xf32>
    %cst = arith.constant dense<0.000000e+00> : vector<18x32xf32>
    %2 = tpu.matmul %0, %1, %cst {dimension_numbers = #tpu.dot_dimension_numbers<[1], [0], [0], [1], [0, 0, 1, 1], [], []>} : vector<18x256xf32>, vector<256x32xf32>, vector<18x32xf32> -> vector<18x32xf32>
    %c0_3 = arith.constant 0 : index
    %c0_4 = arith.constant 0 : index
    %3 = vector.load %arg3[%c0_3, %c0_4] : memref<1x32xf32, #tpu.memory_space<vmem>>, vector<1x32xf32>
    %4 = vector.broadcast %3 : vector<1x32xf32> to vector<18x32xf32>
    %5 = arith.addf %2, %4 : vector<18x32xf32>
    %c0_5 = arith.constant 0 : index
    %c0_6 = arith.constant 0 : index
    %6 = vector.load %arg4[%c0_5, %c0_6] : memref<32x256xf32, #tpu.memory_space<vmem>>, vector<32x256xf32>
    %cst_7 = arith.constant dense<0.000000e+00> : vector<18x256xf32>
    %7 = tpu.matmul %5, %6, %cst_7 {dimension_numbers = #tpu.dot_dimension_numbers<[1], [0], [0], [1], [0, 0, 1, 1], [], []>} : vector<18x32xf32>, vector<32x256xf32>, vector<18x256xf32> -> vector<18x256xf32>
    %c0_8 = arith.constant 0 : index
    %c0_9 = arith.constant 0 : index
    %8 = vector.load %arg5[%c0_8, %c0_9] : memref<1x256xf32, #tpu.memory_space<vmem>>, vector<1x256xf32>
    %9 = vector.broadcast %8 : vector<1x256xf32> to vector<18x256xf32>
    %10 = arith.addf %7, %9 : vector<18x256xf32>
    %c0_10 = arith.constant 0 : index
    %c0_11 = arith.constant 0 : index
    %11 = vector.load %arg6[%c0_10, %c0_11] : memref<32x128xf32, #tpu.memory_space<vmem>>, vector<32x128xf32>
    %c0_12 = arith.constant 0 : index
    %c0_13 = arith.constant 0 : index
    %12 = vector.load %arg7[%c0_12, %c0_13] : memref<32x128xf32, #tpu.memory_space<vmem>>, vector<32x128xf32>
    %cst_14 = arith.constant 0.000000e+00 : f32
    %13 = vector.broadcast %cst_14 : f32 to vector<1x32xf32>
    %cst_15 = arith.constant 0.000000e+00 : f32
    %14 = vector.broadcast %cst_15 : f32 to vector<1x32xf32>
    %15 = vector.extract_strided_slice %10 {offsets = [0, 0], sizes = [1, 128], strides = [1, 1]} : vector<18x256xf32> to vector<1x128xf32>
    %cst_16 = arith.constant dense<0.000000e+00> : vector<1x128xf32>
    %16 = tpu.matmul %13, %11, %cst_16 {dimension_numbers = #tpu.dot_dimension_numbers<[1], [0], [0], [1], [0, 0, 1, 1], [], []>} : vector<1x32xf32>, vector<32x128xf32>, vector<1x128xf32> -> vector<1x128xf32>
    %17 = arith.addf %15, %16 : vector<1x128xf32>
    %18 = vector.extract_strided_slice %17 {offsets = [0, 0], sizes = [1, 32], strides = [1, 1]} : vector<1x128xf32> to vector<1x32xf32>
    %19 = arith.negf %18 : vector<1x32xf32>
    %20 = math.exp %19 : vector<1x32xf32>
    %cst_17 = arith.constant 1.000000e+00 : f32
    %21 = vector.broadcast %cst_17 : f32 to vector<1x32xf32>
    %22 = arith.addf %21, %20 : vector<1x32xf32>
    %23 = arith.divf %21, %22 : vector<1x32xf32>
    %24 = vector.extract_strided_slice %17 {offsets = [0, 32], sizes = [1, 32], strides = [1, 1]} : vector<1x128xf32> to vector<1x32xf32>
    %25 = arith.negf %24 : vector<1x32xf32>
    %26 = math.exp %25 : vector<1x32xf32>
    %cst_18 = arith.constant 1.000000e+00 : f32
    %27 = vector.broadcast %cst_18 : f32 to vector<1x32xf32>
    %28 = arith.addf %27, %26 : vector<1x32xf32>
    %29 = arith.divf %27, %28 : vector<1x32xf32>
    %30 = vector.extract_strided_slice %17 {offsets = [0, 64], sizes = [1, 32], strides = [1, 1]} : vector<1x128xf32> to vector<1x32xf32>
    %31 = math.tanh %30 : vector<1x32xf32>
    %32 = vector.extract_strided_slice %17 {offsets = [0, 96], sizes = [1, 32], strides = [1, 1]} : vector<1x128xf32> to vector<1x32xf32>
    %33 = arith.negf %32 : vector<1x32xf32>
    %34 = math.exp %33 : vector<1x32xf32>
    %cst_19 = arith.constant 1.000000e+00 : f32
    %35 = vector.broadcast %cst_19 : f32 to vector<1x32xf32>
    %36 = arith.addf %35, %34 : vector<1x32xf32>
    %37 = arith.divf %35, %36 : vector<1x32xf32>
    %38 = arith.mulf %29, %14 : vector<1x32xf32>
    %39 = arith.mulf %23, %31 : vector<1x32xf32>
    %40 = arith.addf %38, %39 : vector<1x32xf32>
    %41 = math.tanh %40 : vector<1x32xf32>
    %42 = arith.mulf %37, %41 : vector<1x32xf32>
    %c0_20 = arith.constant 0 : index
    %c0_21 = arith.constant 0 : index
    %43 = vector.load %arg8[%c0_20, %c0_21] : memref<18x64xf32, #tpu.memory_space<vmem>>, vector<1x32xf32>
    tpu.vector_store %arg8[%c0_20, %c0_21], %42 {strides = array<i32>} : memref<18x64xf32, #tpu.memory_space<vmem>>, vector<1x32xf32>,
    %44 = vector.extract_strided_slice %10 {offsets = [1, 0], sizes = [1, 128], strides = [1, 1]} : vector<18x256xf32> to vector<1x128xf32>
    %cst_22 = arith.constant dense<0.000000e+00> : vector<1x128xf32>
    %45 = tpu.matmul %42, %11, %cst_22 {dimension_numbers = #tpu.dot_dimension_numbers<[1], [0], [0], [1], [0, 0, 1, 1], [], []>} : vector<1x32xf32>, vector<32x128xf32>, vector<1x128xf32> -> vector<1x128xf32>
    %46 = arith.addf %44, %45 : vector<1x128xf32>
    %47 = vector.extract_strided_slice %46 {offsets = [0, 0], sizes = [1, 32], strides = [1, 1]} : vector<1x128xf32> to vector<1x32xf32>
    %48 = arith.negf %47 : vector<1x32xf32>
    %49 = math.exp %48 : vector<1x32xf32>
    %cst_23 = arith.constant 1.000000e+00 : f32
    %50 = vector.broadcast %cst_23 : f32 to vector<1x32xf32>
    %51 = arith.addf %50, %49 : vector<1x32xf32>
    %52 = arith.divf %50, %51 : vector<1x32xf32>
    %53 = vector.extract_strided_slice %46 {offsets = [0, 32], sizes = [1, 32], strides = [1, 1]} : vector<1x128xf32> to vector<1x32xf32>
    %54 = arith.negf %53 : vector<1x32xf32>
    %55 = math.exp %54 : vector<1x32xf32>
    %cst_24 = arith.constant 1.000000e+00 : f32
    %56 = vector.broadcast %cst_24 : f32 to vector<1x32xf32>
    %57 = arith.addf %56, %55 : vector<1x32xf32>
    %58 = arith.divf %56, %57 : vector<1x32xf32>
    %59 = vector.extract_strided_slice %46 {offsets = [0, 64], sizes = [1, 32], strides = [1, 1]} : vector<1x128xf32> to vector<1x32xf32>
    %60 = math.tanh %59 : vector<1x32xf32>
    %61 = vector.extract_strided_slice %46 {offsets = [0, 96], sizes = [1, 32], strides = [1, 1]} : vector<1x128xf32> to vector<1x32xf32>
    %62 = arith.negf %61 : vector<1x32xf32>
    %63 = math.exp %62 : vector<1x32xf32>
    %cst_25 = arith.constant 1.000000e+00 : f32
    %64 = vector.broadcast %cst_25 : f32 to vector<1x32xf32>
    %65 = arith.addf %64, %63 : vector<1x32xf32>
    %66 = arith.divf %64, %65 : vector<1x32xf32>
    %67 = arith.mulf %58, %40 : vector<1x32xf32>
    %68 = arith.mulf %52, %60 : vector<1x32xf32>
    %69 = arith.addf %67, %68 : vector<1x32xf32>
    %70 = math.tanh %69 : vector<1x32xf32>
    %71 = arith.mulf %66, %70 : vector<1x32xf32>
    %c1 = arith.constant 1 : index
    %c0_26 = arith.constant 0 : index
    %72 = vector.load %arg8[%c1, %c0_26] : memref<18x64xf32, #tpu.memory_space<vmem>>, vector<1x32xf32>
    tpu.vector_store %arg8[%c1, %c0_26], %71 {strides = array<i32>} : memref<18x64xf32, #tpu.memory_space<vmem>>, vector<1x32xf32>,
    %73 = vector.extract_strided_slice %10 {offsets = [2, 0], sizes = [1, 128], strides = [1, 1]} : vector<18x256xf32> to vector<1x128xf32>
    %cst_27 = arith.constant dense<0.000000e+00> : vector<1x128xf32>
    %74 = tpu.matmul %71, %11, %cst_27 {dimension_numbers = #tpu.dot_dimension_numbers<[1], [0], [0], [1], [0, 0, 1, 1], [], []>} : vector<1x32xf32>, vector<32x128xf32>, vector<1x128xf32> -> vector<1x128xf32>
    %75 = arith.addf %73, %74 : vector<1x128xf32>
    %76 = vector.extract_strided_slice %75 {offsets = [0, 0], sizes = [1, 32], strides = [1, 1]} : vector<1x128xf32> to vector<1x32xf32>
    %77 = arith.negf %76 : vector<1x32xf32>
    %78 = math.exp %77 : vector<1x32xf32>
    %cst_28 = arith.constant 1.000000e+00 : f32
    %79 = vector.broadcast %cst_28 : f32 to vector<1x32xf32>
    %80 = arith.addf %79, %78 : vector<1x32xf32>
    %81 = arith.divf %79, %80 : vector<1x32xf32>
    %82 = vector.extract_strided_slice %75 {offsets = [0, 32], sizes = [1, 32], strides = [1, 1]} : vector<1x128xf32> to vector<1x32xf32>
    %83 = arith.negf %82 : vector<1x32xf32>
    %84 = math.exp %83 : vector<1x32xf32>
    %cst_29 = arith.constant 1.000000e+00 : f32
    %85 = vector.broadcast %cst_29 : f32 to vector<1x32xf32>
    %86 = arith.addf %85, %84 : vector<1x32xf32>
    %87 = arith.divf %85, %86 : vector<1x32xf32>
    %88 = vector.extract_strided_slice %75 {offsets = [0, 64], sizes = [1, 32], strides = [1, 1]} : vector<1x128xf32> to vector<1x32xf32>
    %89 = math.tanh %88 : vector<1x32xf32>
    %90 = vector.extract_strided_slice %75 {offsets = [0, 96], sizes = [1, 32], strides = [1, 1]} : vector<1x128xf32> to vector<1x32xf32>
    %91 = arith.negf %90 : vector<1x32xf32>
    %92 = math.exp %91 : vector<1x32xf32>
    %cst_30 = arith.constant 1.000000e+00 : f32
    %93 = vector.broadcast %cst_30 : f32 to vector<1x32xf32>
    %94 = arith.addf %93, %92 : vector<1x32xf32>
    %95 = arith.divf %93, %94 : vector<1x32xf32>
    %96 = arith.mulf %87, %69 : vector<1x32xf32>
    %97 = arith.mulf %81, %89 : vector<1x32xf32>
    %98 = arith.addf %96, %97 : vector<1x32xf32>
    %99 = math.tanh %98 : vector<1x32xf32>
    %100 = arith.mulf %95, %99 : vector<1x32xf32>
    %c2 = arith.constant 2 : index
    %c0_31 = arith.constant 0 : index
    %101 = vector.load %arg8[%c2, %c0_31] : memref<18x64xf32, #tpu.memory_space<vmem>>, vector<1x32xf32>
    tpu.vector_store %arg8[%c2, %c0_31], %100 {strides = array<i32>} : memref<18x64xf32, #tpu.memory_space<vmem>>, vector<1x32xf32>,
    %102 = vector.extract_strided_slice %10 {offsets = [3, 0], sizes = [1, 128], strides = [1, 1]} : vector<18x256xf32> to vector<1x128xf32>
    %cst_32 = arith.constant dense<0.000000e+00> : vector<1x128xf32>
    %103 = tpu.matmul %100, %11, %cst_32 {dimension_numbers = #tpu.dot_dimension_numbers<[1], [0], [0], [1], [0, 0, 1, 1], [], []>} : vector<1x32xf32>, vector<32x128xf32>, vector<1x128xf32> -> vector<1x128xf32>
    %104 = arith.addf %102, %103 : vector<1x128xf32>
    %105 = vector.extract_strided_slice %104 {offsets = [0, 0], sizes = [1, 32], strides = [1, 1]} : vector<1x128xf32> to vector<1x32xf32>
    %106 = arith.negf %105 : vector<1x32xf32>
    %107 = math.exp %106 : vector<1x32xf32>
    %cst_33 = arith.constant 1.000000e+00 : f32
    %108 = vector.broadcast %cst_33 : f32 to vector<1x32xf32>
    %109 = arith.addf %108, %107 : vector<1x32xf32>
    %110 = arith.divf %108, %109 : vector<1x32xf32>
    %111 = vector.extract_strided_slice %104 {offsets = [0, 32], sizes = [1, 32], strides = [1, 1]} : vector<1x128xf32> to vector<1x32xf32>
    %112 = arith.negf %111 : vector<1x32xf32>
    %113 = math.exp %112 : vector<1x32xf32>
    %cst_34 = arith.constant 1.000000e+00 : f32
    %114 = vector.broadcast %cst_34 : f32 to vector<1x32xf32>
    %115 = arith.addf %114, %113 : vector<1x32xf32>
    %116 = arith.divf %114, %115 : vector<1x32xf32>
    %117 = vector.extract_strided_slice %104 {offsets = [0, 64], sizes = [1, 32], strides = [1, 1]} : vector<1x128xf32> to vector<1x32xf32>
    %118 = math.tanh %117 : vector<1x32xf32>
    %119 = vector.extract_strided_slice %104 {offsets = [0, 96], sizes = [1, 32], strides = [1, 1]} : vector<1x128xf32> to vector<1x32xf32>
    %120 = arith.negf %119 : vector<1x32xf32>
    %121 = math.exp %120 : vector<1x32xf32>
    %cst_35 = arith.constant 1.000000e+00 : f32
    %122 = vector.broadcast %cst_35 : f32 to vector<1x32xf32>
    %123 = arith.addf %122, %121 : vector<1x32xf32>
    %124 = arith.divf %122, %123 : vector<1x32xf32>
    %125 = arith.mulf %116, %98 : vector<1x32xf32>
    %126 = arith.mulf %110, %118 : vector<1x32xf32>
    %127 = arith.addf %125, %126 : vector<1x32xf32>
    %128 = math.tanh %127 : vector<1x32xf32>
    %129 = arith.mulf %124, %128 : vector<1x32xf32>
    %c3 = arith.constant 3 : index
    %c0_36 = arith.constant 0 : index
    %130 = vector.load %arg8[%c3, %c0_36] : memref<18x64xf32, #tpu.memory_space<vmem>>, vector<1x32xf32>
    tpu.vector_store %arg8[%c3, %c0_36], %129 {strides = array<i32>} : memref<18x64xf32, #tpu.memory_space<vmem>>, vector<1x32xf32>,
    %131 = vector.extract_strided_slice %10 {offsets = [4, 0], sizes = [1, 128], strides = [1, 1]} : vector<18x256xf32> to vector<1x128xf32>
    %cst_37 = arith.constant dense<0.000000e+00> : vector<1x128xf32>
    %132 = tpu.matmul %129, %11, %cst_37 {dimension_numbers = #tpu.dot_dimension_numbers<[1], [0], [0], [1], [0, 0, 1, 1], [], []>} : vector<1x32xf32>, vector<32x128xf32>, vector<1x128xf32> -> vector<1x128xf32>
    %133 = arith.addf %131, %132 : vector<1x128xf32>
    %134 = vector.extract_strided_slice %133 {offsets = [0, 0], sizes = [1, 32], strides = [1, 1]} : vector<1x128xf32> to vector<1x32xf32>
    %135 = arith.negf %134 : vector<1x32xf32>
    %136 = math.exp %135 : vector<1x32xf32>
    %cst_38 = arith.constant 1.000000e+00 : f32
    %137 = vector.broadcast %cst_38 : f32 to vector<1x32xf32>
    %138 = arith.addf %137, %136 : vector<1x32xf32>
    %139 = arith.divf %137, %138 : vector<1x32xf32>
    %140 = vector.extract_strided_slice %133 {offsets = [0, 32], sizes = [1, 32], strides = [1, 1]} : vector<1x128xf32> to vector<1x32xf32>
    %141 = arith.negf %140 : vector<1x32xf32>
    %142 = math.exp %141 : vector<1x32xf32>
    %cst_39 = arith.constant 1.000000e+00 : f32
    %143 = vector.broadcast %cst_39 : f32 to vector<1x32xf32>
    %144 = arith.addf %143, %142 : vector<1x32xf32>
    %145 = arith.divf %143, %144 : vector<1x32xf32>
    %146 = vector.extract_strided_slice %133 {offsets = [0, 64], sizes = [1, 32], strides = [1, 1]} : vector<1x128xf32> to vector<1x32xf32>
    %147 = math.tanh %146 : vector<1x32xf32>
    %148 = vector.extract_strided_slice %133 {offsets = [0, 96], sizes = [1, 32], strides = [1, 1]} : vector<1x128xf32> to vector<1x32xf32>
    %149 = arith.negf %148 : vector<1x32xf32>
    %150 = math.exp %149 : vector<1x32xf32>
    %cst_40 = arith.constant 1.000000e+00 : f32
    %151 = vector.broadcast %cst_40 : f32 to vector<1x32xf32>
    %152 = arith.addf %151, %150 : vector<1x32xf32>
    %153 = arith.divf %151, %152 : vector<1x32xf32>
    %154 = arith.mulf %145, %127 : vector<1x32xf32>
    %155 = arith.mulf %139, %147 : vector<1x32xf32>
    %156 = arith.addf %154, %155 : vector<1x32xf32>
    %157 = math.tanh %156 : vector<1x32xf32>
    %158 = arith.mulf %153, %157 : vector<1x32xf32>
    %c4 = arith.constant 4 : index
    %c0_41 = arith.constant 0 : index
    %159 = vector.load %arg8[%c4, %c0_41] : memref<18x64xf32, #tpu.memory_space<vmem>>, vector<1x32xf32>
    tpu.vector_store %arg8[%c4, %c0_41], %158 {strides = array<i32>} : memref<18x64xf32, #tpu.memory_space<vmem>>, vector<1x32xf32>,
    %160 = vector.extract_strided_slice %10 {offsets = [5, 0], sizes = [1, 128], strides = [1, 1]} : vector<18x256xf32> to vector<1x128xf32>
    %cst_42 = arith.constant dense<0.000000e+00> : vector<1x128xf32>
    %161 = tpu.matmul %158, %11, %cst_42 {dimension_numbers = #tpu.dot_dimension_numbers<[1], [0], [0], [1], [0, 0, 1, 1], [], []>} : vector<1x32xf32>, vector<32x128xf32>, vector<1x128xf32> -> vector<1x128xf32>
    %162 = arith.addf %160, %161 : vector<1x128xf32>
    %163 = vector.extract_strided_slice %162 {offsets = [0, 0], sizes = [1, 32], strides = [1, 1]} : vector<1x128xf32> to vector<1x32xf32>
    %164 = arith.negf %163 : vector<1x32xf32>
    %165 = math.exp %164 : vector<1x32xf32>
    %cst_43 = arith.constant 1.000000e+00 : f32
    %166 = vector.broadcast %cst_43 : f32 to vector<1x32xf32>
    %167 = arith.addf %166, %165 : vector<1x32xf32>
    %168 = arith.divf %166, %167 : vector<1x32xf32>
    %169 = vector.extract_strided_slice %162 {offsets = [0, 32], sizes = [1, 32], strides = [1, 1]} : vector<1x128xf32> to vector<1x32xf32>
    %170 = arith.negf %169 : vector<1x32xf32>
    %171 = math.exp %170 : vector<1x32xf32>
    %cst_44 = arith.constant 1.000000e+00 : f32
    %172 = vector.broadcast %cst_44 : f32 to vector<1x32xf32>
    %173 = arith.addf %172, %171 : vector<1x32xf32>
    %174 = arith.divf %172, %173 : vector<1x32xf32>
    %175 = vector.extract_strided_slice %162 {offsets = [0, 64], sizes = [1, 32], strides = [1, 1]} : vector<1x128xf32> to vector<1x32xf32>
    %176 = math.tanh %175 : vector<1x32xf32>
    %177 = vector.extract_strided_slice %162 {offsets = [0, 96], sizes = [1, 32], strides = [1, 1]} : vector<1x128xf32> to vector<1x32xf32>
    %178 = arith.negf %177 : vector<1x32xf32>
    %179 = math.exp %178 : vector<1x32xf32>
    %cst_45 = arith.constant 1.000000e+00 : f32
    %180 = vector.broadcast %cst_45 : f32 to vector<1x32xf32>
    %181 = arith.addf %180, %179 : vector<1x32xf32>
    %182 = arith.divf %180, %181 : vector<1x32xf32>
    %183 = arith.mulf %174, %156 : vector<1x32xf32>
    %184 = arith.mulf %168, %176 : vector<1x32xf32>
    %185 = arith.addf %183, %184 : vector<1x32xf32>
    %186 = math.tanh %185 : vector<1x32xf32>
    %187 = arith.mulf %182, %186 : vector<1x32xf32>
    %c5 = arith.constant 5 : index
    %c0_46 = arith.constant 0 : index
    %188 = vector.load %arg8[%c5, %c0_46] : memref<18x64xf32, #tpu.memory_space<vmem>>, vector<1x32xf32>
    tpu.vector_store %arg8[%c5, %c0_46], %187 {strides = array<i32>} : memref<18x64xf32, #tpu.memory_space<vmem>>, vector<1x32xf32>,
    %189 = vector.extract_strided_slice %10 {offsets = [6, 0], sizes = [1, 128], strides = [1, 1]} : vector<18x256xf32> to vector<1x128xf32>
    %cst_47 = arith.constant dense<0.000000e+00> : vector<1x128xf32>
    %190 = tpu.matmul %187, %11, %cst_47 {dimension_numbers = #tpu.dot_dimension_numbers<[1], [0], [0], [1], [0, 0, 1, 1], [], []>} : vector<1x32xf32>, vector<32x128xf32>, vector<1x128xf32> -> vector<1x128xf32>
    %191 = arith.addf %189, %190 : vector<1x128xf32>
    %192 = vector.extract_strided_slice %191 {offsets = [0, 0], sizes = [1, 32], strides = [1, 1]} : vector<1x128xf32> to vector<1x32xf32>
    %193 = arith.negf %192 : vector<1x32xf32>
    %194 = math.exp %193 : vector<1x32xf32>
    %cst_48 = arith.constant 1.000000e+00 : f32
    %195 = vector.broadcast %cst_48 : f32 to vector<1x32xf32>
    %196 = arith.addf %195, %194 : vector<1x32xf32>
    %197 = arith.divf %195, %196 : vector<1x32xf32>
    %198 = vector.extract_strided_slice %191 {offsets = [0, 32], sizes = [1, 32], strides = [1, 1]} : vector<1x128xf32> to vector<1x32xf32>
    %199 = arith.negf %198 : vector<1x32xf32>
    %200 = math.exp %199 : vector<1x32xf32>
    %cst_49 = arith.constant 1.000000e+00 : f32
    %201 = vector.broadcast %cst_49 : f32 to vector<1x32xf32>
    %202 = arith.addf %201, %200 : vector<1x32xf32>
    %203 = arith.divf %201, %202 : vector<1x32xf32>
    %204 = vector.extract_strided_slice %191 {offsets = [0, 64], sizes = [1, 32], strides = [1, 1]} : vector<1x128xf32> to vector<1x32xf32>
    %205 = math.tanh %204 : vector<1x32xf32>
    %206 = vector.extract_strided_slice %191 {offsets = [0, 96], sizes = [1, 32], strides = [1, 1]} : vector<1x128xf32> to vector<1x32xf32>
    %207 = arith.negf %206 : vector<1x32xf32>
    %208 = math.exp %207 : vector<1x32xf32>
    %cst_50 = arith.constant 1.000000e+00 : f32
    %209 = vector.broadcast %cst_50 : f32 to vector<1x32xf32>
    %210 = arith.addf %209, %208 : vector<1x32xf32>
    %211 = arith.divf %209, %210 : vector<1x32xf32>
    %212 = arith.mulf %203, %185 : vector<1x32xf32>
    %213 = arith.mulf %197, %205 : vector<1x32xf32>
    %214 = arith.addf %212, %213 : vector<1x32xf32>
    %215 = math.tanh %214 : vector<1x32xf32>
    %216 = arith.mulf %211, %215 : vector<1x32xf32>
    %c6 = arith.constant 6 : index
    %c0_51 = arith.constant 0 : index
    %217 = vector.load %arg8[%c6, %c0_51] : memref<18x64xf32, #tpu.memory_space<vmem>>, vector<1x32xf32>
    tpu.vector_store %arg8[%c6, %c0_51], %216 {strides = array<i32>} : memref<18x64xf32, #tpu.memory_space<vmem>>, vector<1x32xf32>,
    %218 = vector.extract_strided_slice %10 {offsets = [7, 0], sizes = [1, 128], strides = [1, 1]} : vector<18x256xf32> to vector<1x128xf32>
    %cst_52 = arith.constant dense<0.000000e+00> : vector<1x128xf32>
    %219 = tpu.matmul %216, %11, %cst_52 {dimension_numbers = #tpu.dot_dimension_numbers<[1], [0], [0], [1], [0, 0, 1, 1], [], []>} : vector<1x32xf32>, vector<32x128xf32>, vector<1x128xf32> -> vector<1x128xf32>
    %220 = arith.addf %218, %219 : vector<1x128xf32>
    %221 = vector.extract_strided_slice %220 {offsets = [0, 0], sizes = [1, 32], strides = [1, 1]} : vector<1x128xf32> to vector<1x32xf32>
    %222 = arith.negf %221 : vector<1x32xf32>
    %223 = math.exp %222 : vector<1x32xf32>
    %cst_53 = arith.constant 1.000000e+00 : f32
    %224 = vector.broadcast %cst_53 : f32 to vector<1x32xf32>
    %225 = arith.addf %224, %223 : vector<1x32xf32>
    %226 = arith.divf %224, %225 : vector<1x32xf32>
    %227 = vector.extract_strided_slice %220 {offsets = [0, 32], sizes = [1, 32], strides = [1, 1]} : vector<1x128xf32> to vector<1x32xf32>
    %228 = arith.negf %227 : vector<1x32xf32>
    %229 = math.exp %228 : vector<1x32xf32>
    %cst_54 = arith.constant 1.000000e+00 : f32
    %230 = vector.broadcast %cst_54 : f32 to vector<1x32xf32>
    %231 = arith.addf %230, %229 : vector<1x32xf32>
    %232 = arith.divf %230, %231 : vector<1x32xf32>
    %233 = vector.extract_strided_slice %220 {offsets = [0, 64], sizes = [1, 32], strides = [1, 1]} : vector<1x128xf32> to vector<1x32xf32>
    %234 = math.tanh %233 : vector<1x32xf32>
    %235 = vector.extract_strided_slice %220 {offsets = [0, 96], sizes = [1, 32], strides = [1, 1]} : vector<1x128xf32> to vector<1x32xf32>
    %236 = arith.negf %235 : vector<1x32xf32>
    %237 = math.exp %236 : vector<1x32xf32>
    %cst_55 = arith.constant 1.000000e+00 : f32
    %238 = vector.broadcast %cst_55 : f32 to vector<1x32xf32>
    %239 = arith.addf %238, %237 : vector<1x32xf32>
    %240 = arith.divf %238, %239 : vector<1x32xf32>
    %241 = arith.mulf %232, %214 : vector<1x32xf32>
    %242 = arith.mulf %226, %234 : vector<1x32xf32>
    %243 = arith.addf %241, %242 : vector<1x32xf32>
    %244 = math.tanh %243 : vector<1x32xf32>
    %245 = arith.mulf %240, %244 : vector<1x32xf32>
    %c7 = arith.constant 7 : index
    %c0_56 = arith.constant 0 : index
    %246 = vector.load %arg8[%c7, %c0_56] : memref<18x64xf32, #tpu.memory_space<vmem>>, vector<1x32xf32>
    tpu.vector_store %arg8[%c7, %c0_56], %245 {strides = array<i32>} : memref<18x64xf32, #tpu.memory_space<vmem>>, vector<1x32xf32>,
    %247 = vector.extract_strided_slice %10 {offsets = [8, 0], sizes = [1, 128], strides = [1, 1]} : vector<18x256xf32> to vector<1x128xf32>
    %cst_57 = arith.constant dense<0.000000e+00> : vector<1x128xf32>
    %248 = tpu.matmul %245, %11, %cst_57 {dimension_numbers = #tpu.dot_dimension_numbers<[1], [0], [0], [1], [0, 0, 1, 1], [], []>} : vector<1x32xf32>, vector<32x128xf32>, vector<1x128xf32> -> vector<1x128xf32>
    %249 = arith.addf %247, %248 : vector<1x128xf32>
    %250 = vector.extract_strided_slice %249 {offsets = [0, 0], sizes = [1, 32], strides = [1, 1]} : vector<1x128xf32> to vector<1x32xf32>
    %251 = arith.negf %250 : vector<1x32xf32>
    %252 = math.exp %251 : vector<1x32xf32>
    %cst_58 = arith.constant 1.000000e+00 : f32
    %253 = vector.broadcast %cst_58 : f32 to vector<1x32xf32>
    %254 = arith.addf %253, %252 : vector<1x32xf32>
    %255 = arith.divf %253, %254 : vector<1x32xf32>
    %256 = vector.extract_strided_slice %249 {offsets = [0, 32], sizes = [1, 32], strides = [1, 1]} : vector<1x128xf32> to vector<1x32xf32>
    %257 = arith.negf %256 : vector<1x32xf32>
    %258 = math.exp %257 : vector<1x32xf32>
    %cst_59 = arith.constant 1.000000e+00 : f32
    %259 = vector.broadcast %cst_59 : f32 to vector<1x32xf32>
    %260 = arith.addf %259, %258 : vector<1x32xf32>
    %261 = arith.divf %259, %260 : vector<1x32xf32>
    %262 = vector.extract_strided_slice %249 {offsets = [0, 64], sizes = [1, 32], strides = [1, 1]} : vector<1x128xf32> to vector<1x32xf32>
    %263 = math.tanh %262 : vector<1x32xf32>
    %264 = vector.extract_strided_slice %249 {offsets = [0, 96], sizes = [1, 32], strides = [1, 1]} : vector<1x128xf32> to vector<1x32xf32>
    %265 = arith.negf %264 : vector<1x32xf32>
    %266 = math.exp %265 : vector<1x32xf32>
    %cst_60 = arith.constant 1.000000e+00 : f32
    %267 = vector.broadcast %cst_60 : f32 to vector<1x32xf32>
    %268 = arith.addf %267, %266 : vector<1x32xf32>
    %269 = arith.divf %267, %268 : vector<1x32xf32>
    %270 = arith.mulf %261, %243 : vector<1x32xf32>
    %271 = arith.mulf %255, %263 : vector<1x32xf32>
    %272 = arith.addf %270, %271 : vector<1x32xf32>
    %273 = math.tanh %272 : vector<1x32xf32>
    %274 = arith.mulf %269, %273 : vector<1x32xf32>
    %c8 = arith.constant 8 : index
    %c0_61 = arith.constant 0 : index
    %275 = vector.load %arg8[%c8, %c0_61] : memref<18x64xf32, #tpu.memory_space<vmem>>, vector<1x32xf32>
    tpu.vector_store %arg8[%c8, %c0_61], %274 {strides = array<i32>} : memref<18x64xf32, #tpu.memory_space<vmem>>, vector<1x32xf32>,
    %cst_62 = arith.constant 0.000000e+00 : f32
    %276 = vector.broadcast %cst_62 : f32 to vector<1x32xf32>
    %cst_63 = arith.constant 0.000000e+00 : f32
    %277 = vector.broadcast %cst_63 : f32 to vector<1x32xf32>
    %278 = vector.extract_strided_slice %10 {offsets = [8, 128], sizes = [1, 128], strides = [1, 1]} : vector<18x256xf32> to vector<1x128xf32>
    %cst_64 = arith.constant dense<0.000000e+00> : vector<1x128xf32>
    %279 = tpu.matmul %276, %12, %cst_64 {dimension_numbers = #tpu.dot_dimension_numbers<[1], [0], [0], [1], [0, 0, 1, 1], [], []>} : vector<1x32xf32>, vector<32x128xf32>, vector<1x128xf32> -> vector<1x128xf32>
    %280 = arith.addf %278, %279 : vector<1x128xf32>
    %281 = vector.extract_strided_slice %280 {offsets = [0, 0], sizes = [1, 32], strides = [1, 1]} : vector<1x128xf32> to vector<1x32xf32>
    %282 = arith.negf %281 : vector<1x32xf32>
    %283 = math.exp %282 : vector<1x32xf32>
    %cst_65 = arith.constant 1.000000e+00 : f32
    %284 = vector.broadcast %cst_65 : f32 to vector<1x32xf32>
    %285 = arith.addf %284, %283 : vector<1x32xf32>
    %286 = arith.divf %284, %285 : vector<1x32xf32>
    %287 = vector.extract_strided_slice %280 {offsets = [0, 32], sizes = [1, 32], strides = [1, 1]} : vector<1x128xf32> to vector<1x32xf32>
    %288 = arith.negf %287 : vector<1x32xf32>
    %289 = math.exp %288 : vector<1x32xf32>
    %cst_66 = arith.constant 1.000000e+00 : f32
    %290 = vector.broadcast %cst_66 : f32 to vector<1x32xf32>
    %291 = arith.addf %290, %289 : vector<1x32xf32>
    %292 = arith.divf %290, %291 : vector<1x32xf32>
    %293 = vector.extract_strided_slice %280 {offsets = [0, 64], sizes = [1, 32], strides = [1, 1]} : vector<1x128xf32> to vector<1x32xf32>
    %294 = math.tanh %293 : vector<1x32xf32>
    %295 = vector.extract_strided_slice %280 {offsets = [0, 96], sizes = [1, 32], strides = [1, 1]} : vector<1x128xf32> to vector<1x32xf32>
    %296 = arith.negf %295 : vector<1x32xf32>
    %297 = math.exp %296 : vector<1x32xf32>
    %cst_67 = arith.constant 1.000000e+00 : f32
    %298 = vector.broadcast %cst_67 : f32 to vector<1x32xf32>
    %299 = arith.addf %298, %297 : vector<1x32xf32>
    %300 = arith.divf %298, %299 : vector<1x32xf32>
    %301 = arith.mulf %292, %277 : vector<1x32xf32>
    %302 = arith.mulf %286, %294 : vector<1x32xf32>
    %303 = arith.addf %301, %302 : vector<1x32xf32>
    %304 = math.tanh %303 : vector<1x32xf32>
    %305 = arith.mulf %300, %304 : vector<1x32xf32>
    %c8_68 = arith.constant 8 : index
    %c32 = arith.constant 32 : index
    %306 = vector.load %arg8[%c8_68, %c32] : memref<18x64xf32, #tpu.memory_space<vmem>>, vector<1x32xf32>
    tpu.vector_store %arg8[%c8_68, %c32], %305 {strides = array<i32>} : memref<18x64xf32, #tpu.memory_space<vmem>>, vector<1x32xf32>,
    %307 = vector.extract_strided_slice %10 {offsets = [7, 128], sizes = [1, 128], strides = [1, 1]} : vector<18x256xf32> to vector<1x128xf32>
    %cst_69 = arith.constant dense<0.000000e+00> : vector<1x128xf32>
    %308 = tpu.matmul %305, %12, %cst_69 {dimension_numbers = #tpu.dot_dimension_numbers<[1], [0], [0], [1], [0, 0, 1, 1], [], []>} : vector<1x32xf32>, vector<32x128xf32>, vector<1x128xf32> -> vector<1x128xf32>
    %309 = arith.addf %307, %308 : vector<1x128xf32>
    %310 = vector.extract_strided_slice %309 {offsets = [0, 0], sizes = [1, 32], strides = [1, 1]} : vector<1x128xf32> to vector<1x32xf32>
    %311 = arith.negf %310 : vector<1x32xf32>
    %312 = math.exp %311 : vector<1x32xf32>
    %cst_70 = arith.constant 1.000000e+00 : f32
    %313 = vector.broadcast %cst_70 : f32 to vector<1x32xf32>
    %314 = arith.addf %313, %312 : vector<1x32xf32>
    %315 = arith.divf %313, %314 : vector<1x32xf32>
    %316 = vector.extract_strided_slice %309 {offsets = [0, 32], sizes = [1, 32], strides = [1, 1]} : vector<1x128xf32> to vector<1x32xf32>
    %317 = arith.negf %316 : vector<1x32xf32>
    %318 = math.exp %317 : vector<1x32xf32>
    %cst_71 = arith.constant 1.000000e+00 : f32
    %319 = vector.broadcast %cst_71 : f32 to vector<1x32xf32>
    %320 = arith.addf %319, %318 : vector<1x32xf32>
    %321 = arith.divf %319, %320 : vector<1x32xf32>
    %322 = vector.extract_strided_slice %309 {offsets = [0, 64], sizes = [1, 32], strides = [1, 1]} : vector<1x128xf32> to vector<1x32xf32>
    %323 = math.tanh %322 : vector<1x32xf32>
    %324 = vector.extract_strided_slice %309 {offsets = [0, 96], sizes = [1, 32], strides = [1, 1]} : vector<1x128xf32> to vector<1x32xf32>
    %325 = arith.negf %324 : vector<1x32xf32>
    %326 = math.exp %325 : vector<1x32xf32>
    %cst_72 = arith.constant 1.000000e+00 : f32
    %327 = vector.broadcast %cst_72 : f32 to vector<1x32xf32>
    %328 = arith.addf %327, %326 : vector<1x32xf32>
    %329 = arith.divf %327, %328 : vector<1x32xf32>
    %330 = arith.mulf %321, %303 : vector<1x32xf32>
    %331 = arith.mulf %315, %323 : vector<1x32xf32>
    %332 = arith.addf %330, %331 : vector<1x32xf32>
    %333 = math.tanh %332 : vector<1x32xf32>
    %334 = arith.mulf %329, %333 : vector<1x32xf32>
    %c7_73 = arith.constant 7 : index
    %c32_74 = arith.constant 32 : index
    %335 = vector.load %arg8[%c7_73, %c32_74] : memref<18x64xf32, #tpu.memory_space<vmem>>, vector<1x32xf32>
    tpu.vector_store %arg8[%c7_73, %c32_74], %334 {strides = array<i32>} : memref<18x64xf32, #tpu.memory_space<vmem>>, vector<1x32xf32>,
    %336 = vector.extract_strided_slice %10 {offsets = [6, 128], sizes = [1, 128], strides = [1, 1]} : vector<18x256xf32> to vector<1x128xf32>
    %cst_75 = arith.constant dense<0.000000e+00> : vector<1x128xf32>
    %337 = tpu.matmul %334, %12, %cst_75 {dimension_numbers = #tpu.dot_dimension_numbers<[1], [0], [0], [1], [0, 0, 1, 1], [], []>} : vector<1x32xf32>, vector<32x128xf32>, vector<1x128xf32> -> vector<1x128xf32>
    %338 = arith.addf %336, %337 : vector<1x128xf32>
    %339 = vector.extract_strided_slice %338 {offsets = [0, 0], sizes = [1, 32], strides = [1, 1]} : vector<1x128xf32> to vector<1x32xf32>
    %340 = arith.negf %339 : vector<1x32xf32>
    %341 = math.exp %340 : vector<1x32xf32>
    %cst_76 = arith.constant 1.000000e+00 : f32
    %342 = vector.broadcast %cst_76 : f32 to vector<1x32xf32>
    %343 = arith.addf %342, %341 : vector<1x32xf32>
    %344 = arith.divf %342, %343 : vector<1x32xf32>
    %345 = vector.extract_strided_slice %338 {offsets = [0, 32], sizes = [1, 32], strides = [1, 1]} : vector<1x128xf32> to vector<1x32xf32>
    %346 = arith.negf %345 : vector<1x32xf32>
    %347 = math.exp %346 : vector<1x32xf32>
    %cst_77 = arith.constant 1.000000e+00 : f32
    %348 = vector.broadcast %cst_77 : f32 to vector<1x32xf32>
    %349 = arith.addf %348, %347 : vector<1x32xf32>
    %350 = arith.divf %348, %349 : vector<1x32xf32>
    %351 = vector.extract_strided_slice %338 {offsets = [0, 64], sizes = [1, 32], strides = [1, 1]} : vector<1x128xf32> to vector<1x32xf32>
    %352 = math.tanh %351 : vector<1x32xf32>
    %353 = vector.extract_strided_slice %338 {offsets = [0, 96], sizes = [1, 32], strides = [1, 1]} : vector<1x128xf32> to vector<1x32xf32>
    %354 = arith.negf %353 : vector<1x32xf32>
    %355 = math.exp %354 : vector<1x32xf32>
    %cst_78 = arith.constant 1.000000e+00 : f32
    %356 = vector.broadcast %cst_78 : f32 to vector<1x32xf32>
    %357 = arith.addf %356, %355 : vector<1x32xf32>
    %358 = arith.divf %356, %357 : vector<1x32xf32>
    %359 = arith.mulf %350, %332 : vector<1x32xf32>
    %360 = arith.mulf %344, %352 : vector<1x32xf32>
    %361 = arith.addf %359, %360 : vector<1x32xf32>
    %362 = math.tanh %361 : vector<1x32xf32>
    %363 = arith.mulf %358, %362 : vector<1x32xf32>
    %c6_79 = arith.constant 6 : index
    %c32_80 = arith.constant 32 : index
    %364 = vector.load %arg8[%c6_79, %c32_80] : memref<18x64xf32, #tpu.memory_space<vmem>>, vector<1x32xf32>
    tpu.vector_store %arg8[%c6_79, %c32_80], %363 {strides = array<i32>} : memref<18x64xf32, #tpu.memory_space<vmem>>, vector<1x32xf32>,
    %365 = vector.extract_strided_slice %10 {offsets = [5, 128], sizes = [1, 128], strides = [1, 1]} : vector<18x256xf32> to vector<1x128xf32>
    %cst_81 = arith.constant dense<0.000000e+00> : vector<1x128xf32>
    %366 = tpu.matmul %363, %12, %cst_81 {dimension_numbers = #tpu.dot_dimension_numbers<[1], [0], [0], [1], [0, 0, 1, 1], [], []>} : vector<1x32xf32>, vector<32x128xf32>, vector<1x128xf32> -> vector<1x128xf32>
    %367 = arith.addf %365, %366 : vector<1x128xf32>
    %368 = vector.extract_strided_slice %367 {offsets = [0, 0], sizes = [1, 32], strides = [1, 1]} : vector<1x128xf32> to vector<1x32xf32>
    %369 = arith.negf %368 : vector<1x32xf32>
    %370 = math.exp %369 : vector<1x32xf32>
    %cst_82 = arith.constant 1.000000e+00 : f32
    %371 = vector.broadcast %cst_82 : f32 to vector<1x32xf32>
    %372 = arith.addf %371, %370 : vector<1x32xf32>
    %373 = arith.divf %371, %372 : vector<1x32xf32>
    %374 = vector.extract_strided_slice %367 {offsets = [0, 32], sizes = [1, 32], strides = [1, 1]} : vector<1x128xf32> to vector<1x32xf32>
    %375 = arith.negf %374 : vector<1x32xf32>
    %376 = math.exp %375 : vector<1x32xf32>
    %cst_83 = arith.constant 1.000000e+00 : f32
    %377 = vector.broadcast %cst_83 : f32 to vector<1x32xf32>
    %378 = arith.addf %377, %376 : vector<1x32xf32>
    %379 = arith.divf %377, %378 : vector<1x32xf32>
    %380 = vector.extract_strided_slice %367 {offsets = [0, 64], sizes = [1, 32], strides = [1, 1]} : vector<1x128xf32> to vector<1x32xf32>
    %381 = math.tanh %380 : vector<1x32xf32>
    %382 = vector.extract_strided_slice %367 {offsets = [0, 96], sizes = [1, 32], strides = [1, 1]} : vector<1x128xf32> to vector<1x32xf32>
    %383 = arith.negf %382 : vector<1x32xf32>
    %384 = math.exp %383 : vector<1x32xf32>
    %cst_84 = arith.constant 1.000000e+00 : f32
    %385 = vector.broadcast %cst_84 : f32 to vector<1x32xf32>
    %386 = arith.addf %385, %384 : vector<1x32xf32>
    %387 = arith.divf %385, %386 : vector<1x32xf32>
    %388 = arith.mulf %379, %361 : vector<1x32xf32>
    %389 = arith.mulf %373, %381 : vector<1x32xf32>
    %390 = arith.addf %388, %389 : vector<1x32xf32>
    %391 = math.tanh %390 : vector<1x32xf32>
    %392 = arith.mulf %387, %391 : vector<1x32xf32>
    %c5_85 = arith.constant 5 : index
    %c32_86 = arith.constant 32 : index
    %393 = vector.load %arg8[%c5_85, %c32_86] : memref<18x64xf32, #tpu.memory_space<vmem>>, vector<1x32xf32>
    tpu.vector_store %arg8[%c5_85, %c32_86], %392 {strides = array<i32>} : memref<18x64xf32, #tpu.memory_space<vmem>>, vector<1x32xf32>,
    %394 = vector.extract_strided_slice %10 {offsets = [4, 128], sizes = [1, 128], strides = [1, 1]} : vector<18x256xf32> to vector<1x128xf32>
    %cst_87 = arith.constant dense<0.000000e+00> : vector<1x128xf32>
    %395 = tpu.matmul %392, %12, %cst_87 {dimension_numbers = #tpu.dot_dimension_numbers<[1], [0], [0], [1], [0, 0, 1, 1], [], []>} : vector<1x32xf32>, vector<32x128xf32>, vector<1x128xf32> -> vector<1x128xf32>
    %396 = arith.addf %394, %395 : vector<1x128xf32>
    %397 = vector.extract_strided_slice %396 {offsets = [0, 0], sizes = [1, 32], strides = [1, 1]} : vector<1x128xf32> to vector<1x32xf32>
    %398 = arith.negf %397 : vector<1x32xf32>
    %399 = math.exp %398 : vector<1x32xf32>
    %cst_88 = arith.constant 1.000000e+00 : f32
    %400 = vector.broadcast %cst_88 : f32 to vector<1x32xf32>
    %401 = arith.addf %400, %399 : vector<1x32xf32>
    %402 = arith.divf %400, %401 : vector<1x32xf32>
    %403 = vector.extract_strided_slice %396 {offsets = [0, 32], sizes = [1, 32], strides = [1, 1]} : vector<1x128xf32> to vector<1x32xf32>
    %404 = arith.negf %403 : vector<1x32xf32>
    %405 = math.exp %404 : vector<1x32xf32>
    %cst_89 = arith.constant 1.000000e+00 : f32
    %406 = vector.broadcast %cst_89 : f32 to vector<1x32xf32>
    %407 = arith.addf %406, %405 : vector<1x32xf32>
    %408 = arith.divf %406, %407 : vector<1x32xf32>
    %409 = vector.extract_strided_slice %396 {offsets = [0, 64], sizes = [1, 32], strides = [1, 1]} : vector<1x128xf32> to vector<1x32xf32>
    %410 = math.tanh %409 : vector<1x32xf32>
    %411 = vector.extract_strided_slice %396 {offsets = [0, 96], sizes = [1, 32], strides = [1, 1]} : vector<1x128xf32> to vector<1x32xf32>
    %412 = arith.negf %411 : vector<1x32xf32>
    %413 = math.exp %412 : vector<1x32xf32>
    %cst_90 = arith.constant 1.000000e+00 : f32
    %414 = vector.broadcast %cst_90 : f32 to vector<1x32xf32>
    %415 = arith.addf %414, %413 : vector<1x32xf32>
    %416 = arith.divf %414, %415 : vector<1x32xf32>
    %417 = arith.mulf %408, %390 : vector<1x32xf32>
    %418 = arith.mulf %402, %410 : vector<1x32xf32>
    %419 = arith.addf %417, %418 : vector<1x32xf32>
    %420 = math.tanh %419 : vector<1x32xf32>
    %421 = arith.mulf %416, %420 : vector<1x32xf32>
    %c4_91 = arith.constant 4 : index
    %c32_92 = arith.constant 32 : index
    %422 = vector.load %arg8[%c4_91, %c32_92] : memref<18x64xf32, #tpu.memory_space<vmem>>, vector<1x32xf32>
    tpu.vector_store %arg8[%c4_91, %c32_92], %421 {strides = array<i32>} : memref<18x64xf32, #tpu.memory_space<vmem>>, vector<1x32xf32>,
    %423 = vector.extract_strided_slice %10 {offsets = [3, 128], sizes = [1, 128], strides = [1, 1]} : vector<18x256xf32> to vector<1x128xf32>
    %cst_93 = arith.constant dense<0.000000e+00> : vector<1x128xf32>
    %424 = tpu.matmul %421, %12, %cst_93 {dimension_numbers = #tpu.dot_dimension_numbers<[1], [0], [0], [1], [0, 0, 1, 1], [], []>} : vector<1x32xf32>, vector<32x128xf32>, vector<1x128xf32> -> vector<1x128xf32>
    %425 = arith.addf %423, %424 : vector<1x128xf32>
    %426 = vector.extract_strided_slice %425 {offsets = [0, 0], sizes = [1, 32], strides = [1, 1]} : vector<1x128xf32> to vector<1x32xf32>
    %427 = arith.negf %426 : vector<1x32xf32>
    %428 = math.exp %427 : vector<1x32xf32>
    %cst_94 = arith.constant 1.000000e+00 : f32
    %429 = vector.broadcast %cst_94 : f32 to vector<1x32xf32>
    %430 = arith.addf %429, %428 : vector<1x32xf32>
    %431 = arith.divf %429, %430 : vector<1x32xf32>
    %432 = vector.extract_strided_slice %425 {offsets = [0, 32], sizes = [1, 32], strides = [1, 1]} : vector<1x128xf32> to vector<1x32xf32>
    %433 = arith.negf %432 : vector<1x32xf32>
    %434 = math.exp %433 : vector<1x32xf32>
    %cst_95 = arith.constant 1.000000e+00 : f32
    %435 = vector.broadcast %cst_95 : f32 to vector<1x32xf32>
    %436 = arith.addf %435, %434 : vector<1x32xf32>
    %437 = arith.divf %435, %436 : vector<1x32xf32>
    %438 = vector.extract_strided_slice %425 {offsets = [0, 64], sizes = [1, 32], strides = [1, 1]} : vector<1x128xf32> to vector<1x32xf32>
    %439 = math.tanh %438 : vector<1x32xf32>
    %440 = vector.extract_strided_slice %425 {offsets = [0, 96], sizes = [1, 32], strides = [1, 1]} : vector<1x128xf32> to vector<1x32xf32>
    %441 = arith.negf %440 : vector<1x32xf32>
    %442 = math.exp %441 : vector<1x32xf32>
    %cst_96 = arith.constant 1.000000e+00 : f32
    %443 = vector.broadcast %cst_96 : f32 to vector<1x32xf32>
    %444 = arith.addf %443, %442 : vector<1x32xf32>
    %445 = arith.divf %443, %444 : vector<1x32xf32>
    %446 = arith.mulf %437, %419 : vector<1x32xf32>
    %447 = arith.mulf %431, %439 : vector<1x32xf32>
    %448 = arith.addf %446, %447 : vector<1x32xf32>
    %449 = math.tanh %448 : vector<1x32xf32>
    %450 = arith.mulf %445, %449 : vector<1x32xf32>
    %c3_97 = arith.constant 3 : index
    %c32_98 = arith.constant 32 : index
    %451 = vector.load %arg8[%c3_97, %c32_98] : memref<18x64xf32, #tpu.memory_space<vmem>>, vector<1x32xf32>
    tpu.vector_store %arg8[%c3_97, %c32_98], %450 {strides = array<i32>} : memref<18x64xf32, #tpu.memory_space<vmem>>, vector<1x32xf32>,
    %452 = vector.extract_strided_slice %10 {offsets = [2, 128], sizes = [1, 128], strides = [1, 1]} : vector<18x256xf32> to vector<1x128xf32>
    %cst_99 = arith.constant dense<0.000000e+00> : vector<1x128xf32>
    %453 = tpu.matmul %450, %12, %cst_99 {dimension_numbers = #tpu.dot_dimension_numbers<[1], [0], [0], [1], [0, 0, 1, 1], [], []>} : vector<1x32xf32>, vector<32x128xf32>, vector<1x128xf32> -> vector<1x128xf32>
    %454 = arith.addf %452, %453 : vector<1x128xf32>
    %455 = vector.extract_strided_slice %454 {offsets = [0, 0], sizes = [1, 32], strides = [1, 1]} : vector<1x128xf32> to vector<1x32xf32>
    %456 = arith.negf %455 : vector<1x32xf32>
    %457 = math.exp %456 : vector<1x32xf32>
    %cst_100 = arith.constant 1.000000e+00 : f32
    %458 = vector.broadcast %cst_100 : f32 to vector<1x32xf32>
    %459 = arith.addf %458, %457 : vector<1x32xf32>
    %460 = arith.divf %458, %459 : vector<1x32xf32>
    %461 = vector.extract_strided_slice %454 {offsets = [0, 32], sizes = [1, 32], strides = [1, 1]} : vector<1x128xf32> to vector<1x32xf32>
    %462 = arith.negf %461 : vector<1x32xf32>
    %463 = math.exp %462 : vector<1x32xf32>
    %cst_101 = arith.constant 1.000000e+00 : f32
    %464 = vector.broadcast %cst_101 : f32 to vector<1x32xf32>
    %465 = arith.addf %464, %463 : vector<1x32xf32>
    %466 = arith.divf %464, %465 : vector<1x32xf32>
    %467 = vector.extract_strided_slice %454 {offsets = [0, 64], sizes = [1, 32], strides = [1, 1]} : vector<1x128xf32> to vector<1x32xf32>
    %468 = math.tanh %467 : vector<1x32xf32>
    %469 = vector.extract_strided_slice %454 {offsets = [0, 96], sizes = [1, 32], strides = [1, 1]} : vector<1x128xf32> to vector<1x32xf32>
    %470 = arith.negf %469 : vector<1x32xf32>
    %471 = math.exp %470 : vector<1x32xf32>
    %cst_102 = arith.constant 1.000000e+00 : f32
    %472 = vector.broadcast %cst_102 : f32 to vector<1x32xf32>
    %473 = arith.addf %472, %471 : vector<1x32xf32>
    %474 = arith.divf %472, %473 : vector<1x32xf32>
    %475 = arith.mulf %466, %448 : vector<1x32xf32>
    %476 = arith.mulf %460, %468 : vector<1x32xf32>
    %477 = arith.addf %475, %476 : vector<1x32xf32>
    %478 = math.tanh %477 : vector<1x32xf32>
    %479 = arith.mulf %474, %478 : vector<1x32xf32>
    %c2_103 = arith.constant 2 : index
    %c32_104 = arith.constant 32 : index
    %480 = vector.load %arg8[%c2_103, %c32_104] : memref<18x64xf32, #tpu.memory_space<vmem>>, vector<1x32xf32>
    tpu.vector_store %arg8[%c2_103, %c32_104], %479 {strides = array<i32>} : memref<18x64xf32, #tpu.memory_space<vmem>>, vector<1x32xf32>,
    %481 = vector.extract_strided_slice %10 {offsets = [1, 128], sizes = [1, 128], strides = [1, 1]} : vector<18x256xf32> to vector<1x128xf32>
    %cst_105 = arith.constant dense<0.000000e+00> : vector<1x128xf32>
    %482 = tpu.matmul %479, %12, %cst_105 {dimension_numbers = #tpu.dot_dimension_numbers<[1], [0], [0], [1], [0, 0, 1, 1], [], []>} : vector<1x32xf32>, vector<32x128xf32>, vector<1x128xf32> -> vector<1x128xf32>
    %483 = arith.addf %481, %482 : vector<1x128xf32>
    %484 = vector.extract_strided_slice %483 {offsets = [0, 0], sizes = [1, 32], strides = [1, 1]} : vector<1x128xf32> to vector<1x32xf32>
    %485 = arith.negf %484 : vector<1x32xf32>
    %486 = math.exp %485 : vector<1x32xf32>
    %cst_106 = arith.constant 1.000000e+00 : f32
    %487 = vector.broadcast %cst_106 : f32 to vector<1x32xf32>
    %488 = arith.addf %487, %486 : vector<1x32xf32>
    %489 = arith.divf %487, %488 : vector<1x32xf32>
    %490 = vector.extract_strided_slice %483 {offsets = [0, 32], sizes = [1, 32], strides = [1, 1]} : vector<1x128xf32> to vector<1x32xf32>
    %491 = arith.negf %490 : vector<1x32xf32>
    %492 = math.exp %491 : vector<1x32xf32>
    %cst_107 = arith.constant 1.000000e+00 : f32
    %493 = vector.broadcast %cst_107 : f32 to vector<1x32xf32>
    %494 = arith.addf %493, %492 : vector<1x32xf32>
    %495 = arith.divf %493, %494 : vector<1x32xf32>
    %496 = vector.extract_strided_slice %483 {offsets = [0, 64], sizes = [1, 32], strides = [1, 1]} : vector<1x128xf32> to vector<1x32xf32>
    %497 = math.tanh %496 : vector<1x32xf32>
    %498 = vector.extract_strided_slice %483 {offsets = [0, 96], sizes = [1, 32], strides = [1, 1]} : vector<1x128xf32> to vector<1x32xf32>
    %499 = arith.negf %498 : vector<1x32xf32>
    %500 = math.exp %499 : vector<1x32xf32>
    %cst_108 = arith.constant 1.000000e+00 : f32
    %501 = vector.broadcast %cst_108 : f32 to vector<1x32xf32>
    %502 = arith.addf %501, %500 : vector<1x32xf32>
    %503 = arith.divf %501, %502 : vector<1x32xf32>
    %504 = arith.mulf %495, %477 : vector<1x32xf32>
    %505 = arith.mulf %489, %497 : vector<1x32xf32>
    %506 = arith.addf %504, %505 : vector<1x32xf32>
    %507 = math.tanh %506 : vector<1x32xf32>
    %508 = arith.mulf %503, %507 : vector<1x32xf32>
    %c1_109 = arith.constant 1 : index
    %c32_110 = arith.constant 32 : index
    %509 = vector.load %arg8[%c1_109, %c32_110] : memref<18x64xf32, #tpu.memory_space<vmem>>, vector<1x32xf32>
    tpu.vector_store %arg8[%c1_109, %c32_110], %508 {strides = array<i32>} : memref<18x64xf32, #tpu.memory_space<vmem>>, vector<1x32xf32>,
    %510 = vector.extract_strided_slice %10 {offsets = [0, 128], sizes = [1, 128], strides = [1, 1]} : vector<18x256xf32> to vector<1x128xf32>
    %cst_111 = arith.constant dense<0.000000e+00> : vector<1x128xf32>
    %511 = tpu.matmul %508, %12, %cst_111 {dimension_numbers = #tpu.dot_dimension_numbers<[1], [0], [0], [1], [0, 0, 1, 1], [], []>} : vector<1x32xf32>, vector<32x128xf32>, vector<1x128xf32> -> vector<1x128xf32>
    %512 = arith.addf %510, %511 : vector<1x128xf32>
    %513 = vector.extract_strided_slice %512 {offsets = [0, 0], sizes = [1, 32], strides = [1, 1]} : vector<1x128xf32> to vector<1x32xf32>
    %514 = arith.negf %513 : vector<1x32xf32>
    %515 = math.exp %514 : vector<1x32xf32>
    %cst_112 = arith.constant 1.000000e+00 : f32
    %516 = vector.broadcast %cst_112 : f32 to vector<1x32xf32>
    %517 = arith.addf %516, %515 : vector<1x32xf32>
    %518 = arith.divf %516, %517 : vector<1x32xf32>
    %519 = vector.extract_strided_slice %512 {offsets = [0, 32], sizes = [1, 32], strides = [1, 1]} : vector<1x128xf32> to vector<1x32xf32>
    %520 = arith.negf %519 : vector<1x32xf32>
    %521 = math.exp %520 : vector<1x32xf32>
    %cst_113 = arith.constant 1.000000e+00 : f32
    %522 = vector.broadcast %cst_113 : f32 to vector<1x32xf32>
    %523 = arith.addf %522, %521 : vector<1x32xf32>
    %524 = arith.divf %522, %523 : vector<1x32xf32>
    %525 = vector.extract_strided_slice %512 {offsets = [0, 64], sizes = [1, 32], strides = [1, 1]} : vector<1x128xf32> to vector<1x32xf32>
    %526 = math.tanh %525 : vector<1x32xf32>
    %527 = vector.extract_strided_slice %512 {offsets = [0, 96], sizes = [1, 32], strides = [1, 1]} : vector<1x128xf32> to vector<1x32xf32>
    %528 = arith.negf %527 : vector<1x32xf32>
    %529 = math.exp %528 : vector<1x32xf32>
    %cst_114 = arith.constant 1.000000e+00 : f32
    %530 = vector.broadcast %cst_114 : f32 to vector<1x32xf32>
    %531 = arith.addf %530, %529 : vector<1x32xf32>
    %532 = arith.divf %530, %531 : vector<1x32xf32>
    %533 = arith.mulf %524, %506 : vector<1x32xf32>
    %534 = arith.mulf %518, %526 : vector<1x32xf32>
    %535 = arith.addf %533, %534 : vector<1x32xf32>
    %536 = math.tanh %535 : vector<1x32xf32>
    %537 = arith.mulf %532, %536 : vector<1x32xf32>
    %c0_115 = arith.constant 0 : index
    %c32_116 = arith.constant 32 : index
    %538 = vector.load %arg8[%c0_115, %c32_116] : memref<18x64xf32, #tpu.memory_space<vmem>>, vector<1x32xf32>
    tpu.vector_store %arg8[%c0_115, %c32_116], %537 {strides = array<i32>} : memref<18x64xf32, #tpu.memory_space<vmem>>, vector<1x32xf32>,
    %cst_117 = arith.constant 0.000000e+00 : f32
    %539 = vector.broadcast %cst_117 : f32 to vector<1x32xf32>
    %cst_118 = arith.constant 0.000000e+00 : f32
    %540 = vector.broadcast %cst_118 : f32 to vector<1x32xf32>
    %541 = vector.extract_strided_slice %10 {offsets = [9, 0], sizes = [1, 128], strides = [1, 1]} : vector<18x256xf32> to vector<1x128xf32>
    %cst_119 = arith.constant dense<0.000000e+00> : vector<1x128xf32>
    %542 = tpu.matmul %539, %11, %cst_119 {dimension_numbers = #tpu.dot_dimension_numbers<[1], [0], [0], [1], [0, 0, 1, 1], [], []>} : vector<1x32xf32>, vector<32x128xf32>, vector<1x128xf32> -> vector<1x128xf32>
    %543 = arith.addf %541, %542 : vector<1x128xf32>
    %544 = vector.extract_strided_slice %543 {offsets = [0, 0], sizes = [1, 32], strides = [1, 1]} : vector<1x128xf32> to vector<1x32xf32>
    %545 = arith.negf %544 : vector<1x32xf32>
    %546 = math.exp %545 : vector<1x32xf32>
    %cst_120 = arith.constant 1.000000e+00 : f32
    %547 = vector.broadcast %cst_120 : f32 to vector<1x32xf32>
    %548 = arith.addf %547, %546 : vector<1x32xf32>
    %549 = arith.divf %547, %548 : vector<1x32xf32>
    %550 = vector.extract_strided_slice %543 {offsets = [0, 32], sizes = [1, 32], strides = [1, 1]} : vector<1x128xf32> to vector<1x32xf32>
    %551 = arith.negf %550 : vector<1x32xf32>
    %552 = math.exp %551 : vector<1x32xf32>
    %cst_121 = arith.constant 1.000000e+00 : f32
    %553 = vector.broadcast %cst_121 : f32 to vector<1x32xf32>
    %554 = arith.addf %553, %552 : vector<1x32xf32>
    %555 = arith.divf %553, %554 : vector<1x32xf32>
    %556 = vector.extract_strided_slice %543 {offsets = [0, 64], sizes = [1, 32], strides = [1, 1]} : vector<1x128xf32> to vector<1x32xf32>
    %557 = math.tanh %556 : vector<1x32xf32>
    %558 = vector.extract_strided_slice %543 {offsets = [0, 96], sizes = [1, 32], strides = [1, 1]} : vector<1x128xf32> to vector<1x32xf32>
    %559 = arith.negf %558 : vector<1x32xf32>
    %560 = math.exp %559 : vector<1x32xf32>
    %cst_122 = arith.constant 1.000000e+00 : f32
    %561 = vector.broadcast %cst_122 : f32 to vector<1x32xf32>
    %562 = arith.addf %561, %560 : vector<1x32xf32>
    %563 = arith.divf %561, %562 : vector<1x32xf32>
    %564 = arith.mulf %555, %540 : vector<1x32xf32>
    %565 = arith.mulf %549, %557 : vector<1x32xf32>
    %566 = arith.addf %564, %565 : vector<1x32xf32>
    %567 = math.tanh %566 : vector<1x32xf32>
    %568 = arith.mulf %563, %567 : vector<1x32xf32>
    %c9 = arith.constant 9 : index
    %c0_123 = arith.constant 0 : index
    %569 = vector.load %arg8[%c9, %c0_123] : memref<18x64xf32, #tpu.memory_space<vmem>>, vector<1x32xf32>
    tpu.vector_store %arg8[%c9, %c0_123], %568 {strides = array<i32>} : memref<18x64xf32, #tpu.memory_space<vmem>>, vector<1x32xf32>,
    %570 = vector.extract_strided_slice %10 {offsets = [10, 0], sizes = [1, 128], strides = [1, 1]} : vector<18x256xf32> to vector<1x128xf32>
    %cst_124 = arith.constant dense<0.000000e+00> : vector<1x128xf32>
    %571 = tpu.matmul %568, %11, %cst_124 {dimension_numbers = #tpu.dot_dimension_numbers<[1], [0], [0], [1], [0, 0, 1, 1], [], []>} : vector<1x32xf32>, vector<32x128xf32>, vector<1x128xf32> -> vector<1x128xf32>
    %572 = arith.addf %570, %571 : vector<1x128xf32>
    %573 = vector.extract_strided_slice %572 {offsets = [0, 0], sizes = [1, 32], strides = [1, 1]} : vector<1x128xf32> to vector<1x32xf32>
    %574 = arith.negf %573 : vector<1x32xf32>
    %575 = math.exp %574 : vector<1x32xf32>
    %cst_125 = arith.constant 1.000000e+00 : f32
    %576 = vector.broadcast %cst_125 : f32 to vector<1x32xf32>
    %577 = arith.addf %576, %575 : vector<1x32xf32>
    %578 = arith.divf %576, %577 : vector<1x32xf32>
    %579 = vector.extract_strided_slice %572 {offsets = [0, 32], sizes = [1, 32], strides = [1, 1]} : vector<1x128xf32> to vector<1x32xf32>
    %580 = arith.negf %579 : vector<1x32xf32>
    %581 = math.exp %580 : vector<1x32xf32>
    %cst_126 = arith.constant 1.000000e+00 : f32
    %582 = vector.broadcast %cst_126 : f32 to vector<1x32xf32>
    %583 = arith.addf %582, %581 : vector<1x32xf32>
    %584 = arith.divf %582, %583 : vector<1x32xf32>
    %585 = vector.extract_strided_slice %572 {offsets = [0, 64], sizes = [1, 32], strides = [1, 1]} : vector<1x128xf32> to vector<1x32xf32>
    %586 = math.tanh %585 : vector<1x32xf32>
    %587 = vector.extract_strided_slice %572 {offsets = [0, 96], sizes = [1, 32], strides = [1, 1]} : vector<1x128xf32> to vector<1x32xf32>
    %588 = arith.negf %587 : vector<1x32xf32>
    %589 = math.exp %588 : vector<1x32xf32>
    %cst_127 = arith.constant 1.000000e+00 : f32
    %590 = vector.broadcast %cst_127 : f32 to vector<1x32xf32>
    %591 = arith.addf %590, %589 : vector<1x32xf32>
    %592 = arith.divf %590, %591 : vector<1x32xf32>
    %593 = arith.mulf %584, %566 : vector<1x32xf32>
    %594 = arith.mulf %578, %586 : vector<1x32xf32>
    %595 = arith.addf %593, %594 : vector<1x32xf32>
    %596 = math.tanh %595 : vector<1x32xf32>
    %597 = arith.mulf %592, %596 : vector<1x32xf32>
    %c10 = arith.constant 10 : index
    %c0_128 = arith.constant 0 : index
    %598 = vector.load %arg8[%c10, %c0_128] : memref<18x64xf32, #tpu.memory_space<vmem>>, vector<1x32xf32>
    tpu.vector_store %arg8[%c10, %c0_128], %597 {strides = array<i32>} : memref<18x64xf32, #tpu.memory_space<vmem>>, vector<1x32xf32>,
    %599 = vector.extract_strided_slice %10 {offsets = [11, 0], sizes = [1, 128], strides = [1, 1]} : vector<18x256xf32> to vector<1x128xf32>
    %cst_129 = arith.constant dense<0.000000e+00> : vector<1x128xf32>
    %600 = tpu.matmul %597, %11, %cst_129 {dimension_numbers = #tpu.dot_dimension_numbers<[1], [0], [0], [1], [0, 0, 1, 1], [], []>} : vector<1x32xf32>, vector<32x128xf32>, vector<1x128xf32> -> vector<1x128xf32>
    %601 = arith.addf %599, %600 : vector<1x128xf32>
    %602 = vector.extract_strided_slice %601 {offsets = [0, 0], sizes = [1, 32], strides = [1, 1]} : vector<1x128xf32> to vector<1x32xf32>
    %603 = arith.negf %602 : vector<1x32xf32>
    %604 = math.exp %603 : vector<1x32xf32>
    %cst_130 = arith.constant 1.000000e+00 : f32
    %605 = vector.broadcast %cst_130 : f32 to vector<1x32xf32>
    %606 = arith.addf %605, %604 : vector<1x32xf32>
    %607 = arith.divf %605, %606 : vector<1x32xf32>
    %608 = vector.extract_strided_slice %601 {offsets = [0, 32], sizes = [1, 32], strides = [1, 1]} : vector<1x128xf32> to vector<1x32xf32>
    %609 = arith.negf %608 : vector<1x32xf32>
    %610 = math.exp %609 : vector<1x32xf32>
    %cst_131 = arith.constant 1.000000e+00 : f32
    %611 = vector.broadcast %cst_131 : f32 to vector<1x32xf32>
    %612 = arith.addf %611, %610 : vector<1x32xf32>
    %613 = arith.divf %611, %612 : vector<1x32xf32>
    %614 = vector.extract_strided_slice %601 {offsets = [0, 64], sizes = [1, 32], strides = [1, 1]} : vector<1x128xf32> to vector<1x32xf32>
    %615 = math.tanh %614 : vector<1x32xf32>
    %616 = vector.extract_strided_slice %601 {offsets = [0, 96], sizes = [1, 32], strides = [1, 1]} : vector<1x128xf32> to vector<1x32xf32>
    %617 = arith.negf %616 : vector<1x32xf32>
    %618 = math.exp %617 : vector<1x32xf32>
    %cst_132 = arith.constant 1.000000e+00 : f32
    %619 = vector.broadcast %cst_132 : f32 to vector<1x32xf32>
    %620 = arith.addf %619, %618 : vector<1x32xf32>
    %621 = arith.divf %619, %620 : vector<1x32xf32>
    %622 = arith.mulf %613, %595 : vector<1x32xf32>
    %623 = arith.mulf %607, %615 : vector<1x32xf32>
    %624 = arith.addf %622, %623 : vector<1x32xf32>
    %625 = math.tanh %624 : vector<1x32xf32>
    %626 = arith.mulf %621, %625 : vector<1x32xf32>
    %c11 = arith.constant 11 : index
    %c0_133 = arith.constant 0 : index
    %627 = vector.load %arg8[%c11, %c0_133] : memref<18x64xf32, #tpu.memory_space<vmem>>, vector<1x32xf32>
    tpu.vector_store %arg8[%c11, %c0_133], %626 {strides = array<i32>} : memref<18x64xf32, #tpu.memory_space<vmem>>, vector<1x32xf32>,
    %628 = vector.extract_strided_slice %10 {offsets = [12, 0], sizes = [1, 128], strides = [1, 1]} : vector<18x256xf32> to vector<1x128xf32>
    %cst_134 = arith.constant dense<0.000000e+00> : vector<1x128xf32>
    %629 = tpu.matmul %626, %11, %cst_134 {dimension_numbers = #tpu.dot_dimension_numbers<[1], [0], [0], [1], [0, 0, 1, 1], [], []>} : vector<1x32xf32>, vector<32x128xf32>, vector<1x128xf32> -> vector<1x128xf32>
    %630 = arith.addf %628, %629 : vector<1x128xf32>
    %631 = vector.extract_strided_slice %630 {offsets = [0, 0], sizes = [1, 32], strides = [1, 1]} : vector<1x128xf32> to vector<1x32xf32>
    %632 = arith.negf %631 : vector<1x32xf32>
    %633 = math.exp %632 : vector<1x32xf32>
    %cst_135 = arith.constant 1.000000e+00 : f32
    %634 = vector.broadcast %cst_135 : f32 to vector<1x32xf32>
    %635 = arith.addf %634, %633 : vector<1x32xf32>
    %636 = arith.divf %634, %635 : vector<1x32xf32>
    %637 = vector.extract_strided_slice %630 {offsets = [0, 32], sizes = [1, 32], strides = [1, 1]} : vector<1x128xf32> to vector<1x32xf32>
    %638 = arith.negf %637 : vector<1x32xf32>
    %639 = math.exp %638 : vector<1x32xf32>
    %cst_136 = arith.constant 1.000000e+00 : f32
    %640 = vector.broadcast %cst_136 : f32 to vector<1x32xf32>
    %641 = arith.addf %640, %639 : vector<1x32xf32>
    %642 = arith.divf %640, %641 : vector<1x32xf32>
    %643 = vector.extract_strided_slice %630 {offsets = [0, 64], sizes = [1, 32], strides = [1, 1]} : vector<1x128xf32> to vector<1x32xf32>
    %644 = math.tanh %643 : vector<1x32xf32>
    %645 = vector.extract_strided_slice %630 {offsets = [0, 96], sizes = [1, 32], strides = [1, 1]} : vector<1x128xf32> to vector<1x32xf32>
    %646 = arith.negf %645 : vector<1x32xf32>
    %647 = math.exp %646 : vector<1x32xf32>
    %cst_137 = arith.constant 1.000000e+00 : f32
    %648 = vector.broadcast %cst_137 : f32 to vector<1x32xf32>
    %649 = arith.addf %648, %647 : vector<1x32xf32>
    %650 = arith.divf %648, %649 : vector<1x32xf32>
    %651 = arith.mulf %642, %624 : vector<1x32xf32>
    %652 = arith.mulf %636, %644 : vector<1x32xf32>
    %653 = arith.addf %651, %652 : vector<1x32xf32>
    %654 = math.tanh %653 : vector<1x32xf32>
    %655 = arith.mulf %650, %654 : vector<1x32xf32>
    %c12 = arith.constant 12 : index
    %c0_138 = arith.constant 0 : index
    %656 = vector.load %arg8[%c12, %c0_138] : memref<18x64xf32, #tpu.memory_space<vmem>>, vector<1x32xf32>
    tpu.vector_store %arg8[%c12, %c0_138], %655 {strides = array<i32>} : memref<18x64xf32, #tpu.memory_space<vmem>>, vector<1x32xf32>,
    %657 = vector.extract_strided_slice %10 {offsets = [13, 0], sizes = [1, 128], strides = [1, 1]} : vector<18x256xf32> to vector<1x128xf32>
    %cst_139 = arith.constant dense<0.000000e+00> : vector<1x128xf32>
    %658 = tpu.matmul %655, %11, %cst_139 {dimension_numbers = #tpu.dot_dimension_numbers<[1], [0], [0], [1], [0, 0, 1, 1], [], []>} : vector<1x32xf32>, vector<32x128xf32>, vector<1x128xf32> -> vector<1x128xf32>
    %659 = arith.addf %657, %658 : vector<1x128xf32>
    %660 = vector.extract_strided_slice %659 {offsets = [0, 0], sizes = [1, 32], strides = [1, 1]} : vector<1x128xf32> to vector<1x32xf32>
    %661 = arith.negf %660 : vector<1x32xf32>
    %662 = math.exp %661 : vector<1x32xf32>
    %cst_140 = arith.constant 1.000000e+00 : f32
    %663 = vector.broadcast %cst_140 : f32 to vector<1x32xf32>
    %664 = arith.addf %663, %662 : vector<1x32xf32>
    %665 = arith.divf %663, %664 : vector<1x32xf32>
    %666 = vector.extract_strided_slice %659 {offsets = [0, 32], sizes = [1, 32], strides = [1, 1]} : vector<1x128xf32> to vector<1x32xf32>
    %667 = arith.negf %666 : vector<1x32xf32>
    %668 = math.exp %667 : vector<1x32xf32>
    %cst_141 = arith.constant 1.000000e+00 : f32
    %669 = vector.broadcast %cst_141 : f32 to vector<1x32xf32>
    %670 = arith.addf %669, %668 : vector<1x32xf32>
    %671 = arith.divf %669, %670 : vector<1x32xf32>
    %672 = vector.extract_strided_slice %659 {offsets = [0, 64], sizes = [1, 32], strides = [1, 1]} : vector<1x128xf32> to vector<1x32xf32>
    %673 = math.tanh %672 : vector<1x32xf32>
    %674 = vector.extract_strided_slice %659 {offsets = [0, 96], sizes = [1, 32], strides = [1, 1]} : vector<1x128xf32> to vector<1x32xf32>
    %675 = arith.negf %674 : vector<1x32xf32>
    %676 = math.exp %675 : vector<1x32xf32>
    %cst_142 = arith.constant 1.000000e+00 : f32
    %677 = vector.broadcast %cst_142 : f32 to vector<1x32xf32>
    %678 = arith.addf %677, %676 : vector<1x32xf32>
    %679 = arith.divf %677, %678 : vector<1x32xf32>
    %680 = arith.mulf %671, %653 : vector<1x32xf32>
    %681 = arith.mulf %665, %673 : vector<1x32xf32>
    %682 = arith.addf %680, %681 : vector<1x32xf32>
    %683 = math.tanh %682 : vector<1x32xf32>
    %684 = arith.mulf %679, %683 : vector<1x32xf32>
    %c13 = arith.constant 13 : index
    %c0_143 = arith.constant 0 : index
    %685 = vector.load %arg8[%c13, %c0_143] : memref<18x64xf32, #tpu.memory_space<vmem>>, vector<1x32xf32>
    tpu.vector_store %arg8[%c13, %c0_143], %684 {strides = array<i32>} : memref<18x64xf32, #tpu.memory_space<vmem>>, vector<1x32xf32>,
    %686 = vector.extract_strided_slice %10 {offsets = [14, 0], sizes = [1, 128], strides = [1, 1]} : vector<18x256xf32> to vector<1x128xf32>
    %cst_144 = arith.constant dense<0.000000e+00> : vector<1x128xf32>
    %687 = tpu.matmul %684, %11, %cst_144 {dimension_numbers = #tpu.dot_dimension_numbers<[1], [0], [0], [1], [0, 0, 1, 1], [], []>} : vector<1x32xf32>, vector<32x128xf32>, vector<1x128xf32> -> vector<1x128xf32>
    %688 = arith.addf %686, %687 : vector<1x128xf32>
    %689 = vector.extract_strided_slice %688 {offsets = [0, 0], sizes = [1, 32], strides = [1, 1]} : vector<1x128xf32> to vector<1x32xf32>
    %690 = arith.negf %689 : vector<1x32xf32>
    %691 = math.exp %690 : vector<1x32xf32>
    %cst_145 = arith.constant 1.000000e+00 : f32
    %692 = vector.broadcast %cst_145 : f32 to vector<1x32xf32>
    %693 = arith.addf %692, %691 : vector<1x32xf32>
    %694 = arith.divf %692, %693 : vector<1x32xf32>
    %695 = vector.extract_strided_slice %688 {offsets = [0, 32], sizes = [1, 32], strides = [1, 1]} : vector<1x128xf32> to vector<1x32xf32>
    %696 = arith.negf %695 : vector<1x32xf32>
    %697 = math.exp %696 : vector<1x32xf32>
    %cst_146 = arith.constant 1.000000e+00 : f32
    %698 = vector.broadcast %cst_146 : f32 to vector<1x32xf32>
    %699 = arith.addf %698, %697 : vector<1x32xf32>
    %700 = arith.divf %698, %699 : vector<1x32xf32>
    %701 = vector.extract_strided_slice %688 {offsets = [0, 64], sizes = [1, 32], strides = [1, 1]} : vector<1x128xf32> to vector<1x32xf32>
    %702 = math.tanh %701 : vector<1x32xf32>
    %703 = vector.extract_strided_slice %688 {offsets = [0, 96], sizes = [1, 32], strides = [1, 1]} : vector<1x128xf32> to vector<1x32xf32>
    %704 = arith.negf %703 : vector<1x32xf32>
    %705 = math.exp %704 : vector<1x32xf32>
    %cst_147 = arith.constant 1.000000e+00 : f32
    %706 = vector.broadcast %cst_147 : f32 to vector<1x32xf32>
    %707 = arith.addf %706, %705 : vector<1x32xf32>
    %708 = arith.divf %706, %707 : vector<1x32xf32>
    %709 = arith.mulf %700, %682 : vector<1x32xf32>
    %710 = arith.mulf %694, %702 : vector<1x32xf32>
    %711 = arith.addf %709, %710 : vector<1x32xf32>
    %712 = math.tanh %711 : vector<1x32xf32>
    %713 = arith.mulf %708, %712 : vector<1x32xf32>
    %c14 = arith.constant 14 : index
    %c0_148 = arith.constant 0 : index
    %714 = vector.load %arg8[%c14, %c0_148] : memref<18x64xf32, #tpu.memory_space<vmem>>, vector<1x32xf32>
    tpu.vector_store %arg8[%c14, %c0_148], %713 {strides = array<i32>} : memref<18x64xf32, #tpu.memory_space<vmem>>, vector<1x32xf32>,
    %715 = vector.extract_strided_slice %10 {offsets = [15, 0], sizes = [1, 128], strides = [1, 1]} : vector<18x256xf32> to vector<1x128xf32>
    %cst_149 = arith.constant dense<0.000000e+00> : vector<1x128xf32>
    %716 = tpu.matmul %713, %11, %cst_149 {dimension_numbers = #tpu.dot_dimension_numbers<[1], [0], [0], [1], [0, 0, 1, 1], [], []>} : vector<1x32xf32>, vector<32x128xf32>, vector<1x128xf32> -> vector<1x128xf32>
    %717 = arith.addf %715, %716 : vector<1x128xf32>
    %718 = vector.extract_strided_slice %717 {offsets = [0, 0], sizes = [1, 32], strides = [1, 1]} : vector<1x128xf32> to vector<1x32xf32>
    %719 = arith.negf %718 : vector<1x32xf32>
    %720 = math.exp %719 : vector<1x32xf32>
    %cst_150 = arith.constant 1.000000e+00 : f32
    %721 = vector.broadcast %cst_150 : f32 to vector<1x32xf32>
    %722 = arith.addf %721, %720 : vector<1x32xf32>
    %723 = arith.divf %721, %722 : vector<1x32xf32>
    %724 = vector.extract_strided_slice %717 {offsets = [0, 32], sizes = [1, 32], strides = [1, 1]} : vector<1x128xf32> to vector<1x32xf32>
    %725 = arith.negf %724 : vector<1x32xf32>
    %726 = math.exp %725 : vector<1x32xf32>
    %cst_151 = arith.constant 1.000000e+00 : f32
    %727 = vector.broadcast %cst_151 : f32 to vector<1x32xf32>
    %728 = arith.addf %727, %726 : vector<1x32xf32>
    %729 = arith.divf %727, %728 : vector<1x32xf32>
    %730 = vector.extract_strided_slice %717 {offsets = [0, 64], sizes = [1, 32], strides = [1, 1]} : vector<1x128xf32> to vector<1x32xf32>
    %731 = math.tanh %730 : vector<1x32xf32>
    %732 = vector.extract_strided_slice %717 {offsets = [0, 96], sizes = [1, 32], strides = [1, 1]} : vector<1x128xf32> to vector<1x32xf32>
    %733 = arith.negf %732 : vector<1x32xf32>
    %734 = math.exp %733 : vector<1x32xf32>
    %cst_152 = arith.constant 1.000000e+00 : f32
    %735 = vector.broadcast %cst_152 : f32 to vector<1x32xf32>
    %736 = arith.addf %735, %734 : vector<1x32xf32>
    %737 = arith.divf %735, %736 : vector<1x32xf32>
    %738 = arith.mulf %729, %711 : vector<1x32xf32>
    %739 = arith.mulf %723, %731 : vector<1x32xf32>
    %740 = arith.addf %738, %739 : vector<1x32xf32>
    %741 = math.tanh %740 : vector<1x32xf32>
    %742 = arith.mulf %737, %741 : vector<1x32xf32>
    %c15 = arith.constant 15 : index
    %c0_153 = arith.constant 0 : index
    %743 = vector.load %arg8[%c15, %c0_153] : memref<18x64xf32, #tpu.memory_space<vmem>>, vector<1x32xf32>
    tpu.vector_store %arg8[%c15, %c0_153], %742 {strides = array<i32>} : memref<18x64xf32, #tpu.memory_space<vmem>>, vector<1x32xf32>,
    %744 = vector.extract_strided_slice %10 {offsets = [16, 0], sizes = [1, 128], strides = [1, 1]} : vector<18x256xf32> to vector<1x128xf32>
    %cst_154 = arith.constant dense<0.000000e+00> : vector<1x128xf32>
    %745 = tpu.matmul %742, %11, %cst_154 {dimension_numbers = #tpu.dot_dimension_numbers<[1], [0], [0], [1], [0, 0, 1, 1], [], []>} : vector<1x32xf32>, vector<32x128xf32>, vector<1x128xf32> -> vector<1x128xf32>
    %746 = arith.addf %744, %745 : vector<1x128xf32>
    %747 = vector.extract_strided_slice %746 {offsets = [0, 0], sizes = [1, 32], strides = [1, 1]} : vector<1x128xf32> to vector<1x32xf32>
    %748 = arith.negf %747 : vector<1x32xf32>
    %749 = math.exp %748 : vector<1x32xf32>
    %cst_155 = arith.constant 1.000000e+00 : f32
    %750 = vector.broadcast %cst_155 : f32 to vector<1x32xf32>
    %751 = arith.addf %750, %749 : vector<1x32xf32>
    %752 = arith.divf %750, %751 : vector<1x32xf32>
    %753 = vector.extract_strided_slice %746 {offsets = [0, 32], sizes = [1, 32], strides = [1, 1]} : vector<1x128xf32> to vector<1x32xf32>
    %754 = arith.negf %753 : vector<1x32xf32>
    %755 = math.exp %754 : vector<1x32xf32>
    %cst_156 = arith.constant 1.000000e+00 : f32
    %756 = vector.broadcast %cst_156 : f32 to vector<1x32xf32>
    %757 = arith.addf %756, %755 : vector<1x32xf32>
    %758 = arith.divf %756, %757 : vector<1x32xf32>
    %759 = vector.extract_strided_slice %746 {offsets = [0, 64], sizes = [1, 32], strides = [1, 1]} : vector<1x128xf32> to vector<1x32xf32>
    %760 = math.tanh %759 : vector<1x32xf32>
    %761 = vector.extract_strided_slice %746 {offsets = [0, 96], sizes = [1, 32], strides = [1, 1]} : vector<1x128xf32> to vector<1x32xf32>
    %762 = arith.negf %761 : vector<1x32xf32>
    %763 = math.exp %762 : vector<1x32xf32>
    %cst_157 = arith.constant 1.000000e+00 : f32
    %764 = vector.broadcast %cst_157 : f32 to vector<1x32xf32>
    %765 = arith.addf %764, %763 : vector<1x32xf32>
    %766 = arith.divf %764, %765 : vector<1x32xf32>
    %767 = arith.mulf %758, %740 : vector<1x32xf32>
    %768 = arith.mulf %752, %760 : vector<1x32xf32>
    %769 = arith.addf %767, %768 : vector<1x32xf32>
    %770 = math.tanh %769 : vector<1x32xf32>
    %771 = arith.mulf %766, %770 : vector<1x32xf32>
    %c16 = arith.constant 16 : index
    %c0_158 = arith.constant 0 : index
    %772 = vector.load %arg8[%c16, %c0_158] : memref<18x64xf32, #tpu.memory_space<vmem>>, vector<1x32xf32>
    tpu.vector_store %arg8[%c16, %c0_158], %771 {strides = array<i32>} : memref<18x64xf32, #tpu.memory_space<vmem>>, vector<1x32xf32>,
    %773 = vector.extract_strided_slice %10 {offsets = [17, 0], sizes = [1, 128], strides = [1, 1]} : vector<18x256xf32> to vector<1x128xf32>
    %cst_159 = arith.constant dense<0.000000e+00> : vector<1x128xf32>
    %774 = tpu.matmul %771, %11, %cst_159 {dimension_numbers = #tpu.dot_dimension_numbers<[1], [0], [0], [1], [0, 0, 1, 1], [], []>} : vector<1x32xf32>, vector<32x128xf32>, vector<1x128xf32> -> vector<1x128xf32>
    %775 = arith.addf %773, %774 : vector<1x128xf32>
    %776 = vector.extract_strided_slice %775 {offsets = [0, 0], sizes = [1, 32], strides = [1, 1]} : vector<1x128xf32> to vector<1x32xf32>
    %777 = arith.negf %776 : vector<1x32xf32>
    %778 = math.exp %777 : vector<1x32xf32>
    %cst_160 = arith.constant 1.000000e+00 : f32
    %779 = vector.broadcast %cst_160 : f32 to vector<1x32xf32>
    %780 = arith.addf %779, %778 : vector<1x32xf32>
    %781 = arith.divf %779, %780 : vector<1x32xf32>
    %782 = vector.extract_strided_slice %775 {offsets = [0, 32], sizes = [1, 32], strides = [1, 1]} : vector<1x128xf32> to vector<1x32xf32>
    %783 = arith.negf %782 : vector<1x32xf32>
    %784 = math.exp %783 : vector<1x32xf32>
    %cst_161 = arith.constant 1.000000e+00 : f32
    %785 = vector.broadcast %cst_161 : f32 to vector<1x32xf32>
    %786 = arith.addf %785, %784 : vector<1x32xf32>
    %787 = arith.divf %785, %786 : vector<1x32xf32>
    %788 = vector.extract_strided_slice %775 {offsets = [0, 64], sizes = [1, 32], strides = [1, 1]} : vector<1x128xf32> to vector<1x32xf32>
    %789 = math.tanh %788 : vector<1x32xf32>
    %790 = vector.extract_strided_slice %775 {offsets = [0, 96], sizes = [1, 32], strides = [1, 1]} : vector<1x128xf32> to vector<1x32xf32>
    %791 = arith.negf %790 : vector<1x32xf32>
    %792 = math.exp %791 : vector<1x32xf32>
    %cst_162 = arith.constant 1.000000e+00 : f32
    %793 = vector.broadcast %cst_162 : f32 to vector<1x32xf32>
    %794 = arith.addf %793, %792 : vector<1x32xf32>
    %795 = arith.divf %793, %794 : vector<1x32xf32>
    %796 = arith.mulf %787, %769 : vector<1x32xf32>
    %797 = arith.mulf %781, %789 : vector<1x32xf32>
    %798 = arith.addf %796, %797 : vector<1x32xf32>
    %799 = math.tanh %798 : vector<1x32xf32>
    %800 = arith.mulf %795, %799 : vector<1x32xf32>
    %c17 = arith.constant 17 : index
    %c0_163 = arith.constant 0 : index
    %801 = vector.load %arg8[%c17, %c0_163] : memref<18x64xf32, #tpu.memory_space<vmem>>, vector<1x32xf32>
    tpu.vector_store %arg8[%c17, %c0_163], %800 {strides = array<i32>} : memref<18x64xf32, #tpu.memory_space<vmem>>, vector<1x32xf32>,
    %cst_164 = arith.constant 0.000000e+00 : f32
    %802 = vector.broadcast %cst_164 : f32 to vector<1x32xf32>
    %cst_165 = arith.constant 0.000000e+00 : f32
    %803 = vector.broadcast %cst_165 : f32 to vector<1x32xf32>
    %804 = vector.extract_strided_slice %10 {offsets = [17, 128], sizes = [1, 128], strides = [1, 1]} : vector<18x256xf32> to vector<1x128xf32>
    %cst_166 = arith.constant dense<0.000000e+00> : vector<1x128xf32>
    %805 = tpu.matmul %802, %12, %cst_166 {dimension_numbers = #tpu.dot_dimension_numbers<[1], [0], [0], [1], [0, 0, 1, 1], [], []>} : vector<1x32xf32>, vector<32x128xf32>, vector<1x128xf32> -> vector<1x128xf32>
    %806 = arith.addf %804, %805 : vector<1x128xf32>
    %807 = vector.extract_strided_slice %806 {offsets = [0, 0], sizes = [1, 32], strides = [1, 1]} : vector<1x128xf32> to vector<1x32xf32>
    %808 = arith.negf %807 : vector<1x32xf32>
    %809 = math.exp %808 : vector<1x32xf32>
    %cst_167 = arith.constant 1.000000e+00 : f32
    %810 = vector.broadcast %cst_167 : f32 to vector<1x32xf32>
    %811 = arith.addf %810, %809 : vector<1x32xf32>
    %812 = arith.divf %810, %811 : vector<1x32xf32>
    %813 = vector.extract_strided_slice %806 {offsets = [0, 32], sizes = [1, 32], strides = [1, 1]} : vector<1x128xf32> to vector<1x32xf32>
    %814 = arith.negf %813 : vector<1x32xf32>
    %815 = math.exp %814 : vector<1x32xf32>
    %cst_168 = arith.constant 1.000000e+00 : f32
    %816 = vector.broadcast %cst_168 : f32 to vector<1x32xf32>
    %817 = arith.addf %816, %815 : vector<1x32xf32>
    %818 = arith.divf %816, %817 : vector<1x32xf32>
    %819 = vector.extract_strided_slice %806 {offsets = [0, 64], sizes = [1, 32], strides = [1, 1]} : vector<1x128xf32> to vector<1x32xf32>
    %820 = math.tanh %819 : vector<1x32xf32>
    %821 = vector.extract_strided_slice %806 {offsets = [0, 96], sizes = [1, 32], strides = [1, 1]} : vector<1x128xf32> to vector<1x32xf32>
    %822 = arith.negf %821 : vector<1x32xf32>
    %823 = math.exp %822 : vector<1x32xf32>
    %cst_169 = arith.constant 1.000000e+00 : f32
    %824 = vector.broadcast %cst_169 : f32 to vector<1x32xf32>
    %825 = arith.addf %824, %823 : vector<1x32xf32>
    %826 = arith.divf %824, %825 : vector<1x32xf32>
    %827 = arith.mulf %818, %803 : vector<1x32xf32>
    %828 = arith.mulf %812, %820 : vector<1x32xf32>
    %829 = arith.addf %827, %828 : vector<1x32xf32>
    %830 = math.tanh %829 : vector<1x32xf32>
    %831 = arith.mulf %826, %830 : vector<1x32xf32>
    %c17_170 = arith.constant 17 : index
    %c32_171 = arith.constant 32 : index
    %832 = vector.load %arg8[%c17_170, %c32_171] : memref<18x64xf32, #tpu.memory_space<vmem>>, vector<1x32xf32>
    tpu.vector_store %arg8[%c17_170, %c32_171], %831 {strides = array<i32>} : memref<18x64xf32, #tpu.memory_space<vmem>>, vector<1x32xf32>,
    %833 = vector.extract_strided_slice %10 {offsets = [16, 128], sizes = [1, 128], strides = [1, 1]} : vector<18x256xf32> to vector<1x128xf32>
    %cst_172 = arith.constant dense<0.000000e+00> : vector<1x128xf32>
    %834 = tpu.matmul %831, %12, %cst_172 {dimension_numbers = #tpu.dot_dimension_numbers<[1], [0], [0], [1], [0, 0, 1, 1], [], []>} : vector<1x32xf32>, vector<32x128xf32>, vector<1x128xf32> -> vector<1x128xf32>
    %835 = arith.addf %833, %834 : vector<1x128xf32>
    %836 = vector.extract_strided_slice %835 {offsets = [0, 0], sizes = [1, 32], strides = [1, 1]} : vector<1x128xf32> to vector<1x32xf32>
    %837 = arith.negf %836 : vector<1x32xf32>
    %838 = math.exp %837 : vector<1x32xf32>
    %cst_173 = arith.constant 1.000000e+00 : f32
    %839 = vector.broadcast %cst_173 : f32 to vector<1x32xf32>
    %840 = arith.addf %839, %838 : vector<1x32xf32>
    %841 = arith.divf %839, %840 : vector<1x32xf32>
    %842 = vector.extract_strided_slice %835 {offsets = [0, 32], sizes = [1, 32], strides = [1, 1]} : vector<1x128xf32> to vector<1x32xf32>
    %843 = arith.negf %842 : vector<1x32xf32>
    %844 = math.exp %843 : vector<1x32xf32>
    %cst_174 = arith.constant 1.000000e+00 : f32
    %845 = vector.broadcast %cst_174 : f32 to vector<1x32xf32>
    %846 = arith.addf %845, %844 : vector<1x32xf32>
    %847 = arith.divf %845, %846 : vector<1x32xf32>
    %848 = vector.extract_strided_slice %835 {offsets = [0, 64], sizes = [1, 32], strides = [1, 1]} : vector<1x128xf32> to vector<1x32xf32>
    %849 = math.tanh %848 : vector<1x32xf32>
    %850 = vector.extract_strided_slice %835 {offsets = [0, 96], sizes = [1, 32], strides = [1, 1]} : vector<1x128xf32> to vector<1x32xf32>
    %851 = arith.negf %850 : vector<1x32xf32>
    %852 = math.exp %851 : vector<1x32xf32>
    %cst_175 = arith.constant 1.000000e+00 : f32
    %853 = vector.broadcast %cst_175 : f32 to vector<1x32xf32>
    %854 = arith.addf %853, %852 : vector<1x32xf32>
    %855 = arith.divf %853, %854 : vector<1x32xf32>
    %856 = arith.mulf %847, %829 : vector<1x32xf32>
    %857 = arith.mulf %841, %849 : vector<1x32xf32>
    %858 = arith.addf %856, %857 : vector<1x32xf32>
    %859 = math.tanh %858 : vector<1x32xf32>
    %860 = arith.mulf %855, %859 : vector<1x32xf32>
    %c16_176 = arith.constant 16 : index
    %c32_177 = arith.constant 32 : index
    %861 = vector.load %arg8[%c16_176, %c32_177] : memref<18x64xf32, #tpu.memory_space<vmem>>, vector<1x32xf32>
    tpu.vector_store %arg8[%c16_176, %c32_177], %860 {strides = array<i32>} : memref<18x64xf32, #tpu.memory_space<vmem>>, vector<1x32xf32>,
    %862 = vector.extract_strided_slice %10 {offsets = [15, 128], sizes = [1, 128], strides = [1, 1]} : vector<18x256xf32> to vector<1x128xf32>
    %cst_178 = arith.constant dense<0.000000e+00> : vector<1x128xf32>
    %863 = tpu.matmul %860, %12, %cst_178 {dimension_numbers = #tpu.dot_dimension_numbers<[1], [0], [0], [1], [0, 0, 1, 1], [], []>} : vector<1x32xf32>, vector<32x128xf32>, vector<1x128xf32> -> vector<1x128xf32>
    %864 = arith.addf %862, %863 : vector<1x128xf32>
    %865 = vector.extract_strided_slice %864 {offsets = [0, 0], sizes = [1, 32], strides = [1, 1]} : vector<1x128xf32> to vector<1x32xf32>
    %866 = arith.negf %865 : vector<1x32xf32>
    %867 = math.exp %866 : vector<1x32xf32>
    %cst_179 = arith.constant 1.000000e+00 : f32
    %868 = vector.broadcast %cst_179 : f32 to vector<1x32xf32>
    %869 = arith.addf %868, %867 : vector<1x32xf32>
    %870 = arith.divf %868, %869 : vector<1x32xf32>
    %871 = vector.extract_strided_slice %864 {offsets = [0, 32], sizes = [1, 32], strides = [1, 1]} : vector<1x128xf32> to vector<1x32xf32>
    %872 = arith.negf %871 : vector<1x32xf32>
    %873 = math.exp %872 : vector<1x32xf32>
    %cst_180 = arith.constant 1.000000e+00 : f32
    %874 = vector.broadcast %cst_180 : f32 to vector<1x32xf32>
    %875 = arith.addf %874, %873 : vector<1x32xf32>
    %876 = arith.divf %874, %875 : vector<1x32xf32>
    %877 = vector.extract_strided_slice %864 {offsets = [0, 64], sizes = [1, 32], strides = [1, 1]} : vector<1x128xf32> to vector<1x32xf32>
    %878 = math.tanh %877 : vector<1x32xf32>
    %879 = vector.extract_strided_slice %864 {offsets = [0, 96], sizes = [1, 32], strides = [1, 1]} : vector<1x128xf32> to vector<1x32xf32>
    %880 = arith.negf %879 : vector<1x32xf32>
    %881 = math.exp %880 : vector<1x32xf32>
    %cst_181 = arith.constant 1.000000e+00 : f32
    %882 = vector.broadcast %cst_181 : f32 to vector<1x32xf32>
    %883 = arith.addf %882, %881 : vector<1x32xf32>
    %884 = arith.divf %882, %883 : vector<1x32xf32>
    %885 = arith.mulf %876, %858 : vector<1x32xf32>
    %886 = arith.mulf %870, %878 : vector<1x32xf32>
    %887 = arith.addf %885, %886 : vector<1x32xf32>
    %888 = math.tanh %887 : vector<1x32xf32>
    %889 = arith.mulf %884, %888 : vector<1x32xf32>
    %c15_182 = arith.constant 15 : index
    %c32_183 = arith.constant 32 : index
    %890 = vector.load %arg8[%c15_182, %c32_183] : memref<18x64xf32, #tpu.memory_space<vmem>>, vector<1x32xf32>
    tpu.vector_store %arg8[%c15_182, %c32_183], %889 {strides = array<i32>} : memref<18x64xf32, #tpu.memory_space<vmem>>, vector<1x32xf32>,
    %891 = vector.extract_strided_slice %10 {offsets = [14, 128], sizes = [1, 128], strides = [1, 1]} : vector<18x256xf32> to vector<1x128xf32>
    %cst_184 = arith.constant dense<0.000000e+00> : vector<1x128xf32>
    %892 = tpu.matmul %889, %12, %cst_184 {dimension_numbers = #tpu.dot_dimension_numbers<[1], [0], [0], [1], [0, 0, 1, 1], [], []>} : vector<1x32xf32>, vector<32x128xf32>, vector<1x128xf32> -> vector<1x128xf32>
    %893 = arith.addf %891, %892 : vector<1x128xf32>
    %894 = vector.extract_strided_slice %893 {offsets = [0, 0], sizes = [1, 32], strides = [1, 1]} : vector<1x128xf32> to vector<1x32xf32>
    %895 = arith.negf %894 : vector<1x32xf32>
    %896 = math.exp %895 : vector<1x32xf32>
    %cst_185 = arith.constant 1.000000e+00 : f32
    %897 = vector.broadcast %cst_185 : f32 to vector<1x32xf32>
    %898 = arith.addf %897, %896 : vector<1x32xf32>
    %899 = arith.divf %897, %898 : vector<1x32xf32>
    %900 = vector.extract_strided_slice %893 {offsets = [0, 32], sizes = [1, 32], strides = [1, 1]} : vector<1x128xf32> to vector<1x32xf32>
    %901 = arith.negf %900 : vector<1x32xf32>
    %902 = math.exp %901 : vector<1x32xf32>
    %cst_186 = arith.constant 1.000000e+00 : f32
    %903 = vector.broadcast %cst_186 : f32 to vector<1x32xf32>
    %904 = arith.addf %903, %902 : vector<1x32xf32>
    %905 = arith.divf %903, %904 : vector<1x32xf32>
    %906 = vector.extract_strided_slice %893 {offsets = [0, 64], sizes = [1, 32], strides = [1, 1]} : vector<1x128xf32> to vector<1x32xf32>
    %907 = math.tanh %906 : vector<1x32xf32>
    %908 = vector.extract_strided_slice %893 {offsets = [0, 96], sizes = [1, 32], strides = [1, 1]} : vector<1x128xf32> to vector<1x32xf32>
    %909 = arith.negf %908 : vector<1x32xf32>
    %910 = math.exp %909 : vector<1x32xf32>
    %cst_187 = arith.constant 1.000000e+00 : f32
    %911 = vector.broadcast %cst_187 : f32 to vector<1x32xf32>
    %912 = arith.addf %911, %910 : vector<1x32xf32>
    %913 = arith.divf %911, %912 : vector<1x32xf32>
    %914 = arith.mulf %905, %887 : vector<1x32xf32>
    %915 = arith.mulf %899, %907 : vector<1x32xf32>
    %916 = arith.addf %914, %915 : vector<1x32xf32>
    %917 = math.tanh %916 : vector<1x32xf32>
    %918 = arith.mulf %913, %917 : vector<1x32xf32>
    %c14_188 = arith.constant 14 : index
    %c32_189 = arith.constant 32 : index
    %919 = vector.load %arg8[%c14_188, %c32_189] : memref<18x64xf32, #tpu.memory_space<vmem>>, vector<1x32xf32>
    tpu.vector_store %arg8[%c14_188, %c32_189], %918 {strides = array<i32>} : memref<18x64xf32, #tpu.memory_space<vmem>>, vector<1x32xf32>,
    %920 = vector.extract_strided_slice %10 {offsets = [13, 128], sizes = [1, 128], strides = [1, 1]} : vector<18x256xf32> to vector<1x128xf32>
    %cst_190 = arith.constant dense<0.000000e+00> : vector<1x128xf32>
    %921 = tpu.matmul %918, %12, %cst_190 {dimension_numbers = #tpu.dot_dimension_numbers<[1], [0], [0], [1], [0, 0, 1, 1], [], []>} : vector<1x32xf32>, vector<32x128xf32>, vector<1x128xf32> -> vector<1x128xf32>
    %922 = arith.addf %920, %921 : vector<1x128xf32>
    %923 = vector.extract_strided_slice %922 {offsets = [0, 0], sizes = [1, 32], strides = [1, 1]} : vector<1x128xf32> to vector<1x32xf32>
    %924 = arith.negf %923 : vector<1x32xf32>
    %925 = math.exp %924 : vector<1x32xf32>
    %cst_191 = arith.constant 1.000000e+00 : f32
    %926 = vector.broadcast %cst_191 : f32 to vector<1x32xf32>
    %927 = arith.addf %926, %925 : vector<1x32xf32>
    %928 = arith.divf %926, %927 : vector<1x32xf32>
    %929 = vector.extract_strided_slice %922 {offsets = [0, 32], sizes = [1, 32], strides = [1, 1]} : vector<1x128xf32> to vector<1x32xf32>
    %930 = arith.negf %929 : vector<1x32xf32>
    %931 = math.exp %930 : vector<1x32xf32>
    %cst_192 = arith.constant 1.000000e+00 : f32
    %932 = vector.broadcast %cst_192 : f32 to vector<1x32xf32>
    %933 = arith.addf %932, %931 : vector<1x32xf32>
    %934 = arith.divf %932, %933 : vector<1x32xf32>
    %935 = vector.extract_strided_slice %922 {offsets = [0, 64], sizes = [1, 32], strides = [1, 1]} : vector<1x128xf32> to vector<1x32xf32>
    %936 = math.tanh %935 : vector<1x32xf32>
    %937 = vector.extract_strided_slice %922 {offsets = [0, 96], sizes = [1, 32], strides = [1, 1]} : vector<1x128xf32> to vector<1x32xf32>
    %938 = arith.negf %937 : vector<1x32xf32>
    %939 = math.exp %938 : vector<1x32xf32>
    %cst_193 = arith.constant 1.000000e+00 : f32
    %940 = vector.broadcast %cst_193 : f32 to vector<1x32xf32>
    %941 = arith.addf %940, %939 : vector<1x32xf32>
    %942 = arith.divf %940, %941 : vector<1x32xf32>
    %943 = arith.mulf %934, %916 : vector<1x32xf32>
    %944 = arith.mulf %928, %936 : vector<1x32xf32>
    %945 = arith.addf %943, %944 : vector<1x32xf32>
    %946 = math.tanh %945 : vector<1x32xf32>
    %947 = arith.mulf %942, %946 : vector<1x32xf32>
    %c13_194 = arith.constant 13 : index
    %c32_195 = arith.constant 32 : index
    %948 = vector.load %arg8[%c13_194, %c32_195] : memref<18x64xf32, #tpu.memory_space<vmem>>, vector<1x32xf32>
    tpu.vector_store %arg8[%c13_194, %c32_195], %947 {strides = array<i32>} : memref<18x64xf32, #tpu.memory_space<vmem>>, vector<1x32xf32>,
    %949 = vector.extract_strided_slice %10 {offsets = [12, 128], sizes = [1, 128], strides = [1, 1]} : vector<18x256xf32> to vector<1x128xf32>
    %cst_196 = arith.constant dense<0.000000e+00> : vector<1x128xf32>
    %950 = tpu.matmul %947, %12, %cst_196 {dimension_numbers = #tpu.dot_dimension_numbers<[1], [0], [0], [1], [0, 0, 1, 1], [], []>} : vector<1x32xf32>, vector<32x128xf32>, vector<1x128xf32> -> vector<1x128xf32>
    %951 = arith.addf %949, %950 : vector<1x128xf32>
    %952 = vector.extract_strided_slice %951 {offsets = [0, 0], sizes = [1, 32], strides = [1, 1]} : vector<1x128xf32> to vector<1x32xf32>
    %953 = arith.negf %952 : vector<1x32xf32>
    %954 = math.exp %953 : vector<1x32xf32>
    %cst_197 = arith.constant 1.000000e+00 : f32
    %955 = vector.broadcast %cst_197 : f32 to vector<1x32xf32>
    %956 = arith.addf %955, %954 : vector<1x32xf32>
    %957 = arith.divf %955, %956 : vector<1x32xf32>
    %958 = vector.extract_strided_slice %951 {offsets = [0, 32], sizes = [1, 32], strides = [1, 1]} : vector<1x128xf32> to vector<1x32xf32>
    %959 = arith.negf %958 : vector<1x32xf32>
    %960 = math.exp %959 : vector<1x32xf32>
    %cst_198 = arith.constant 1.000000e+00 : f32
    %961 = vector.broadcast %cst_198 : f32 to vector<1x32xf32>
    %962 = arith.addf %961, %960 : vector<1x32xf32>
    %963 = arith.divf %961, %962 : vector<1x32xf32>
    %964 = vector.extract_strided_slice %951 {offsets = [0, 64], sizes = [1, 32], strides = [1, 1]} : vector<1x128xf32> to vector<1x32xf32>
    %965 = math.tanh %964 : vector<1x32xf32>
    %966 = vector.extract_strided_slice %951 {offsets = [0, 96], sizes = [1, 32], strides = [1, 1]} : vector<1x128xf32> to vector<1x32xf32>
    %967 = arith.negf %966 : vector<1x32xf32>
    %968 = math.exp %967 : vector<1x32xf32>
    %cst_199 = arith.constant 1.000000e+00 : f32
    %969 = vector.broadcast %cst_199 : f32 to vector<1x32xf32>
    %970 = arith.addf %969, %968 : vector<1x32xf32>
    %971 = arith.divf %969, %970 : vector<1x32xf32>
    %972 = arith.mulf %963, %945 : vector<1x32xf32>
    %973 = arith.mulf %957, %965 : vector<1x32xf32>
    %974 = arith.addf %972, %973 : vector<1x32xf32>
    %975 = math.tanh %974 : vector<1x32xf32>
    %976 = arith.mulf %971, %975 : vector<1x32xf32>
    %c12_200 = arith.constant 12 : index
    %c32_201 = arith.constant 32 : index
    %977 = vector.load %arg8[%c12_200, %c32_201] : memref<18x64xf32, #tpu.memory_space<vmem>>, vector<1x32xf32>
    tpu.vector_store %arg8[%c12_200, %c32_201], %976 {strides = array<i32>} : memref<18x64xf32, #tpu.memory_space<vmem>>, vector<1x32xf32>,
    %978 = vector.extract_strided_slice %10 {offsets = [11, 128], sizes = [1, 128], strides = [1, 1]} : vector<18x256xf32> to vector<1x128xf32>
    %cst_202 = arith.constant dense<0.000000e+00> : vector<1x128xf32>
    %979 = tpu.matmul %976, %12, %cst_202 {dimension_numbers = #tpu.dot_dimension_numbers<[1], [0], [0], [1], [0, 0, 1, 1], [], []>} : vector<1x32xf32>, vector<32x128xf32>, vector<1x128xf32> -> vector<1x128xf32>
    %980 = arith.addf %978, %979 : vector<1x128xf32>
    %981 = vector.extract_strided_slice %980 {offsets = [0, 0], sizes = [1, 32], strides = [1, 1]} : vector<1x128xf32> to vector<1x32xf32>
    %982 = arith.negf %981 : vector<1x32xf32>
    %983 = math.exp %982 : vector<1x32xf32>
    %cst_203 = arith.constant 1.000000e+00 : f32
    %984 = vector.broadcast %cst_203 : f32 to vector<1x32xf32>
    %985 = arith.addf %984, %983 : vector<1x32xf32>
    %986 = arith.divf %984, %985 : vector<1x32xf32>
    %987 = vector.extract_strided_slice %980 {offsets = [0, 32], sizes = [1, 32], strides = [1, 1]} : vector<1x128xf32> to vector<1x32xf32>
    %988 = arith.negf %987 : vector<1x32xf32>
    %989 = math.exp %988 : vector<1x32xf32>
    %cst_204 = arith.constant 1.000000e+00 : f32
    %990 = vector.broadcast %cst_204 : f32 to vector<1x32xf32>
    %991 = arith.addf %990, %989 : vector<1x32xf32>
    %992 = arith.divf %990, %991 : vector<1x32xf32>
    %993 = vector.extract_strided_slice %980 {offsets = [0, 64], sizes = [1, 32], strides = [1, 1]} : vector<1x128xf32> to vector<1x32xf32>
    %994 = math.tanh %993 : vector<1x32xf32>
    %995 = vector.extract_strided_slice %980 {offsets = [0, 96], sizes = [1, 32], strides = [1, 1]} : vector<1x128xf32> to vector<1x32xf32>
    %996 = arith.negf %995 : vector<1x32xf32>
    %997 = math.exp %996 : vector<1x32xf32>
    %cst_205 = arith.constant 1.000000e+00 : f32
    %998 = vector.broadcast %cst_205 : f32 to vector<1x32xf32>
    %999 = arith.addf %998, %997 : vector<1x32xf32>
    %1000 = arith.divf %998, %999 : vector<1x32xf32>
    %1001 = arith.mulf %992, %974 : vector<1x32xf32>
    %1002 = arith.mulf %986, %994 : vector<1x32xf32>
    %1003 = arith.addf %1001, %1002 : vector<1x32xf32>
    %1004 = math.tanh %1003 : vector<1x32xf32>
    %1005 = arith.mulf %1000, %1004 : vector<1x32xf32>
    %c11_206 = arith.constant 11 : index
    %c32_207 = arith.constant 32 : index
    %1006 = vector.load %arg8[%c11_206, %c32_207] : memref<18x64xf32, #tpu.memory_space<vmem>>, vector<1x32xf32>
    tpu.vector_store %arg8[%c11_206, %c32_207], %1005 {strides = array<i32>} : memref<18x64xf32, #tpu.memory_space<vmem>>, vector<1x32xf32>,
    %1007 = vector.extract_strided_slice %10 {offsets = [10, 128], sizes = [1, 128], strides = [1, 1]} : vector<18x256xf32> to vector<1x128xf32>
    %cst_208 = arith.constant dense<0.000000e+00> : vector<1x128xf32>
    %1008 = tpu.matmul %1005, %12, %cst_208 {dimension_numbers = #tpu.dot_dimension_numbers<[1], [0], [0], [1], [0, 0, 1, 1], [], []>} : vector<1x32xf32>, vector<32x128xf32>, vector<1x128xf32> -> vector<1x128xf32>
    %1009 = arith.addf %1007, %1008 : vector<1x128xf32>
    %1010 = vector.extract_strided_slice %1009 {offsets = [0, 0], sizes = [1, 32], strides = [1, 1]} : vector<1x128xf32> to vector<1x32xf32>
    %1011 = arith.negf %1010 : vector<1x32xf32>
    %1012 = math.exp %1011 : vector<1x32xf32>
    %cst_209 = arith.constant 1.000000e+00 : f32
    %1013 = vector.broadcast %cst_209 : f32 to vector<1x32xf32>
    %1014 = arith.addf %1013, %1012 : vector<1x32xf32>
    %1015 = arith.divf %1013, %1014 : vector<1x32xf32>
    %1016 = vector.extract_strided_slice %1009 {offsets = [0, 32], sizes = [1, 32], strides = [1, 1]} : vector<1x128xf32> to vector<1x32xf32>
    %1017 = arith.negf %1016 : vector<1x32xf32>
    %1018 = math.exp %1017 : vector<1x32xf32>
    %cst_210 = arith.constant 1.000000e+00 : f32
    %1019 = vector.broadcast %cst_210 : f32 to vector<1x32xf32>
    %1020 = arith.addf %1019, %1018 : vector<1x32xf32>
    %1021 = arith.divf %1019, %1020 : vector<1x32xf32>
    %1022 = vector.extract_strided_slice %1009 {offsets = [0, 64], sizes = [1, 32], strides = [1, 1]} : vector<1x128xf32> to vector<1x32xf32>
    %1023 = math.tanh %1022 : vector<1x32xf32>
    %1024 = vector.extract_strided_slice %1009 {offsets = [0, 96], sizes = [1, 32], strides = [1, 1]} : vector<1x128xf32> to vector<1x32xf32>
    %1025 = arith.negf %1024 : vector<1x32xf32>
    %1026 = math.exp %1025 : vector<1x32xf32>
    %cst_211 = arith.constant 1.000000e+00 : f32
    %1027 = vector.broadcast %cst_211 : f32 to vector<1x32xf32>
    %1028 = arith.addf %1027, %1026 : vector<1x32xf32>
    %1029 = arith.divf %1027, %1028 : vector<1x32xf32>
    %1030 = arith.mulf %1021, %1003 : vector<1x32xf32>
    %1031 = arith.mulf %1015, %1023 : vector<1x32xf32>
    %1032 = arith.addf %1030, %1031 : vector<1x32xf32>
    %1033 = math.tanh %1032 : vector<1x32xf32>
    %1034 = arith.mulf %1029, %1033 : vector<1x32xf32>
    %c10_212 = arith.constant 10 : index
    %c32_213 = arith.constant 32 : index
    %1035 = vector.load %arg8[%c10_212, %c32_213] : memref<18x64xf32, #tpu.memory_space<vmem>>, vector<1x32xf32>
    tpu.vector_store %arg8[%c10_212, %c32_213], %1034 {strides = array<i32>} : memref<18x64xf32, #tpu.memory_space<vmem>>, vector<1x32xf32>,
    %1036 = vector.extract_strided_slice %10 {offsets = [9, 128], sizes = [1, 128], strides = [1, 1]} : vector<18x256xf32> to vector<1x128xf32>
    %cst_214 = arith.constant dense<0.000000e+00> : vector<1x128xf32>
    %1037 = tpu.matmul %1034, %12, %cst_214 {dimension_numbers = #tpu.dot_dimension_numbers<[1], [0], [0], [1], [0, 0, 1, 1], [], []>} : vector<1x32xf32>, vector<32x128xf32>, vector<1x128xf32> -> vector<1x128xf32>
    %1038 = arith.addf %1036, %1037 : vector<1x128xf32>
    %1039 = vector.extract_strided_slice %1038 {offsets = [0, 0], sizes = [1, 32], strides = [1, 1]} : vector<1x128xf32> to vector<1x32xf32>
    %1040 = arith.negf %1039 : vector<1x32xf32>
    %1041 = math.exp %1040 : vector<1x32xf32>
    %cst_215 = arith.constant 1.000000e+00 : f32
    %1042 = vector.broadcast %cst_215 : f32 to vector<1x32xf32>
    %1043 = arith.addf %1042, %1041 : vector<1x32xf32>
    %1044 = arith.divf %1042, %1043 : vector<1x32xf32>
    %1045 = vector.extract_strided_slice %1038 {offsets = [0, 32], sizes = [1, 32], strides = [1, 1]} : vector<1x128xf32> to vector<1x32xf32>
    %1046 = arith.negf %1045 : vector<1x32xf32>
    %1047 = math.exp %1046 : vector<1x32xf32>
    %cst_216 = arith.constant 1.000000e+00 : f32
    %1048 = vector.broadcast %cst_216 : f32 to vector<1x32xf32>
    %1049 = arith.addf %1048, %1047 : vector<1x32xf32>
    %1050 = arith.divf %1048, %1049 : vector<1x32xf32>
    %1051 = vector.extract_strided_slice %1038 {offsets = [0, 64], sizes = [1, 32], strides = [1, 1]} : vector<1x128xf32> to vector<1x32xf32>
    %1052 = math.tanh %1051 : vector<1x32xf32>
    %1053 = vector.extract_strided_slice %1038 {offsets = [0, 96], sizes = [1, 32], strides = [1, 1]} : vector<1x128xf32> to vector<1x32xf32>
    %1054 = arith.negf %1053 : vector<1x32xf32>
    %1055 = math.exp %1054 : vector<1x32xf32>
    %cst_217 = arith.constant 1.000000e+00 : f32
    %1056 = vector.broadcast %cst_217 : f32 to vector<1x32xf32>
    %1057 = arith.addf %1056, %1055 : vector<1x32xf32>
    %1058 = arith.divf %1056, %1057 : vector<1x32xf32>
    %1059 = arith.mulf %1050, %1032 : vector<1x32xf32>
    %1060 = arith.mulf %1044, %1052 : vector<1x32xf32>
    %1061 = arith.addf %1059, %1060 : vector<1x32xf32>
    %1062 = math.tanh %1061 : vector<1x32xf32>
    %1063 = arith.mulf %1058, %1062 : vector<1x32xf32>
    %c9_218 = arith.constant 9 : index
    %c32_219 = arith.constant 32 : index
    %1064 = vector.load %arg8[%c9_218, %c32_219] : memref<18x64xf32, #tpu.memory_space<vmem>>, vector<1x32xf32>
    tpu.vector_store %arg8[%c9_218, %c32_219], %1063 {strides = array<i32>} : memref<18x64xf32, #tpu.memory_space<vmem>>, vector<1x32xf32>,
    return
  }
  func.func @transform_0(%arg0: i32) -> (i32, i32) {
    %c0_i32 = arith.constant 0 : i32
    %c0_i32_0 = arith.constant 0 : i32
    %c0_i32_1 = arith.constant 0 : i32
    return %c0_i32, %c0_i32_0 : i32, i32
  }
  func.func @transform_1(%arg0: i32) -> (i32, i32) {
    %c0_i32 = arith.constant 0 : i32
    %c0_i32_0 = arith.constant 0 : i32
    %c0_i32_1 = arith.constant 0 : i32
    return %c0_i32, %c0_i32_0 : i32, i32
  }
  func.func @transform_2(%arg0: i32) -> (i32, i32) {
    %c0_i32 = arith.constant 0 : i32
    %c0_i32_0 = arith.constant 0 : i32
    %c0_i32_1 = arith.constant 0 : i32
    return %c0_i32, %c0_i32_0 : i32, i32
  }
  func.func @transform_3(%arg0: i32) -> (i32, i32) {
    %c0_i32 = arith.constant 0 : i32
    %c0_i32_0 = arith.constant 0 : i32
    %c0_i32_1 = arith.constant 0 : i32
    return %c0_i32, %c0_i32_0 : i32, i32
  }
  func.func @transform_4(%arg0: i32) -> (i32, i32) {
    %c0_i32 = arith.constant 0 : i32
    %c0_i32_0 = arith.constant 0 : i32
    %c0_i32_1 = arith.constant 0 : i32
    return %c0_i32, %c0_i32_0 : i32, i32
  }
  func.func @transform_5(%arg0: i32) -> (i32, i32) {
    %c0_i32 = arith.constant 0 : i32
    %c0_i32_0 = arith.constant 0 : i32
    %c0_i32_1 = arith.constant 0 : i32
    return %c0_i32, %c0_i32_0 : i32, i32
  }
  func.func @transform_6(%arg0: i32) -> (i32, i32) {
    %c0_i32 = arith.constant 0 : i32
    %c0_i32_0 = arith.constant 0 : i32
    %c0_i32_1 = arith.constant 0 : i32
    return %c0_i32, %c0_i32_0 : i32, i32
  }
  func.func @transform_7(%arg0: i32) -> (i32, i32) {
    %c0_i32 = arith.constant 0 : i32
    %c0_i32_0 = arith.constant 0 : i32
    %c0_i32_1 = arith.constant 0 : i32
    return %c0_i32, %c0_i32_0 : i32, i32
  }
}

module attributes {stable_mosaic.version = 11 : i64} {
  func.func @_dec_attn_kernel(%arg0: i32, %arg1: memref<12x32xf32, #tpu.memory_space<vmem>>, %arg2: memref<32x128xf32, #tpu.memory_space<vmem>>, %arg3: memref<1x128xf32, #tpu.memory_space<vmem>>, %arg4: memref<32x128xf32, #tpu.memory_space<vmem>>, %arg5: memref<18x64xf32, #tpu.memory_space<vmem>>, %arg6: memref<32x32xf32, #tpu.memory_space<vmem>>, %arg7: memref<1x32xf32, #tpu.memory_space<vmem>>, %arg8: memref<64x64xf32, #tpu.memory_space<vmem>>, %arg9: memref<1x64xf32, #tpu.memory_space<vmem>>, %arg10: memref<32x32xf32, #tpu.memory_space<vmem>>, %arg11: memref<1x32xf32, #tpu.memory_space<vmem>>, %arg12: memref<64x44xf32, #tpu.memory_space<vmem>>, %arg13: memref<64x32xf32, #tpu.memory_space<vmem>>, %arg14: memref<32x40xf32, #tpu.memory_space<vmem>>, %arg15: memref<64x16xf32, #tpu.memory_space<vmem>>, %arg16: memref<16x40xf32, #tpu.memory_space<vmem>>, %arg17: memref<64x8xf32, #tpu.memory_space<vmem>>, %arg18: memref<8x40xf32, #tpu.memory_space<vmem>>, %arg19: memref<64x4xf32, #tpu.memory_space<vmem>>, %arg20: memref<4x40xf32, #tpu.memory_space<vmem>>, %arg21: memref<12x200xf32, #tpu.memory_space<vmem>>, %arg22: memref<12x32xf32, #tpu.memory_space<vmem>>, %arg23: memref<12x32xf32, #tpu.memory_space<vmem>>) attributes {dimension_semantics = [#tpu.dimension_semantics<arbitrary>], iteration_bounds = array<i64: 1>, scalar_prefetch = 0 : i64, scratch_operands = 2 : i64, tpu.core_type = #tpu.core_type<tc>, window_params = [{pipeline_mode = #tpu.pipeline_mode<synchronous>, transform_indices = @transform_0, window_bounds = array<i64: 12, 32>}, {pipeline_mode = #tpu.pipeline_mode<synchronous>, transform_indices = @transform_1, window_bounds = array<i64: 32, 128>}, {pipeline_mode = #tpu.pipeline_mode<synchronous>, transform_indices = @transform_2, window_bounds = array<i64: 1, 128>}, {pipeline_mode = #tpu.pipeline_mode<synchronous>, transform_indices = @transform_3, window_bounds = array<i64: 32, 128>}, {pipeline_mode = #tpu.pipeline_mode<synchronous>, transform_indices = @transform_4, window_bounds = array<i64: 18, 64>}, {pipeline_mode = #tpu.pipeline_mode<synchronous>, transform_indices = @transform_5, window_bounds = array<i64: 32, 32>}, {pipeline_mode = #tpu.pipeline_mode<synchronous>, transform_indices = @transform_6, window_bounds = array<i64: 1, 32>}, {pipeline_mode = #tpu.pipeline_mode<synchronous>, transform_indices = @transform_7, window_bounds = array<i64: 64, 64>}, {pipeline_mode = #tpu.pipeline_mode<synchronous>, transform_indices = @transform_8, window_bounds = array<i64: 1, 64>}, {pipeline_mode = #tpu.pipeline_mode<synchronous>, transform_indices = @transform_9, window_bounds = array<i64: 32, 32>}, {pipeline_mode = #tpu.pipeline_mode<synchronous>, transform_indices = @transform_10, window_bounds = array<i64: 1, 32>}, {pipeline_mode = #tpu.pipeline_mode<synchronous>, transform_indices = @transform_11, window_bounds = array<i64: 64, 44>}, {pipeline_mode = #tpu.pipeline_mode<synchronous>, transform_indices = @transform_12, window_bounds = array<i64: 64, 32>}, {pipeline_mode = #tpu.pipeline_mode<synchronous>, transform_indices = @transform_13, window_bounds = array<i64: 32, 40>}, {pipeline_mode = #tpu.pipeline_mode<synchronous>, transform_indices = @transform_14, window_bounds = array<i64: 64, 16>}, {pipeline_mode = #tpu.pipeline_mode<synchronous>, transform_indices = @transform_15, window_bounds = array<i64: 16, 40>}, {pipeline_mode = #tpu.pipeline_mode<synchronous>, transform_indices = @transform_16, window_bounds = array<i64: 64, 8>}, {pipeline_mode = #tpu.pipeline_mode<synchronous>, transform_indices = @transform_17, window_bounds = array<i64: 8, 40>}, {pipeline_mode = #tpu.pipeline_mode<synchronous>, transform_indices = @transform_18, window_bounds = array<i64: 64, 4>}, {pipeline_mode = #tpu.pipeline_mode<synchronous>, transform_indices = @transform_19, window_bounds = array<i64: 4, 40>}, {pipeline_mode = #tpu.pipeline_mode<synchronous>, transform_indices = @transform_20, window_bounds = array<i64: 12, 200>}]} {
    %c0 = arith.constant 0 : index
    %c0_0 = arith.constant 0 : index
    %0 = vector.load %arg1[%c0, %c0_0] : memref<12x32xf32, #tpu.memory_space<vmem>>, vector<12x32xf32>
    %c0_1 = arith.constant 0 : index
    %c0_2 = arith.constant 0 : index
    %1 = vector.load %arg2[%c0_1, %c0_2] : memref<32x128xf32, #tpu.memory_space<vmem>>, vector<32x128xf32>
    %cst = arith.constant dense<0.000000e+00> : vector<12x128xf32>
    %2 = tpu.matmul %0, %1, %cst {dimension_numbers = #tpu.dot_dimension_numbers<[1], [0], [0], [1], [0, 0, 1, 1], [], []>} : vector<12x32xf32>, vector<32x128xf32>, vector<12x128xf32> -> vector<12x128xf32>
    %c0_3 = arith.constant 0 : index
    %c0_4 = arith.constant 0 : index
    %3 = vector.load %arg3[%c0_3, %c0_4] : memref<1x128xf32, #tpu.memory_space<vmem>>, vector<1x128xf32>
    %4 = vector.broadcast %3 : vector<1x128xf32> to vector<12x128xf32>
    %5 = arith.addf %2, %4 : vector<12x128xf32>
    %c0_5 = arith.constant 0 : index
    %c0_6 = arith.constant 0 : index
    %6 = vector.load %arg4[%c0_5, %c0_6] : memref<32x128xf32, #tpu.memory_space<vmem>>, vector<32x128xf32>
    %cst_7 = arith.constant 0.000000e+00 : f32
    %7 = vector.broadcast %cst_7 : f32 to vector<2x32xf32>
    %cst_8 = arith.constant 0.000000e+00 : f32
    %8 = vector.broadcast %cst_8 : f32 to vector<2x32xf32>
    %9 = vector.extract_strided_slice %5 {offsets = [0, 0], sizes = [2, 128], strides = [1, 1]} : vector<12x128xf32> to vector<2x128xf32>
    %cst_9 = arith.constant dense<0.000000e+00> : vector<2x128xf32>
    %10 = tpu.matmul %7, %6, %cst_9 {dimension_numbers = #tpu.dot_dimension_numbers<[1], [0], [0], [1], [0, 0, 1, 1], [], []>} : vector<2x32xf32>, vector<32x128xf32>, vector<2x128xf32> -> vector<2x128xf32>
    %11 = arith.addf %9, %10 : vector<2x128xf32>
    %12 = vector.extract_strided_slice %11 {offsets = [0, 0], sizes = [2, 32], strides = [1, 1]} : vector<2x128xf32> to vector<2x32xf32>
    %13 = arith.negf %12 : vector<2x32xf32>
    %14 = math.exp %13 : vector<2x32xf32>
    %cst_10 = arith.constant 1.000000e+00 : f32
    %15 = vector.broadcast %cst_10 : f32 to vector<2x32xf32>
    %16 = arith.addf %15, %14 : vector<2x32xf32>
    %17 = arith.divf %15, %16 : vector<2x32xf32>
    %18 = vector.extract_strided_slice %11 {offsets = [0, 32], sizes = [2, 32], strides = [1, 1]} : vector<2x128xf32> to vector<2x32xf32>
    %19 = arith.negf %18 : vector<2x32xf32>
    %20 = math.exp %19 : vector<2x32xf32>
    %cst_11 = arith.constant 1.000000e+00 : f32
    %21 = vector.broadcast %cst_11 : f32 to vector<2x32xf32>
    %22 = arith.addf %21, %20 : vector<2x32xf32>
    %23 = arith.divf %21, %22 : vector<2x32xf32>
    %24 = vector.extract_strided_slice %11 {offsets = [0, 64], sizes = [2, 32], strides = [1, 1]} : vector<2x128xf32> to vector<2x32xf32>
    %25 = math.tanh %24 : vector<2x32xf32>
    %26 = vector.extract_strided_slice %11 {offsets = [0, 96], sizes = [2, 32], strides = [1, 1]} : vector<2x128xf32> to vector<2x32xf32>
    %27 = arith.negf %26 : vector<2x32xf32>
    %28 = math.exp %27 : vector<2x32xf32>
    %cst_12 = arith.constant 1.000000e+00 : f32
    %29 = vector.broadcast %cst_12 : f32 to vector<2x32xf32>
    %30 = arith.addf %29, %28 : vector<2x32xf32>
    %31 = arith.divf %29, %30 : vector<2x32xf32>
    %32 = arith.mulf %23, %8 : vector<2x32xf32>
    %33 = arith.mulf %17, %25 : vector<2x32xf32>
    %34 = arith.addf %32, %33 : vector<2x32xf32>
    %35 = math.tanh %34 : vector<2x32xf32>
    %36 = arith.mulf %31, %35 : vector<2x32xf32>
    %37 = vector.extract_strided_slice %36 {offsets = [0, 0], sizes = [1, 32], strides = [1, 1]} : vector<2x32xf32> to vector<1x32xf32>
    %c0_13 = arith.constant 0 : index
    %c0_14 = arith.constant 0 : index
    %38 = vector.load %arg22[%c0_13, %c0_14] : memref<12x32xf32, #tpu.memory_space<vmem>>, vector<1x32xf32>
    tpu.vector_store %arg22[%c0_13, %c0_14], %37 {strides = array<i32>} : memref<12x32xf32, #tpu.memory_space<vmem>>, vector<1x32xf32>,
    %39 = vector.extract_strided_slice %36 {offsets = [1, 0], sizes = [1, 32], strides = [1, 1]} : vector<2x32xf32> to vector<1x32xf32>
    %c6 = arith.constant 6 : index
    %c0_15 = arith.constant 0 : index
    %40 = vector.load %arg22[%c6, %c0_15] : memref<12x32xf32, #tpu.memory_space<vmem>>, vector<1x32xf32>
    tpu.vector_store %arg22[%c6, %c0_15], %39 {strides = array<i32>} : memref<12x32xf32, #tpu.memory_space<vmem>>, vector<1x32xf32>,
    %41 = vector.extract_strided_slice %5 {offsets = [2, 0], sizes = [2, 128], strides = [1, 1]} : vector<12x128xf32> to vector<2x128xf32>
    %cst_16 = arith.constant dense<0.000000e+00> : vector<2x128xf32>
    %42 = tpu.matmul %36, %6, %cst_16 {dimension_numbers = #tpu.dot_dimension_numbers<[1], [0], [0], [1], [0, 0, 1, 1], [], []>} : vector<2x32xf32>, vector<32x128xf32>, vector<2x128xf32> -> vector<2x128xf32>
    %43 = arith.addf %41, %42 : vector<2x128xf32>
    %44 = vector.extract_strided_slice %43 {offsets = [0, 0], sizes = [2, 32], strides = [1, 1]} : vector<2x128xf32> to vector<2x32xf32>
    %45 = arith.negf %44 : vector<2x32xf32>
    %46 = math.exp %45 : vector<2x32xf32>
    %cst_17 = arith.constant 1.000000e+00 : f32
    %47 = vector.broadcast %cst_17 : f32 to vector<2x32xf32>
    %48 = arith.addf %47, %46 : vector<2x32xf32>
    %49 = arith.divf %47, %48 : vector<2x32xf32>
    %50 = vector.extract_strided_slice %43 {offsets = [0, 32], sizes = [2, 32], strides = [1, 1]} : vector<2x128xf32> to vector<2x32xf32>
    %51 = arith.negf %50 : vector<2x32xf32>
    %52 = math.exp %51 : vector<2x32xf32>
    %cst_18 = arith.constant 1.000000e+00 : f32
    %53 = vector.broadcast %cst_18 : f32 to vector<2x32xf32>
    %54 = arith.addf %53, %52 : vector<2x32xf32>
    %55 = arith.divf %53, %54 : vector<2x32xf32>
    %56 = vector.extract_strided_slice %43 {offsets = [0, 64], sizes = [2, 32], strides = [1, 1]} : vector<2x128xf32> to vector<2x32xf32>
    %57 = math.tanh %56 : vector<2x32xf32>
    %58 = vector.extract_strided_slice %43 {offsets = [0, 96], sizes = [2, 32], strides = [1, 1]} : vector<2x128xf32> to vector<2x32xf32>
    %59 = arith.negf %58 : vector<2x32xf32>
    %60 = math.exp %59 : vector<2x32xf32>
    %cst_19 = arith.constant 1.000000e+00 : f32
    %61 = vector.broadcast %cst_19 : f32 to vector<2x32xf32>
    %62 = arith.addf %61, %60 : vector<2x32xf32>
    %63 = arith.divf %61, %62 : vector<2x32xf32>
    %64 = arith.mulf %55, %34 : vector<2x32xf32>
    %65 = arith.mulf %49, %57 : vector<2x32xf32>
    %66 = arith.addf %64, %65 : vector<2x32xf32>
    %67 = math.tanh %66 : vector<2x32xf32>
    %68 = arith.mulf %63, %67 : vector<2x32xf32>
    %69 = vector.extract_strided_slice %68 {offsets = [0, 0], sizes = [1, 32], strides = [1, 1]} : vector<2x32xf32> to vector<1x32xf32>
    %c1 = arith.constant 1 : index
    %c0_20 = arith.constant 0 : index
    %70 = vector.load %arg22[%c1, %c0_20] : memref<12x32xf32, #tpu.memory_space<vmem>>, vector<1x32xf32>
    tpu.vector_store %arg22[%c1, %c0_20], %69 {strides = array<i32>} : memref<12x32xf32, #tpu.memory_space<vmem>>, vector<1x32xf32>,
    %71 = vector.extract_strided_slice %68 {offsets = [1, 0], sizes = [1, 32], strides = [1, 1]} : vector<2x32xf32> to vector<1x32xf32>
    %c7 = arith.constant 7 : index
    %c0_21 = arith.constant 0 : index
    %72 = vector.load %arg22[%c7, %c0_21] : memref<12x32xf32, #tpu.memory_space<vmem>>, vector<1x32xf32>
    tpu.vector_store %arg22[%c7, %c0_21], %71 {strides = array<i32>} : memref<12x32xf32, #tpu.memory_space<vmem>>, vector<1x32xf32>,
    %73 = vector.extract_strided_slice %5 {offsets = [4, 0], sizes = [2, 128], strides = [1, 1]} : vector<12x128xf32> to vector<2x128xf32>
    %cst_22 = arith.constant dense<0.000000e+00> : vector<2x128xf32>
    %74 = tpu.matmul %68, %6, %cst_22 {dimension_numbers = #tpu.dot_dimension_numbers<[1], [0], [0], [1], [0, 0, 1, 1], [], []>} : vector<2x32xf32>, vector<32x128xf32>, vector<2x128xf32> -> vector<2x128xf32>
    %75 = arith.addf %73, %74 : vector<2x128xf32>
    %76 = vector.extract_strided_slice %75 {offsets = [0, 0], sizes = [2, 32], strides = [1, 1]} : vector<2x128xf32> to vector<2x32xf32>
    %77 = arith.negf %76 : vector<2x32xf32>
    %78 = math.exp %77 : vector<2x32xf32>
    %cst_23 = arith.constant 1.000000e+00 : f32
    %79 = vector.broadcast %cst_23 : f32 to vector<2x32xf32>
    %80 = arith.addf %79, %78 : vector<2x32xf32>
    %81 = arith.divf %79, %80 : vector<2x32xf32>
    %82 = vector.extract_strided_slice %75 {offsets = [0, 32], sizes = [2, 32], strides = [1, 1]} : vector<2x128xf32> to vector<2x32xf32>
    %83 = arith.negf %82 : vector<2x32xf32>
    %84 = math.exp %83 : vector<2x32xf32>
    %cst_24 = arith.constant 1.000000e+00 : f32
    %85 = vector.broadcast %cst_24 : f32 to vector<2x32xf32>
    %86 = arith.addf %85, %84 : vector<2x32xf32>
    %87 = arith.divf %85, %86 : vector<2x32xf32>
    %88 = vector.extract_strided_slice %75 {offsets = [0, 64], sizes = [2, 32], strides = [1, 1]} : vector<2x128xf32> to vector<2x32xf32>
    %89 = math.tanh %88 : vector<2x32xf32>
    %90 = vector.extract_strided_slice %75 {offsets = [0, 96], sizes = [2, 32], strides = [1, 1]} : vector<2x128xf32> to vector<2x32xf32>
    %91 = arith.negf %90 : vector<2x32xf32>
    %92 = math.exp %91 : vector<2x32xf32>
    %cst_25 = arith.constant 1.000000e+00 : f32
    %93 = vector.broadcast %cst_25 : f32 to vector<2x32xf32>
    %94 = arith.addf %93, %92 : vector<2x32xf32>
    %95 = arith.divf %93, %94 : vector<2x32xf32>
    %96 = arith.mulf %87, %66 : vector<2x32xf32>
    %97 = arith.mulf %81, %89 : vector<2x32xf32>
    %98 = arith.addf %96, %97 : vector<2x32xf32>
    %99 = math.tanh %98 : vector<2x32xf32>
    %100 = arith.mulf %95, %99 : vector<2x32xf32>
    %101 = vector.extract_strided_slice %100 {offsets = [0, 0], sizes = [1, 32], strides = [1, 1]} : vector<2x32xf32> to vector<1x32xf32>
    %c2 = arith.constant 2 : index
    %c0_26 = arith.constant 0 : index
    %102 = vector.load %arg22[%c2, %c0_26] : memref<12x32xf32, #tpu.memory_space<vmem>>, vector<1x32xf32>
    tpu.vector_store %arg22[%c2, %c0_26], %101 {strides = array<i32>} : memref<12x32xf32, #tpu.memory_space<vmem>>, vector<1x32xf32>,
    %103 = vector.extract_strided_slice %100 {offsets = [1, 0], sizes = [1, 32], strides = [1, 1]} : vector<2x32xf32> to vector<1x32xf32>
    %c8 = arith.constant 8 : index
    %c0_27 = arith.constant 0 : index
    %104 = vector.load %arg22[%c8, %c0_27] : memref<12x32xf32, #tpu.memory_space<vmem>>, vector<1x32xf32>
    tpu.vector_store %arg22[%c8, %c0_27], %103 {strides = array<i32>} : memref<12x32xf32, #tpu.memory_space<vmem>>, vector<1x32xf32>,
    %105 = vector.extract_strided_slice %5 {offsets = [6, 0], sizes = [2, 128], strides = [1, 1]} : vector<12x128xf32> to vector<2x128xf32>
    %cst_28 = arith.constant dense<0.000000e+00> : vector<2x128xf32>
    %106 = tpu.matmul %100, %6, %cst_28 {dimension_numbers = #tpu.dot_dimension_numbers<[1], [0], [0], [1], [0, 0, 1, 1], [], []>} : vector<2x32xf32>, vector<32x128xf32>, vector<2x128xf32> -> vector<2x128xf32>
    %107 = arith.addf %105, %106 : vector<2x128xf32>
    %108 = vector.extract_strided_slice %107 {offsets = [0, 0], sizes = [2, 32], strides = [1, 1]} : vector<2x128xf32> to vector<2x32xf32>
    %109 = arith.negf %108 : vector<2x32xf32>
    %110 = math.exp %109 : vector<2x32xf32>
    %cst_29 = arith.constant 1.000000e+00 : f32
    %111 = vector.broadcast %cst_29 : f32 to vector<2x32xf32>
    %112 = arith.addf %111, %110 : vector<2x32xf32>
    %113 = arith.divf %111, %112 : vector<2x32xf32>
    %114 = vector.extract_strided_slice %107 {offsets = [0, 32], sizes = [2, 32], strides = [1, 1]} : vector<2x128xf32> to vector<2x32xf32>
    %115 = arith.negf %114 : vector<2x32xf32>
    %116 = math.exp %115 : vector<2x32xf32>
    %cst_30 = arith.constant 1.000000e+00 : f32
    %117 = vector.broadcast %cst_30 : f32 to vector<2x32xf32>
    %118 = arith.addf %117, %116 : vector<2x32xf32>
    %119 = arith.divf %117, %118 : vector<2x32xf32>
    %120 = vector.extract_strided_slice %107 {offsets = [0, 64], sizes = [2, 32], strides = [1, 1]} : vector<2x128xf32> to vector<2x32xf32>
    %121 = math.tanh %120 : vector<2x32xf32>
    %122 = vector.extract_strided_slice %107 {offsets = [0, 96], sizes = [2, 32], strides = [1, 1]} : vector<2x128xf32> to vector<2x32xf32>
    %123 = arith.negf %122 : vector<2x32xf32>
    %124 = math.exp %123 : vector<2x32xf32>
    %cst_31 = arith.constant 1.000000e+00 : f32
    %125 = vector.broadcast %cst_31 : f32 to vector<2x32xf32>
    %126 = arith.addf %125, %124 : vector<2x32xf32>
    %127 = arith.divf %125, %126 : vector<2x32xf32>
    %128 = arith.mulf %119, %98 : vector<2x32xf32>
    %129 = arith.mulf %113, %121 : vector<2x32xf32>
    %130 = arith.addf %128, %129 : vector<2x32xf32>
    %131 = math.tanh %130 : vector<2x32xf32>
    %132 = arith.mulf %127, %131 : vector<2x32xf32>
    %133 = vector.extract_strided_slice %132 {offsets = [0, 0], sizes = [1, 32], strides = [1, 1]} : vector<2x32xf32> to vector<1x32xf32>
    %c3 = arith.constant 3 : index
    %c0_32 = arith.constant 0 : index
    %134 = vector.load %arg22[%c3, %c0_32] : memref<12x32xf32, #tpu.memory_space<vmem>>, vector<1x32xf32>
    tpu.vector_store %arg22[%c3, %c0_32], %133 {strides = array<i32>} : memref<12x32xf32, #tpu.memory_space<vmem>>, vector<1x32xf32>,
    %135 = vector.extract_strided_slice %132 {offsets = [1, 0], sizes = [1, 32], strides = [1, 1]} : vector<2x32xf32> to vector<1x32xf32>
    %c9 = arith.constant 9 : index
    %c0_33 = arith.constant 0 : index
    %136 = vector.load %arg22[%c9, %c0_33] : memref<12x32xf32, #tpu.memory_space<vmem>>, vector<1x32xf32>
    tpu.vector_store %arg22[%c9, %c0_33], %135 {strides = array<i32>} : memref<12x32xf32, #tpu.memory_space<vmem>>, vector<1x32xf32>,
    %137 = vector.extract_strided_slice %5 {offsets = [8, 0], sizes = [2, 128], strides = [1, 1]} : vector<12x128xf32> to vector<2x128xf32>
    %cst_34 = arith.constant dense<0.000000e+00> : vector<2x128xf32>
    %138 = tpu.matmul %132, %6, %cst_34 {dimension_numbers = #tpu.dot_dimension_numbers<[1], [0], [0], [1], [0, 0, 1, 1], [], []>} : vector<2x32xf32>, vector<32x128xf32>, vector<2x128xf32> -> vector<2x128xf32>
    %139 = arith.addf %137, %138 : vector<2x128xf32>
    %140 = vector.extract_strided_slice %139 {offsets = [0, 0], sizes = [2, 32], strides = [1, 1]} : vector<2x128xf32> to vector<2x32xf32>
    %141 = arith.negf %140 : vector<2x32xf32>
    %142 = math.exp %141 : vector<2x32xf32>
    %cst_35 = arith.constant 1.000000e+00 : f32
    %143 = vector.broadcast %cst_35 : f32 to vector<2x32xf32>
    %144 = arith.addf %143, %142 : vector<2x32xf32>
    %145 = arith.divf %143, %144 : vector<2x32xf32>
    %146 = vector.extract_strided_slice %139 {offsets = [0, 32], sizes = [2, 32], strides = [1, 1]} : vector<2x128xf32> to vector<2x32xf32>
    %147 = arith.negf %146 : vector<2x32xf32>
    %148 = math.exp %147 : vector<2x32xf32>
    %cst_36 = arith.constant 1.000000e+00 : f32
    %149 = vector.broadcast %cst_36 : f32 to vector<2x32xf32>
    %150 = arith.addf %149, %148 : vector<2x32xf32>
    %151 = arith.divf %149, %150 : vector<2x32xf32>
    %152 = vector.extract_strided_slice %139 {offsets = [0, 64], sizes = [2, 32], strides = [1, 1]} : vector<2x128xf32> to vector<2x32xf32>
    %153 = math.tanh %152 : vector<2x32xf32>
    %154 = vector.extract_strided_slice %139 {offsets = [0, 96], sizes = [2, 32], strides = [1, 1]} : vector<2x128xf32> to vector<2x32xf32>
    %155 = arith.negf %154 : vector<2x32xf32>
    %156 = math.exp %155 : vector<2x32xf32>
    %cst_37 = arith.constant 1.000000e+00 : f32
    %157 = vector.broadcast %cst_37 : f32 to vector<2x32xf32>
    %158 = arith.addf %157, %156 : vector<2x32xf32>
    %159 = arith.divf %157, %158 : vector<2x32xf32>
    %160 = arith.mulf %151, %130 : vector<2x32xf32>
    %161 = arith.mulf %145, %153 : vector<2x32xf32>
    %162 = arith.addf %160, %161 : vector<2x32xf32>
    %163 = math.tanh %162 : vector<2x32xf32>
    %164 = arith.mulf %159, %163 : vector<2x32xf32>
    %165 = vector.extract_strided_slice %164 {offsets = [0, 0], sizes = [1, 32], strides = [1, 1]} : vector<2x32xf32> to vector<1x32xf32>
    %c4 = arith.constant 4 : index
    %c0_38 = arith.constant 0 : index
    %166 = vector.load %arg22[%c4, %c0_38] : memref<12x32xf32, #tpu.memory_space<vmem>>, vector<1x32xf32>
    tpu.vector_store %arg22[%c4, %c0_38], %165 {strides = array<i32>} : memref<12x32xf32, #tpu.memory_space<vmem>>, vector<1x32xf32>,
    %167 = vector.extract_strided_slice %164 {offsets = [1, 0], sizes = [1, 32], strides = [1, 1]} : vector<2x32xf32> to vector<1x32xf32>
    %c10 = arith.constant 10 : index
    %c0_39 = arith.constant 0 : index
    %168 = vector.load %arg22[%c10, %c0_39] : memref<12x32xf32, #tpu.memory_space<vmem>>, vector<1x32xf32>
    tpu.vector_store %arg22[%c10, %c0_39], %167 {strides = array<i32>} : memref<12x32xf32, #tpu.memory_space<vmem>>, vector<1x32xf32>,
    %169 = vector.extract_strided_slice %5 {offsets = [10, 0], sizes = [2, 128], strides = [1, 1]} : vector<12x128xf32> to vector<2x128xf32>
    %cst_40 = arith.constant dense<0.000000e+00> : vector<2x128xf32>
    %170 = tpu.matmul %164, %6, %cst_40 {dimension_numbers = #tpu.dot_dimension_numbers<[1], [0], [0], [1], [0, 0, 1, 1], [], []>} : vector<2x32xf32>, vector<32x128xf32>, vector<2x128xf32> -> vector<2x128xf32>
    %171 = arith.addf %169, %170 : vector<2x128xf32>
    %172 = vector.extract_strided_slice %171 {offsets = [0, 0], sizes = [2, 32], strides = [1, 1]} : vector<2x128xf32> to vector<2x32xf32>
    %173 = arith.negf %172 : vector<2x32xf32>
    %174 = math.exp %173 : vector<2x32xf32>
    %cst_41 = arith.constant 1.000000e+00 : f32
    %175 = vector.broadcast %cst_41 : f32 to vector<2x32xf32>
    %176 = arith.addf %175, %174 : vector<2x32xf32>
    %177 = arith.divf %175, %176 : vector<2x32xf32>
    %178 = vector.extract_strided_slice %171 {offsets = [0, 32], sizes = [2, 32], strides = [1, 1]} : vector<2x128xf32> to vector<2x32xf32>
    %179 = arith.negf %178 : vector<2x32xf32>
    %180 = math.exp %179 : vector<2x32xf32>
    %cst_42 = arith.constant 1.000000e+00 : f32
    %181 = vector.broadcast %cst_42 : f32 to vector<2x32xf32>
    %182 = arith.addf %181, %180 : vector<2x32xf32>
    %183 = arith.divf %181, %182 : vector<2x32xf32>
    %184 = vector.extract_strided_slice %171 {offsets = [0, 64], sizes = [2, 32], strides = [1, 1]} : vector<2x128xf32> to vector<2x32xf32>
    %185 = math.tanh %184 : vector<2x32xf32>
    %186 = vector.extract_strided_slice %171 {offsets = [0, 96], sizes = [2, 32], strides = [1, 1]} : vector<2x128xf32> to vector<2x32xf32>
    %187 = arith.negf %186 : vector<2x32xf32>
    %188 = math.exp %187 : vector<2x32xf32>
    %cst_43 = arith.constant 1.000000e+00 : f32
    %189 = vector.broadcast %cst_43 : f32 to vector<2x32xf32>
    %190 = arith.addf %189, %188 : vector<2x32xf32>
    %191 = arith.divf %189, %190 : vector<2x32xf32>
    %192 = arith.mulf %183, %162 : vector<2x32xf32>
    %193 = arith.mulf %177, %185 : vector<2x32xf32>
    %194 = arith.addf %192, %193 : vector<2x32xf32>
    %195 = math.tanh %194 : vector<2x32xf32>
    %196 = arith.mulf %191, %195 : vector<2x32xf32>
    %197 = vector.extract_strided_slice %196 {offsets = [0, 0], sizes = [1, 32], strides = [1, 1]} : vector<2x32xf32> to vector<1x32xf32>
    %c5 = arith.constant 5 : index
    %c0_44 = arith.constant 0 : index
    %198 = vector.load %arg22[%c5, %c0_44] : memref<12x32xf32, #tpu.memory_space<vmem>>, vector<1x32xf32>
    tpu.vector_store %arg22[%c5, %c0_44], %197 {strides = array<i32>} : memref<12x32xf32, #tpu.memory_space<vmem>>, vector<1x32xf32>,
    %199 = vector.extract_strided_slice %196 {offsets = [1, 0], sizes = [1, 32], strides = [1, 1]} : vector<2x32xf32> to vector<1x32xf32>
    %c11 = arith.constant 11 : index
    %c0_45 = arith.constant 0 : index
    %200 = vector.load %arg22[%c11, %c0_45] : memref<12x32xf32, #tpu.memory_space<vmem>>, vector<1x32xf32>
    tpu.vector_store %arg22[%c11, %c0_45], %199 {strides = array<i32>} : memref<12x32xf32, #tpu.memory_space<vmem>>, vector<1x32xf32>,
    %c0_46 = arith.constant 0 : index
    %c0_47 = arith.constant 0 : index
    %201 = vector.load %arg22[%c0_46, %c0_47] : memref<12x32xf32, #tpu.memory_space<vmem>>, vector<12x32xf32>
    %c0_48 = arith.constant 0 : index
    %c0_49 = arith.constant 0 : index
    %202 = vector.load %arg5[%c0_48, %c0_49] : memref<18x64xf32, #tpu.memory_space<vmem>>, vector<18x64xf32>
    %c0_50 = arith.constant 0 : index
    %c0_51 = arith.constant 0 : index
    %203 = vector.load %arg6[%c0_50, %c0_51] : memref<32x32xf32, #tpu.memory_space<vmem>>, vector<32x32xf32>
    %cst_52 = arith.constant dense<0.000000e+00> : vector<12x32xf32>
    %204 = tpu.matmul %201, %203, %cst_52 {dimension_numbers = #tpu.dot_dimension_numbers<[1], [0], [0], [1], [0, 0, 1, 1], [], []>} : vector<12x32xf32>, vector<32x32xf32>, vector<12x32xf32> -> vector<12x32xf32>
    %c0_53 = arith.constant 0 : index
    %c0_54 = arith.constant 0 : index
    %205 = vector.load %arg7[%c0_53, %c0_54] : memref<1x32xf32, #tpu.memory_space<vmem>>, vector<1x32xf32>
    %206 = vector.broadcast %205 : vector<1x32xf32> to vector<12x32xf32>
    %207 = arith.addf %204, %206 : vector<12x32xf32>
    %c0_55 = arith.constant 0 : index
    %c0_56 = arith.constant 0 : index
    %208 = vector.load %arg8[%c0_55, %c0_56] : memref<64x64xf32, #tpu.memory_space<vmem>>, vector<64x64xf32>
    %cst_57 = arith.constant dense<0.000000e+00> : vector<18x64xf32>
    %209 = tpu.matmul %202, %208, %cst_57 {dimension_numbers = #tpu.dot_dimension_numbers<[1], [0], [0], [1], [0, 0, 1, 1], [], []>} : vector<18x64xf32>, vector<64x64xf32>, vector<18x64xf32> -> vector<18x64xf32>
    %c0_58 = arith.constant 0 : index
    %c0_59 = arith.constant 0 : index
    %210 = vector.load %arg9[%c0_58, %c0_59] : memref<1x64xf32, #tpu.memory_space<vmem>>, vector<1x64xf32>
    %211 = vector.broadcast %210 : vector<1x64xf32> to vector<18x64xf32>
    %212 = arith.addf %209, %211 : vector<18x64xf32>
    %213 = vector.extract_strided_slice %212 {offsets = [0, 0], sizes = [18, 32], strides = [1, 1]} : vector<18x64xf32> to vector<18x32xf32>
    %214 = vector.extract_strided_slice %212 {offsets = [0, 32], sizes = [18, 32], strides = [1, 1]} : vector<18x64xf32> to vector<18x32xf32>
    %c0_60 = arith.constant 0 : index
    %c0_61 = arith.constant 0 : index
    %215 = vector.load %arg10[%c0_60, %c0_61] : memref<32x32xf32, #tpu.memory_space<vmem>>, vector<32x32xf32>
    %c0_62 = arith.constant 0 : index
    %c0_63 = arith.constant 0 : index
    %216 = vector.load %arg11[%c0_62, %c0_63] : memref<1x32xf32, #tpu.memory_space<vmem>>, vector<1x32xf32>
    %217 = vector.extract_strided_slice %207 {offsets = [0, 0], sizes = [6, 32], strides = [1, 1]} : vector<12x32xf32> to vector<6x32xf32>
    %218 = vector.extract_strided_slice %213 {offsets = [0, 0], sizes = [9, 32], strides = [1, 1]} : vector<18x32xf32> to vector<9x32xf32>
    %219 = vector.extract_strided_slice %214 {offsets = [0, 0], sizes = [9, 32], strides = [1, 1]} : vector<18x32xf32> to vector<9x32xf32>
    %cst_64 = arith.constant 0.000000e+00 : f32
    %220 = vector.broadcast %cst_64 : f32 to vector<6x32xf32>
    %221 = vector.broadcast %216 : vector<1x32xf32> to vector<6x32xf32>
    %222 = arith.addf %220, %221 : vector<6x32xf32>
    %223 = vector.extract_strided_slice %217 {offsets = [0, 0], sizes = [6, 8], strides = [1, 1]} : vector<6x32xf32> to vector<6x8xf32>
    %224 = vector.extract_strided_slice %218 {offsets = [0, 0], sizes = [9, 8], strides = [1, 1]} : vector<9x32xf32> to vector<9x8xf32>
    %cst_65 = arith.constant dense<0.000000e+00> : vector<6x9xf32>
    %225 = tpu.matmul %223, %224, %cst_65 {dimension_numbers = #tpu.dot_dimension_numbers<[1], [1], [0], [0], [0, 0, 1, 0], [], []>} : vector<6x8xf32>, vector<9x8xf32>, vector<6x9xf32> -> vector<6x9xf32>
    %cst_66 = arith.constant 0.353553385 : f32
    %226 = vector.broadcast %cst_66 : f32 to vector<6x9xf32>
    %227 = arith.mulf %225, %226 : vector<6x9xf32>
    %cst_67 = arith.constant dense<0xFF800000> : vector<6xf32>
    %228 = vector.multi_reduction <maximumf>, %227, %cst_67 [1] : vector<6x9xf32> to vector<6xf32>
    %229 = vector.shape_cast %228 : vector<6xf32> to vector<6x1xf32>
    %230 = vector.broadcast %229 : vector<6x1xf32> to vector<6x9xf32>
    %231 = arith.subf %227, %230 : vector<6x9xf32>
    %232 = math.exp %231 : vector<6x9xf32>
    %cst_68 = arith.constant dense<0.000000e+00> : vector<6xf32>
    %233 = vector.multi_reduction <add>, %232, %cst_68 [1] : vector<6x9xf32> to vector<6xf32>
    %234 = vector.shape_cast %233 : vector<6xf32> to vector<6x1xf32>
    %235 = tpu.reciprocal %234 {approx = true} : vector<6x1xf32> -> vector<6x1xf32>
    %236 = vector.broadcast %235 : vector<6x1xf32> to vector<6x9xf32>
    %237 = arith.mulf %232, %236 : vector<6x9xf32>
    %238 = vector.extract_strided_slice %219 {offsets = [0, 0], sizes = [9, 8], strides = [1, 1]} : vector<9x32xf32> to vector<9x8xf32>
    %cst_69 = arith.constant dense<0.000000e+00> : vector<6x8xf32>
    %239 = tpu.matmul %237, %238, %cst_69 {dimension_numbers = #tpu.dot_dimension_numbers<[1], [0], [0], [1], [0, 0, 1, 1], [], []>} : vector<6x9xf32>, vector<9x8xf32>, vector<6x8xf32> -> vector<6x8xf32>
    %240 = vector.extract_strided_slice %215 {offsets = [0, 0], sizes = [8, 32], strides = [1, 1]} : vector<32x32xf32> to vector<8x32xf32>
    %cst_70 = arith.constant dense<0.000000e+00> : vector<6x32xf32>
    %241 = tpu.matmul %239, %240, %cst_70 {dimension_numbers = #tpu.dot_dimension_numbers<[1], [0], [0], [1], [0, 0, 1, 1], [], []>} : vector<6x8xf32>, vector<8x32xf32>, vector<6x32xf32> -> vector<6x32xf32>
    %242 = arith.addf %222, %241 : vector<6x32xf32>
    %243 = vector.extract_strided_slice %217 {offsets = [0, 8], sizes = [6, 8], strides = [1, 1]} : vector<6x32xf32> to vector<6x8xf32>
    %244 = vector.extract_strided_slice %218 {offsets = [0, 8], sizes = [9, 8], strides = [1, 1]} : vector<9x32xf32> to vector<9x8xf32>
    %cst_71 = arith.constant dense<0.000000e+00> : vector<6x9xf32>
    %245 = tpu.matmul %243, %244, %cst_71 {dimension_numbers = #tpu.dot_dimension_numbers<[1], [1], [0], [0], [0, 0, 1, 0], [], []>} : vector<6x8xf32>, vector<9x8xf32>, vector<6x9xf32> -> vector<6x9xf32>
    %cst_72 = arith.constant 0.353553385 : f32
    %246 = vector.broadcast %cst_72 : f32 to vector<6x9xf32>
    %247 = arith.mulf %245, %246 : vector<6x9xf32>
    %cst_73 = arith.constant dense<0xFF800000> : vector<6xf32>
    %248 = vector.multi_reduction <maximumf>, %247, %cst_73 [1] : vector<6x9xf32> to vector<6xf32>
    %249 = vector.shape_cast %248 : vector<6xf32> to vector<6x1xf32>
    %250 = vector.broadcast %249 : vector<6x1xf32> to vector<6x9xf32>
    %251 = arith.subf %247, %250 : vector<6x9xf32>
    %252 = math.exp %251 : vector<6x9xf32>
    %cst_74 = arith.constant dense<0.000000e+00> : vector<6xf32>
    %253 = vector.multi_reduction <add>, %252, %cst_74 [1] : vector<6x9xf32> to vector<6xf32>
    %254 = vector.shape_cast %253 : vector<6xf32> to vector<6x1xf32>
    %255 = tpu.reciprocal %254 {approx = true} : vector<6x1xf32> -> vector<6x1xf32>
    %256 = vector.broadcast %255 : vector<6x1xf32> to vector<6x9xf32>
    %257 = arith.mulf %252, %256 : vector<6x9xf32>
    %258 = vector.extract_strided_slice %219 {offsets = [0, 8], sizes = [9, 8], strides = [1, 1]} : vector<9x32xf32> to vector<9x8xf32>
    %cst_75 = arith.constant dense<0.000000e+00> : vector<6x8xf32>
    %259 = tpu.matmul %257, %258, %cst_75 {dimension_numbers = #tpu.dot_dimension_numbers<[1], [0], [0], [1], [0, 0, 1, 1], [], []>} : vector<6x9xf32>, vector<9x8xf32>, vector<6x8xf32> -> vector<6x8xf32>
    %260 = vector.extract_strided_slice %215 {offsets = [8, 0], sizes = [8, 32], strides = [1, 1]} : vector<32x32xf32> to vector<8x32xf32>
    %cst_76 = arith.constant dense<0.000000e+00> : vector<6x32xf32>
    %261 = tpu.matmul %259, %260, %cst_76 {dimension_numbers = #tpu.dot_dimension_numbers<[1], [0], [0], [1], [0, 0, 1, 1], [], []>} : vector<6x8xf32>, vector<8x32xf32>, vector<6x32xf32> -> vector<6x32xf32>
    %262 = arith.addf %242, %261 : vector<6x32xf32>
    %263 = vector.extract_strided_slice %217 {offsets = [0, 16], sizes = [6, 8], strides = [1, 1]} : vector<6x32xf32> to vector<6x8xf32>
    %264 = vector.extract_strided_slice %218 {offsets = [0, 16], sizes = [9, 8], strides = [1, 1]} : vector<9x32xf32> to vector<9x8xf32>
    %cst_77 = arith.constant dense<0.000000e+00> : vector<6x9xf32>
    %265 = tpu.matmul %263, %264, %cst_77 {dimension_numbers = #tpu.dot_dimension_numbers<[1], [1], [0], [0], [0, 0, 1, 0], [], []>} : vector<6x8xf32>, vector<9x8xf32>, vector<6x9xf32> -> vector<6x9xf32>
    %cst_78 = arith.constant 0.353553385 : f32
    %266 = vector.broadcast %cst_78 : f32 to vector<6x9xf32>
    %267 = arith.mulf %265, %266 : vector<6x9xf32>
    %cst_79 = arith.constant dense<0xFF800000> : vector<6xf32>
    %268 = vector.multi_reduction <maximumf>, %267, %cst_79 [1] : vector<6x9xf32> to vector<6xf32>
    %269 = vector.shape_cast %268 : vector<6xf32> to vector<6x1xf32>
    %270 = vector.broadcast %269 : vector<6x1xf32> to vector<6x9xf32>
    %271 = arith.subf %267, %270 : vector<6x9xf32>
    %272 = math.exp %271 : vector<6x9xf32>
    %cst_80 = arith.constant dense<0.000000e+00> : vector<6xf32>
    %273 = vector.multi_reduction <add>, %272, %cst_80 [1] : vector<6x9xf32> to vector<6xf32>
    %274 = vector.shape_cast %273 : vector<6xf32> to vector<6x1xf32>
    %275 = tpu.reciprocal %274 {approx = true} : vector<6x1xf32> -> vector<6x1xf32>
    %276 = vector.broadcast %275 : vector<6x1xf32> to vector<6x9xf32>
    %277 = arith.mulf %272, %276 : vector<6x9xf32>
    %278 = vector.extract_strided_slice %219 {offsets = [0, 16], sizes = [9, 8], strides = [1, 1]} : vector<9x32xf32> to vector<9x8xf32>
    %cst_81 = arith.constant dense<0.000000e+00> : vector<6x8xf32>
    %279 = tpu.matmul %277, %278, %cst_81 {dimension_numbers = #tpu.dot_dimension_numbers<[1], [0], [0], [1], [0, 0, 1, 1], [], []>} : vector<6x9xf32>, vector<9x8xf32>, vector<6x8xf32> -> vector<6x8xf32>
    %280 = vector.extract_strided_slice %215 {offsets = [16, 0], sizes = [8, 32], strides = [1, 1]} : vector<32x32xf32> to vector<8x32xf32>
    %cst_82 = arith.constant dense<0.000000e+00> : vector<6x32xf32>
    %281 = tpu.matmul %279, %280, %cst_82 {dimension_numbers = #tpu.dot_dimension_numbers<[1], [0], [0], [1], [0, 0, 1, 1], [], []>} : vector<6x8xf32>, vector<8x32xf32>, vector<6x32xf32> -> vector<6x32xf32>
    %282 = arith.addf %262, %281 : vector<6x32xf32>
    %283 = vector.extract_strided_slice %217 {offsets = [0, 24], sizes = [6, 8], strides = [1, 1]} : vector<6x32xf32> to vector<6x8xf32>
    %284 = vector.extract_strided_slice %218 {offsets = [0, 24], sizes = [9, 8], strides = [1, 1]} : vector<9x32xf32> to vector<9x8xf32>
    %cst_83 = arith.constant dense<0.000000e+00> : vector<6x9xf32>
    %285 = tpu.matmul %283, %284, %cst_83 {dimension_numbers = #tpu.dot_dimension_numbers<[1], [1], [0], [0], [0, 0, 1, 0], [], []>} : vector<6x8xf32>, vector<9x8xf32>, vector<6x9xf32> -> vector<6x9xf32>
    %cst_84 = arith.constant 0.353553385 : f32
    %286 = vector.broadcast %cst_84 : f32 to vector<6x9xf32>
    %287 = arith.mulf %285, %286 : vector<6x9xf32>
    %cst_85 = arith.constant dense<0xFF800000> : vector<6xf32>
    %288 = vector.multi_reduction <maximumf>, %287, %cst_85 [1] : vector<6x9xf32> to vector<6xf32>
    %289 = vector.shape_cast %288 : vector<6xf32> to vector<6x1xf32>
    %290 = vector.broadcast %289 : vector<6x1xf32> to vector<6x9xf32>
    %291 = arith.subf %287, %290 : vector<6x9xf32>
    %292 = math.exp %291 : vector<6x9xf32>
    %cst_86 = arith.constant dense<0.000000e+00> : vector<6xf32>
    %293 = vector.multi_reduction <add>, %292, %cst_86 [1] : vector<6x9xf32> to vector<6xf32>
    %294 = vector.shape_cast %293 : vector<6xf32> to vector<6x1xf32>
    %295 = tpu.reciprocal %294 {approx = true} : vector<6x1xf32> -> vector<6x1xf32>
    %296 = vector.broadcast %295 : vector<6x1xf32> to vector<6x9xf32>
    %297 = arith.mulf %292, %296 : vector<6x9xf32>
    %298 = vector.extract_strided_slice %219 {offsets = [0, 24], sizes = [9, 8], strides = [1, 1]} : vector<9x32xf32> to vector<9x8xf32>
    %cst_87 = arith.constant dense<0.000000e+00> : vector<6x8xf32>
    %299 = tpu.matmul %297, %298, %cst_87 {dimension_numbers = #tpu.dot_dimension_numbers<[1], [0], [0], [1], [0, 0, 1, 1], [], []>} : vector<6x9xf32>, vector<9x8xf32>, vector<6x8xf32> -> vector<6x8xf32>
    %300 = vector.extract_strided_slice %215 {offsets = [24, 0], sizes = [8, 32], strides = [1, 1]} : vector<32x32xf32> to vector<8x32xf32>
    %cst_88 = arith.constant dense<0.000000e+00> : vector<6x32xf32>
    %301 = tpu.matmul %299, %300, %cst_88 {dimension_numbers = #tpu.dot_dimension_numbers<[1], [0], [0], [1], [0, 0, 1, 1], [], []>} : vector<6x8xf32>, vector<8x32xf32>, vector<6x32xf32> -> vector<6x32xf32>
    %302 = arith.addf %282, %301 : vector<6x32xf32>
    %c0_89 = arith.constant 0 : index
    %c0_90 = arith.constant 0 : index
    %303 = vector.load %arg23[%c0_89, %c0_90] : memref<12x32xf32, #tpu.memory_space<vmem>>, vector<6x32xf32>
    tpu.vector_store %arg23[%c0_89, %c0_90], %302 {strides = array<i32>} : memref<12x32xf32, #tpu.memory_space<vmem>>, vector<6x32xf32>,
    %304 = vector.extract_strided_slice %207 {offsets = [6, 0], sizes = [6, 32], strides = [1, 1]} : vector<12x32xf32> to vector<6x32xf32>
    %305 = vector.extract_strided_slice %213 {offsets = [9, 0], sizes = [9, 32], strides = [1, 1]} : vector<18x32xf32> to vector<9x32xf32>
    %306 = vector.extract_strided_slice %214 {offsets = [9, 0], sizes = [9, 32], strides = [1, 1]} : vector<18x32xf32> to vector<9x32xf32>
    %cst_91 = arith.constant 0.000000e+00 : f32
    %307 = vector.broadcast %cst_91 : f32 to vector<6x32xf32>
    %308 = vector.broadcast %216 : vector<1x32xf32> to vector<6x32xf32>
    %309 = arith.addf %307, %308 : vector<6x32xf32>
    %310 = vector.extract_strided_slice %304 {offsets = [0, 0], sizes = [6, 8], strides = [1, 1]} : vector<6x32xf32> to vector<6x8xf32>
    %311 = vector.extract_strided_slice %305 {offsets = [0, 0], sizes = [9, 8], strides = [1, 1]} : vector<9x32xf32> to vector<9x8xf32>
    %cst_92 = arith.constant dense<0.000000e+00> : vector<6x9xf32>
    %312 = tpu.matmul %310, %311, %cst_92 {dimension_numbers = #tpu.dot_dimension_numbers<[1], [1], [0], [0], [0, 0, 1, 0], [], []>} : vector<6x8xf32>, vector<9x8xf32>, vector<6x9xf32> -> vector<6x9xf32>
    %cst_93 = arith.constant 0.353553385 : f32
    %313 = vector.broadcast %cst_93 : f32 to vector<6x9xf32>
    %314 = arith.mulf %312, %313 : vector<6x9xf32>
    %cst_94 = arith.constant dense<0xFF800000> : vector<6xf32>
    %315 = vector.multi_reduction <maximumf>, %314, %cst_94 [1] : vector<6x9xf32> to vector<6xf32>
    %316 = vector.shape_cast %315 : vector<6xf32> to vector<6x1xf32>
    %317 = vector.broadcast %316 : vector<6x1xf32> to vector<6x9xf32>
    %318 = arith.subf %314, %317 : vector<6x9xf32>
    %319 = math.exp %318 : vector<6x9xf32>
    %cst_95 = arith.constant dense<0.000000e+00> : vector<6xf32>
    %320 = vector.multi_reduction <add>, %319, %cst_95 [1] : vector<6x9xf32> to vector<6xf32>
    %321 = vector.shape_cast %320 : vector<6xf32> to vector<6x1xf32>
    %322 = tpu.reciprocal %321 {approx = true} : vector<6x1xf32> -> vector<6x1xf32>
    %323 = vector.broadcast %322 : vector<6x1xf32> to vector<6x9xf32>
    %324 = arith.mulf %319, %323 : vector<6x9xf32>
    %325 = vector.extract_strided_slice %306 {offsets = [0, 0], sizes = [9, 8], strides = [1, 1]} : vector<9x32xf32> to vector<9x8xf32>
    %cst_96 = arith.constant dense<0.000000e+00> : vector<6x8xf32>
    %326 = tpu.matmul %324, %325, %cst_96 {dimension_numbers = #tpu.dot_dimension_numbers<[1], [0], [0], [1], [0, 0, 1, 1], [], []>} : vector<6x9xf32>, vector<9x8xf32>, vector<6x8xf32> -> vector<6x8xf32>
    %327 = vector.extract_strided_slice %215 {offsets = [0, 0], sizes = [8, 32], strides = [1, 1]} : vector<32x32xf32> to vector<8x32xf32>
    %cst_97 = arith.constant dense<0.000000e+00> : vector<6x32xf32>
    %328 = tpu.matmul %326, %327, %cst_97 {dimension_numbers = #tpu.dot_dimension_numbers<[1], [0], [0], [1], [0, 0, 1, 1], [], []>} : vector<6x8xf32>, vector<8x32xf32>, vector<6x32xf32> -> vector<6x32xf32>
    %329 = arith.addf %309, %328 : vector<6x32xf32>
    %330 = vector.extract_strided_slice %304 {offsets = [0, 8], sizes = [6, 8], strides = [1, 1]} : vector<6x32xf32> to vector<6x8xf32>
    %331 = vector.extract_strided_slice %305 {offsets = [0, 8], sizes = [9, 8], strides = [1, 1]} : vector<9x32xf32> to vector<9x8xf32>
    %cst_98 = arith.constant dense<0.000000e+00> : vector<6x9xf32>
    %332 = tpu.matmul %330, %331, %cst_98 {dimension_numbers = #tpu.dot_dimension_numbers<[1], [1], [0], [0], [0, 0, 1, 0], [], []>} : vector<6x8xf32>, vector<9x8xf32>, vector<6x9xf32> -> vector<6x9xf32>
    %cst_99 = arith.constant 0.353553385 : f32
    %333 = vector.broadcast %cst_99 : f32 to vector<6x9xf32>
    %334 = arith.mulf %332, %333 : vector<6x9xf32>
    %cst_100 = arith.constant dense<0xFF800000> : vector<6xf32>
    %335 = vector.multi_reduction <maximumf>, %334, %cst_100 [1] : vector<6x9xf32> to vector<6xf32>
    %336 = vector.shape_cast %335 : vector<6xf32> to vector<6x1xf32>
    %337 = vector.broadcast %336 : vector<6x1xf32> to vector<6x9xf32>
    %338 = arith.subf %334, %337 : vector<6x9xf32>
    %339 = math.exp %338 : vector<6x9xf32>
    %cst_101 = arith.constant dense<0.000000e+00> : vector<6xf32>
    %340 = vector.multi_reduction <add>, %339, %cst_101 [1] : vector<6x9xf32> to vector<6xf32>
    %341 = vector.shape_cast %340 : vector<6xf32> to vector<6x1xf32>
    %342 = tpu.reciprocal %341 {approx = true} : vector<6x1xf32> -> vector<6x1xf32>
    %343 = vector.broadcast %342 : vector<6x1xf32> to vector<6x9xf32>
    %344 = arith.mulf %339, %343 : vector<6x9xf32>
    %345 = vector.extract_strided_slice %306 {offsets = [0, 8], sizes = [9, 8], strides = [1, 1]} : vector<9x32xf32> to vector<9x8xf32>
    %cst_102 = arith.constant dense<0.000000e+00> : vector<6x8xf32>
    %346 = tpu.matmul %344, %345, %cst_102 {dimension_numbers = #tpu.dot_dimension_numbers<[1], [0], [0], [1], [0, 0, 1, 1], [], []>} : vector<6x9xf32>, vector<9x8xf32>, vector<6x8xf32> -> vector<6x8xf32>
    %347 = vector.extract_strided_slice %215 {offsets = [8, 0], sizes = [8, 32], strides = [1, 1]} : vector<32x32xf32> to vector<8x32xf32>
    %cst_103 = arith.constant dense<0.000000e+00> : vector<6x32xf32>
    %348 = tpu.matmul %346, %347, %cst_103 {dimension_numbers = #tpu.dot_dimension_numbers<[1], [0], [0], [1], [0, 0, 1, 1], [], []>} : vector<6x8xf32>, vector<8x32xf32>, vector<6x32xf32> -> vector<6x32xf32>
    %349 = arith.addf %329, %348 : vector<6x32xf32>
    %350 = vector.extract_strided_slice %304 {offsets = [0, 16], sizes = [6, 8], strides = [1, 1]} : vector<6x32xf32> to vector<6x8xf32>
    %351 = vector.extract_strided_slice %305 {offsets = [0, 16], sizes = [9, 8], strides = [1, 1]} : vector<9x32xf32> to vector<9x8xf32>
    %cst_104 = arith.constant dense<0.000000e+00> : vector<6x9xf32>
    %352 = tpu.matmul %350, %351, %cst_104 {dimension_numbers = #tpu.dot_dimension_numbers<[1], [1], [0], [0], [0, 0, 1, 0], [], []>} : vector<6x8xf32>, vector<9x8xf32>, vector<6x9xf32> -> vector<6x9xf32>
    %cst_105 = arith.constant 0.353553385 : f32
    %353 = vector.broadcast %cst_105 : f32 to vector<6x9xf32>
    %354 = arith.mulf %352, %353 : vector<6x9xf32>
    %cst_106 = arith.constant dense<0xFF800000> : vector<6xf32>
    %355 = vector.multi_reduction <maximumf>, %354, %cst_106 [1] : vector<6x9xf32> to vector<6xf32>
    %356 = vector.shape_cast %355 : vector<6xf32> to vector<6x1xf32>
    %357 = vector.broadcast %356 : vector<6x1xf32> to vector<6x9xf32>
    %358 = arith.subf %354, %357 : vector<6x9xf32>
    %359 = math.exp %358 : vector<6x9xf32>
    %cst_107 = arith.constant dense<0.000000e+00> : vector<6xf32>
    %360 = vector.multi_reduction <add>, %359, %cst_107 [1] : vector<6x9xf32> to vector<6xf32>
    %361 = vector.shape_cast %360 : vector<6xf32> to vector<6x1xf32>
    %362 = tpu.reciprocal %361 {approx = true} : vector<6x1xf32> -> vector<6x1xf32>
    %363 = vector.broadcast %362 : vector<6x1xf32> to vector<6x9xf32>
    %364 = arith.mulf %359, %363 : vector<6x9xf32>
    %365 = vector.extract_strided_slice %306 {offsets = [0, 16], sizes = [9, 8], strides = [1, 1]} : vector<9x32xf32> to vector<9x8xf32>
    %cst_108 = arith.constant dense<0.000000e+00> : vector<6x8xf32>
    %366 = tpu.matmul %364, %365, %cst_108 {dimension_numbers = #tpu.dot_dimension_numbers<[1], [0], [0], [1], [0, 0, 1, 1], [], []>} : vector<6x9xf32>, vector<9x8xf32>, vector<6x8xf32> -> vector<6x8xf32>
    %367 = vector.extract_strided_slice %215 {offsets = [16, 0], sizes = [8, 32], strides = [1, 1]} : vector<32x32xf32> to vector<8x32xf32>
    %cst_109 = arith.constant dense<0.000000e+00> : vector<6x32xf32>
    %368 = tpu.matmul %366, %367, %cst_109 {dimension_numbers = #tpu.dot_dimension_numbers<[1], [0], [0], [1], [0, 0, 1, 1], [], []>} : vector<6x8xf32>, vector<8x32xf32>, vector<6x32xf32> -> vector<6x32xf32>
    %369 = arith.addf %349, %368 : vector<6x32xf32>
    %370 = vector.extract_strided_slice %304 {offsets = [0, 24], sizes = [6, 8], strides = [1, 1]} : vector<6x32xf32> to vector<6x8xf32>
    %371 = vector.extract_strided_slice %305 {offsets = [0, 24], sizes = [9, 8], strides = [1, 1]} : vector<9x32xf32> to vector<9x8xf32>
    %cst_110 = arith.constant dense<0.000000e+00> : vector<6x9xf32>
    %372 = tpu.matmul %370, %371, %cst_110 {dimension_numbers = #tpu.dot_dimension_numbers<[1], [1], [0], [0], [0, 0, 1, 0], [], []>} : vector<6x8xf32>, vector<9x8xf32>, vector<6x9xf32> -> vector<6x9xf32>
    %cst_111 = arith.constant 0.353553385 : f32
    %373 = vector.broadcast %cst_111 : f32 to vector<6x9xf32>
    %374 = arith.mulf %372, %373 : vector<6x9xf32>
    %cst_112 = arith.constant dense<0xFF800000> : vector<6xf32>
    %375 = vector.multi_reduction <maximumf>, %374, %cst_112 [1] : vector<6x9xf32> to vector<6xf32>
    %376 = vector.shape_cast %375 : vector<6xf32> to vector<6x1xf32>
    %377 = vector.broadcast %376 : vector<6x1xf32> to vector<6x9xf32>
    %378 = arith.subf %374, %377 : vector<6x9xf32>
    %379 = math.exp %378 : vector<6x9xf32>
    %cst_113 = arith.constant dense<0.000000e+00> : vector<6xf32>
    %380 = vector.multi_reduction <add>, %379, %cst_113 [1] : vector<6x9xf32> to vector<6xf32>
    %381 = vector.shape_cast %380 : vector<6xf32> to vector<6x1xf32>
    %382 = tpu.reciprocal %381 {approx = true} : vector<6x1xf32> -> vector<6x1xf32>
    %383 = vector.broadcast %382 : vector<6x1xf32> to vector<6x9xf32>
    %384 = arith.mulf %379, %383 : vector<6x9xf32>
    %385 = vector.extract_strided_slice %306 {offsets = [0, 24], sizes = [9, 8], strides = [1, 1]} : vector<9x32xf32> to vector<9x8xf32>
    %cst_114 = arith.constant dense<0.000000e+00> : vector<6x8xf32>
    %386 = tpu.matmul %384, %385, %cst_114 {dimension_numbers = #tpu.dot_dimension_numbers<[1], [0], [0], [1], [0, 0, 1, 1], [], []>} : vector<6x9xf32>, vector<9x8xf32>, vector<6x8xf32> -> vector<6x8xf32>
    %387 = vector.extract_strided_slice %215 {offsets = [24, 0], sizes = [8, 32], strides = [1, 1]} : vector<32x32xf32> to vector<8x32xf32>
    %cst_115 = arith.constant dense<0.000000e+00> : vector<6x32xf32>
    %388 = tpu.matmul %386, %387, %cst_115 {dimension_numbers = #tpu.dot_dimension_numbers<[1], [0], [0], [1], [0, 0, 1, 1], [], []>} : vector<6x8xf32>, vector<8x32xf32>, vector<6x32xf32> -> vector<6x32xf32>
    %389 = arith.addf %369, %388 : vector<6x32xf32>
    %c6_116 = arith.constant 6 : index
    %c0_117 = arith.constant 0 : index
    %390 = vector.load %arg23[%c6_116, %c0_117] : memref<12x32xf32, #tpu.memory_space<vmem>>, vector<6x32xf32>
    tpu.vector_store %arg23[%c6_116, %c0_117], %389 {strides = array<i32>} : memref<12x32xf32, #tpu.memory_space<vmem>>, vector<6x32xf32>,
    %c0_118 = arith.constant 0 : index
    %c0_119 = arith.constant 0 : index
    %391 = vector.load %arg23[%c0_118, %c0_119] : memref<12x32xf32, #tpu.memory_space<vmem>>, vector<12x32xf32>
    %c0_120 = arith.constant 0 : index
    %c0_121 = arith.constant 0 : index
    %392 = vector.load %arg12[%c0_120, %c0_121] : memref<64x44xf32, #tpu.memory_space<vmem>>, vector<32x44xf32>
    %cst_122 = arith.constant dense<0.000000e+00> : vector<12x44xf32>
    %393 = tpu.matmul %391, %392, %cst_122 {dimension_numbers = #tpu.dot_dimension_numbers<[1], [0], [0], [1], [0, 0, 1, 1], [], []>} : vector<12x32xf32>, vector<32x44xf32>, vector<12x44xf32> -> vector<12x44xf32>
    %c32 = arith.constant 32 : index
    %c0_123 = arith.constant 0 : index
    %394 = vector.load %arg12[%c32, %c0_123] : memref<64x44xf32, #tpu.memory_space<vmem>>, vector<32x44xf32>
    %cst_124 = arith.constant dense<0.000000e+00> : vector<12x44xf32>
    %395 = tpu.matmul %201, %394, %cst_124 {dimension_numbers = #tpu.dot_dimension_numbers<[1], [0], [0], [1], [0, 0, 1, 1], [], []>} : vector<12x32xf32>, vector<32x44xf32>, vector<12x44xf32> -> vector<12x44xf32>
    %396 = arith.addf %393, %395 : vector<12x44xf32>
    %cst_125 = arith.constant dense<0xFF800000> : vector<12xf32>
    %397 = vector.multi_reduction <maximumf>, %396, %cst_125 [1] : vector<12x44xf32> to vector<12xf32>
    %398 = vector.shape_cast %397 : vector<12xf32> to vector<12x1xf32>
    %399 = vector.broadcast %398 : vector<12x1xf32> to vector<12x44xf32>
    %400 = arith.subf %396, %399 : vector<12x44xf32>
    %401 = vector.broadcast %398 : vector<12x1xf32> to vector<12x44xf32>
    %402 = arith.subf %396, %401 : vector<12x44xf32>
    %403 = math.exp %402 : vector<12x44xf32>
    %cst_126 = arith.constant dense<0.000000e+00> : vector<12xf32>
    %404 = vector.multi_reduction <add>, %403, %cst_126 [1] : vector<12x44xf32> to vector<12xf32>
    %405 = vector.shape_cast %404 : vector<12xf32> to vector<12x1xf32>
    %406 = math.log %405 : vector<12x1xf32>
    %407 = vector.broadcast %406 : vector<12x1xf32> to vector<12x44xf32>
    %408 = arith.subf %400, %407 : vector<12x44xf32>
    %409 = vector.extract_strided_slice %408 {offsets = [0, 0], sizes = [12, 40], strides = [1, 1]} : vector<12x44xf32> to vector<12x40xf32>
    %c0_127 = arith.constant 0 : index
    %c0_128 = arith.constant 0 : index
    %410 = vector.load %arg21[%c0_127, %c0_128] : memref<12x200xf32, #tpu.memory_space<vmem>>, vector<12x40xf32>
    tpu.vector_store %arg21[%c0_127, %c0_128], %409 {strides = array<i32>} : memref<12x200xf32, #tpu.memory_space<vmem>>, vector<12x40xf32>,
    %c0_129 = arith.constant 0 : index
    %c0_130 = arith.constant 0 : index
    %411 = vector.load %arg13[%c0_129, %c0_130] : memref<64x32xf32, #tpu.memory_space<vmem>>, vector<32x32xf32>
    %cst_131 = arith.constant dense<0.000000e+00> : vector<12x32xf32>
    %412 = tpu.matmul %391, %411, %cst_131 {dimension_numbers = #tpu.dot_dimension_numbers<[1], [0], [0], [1], [0, 0, 1, 1], [], []>} : vector<12x32xf32>, vector<32x32xf32>, vector<12x32xf32> -> vector<12x32xf32>
    %c32_132 = arith.constant 32 : index
    %c0_133 = arith.constant 0 : index
    %413 = vector.load %arg13[%c32_132, %c0_133] : memref<64x32xf32, #tpu.memory_space<vmem>>, vector<32x32xf32>
    %cst_134 = arith.constant dense<0.000000e+00> : vector<12x32xf32>
    %414 = tpu.matmul %201, %413, %cst_134 {dimension_numbers = #tpu.dot_dimension_numbers<[1], [0], [0], [1], [0, 0, 1, 1], [], []>} : vector<12x32xf32>, vector<32x32xf32>, vector<12x32xf32> -> vector<12x32xf32>
    %415 = arith.addf %412, %414 : vector<12x32xf32>
    %c0_135 = arith.constant 0 : index
    %c0_136 = arith.constant 0 : index
    %416 = vector.load %arg14[%c0_135, %c0_136] : memref<32x40xf32, #tpu.memory_space<vmem>>, vector<32x40xf32>
    %cst_137 = arith.constant dense<0.000000e+00> : vector<12x40xf32>
    %417 = tpu.matmul %415, %416, %cst_137 {dimension_numbers = #tpu.dot_dimension_numbers<[1], [0], [0], [1], [0, 0, 1, 1], [], []>} : vector<12x32xf32>, vector<32x40xf32>, vector<12x40xf32> -> vector<12x40xf32>
    %cst_138 = arith.constant dense<0xFF800000> : vector<12xf32>
    %418 = vector.multi_reduction <maximumf>, %417, %cst_138 [1] : vector<12x40xf32> to vector<12xf32>
    %419 = vector.shape_cast %418 : vector<12xf32> to vector<12x1xf32>
    %420 = vector.broadcast %419 : vector<12x1xf32> to vector<12x40xf32>
    %421 = arith.subf %417, %420 : vector<12x40xf32>
    %422 = vector.broadcast %419 : vector<12x1xf32> to vector<12x40xf32>
    %423 = arith.subf %417, %422 : vector<12x40xf32>
    %424 = math.exp %423 : vector<12x40xf32>
    %cst_139 = arith.constant dense<0.000000e+00> : vector<12xf32>
    %425 = vector.multi_reduction <add>, %424, %cst_139 [1] : vector<12x40xf32> to vector<12xf32>
    %426 = vector.shape_cast %425 : vector<12xf32> to vector<12x1xf32>
    %427 = math.log %426 : vector<12x1xf32>
    %428 = vector.broadcast %427 : vector<12x1xf32> to vector<12x40xf32>
    %429 = arith.subf %421, %428 : vector<12x40xf32>
    %430 = vector.extract_strided_slice %408 {offsets = [0, 40], sizes = [12, 1], strides = [1, 1]} : vector<12x44xf32> to vector<12x1xf32>
    %431 = vector.broadcast %430 : vector<12x1xf32> to vector<12x40xf32>
    %432 = arith.addf %429, %431 : vector<12x40xf32>
    %c0_140 = arith.constant 0 : index
    %c40 = arith.constant 40 : index
    %433 = vector.load %arg21[%c0_140, %c40] : memref<12x200xf32, #tpu.memory_space<vmem>>, vector<12x40xf32>
    tpu.vector_store %arg21[%c0_140, %c40], %432 {strides = array<i32>} : memref<12x200xf32, #tpu.memory_space<vmem>>, vector<12x40xf32>,
    %c0_141 = arith.constant 0 : index
    %c0_142 = arith.constant 0 : index
    %434 = vector.load %arg15[%c0_141, %c0_142] : memref<64x16xf32, #tpu.memory_space<vmem>>, vector<32x16xf32>
    %cst_143 = arith.constant dense<0.000000e+00> : vector<12x16xf32>
    %435 = tpu.matmul %391, %434, %cst_143 {dimension_numbers = #tpu.dot_dimension_numbers<[1], [0], [0], [1], [0, 0, 1, 1], [], []>} : vector<12x32xf32>, vector<32x16xf32>, vector<12x16xf32> -> vector<12x16xf32>
    %c32_144 = arith.constant 32 : index
    %c0_145 = arith.constant 0 : index
    %436 = vector.load %arg15[%c32_144, %c0_145] : memref<64x16xf32, #tpu.memory_space<vmem>>, vector<32x16xf32>
    %cst_146 = arith.constant dense<0.000000e+00> : vector<12x16xf32>
    %437 = tpu.matmul %201, %436, %cst_146 {dimension_numbers = #tpu.dot_dimension_numbers<[1], [0], [0], [1], [0, 0, 1, 1], [], []>} : vector<12x32xf32>, vector<32x16xf32>, vector<12x16xf32> -> vector<12x16xf32>
    %438 = arith.addf %435, %437 : vector<12x16xf32>
    %c0_147 = arith.constant 0 : index
    %c0_148 = arith.constant 0 : index
    %439 = vector.load %arg16[%c0_147, %c0_148] : memref<16x40xf32, #tpu.memory_space<vmem>>, vector<16x40xf32>
    %cst_149 = arith.constant dense<0.000000e+00> : vector<12x40xf32>
    %440 = tpu.matmul %438, %439, %cst_149 {dimension_numbers = #tpu.dot_dimension_numbers<[1], [0], [0], [1], [0, 0, 1, 1], [], []>} : vector<12x16xf32>, vector<16x40xf32>, vector<12x40xf32> -> vector<12x40xf32>
    %cst_150 = arith.constant dense<0xFF800000> : vector<12xf32>
    %441 = vector.multi_reduction <maximumf>, %440, %cst_150 [1] : vector<12x40xf32> to vector<12xf32>
    %442 = vector.shape_cast %441 : vector<12xf32> to vector<12x1xf32>
    %443 = vector.broadcast %442 : vector<12x1xf32> to vector<12x40xf32>
    %444 = arith.subf %440, %443 : vector<12x40xf32>
    %445 = vector.broadcast %442 : vector<12x1xf32> to vector<12x40xf32>
    %446 = arith.subf %440, %445 : vector<12x40xf32>
    %447 = math.exp %446 : vector<12x40xf32>
    %cst_151 = arith.constant dense<0.000000e+00> : vector<12xf32>
    %448 = vector.multi_reduction <add>, %447, %cst_151 [1] : vector<12x40xf32> to vector<12xf32>
    %449 = vector.shape_cast %448 : vector<12xf32> to vector<12x1xf32>
    %450 = math.log %449 : vector<12x1xf32>
    %451 = vector.broadcast %450 : vector<12x1xf32> to vector<12x40xf32>
    %452 = arith.subf %444, %451 : vector<12x40xf32>
    %453 = vector.extract_strided_slice %408 {offsets = [0, 41], sizes = [12, 1], strides = [1, 1]} : vector<12x44xf32> to vector<12x1xf32>
    %454 = vector.broadcast %453 : vector<12x1xf32> to vector<12x40xf32>
    %455 = arith.addf %452, %454 : vector<12x40xf32>
    %c0_152 = arith.constant 0 : index
    %c80 = arith.constant 80 : index
    %456 = vector.load %arg21[%c0_152, %c80] : memref<12x200xf32, #tpu.memory_space<vmem>>, vector<12x40xf32>
    tpu.vector_store %arg21[%c0_152, %c80], %455 {strides = array<i32>} : memref<12x200xf32, #tpu.memory_space<vmem>>, vector<12x40xf32>,
    %c0_153 = arith.constant 0 : index
    %c0_154 = arith.constant 0 : index
    %457 = vector.load %arg17[%c0_153, %c0_154] : memref<64x8xf32, #tpu.memory_space<vmem>>, vector<32x8xf32>
    %cst_155 = arith.constant dense<0.000000e+00> : vector<12x8xf32>
    %458 = tpu.matmul %391, %457, %cst_155 {dimension_numbers = #tpu.dot_dimension_numbers<[1], [0], [0], [1], [0, 0, 1, 1], [], []>} : vector<12x32xf32>, vector<32x8xf32>, vector<12x8xf32> -> vector<12x8xf32>
    %c32_156 = arith.constant 32 : index
    %c0_157 = arith.constant 0 : index
    %459 = vector.load %arg17[%c32_156, %c0_157] : memref<64x8xf32, #tpu.memory_space<vmem>>, vector<32x8xf32>
    %cst_158 = arith.constant dense<0.000000e+00> : vector<12x8xf32>
    %460 = tpu.matmul %201, %459, %cst_158 {dimension_numbers = #tpu.dot_dimension_numbers<[1], [0], [0], [1], [0, 0, 1, 1], [], []>} : vector<12x32xf32>, vector<32x8xf32>, vector<12x8xf32> -> vector<12x8xf32>
    %461 = arith.addf %458, %460 : vector<12x8xf32>
    %c0_159 = arith.constant 0 : index
    %c0_160 = arith.constant 0 : index
    %462 = vector.load %arg18[%c0_159, %c0_160] : memref<8x40xf32, #tpu.memory_space<vmem>>, vector<8x40xf32>
    %cst_161 = arith.constant dense<0.000000e+00> : vector<12x40xf32>
    %463 = tpu.matmul %461, %462, %cst_161 {dimension_numbers = #tpu.dot_dimension_numbers<[1], [0], [0], [1], [0, 0, 1, 1], [], []>} : vector<12x8xf32>, vector<8x40xf32>, vector<12x40xf32> -> vector<12x40xf32>
    %cst_162 = arith.constant dense<0xFF800000> : vector<12xf32>
    %464 = vector.multi_reduction <maximumf>, %463, %cst_162 [1] : vector<12x40xf32> to vector<12xf32>
    %465 = vector.shape_cast %464 : vector<12xf32> to vector<12x1xf32>
    %466 = vector.broadcast %465 : vector<12x1xf32> to vector<12x40xf32>
    %467 = arith.subf %463, %466 : vector<12x40xf32>
    %468 = vector.broadcast %465 : vector<12x1xf32> to vector<12x40xf32>
    %469 = arith.subf %463, %468 : vector<12x40xf32>
    %470 = math.exp %469 : vector<12x40xf32>
    %cst_163 = arith.constant dense<0.000000e+00> : vector<12xf32>
    %471 = vector.multi_reduction <add>, %470, %cst_163 [1] : vector<12x40xf32> to vector<12xf32>
    %472 = vector.shape_cast %471 : vector<12xf32> to vector<12x1xf32>
    %473 = math.log %472 : vector<12x1xf32>
    %474 = vector.broadcast %473 : vector<12x1xf32> to vector<12x40xf32>
    %475 = arith.subf %467, %474 : vector<12x40xf32>
    %476 = vector.extract_strided_slice %408 {offsets = [0, 42], sizes = [12, 1], strides = [1, 1]} : vector<12x44xf32> to vector<12x1xf32>
    %477 = vector.broadcast %476 : vector<12x1xf32> to vector<12x40xf32>
    %478 = arith.addf %475, %477 : vector<12x40xf32>
    %c0_164 = arith.constant 0 : index
    %c120 = arith.constant 120 : index
    %479 = vector.load %arg21[%c0_164, %c120] : memref<12x200xf32, #tpu.memory_space<vmem>>, vector<12x40xf32>
    tpu.vector_store %arg21[%c0_164, %c120], %478 {strides = array<i32>} : memref<12x200xf32, #tpu.memory_space<vmem>>, vector<12x40xf32>,
    %c0_165 = arith.constant 0 : index
    %c0_166 = arith.constant 0 : index
    %480 = vector.load %arg19[%c0_165, %c0_166] : memref<64x4xf32, #tpu.memory_space<vmem>>, vector<32x4xf32>
    %cst_167 = arith.constant dense<0.000000e+00> : vector<12x4xf32>
    %481 = tpu.matmul %391, %480, %cst_167 {dimension_numbers = #tpu.dot_dimension_numbers<[1], [0], [0], [1], [0, 0, 1, 1], [], []>} : vector<12x32xf32>, vector<32x4xf32>, vector<12x4xf32> -> vector<12x4xf32>
    %c32_168 = arith.constant 32 : index
    %c0_169 = arith.constant 0 : index
    %482 = vector.load %arg19[%c32_168, %c0_169] : memref<64x4xf32, #tpu.memory_space<vmem>>, vector<32x4xf32>
    %cst_170 = arith.constant dense<0.000000e+00> : vector<12x4xf32>
    %483 = tpu.matmul %201, %482, %cst_170 {dimension_numbers = #tpu.dot_dimension_numbers<[1], [0], [0], [1], [0, 0, 1, 1], [], []>} : vector<12x32xf32>, vector<32x4xf32>, vector<12x4xf32> -> vector<12x4xf32>
    %484 = arith.addf %481, %483 : vector<12x4xf32>
    %c0_171 = arith.constant 0 : index
    %c0_172 = arith.constant 0 : index
    %485 = vector.load %arg20[%c0_171, %c0_172] : memref<4x40xf32, #tpu.memory_space<vmem>>, vector<4x40xf32>
    %cst_173 = arith.constant dense<0.000000e+00> : vector<12x40xf32>
    %486 = tpu.matmul %484, %485, %cst_173 {dimension_numbers = #tpu.dot_dimension_numbers<[1], [0], [0], [1], [0, 0, 1, 1], [], []>} : vector<12x4xf32>, vector<4x40xf32>, vector<12x40xf32> -> vector<12x40xf32>
    %cst_174 = arith.constant dense<0xFF800000> : vector<12xf32>
    %487 = vector.multi_reduction <maximumf>, %486, %cst_174 [1] : vector<12x40xf32> to vector<12xf32>
    %488 = vector.shape_cast %487 : vector<12xf32> to vector<12x1xf32>
    %489 = vector.broadcast %488 : vector<12x1xf32> to vector<12x40xf32>
    %490 = arith.subf %486, %489 : vector<12x40xf32>
    %491 = vector.broadcast %488 : vector<12x1xf32> to vector<12x40xf32>
    %492 = arith.subf %486, %491 : vector<12x40xf32>
    %493 = math.exp %492 : vector<12x40xf32>
    %cst_175 = arith.constant dense<0.000000e+00> : vector<12xf32>
    %494 = vector.multi_reduction <add>, %493, %cst_175 [1] : vector<12x40xf32> to vector<12xf32>
    %495 = vector.shape_cast %494 : vector<12xf32> to vector<12x1xf32>
    %496 = math.log %495 : vector<12x1xf32>
    %497 = vector.broadcast %496 : vector<12x1xf32> to vector<12x40xf32>
    %498 = arith.subf %490, %497 : vector<12x40xf32>
    %499 = vector.extract_strided_slice %408 {offsets = [0, 43], sizes = [12, 1], strides = [1, 1]} : vector<12x44xf32> to vector<12x1xf32>
    %500 = vector.broadcast %499 : vector<12x1xf32> to vector<12x40xf32>
    %501 = arith.addf %498, %500 : vector<12x40xf32>
    %c0_176 = arith.constant 0 : index
    %c160 = arith.constant 160 : index
    %502 = vector.load %arg21[%c0_176, %c160] : memref<12x200xf32, #tpu.memory_space<vmem>>, vector<12x40xf32>
    tpu.vector_store %arg21[%c0_176, %c160], %501 {strides = array<i32>} : memref<12x200xf32, #tpu.memory_space<vmem>>, vector<12x40xf32>,
    return
  }
  func.func @transform_0(%arg0: i32) -> (i32, i32) {
    %c0_i32 = arith.constant 0 : i32
    %c0_i32_0 = arith.constant 0 : i32
    %c0_i32_1 = arith.constant 0 : i32
    return %c0_i32, %c0_i32_0 : i32, i32
  }
  func.func @transform_1(%arg0: i32) -> (i32, i32) {
    %c0_i32 = arith.constant 0 : i32
    %c0_i32_0 = arith.constant 0 : i32
    %c0_i32_1 = arith.constant 0 : i32
    return %c0_i32, %c0_i32_0 : i32, i32
  }
  func.func @transform_2(%arg0: i32) -> (i32, i32) {
    %c0_i32 = arith.constant 0 : i32
    %c0_i32_0 = arith.constant 0 : i32
    %c0_i32_1 = arith.constant 0 : i32
    return %c0_i32, %c0_i32_0 : i32, i32
  }
  func.func @transform_3(%arg0: i32) -> (i32, i32) {
    %c0_i32 = arith.constant 0 : i32
    %c0_i32_0 = arith.constant 0 : i32
    %c0_i32_1 = arith.constant 0 : i32
    return %c0_i32, %c0_i32_0 : i32, i32
  }
  func.func @transform_4(%arg0: i32) -> (i32, i32) {
    %c0_i32 = arith.constant 0 : i32
    %c0_i32_0 = arith.constant 0 : i32
    %c0_i32_1 = arith.constant 0 : i32
    return %c0_i32, %c0_i32_0 : i32, i32
  }
  func.func @transform_5(%arg0: i32) -> (i32, i32) {
    %c0_i32 = arith.constant 0 : i32
    %c0_i32_0 = arith.constant 0 : i32
    %c0_i32_1 = arith.constant 0 : i32
    return %c0_i32, %c0_i32_0 : i32, i32
  }
  func.func @transform_6(%arg0: i32) -> (i32, i32) {
    %c0_i32 = arith.constant 0 : i32
    %c0_i32_0 = arith.constant 0 : i32
    %c0_i32_1 = arith.constant 0 : i32
    return %c0_i32, %c0_i32_0 : i32, i32
  }
  func.func @transform_7(%arg0: i32) -> (i32, i32) {
    %c0_i32 = arith.constant 0 : i32
    %c0_i32_0 = arith.constant 0 : i32
    %c0_i32_1 = arith.constant 0 : i32
    return %c0_i32, %c0_i32_0 : i32, i32
  }
  func.func @transform_8(%arg0: i32) -> (i32, i32) {
    %c0_i32 = arith.constant 0 : i32
    %c0_i32_0 = arith.constant 0 : i32
    %c0_i32_1 = arith.constant 0 : i32
    return %c0_i32, %c0_i32_0 : i32, i32
  }
  func.func @transform_9(%arg0: i32) -> (i32, i32) {
    %c0_i32 = arith.constant 0 : i32
    %c0_i32_0 = arith.constant 0 : i32
    %c0_i32_1 = arith.constant 0 : i32
    return %c0_i32, %c0_i32_0 : i32, i32
  }
  func.func @transform_10(%arg0: i32) -> (i32, i32) {
    %c0_i32 = arith.constant 0 : i32
    %c0_i32_0 = arith.constant 0 : i32
    %c0_i32_1 = arith.constant 0 : i32
    return %c0_i32, %c0_i32_0 : i32, i32
  }
  func.func @transform_11(%arg0: i32) -> (i32, i32) {
    %c0_i32 = arith.constant 0 : i32
    %c0_i32_0 = arith.constant 0 : i32
    %c0_i32_1 = arith.constant 0 : i32
    return %c0_i32, %c0_i32_0 : i32, i32
  }
  func.func @transform_12(%arg0: i32) -> (i32, i32) {
    %c0_i32 = arith.constant 0 : i32
    %c0_i32_0 = arith.constant 0 : i32
    %c0_i32_1 = arith.constant 0 : i32
    return %c0_i32, %c0_i32_0 : i32, i32
  }
  func.func @transform_13(%arg0: i32) -> (i32, i32) {
    %c0_i32 = arith.constant 0 : i32
    %c0_i32_0 = arith.constant 0 : i32
    %c0_i32_1 = arith.constant 0 : i32
    return %c0_i32, %c0_i32_0 : i32, i32
  }
  func.func @transform_14(%arg0: i32) -> (i32, i32) {
    %c0_i32 = arith.constant 0 : i32
    %c0_i32_0 = arith.constant 0 : i32
    %c0_i32_1 = arith.constant 0 : i32
    return %c0_i32, %c0_i32_0 : i32, i32
  }
  func.func @transform_15(%arg0: i32) -> (i32, i32) {
    %c0_i32 = arith.constant 0 : i32
    %c0_i32_0 = arith.constant 0 : i32
    %c0_i32_1 = arith.constant 0 : i32
    return %c0_i32, %c0_i32_0 : i32, i32
  }
  func.func @transform_16(%arg0: i32) -> (i32, i32) {
    %c0_i32 = arith.constant 0 : i32
    %c0_i32_0 = arith.constant 0 : i32
    %c0_i32_1 = arith.constant 0 : i32
    return %c0_i32, %c0_i32_0 : i32, i32
  }
  func.func @transform_17(%arg0: i32) -> (i32, i32) {
    %c0_i32 = arith.constant 0 : i32
    %c0_i32_0 = arith.constant 0 : i32
    %c0_i32_1 = arith.constant 0 : i32
    return %c0_i32, %c0_i32_0 : i32, i32
  }
  func.func @transform_18(%arg0: i32) -> (i32, i32) {
    %c0_i32 = arith.constant 0 : i32
    %c0_i32_0 = arith.constant 0 : i32
    %c0_i32_1 = arith.constant 0 : i32
    return %c0_i32, %c0_i32_0 : i32, i32
  }
  func.func @transform_19(%arg0: i32) -> (i32, i32) {
    %c0_i32 = arith.constant 0 : i32
    %c0_i32_0 = arith.constant 0 : i32
    %c0_i32_1 = arith.constant 0 : i32
    return %c0_i32, %c0_i32_0 : i32, i32
  }
  func.func @transform_20(%arg0: i32) -> (i32, i32) {
    %c0_i32 = arith.constant 0 : i32
    %c0_i32_0 = arith.constant 0 : i32
    %c0_i32_1 = arith.constant 0 : i32
    return %c0_i32, %c0_i32_0 : i32, i32
  }
}

</mosaic_0001>

<llo_original>
// kernel: custom-call.10
$region0: #{custom-call.10}
  %s0 = inlined_call_operand.vmem [shape: f32[6,2], index: 0, kind: output, shape index: {}]

// kernel: custom-call.2
$region0: #{custom-call.2}
  %s0 = inlined_call_operand.vmem [shape: f32[2], index: 0, kind: output, shape index: {}]

// kernel: model_forward.3
$region0: #{model_forward.3}
  #allocation0 [shape = 'u32[]', space=smem, size = 0x4, offset = 0x4, fixed_abs, tag = 'smem constant byte address 0x4 - core index']
  #allocation1 [shape = 'u32[72,128]{1,0:T(1,128)}', space=vmem, size = 0x9000, scoped, tag = 'internal scratch']
  #allocation2 [shape = 'f32[12,32]{1,0:T(8,128)}', space=vmem, size = 0x2000, scoped, tag = 'scratch operand']
  #allocation3 [shape = 'f32[12,32]{1,0:T(8,128)}', space=vmem, size = 0x2000, scoped, tag = 'scratch operand']
  %s0 = inlined_call_operand.vmem [shape: f32[12,32], index: 0, kind: input, shape index: {}]
  %s1 = inlined_call_operand.vmem [shape: f32[32,128], index: 1, kind: input, shape index: {}]
  %s2 = inlined_call_operand.vmem [shape: f32[1,128], index: 2, kind: input, shape index: {}]
  %s3 = inlined_call_operand.vmem [shape: f32[32,128], index: 3, kind: input, shape index: {}]
  %s4 = inlined_call_operand.vmem [shape: f32[18,64], index: 4, kind: input, shape index: {}]
  %s5 = inlined_call_operand.vmem [shape: f32[32,32], index: 5, kind: input, shape index: {}]
  %s6 = inlined_call_operand.vmem [shape: f32[1,32], index: 6, kind: input, shape index: {}]
  %s7 = inlined_call_operand.vmem [shape: f32[64,64], index: 7, kind: input, shape index: {}]
  %s8 = inlined_call_operand.vmem [shape: f32[1,64], index: 8, kind: input, shape index: {}]
  %s9 = inlined_call_operand.vmem [shape: f32[32,32], index: 9, kind: input, shape index: {}]
  %s10 = inlined_call_operand.vmem [shape: f32[1,32], index: 10, kind: input, shape index: {}]
  %s11 = inlined_call_operand.vmem [shape: f32[64,44], index: 11, kind: input, shape index: {}]
  %s12 = inlined_call_operand.vmem [shape: f32[64,32], index: 12, kind: input, shape index: {}]
  %s13 = inlined_call_operand.vmem [shape: f32[32,40], index: 13, kind: input, shape index: {}]
  %s14 = inlined_call_operand.vmem [shape: f32[64,16], index: 14, kind: input, shape index: {}]
  %s15 = inlined_call_operand.vmem [shape: f32[16,40], index: 15, kind: input, shape index: {}]
  %s16 = inlined_call_operand.vmem [shape: f32[64,8], index: 16, kind: input, shape index: {}]
  %s17 = inlined_call_operand.vmem [shape: f32[8,40], index: 17, kind: input, shape index: {}]
  %s18 = inlined_call_operand.vmem [shape: f32[64,4], index: 18, kind: input, shape index: {}]
  %s19 = inlined_call_operand.vmem [shape: f32[4,40], index: 19, kind: input, shape index: {}]
  %s20 = inlined_call_operand.vmem [shape: f32[12,200], index: 20, kind: output, shape index: {}]
  %s21 = sld [smem:[#allocation0]]
  $region90: #{model_forward.3} parent=0
    _
  %s23 = ssub.s32 1, %s21
  %s24 = scalar_select 0, %s23, %s21
  // Predicated region
  $region2: #{model_forward.3} parent=0 // pred_check
    _
  $region3: #{model_forward.3} parent=0 // pred_check_branch
    %26 = sbr.rel (0) target = $region5
  $region4: #{model_forward.3} parent=0 // pred_region
    _
  $region5: #{model_forward.3} parent=0 // pred_fallthru
    _
  // Predicated region
  $region6: #{model_forward.3} parent=0 // pred_check
    _
  $region7: #{model_forward.3} parent=0 // pred_check_branch
    %28 = sbr.rel (0) target = $region9
  $region8: #{model_forward.3} parent=0 // pred_region
    _
  $region9: #{model_forward.3} parent=0 // pred_fallthru
    _
  // Predicated region
  $region10: #{model_forward.3} parent=0 // pred_check
    _
  $region11: #{model_forward.3} parent=0 // pred_check_branch
    %30 = sbr.rel (0) target = $region13
  $region12: #{model_forward.3} parent=0 // pred_region
    _
  $region13: #{model_forward.3} parent=0 // pred_fallthru
    _
  // Predicated region
  $region14: #{model_forward.3} parent=0 // pred_check
    _
  $region15: #{model_forward.3} parent=0 // pred_check_branch
    %32 = sbr.rel (0) target = $region17
  $region16: #{model_forward.3} parent=0 // pred_region
    _
  $region17: #{model_forward.3} parent=0 // pred_fallthru
    _
  // Predicated region
  $region18: #{model_forward.3} parent=0 // pred_check
    _
  $region19: #{model_forward.3} parent=0 // pred_check_branch
    %34 = sbr.rel (0) target = $region21
  $region20: #{model_forward.3} parent=0 // pred_region
    _
  $region21: #{model_forward.3} parent=0 // pred_fallthru
    _
  // Predicated region
  $region22: #{model_forward.3} parent=0 // pred_check
    _
  $region23: #{model_forward.3} parent=0 // pred_check_branch
    %36 = sbr.rel (0) target = $region25
  $region24: #{model_forward.3} parent=0 // pred_region
    _
  $region25: #{model_forward.3} parent=0 // pred_fallthru
    _
  // Predicated region
  $region26: #{model_forward.3} parent=0 // pred_check
    _
  $region27: #{model_forward.3} parent=0 // pred_check_branch
    %38 = sbr.rel (0) target = $region29
  $region28: #{model_forward.3} parent=0 // pred_region
    _
  $region29: #{model_forward.3} parent=0 // pred_fallthru
    _
  // Predicated region
  $region30: #{model_forward.3} parent=0 // pred_check
    _
  $region31: #{model_forward.3} parent=0 // pred_check_branch
    %40 = sbr.rel (0) target = $region33
  $region32: #{model_forward.3} parent=0 // pred_region
    _
  $region33: #{model_forward.3} parent=0 // pred_fallthru
    _
  // Predicated region
  $region34: #{model_forward.3} parent=0 // pred_check
    _
  $region35: #{model_forward.3} parent=0 // pred_check_branch
    %42 = sbr.rel (0) target = $region37
  $region36: #{model_forward.3} parent=0 // pred_region
    _
  $region37: #{model_forward.3} parent=0 // pred_fallthru
    _
  // Predicated region
  $region38: #{model_forward.3} parent=0 // pred_check
    _
  $region39: #{model_forward.3} parent=0 // pred_check_branch
    %44 = sbr.rel (0) target = $region41
  $region40: #{model_forward.3} parent=0 // pred_region
    _
  $region41: #{model_forward.3} parent=0 // pred_fallthru
    _
  // Predicated region
  $region42: #{model_forward.3} parent=0 // pred_check
    _
  $region43: #{model_forward.3} parent=0 // pred_check_branch
    %46 = sbr.rel (0) target = $region45
  $region44: #{model_forward.3} parent=0 // pred_region
    _
  $region45: #{model_forward.3} parent=0 // pred_fallthru
    _
  // Predicated region
  $region46: #{model_forward.3} parent=0 // pred_check
    _
  $region47: #{model_forward.3} parent=0 // pred_check_branch
    %48 = sbr.rel (0) target = $region49
  $region48: #{model_forward.3} parent=0 // pred_region
    _
  $region49: #{model_forward.3} parent=0 // pred_fallthru
    _
  // Predicated region
  $region50: #{model_forward.3} parent=0 // pred_check
    _
  $region51: #{model_forward.3} parent=0 // pred_check_branch
    %50 = sbr.rel (0) target = $region53
  $region52: #{model_forward.3} parent=0 // pred_region
    _
  $region53: #{model_forward.3} parent=0 // pred_fallthru
    _
  // Predicated region
  $region54: #{model_forward.3} parent=0 // pred_check
    _
  $region55: #{model_forward.3} parent=0 // pred_check_branch
    %52 = sbr.rel (0) target = $region57
  $region56: #{model_forward.3} parent=0 // pred_region
    _
  $region57: #{model_forward.3} parent=0 // pred_fallthru
    _
  // Predicated region
  $region58: #{model_forward.3} parent=0 // pred_check
    _
  $region59: #{model_forward.3} parent=0 // pred_check_branch
    %54 = sbr.rel (0) target = $region61
  $region60: #{model_forward.3} parent=0 // pred_region
    _
  $region61: #{model_forward.3} parent=0 // pred_fallthru
    _
  // Predicated region
  $region62: #{model_forward.3} parent=0 // pred_check
    _
  $region63: #{model_forward.3} parent=0 // pred_check_branch
    %56 = sbr.rel (0) target = $region65
  $region64: #{model_forward.3} parent=0 // pred_region
    _
  $region65: #{model_forward.3} parent=0 // pred_fallthru
    _
  // Predicated region
  $region66: #{model_forward.3} parent=0 // pred_check
    _
  $region67: #{model_forward.3} parent=0 // pred_check_branch
    %58 = sbr.rel (0) target = $region69
  $region68: #{model_forward.3} parent=0 // pred_region
    _
  $region69: #{model_forward.3} parent=0 // pred_fallthru
    _
  // Predicated region
  $region70: #{model_forward.3} parent=0 // pred_check
    _
  $region71: #{model_forward.3} parent=0 // pred_check_branch
    %60 = sbr.rel (0) target = $region73
  $region72: #{model_forward.3} parent=0 // pred_region
    _
  $region73: #{model_forward.3} parent=0 // pred_fallthru
    _
  // Predicated region
  $region74: #{model_forward.3} parent=0 // pred_check
    _
  $region75: #{model_forward.3} parent=0 // pred_check_branch
    %62 = sbr.rel (0) target = $region77
  $region76: #{model_forward.3} parent=0 // pred_region
    _
  $region77: #{model_forward.3} parent=0 // pred_fallthru
    _
  // Predicated region
  $region78: #{model_forward.3} parent=0 // pred_check
    _
  $region79: #{model_forward.3} parent=0 // pred_check_branch
    %64 = sbr.rel (0) target = $region81
  $region80: #{model_forward.3} parent=0 // pred_region
    _
  $region81: #{model_forward.3} parent=0 // pred_fallthru
    _
  %v65 = vld [vmem:[%s0] sm:$0xff]
  %v66 = vld [vmem:[%s0 + $0x8] sm:$0xf]
  %v67 = vld [vmem:[%s1] sm:$0xff]
  %v68 = vld [vmem:[%s1 + $0x8] sm:$0xff]
  %v69 = vld [vmem:[%s1 + $0x10] sm:$0xff]
  %v70 = vld [vmem:[%s1 + $0x18] sm:$0xff]
  %v71 = vld [vmem:[%s2] sm:$0x1]
  %v73 = vperm.slane %v71, 0
  %vm75 = vcmask 261120
  %v77 = vsel %vm75, %v65, 0
  %v80 = vsel %vm75, %v66, 0
  %82 = vmatpush.msra.mxu0 0.0
  %83 = vmatpush.msra.mxu0 0.0
  %84 = vmatpush.msra.mxu0 0.0
  %85 = vmatpush.msra.mxu0 0.0
  %86 = vmatpush.msra.mxu0 0.0
  %87 = vmatpush.msra.mxu0 0.0
  %88 = vmatpush.msra.mxu0 0.0
  %89 = vmatpush.msra.mxu0 0.0
  %90 = vmatpush.msra.mxu0 0.0
  %91 = vmatpush.msra.mxu0 0.0
  %92 = vmatpush.msra.mxu0 0.0
  %93 = vmatpush.msra.mxu0 0.0
  %94 = vmatpush.msra.mxu0 %v70
  %95 = vmatpush.msra.mxu0 %v69
  %96 = vmatpush.msra.mxu0 %v68
  %97 = vmatpush.msra.mxu0 %v67
  %98 = vmatmul.f32.gmra.mxu0 %v77
  %v99 = vpop.f32.mrf.mxu0
  %v100 = vadd.f32 %v73, %v99
  %101 = vmatmul.f32.gmra.mxu0 %v80
  %v102 = vpop.f32.mrf.mxu0
  %v103 = vadd.f32 %v73, %v102
  %104 = vdwg.mxu0
  %v105 = vld [vmem:[%s3] sm:$0xff]
  %v106 = vld [vmem:[%s3 + $0x8] sm:$0xff]
  %v107 = vld [vmem:[%s3 + $0x10] sm:$0xff]
  %v108 = vld [vmem:[%s3 + $0x18] sm:$0xff]
  %v110 = vsel %vm75, 0.0, 0
  %112 = vmatpush.msra.mxu0 0.0
  %113 = vmatpush.msra.mxu0 0.0
  %114 = vmatpush.msra.mxu0 0.0
  %115 = vmatpush.msra.mxu0 0.0
  %116 = vmatpush.msra.mxu0 0.0
  %117 = vmatpush.msra.mxu0 0.0
  %118 = vmatpush.msra.mxu0 0.0
  %119 = vmatpush.msra.mxu0 0.0
  %120 = vmatpush.msra.mxu0 0.0
  %121 = vmatpush.msra.mxu0 0.0
  %122 = vmatpush.msra.mxu0 0.0
  %123 = vmatpush.msra.mxu0 0.0
  %124 = vmatpush.msra.mxu0 %v108
  %125 = vmatpush.msra.mxu0 %v107
  %126 = vmatpush.msra.mxu0 %v106
  %127 = vmatpush.msra.mxu0 %v105
  %128 = vmatmul.f32.gmra.mxu0 %v110
  %v129 = vpop.f32.mrf.mxu0
  %v130 = vadd.f32 0.0, %v129
  %131 = vdwg.mxu0
  %v132 = vadd.f32 %v100, %v130
  %v133 = vxor.u32 %v132, 2147483648
  %v134 = vmul.f32 %v133, 1.442695
  %v135 = vpow.pop %v134
  %v136 = vadd.f32 %v135, 1.0
  %v137 = vrcp.pop %v136
  %v138 = vmul.f32 %v136, %v137
  %v139 = vsub.f32 1.0, %v138
  %v140 = vmul.f32 %v137, %v139
  %v141 = vadd.f32 %v137, %v140
  %vm142 = vweird.f32 %v136
  %vm143 = vweird.f32 %v137
  %vm144 = vmor %vm142, %vm143
  %v145 = vsel %vm144, %v137, %v141
  %v146 = vand.u32 2147483647, %v136
  %vm147 = vcmp.eq.f32.partialorder %v146, 8.507059e+37
  %v148 = vand.u32 %v136, 2147483648
  %v149 = vor.u32 1.1754944e-38, %v148
  %v150 = vsel %vm147, %v149, %v145
  %v151 = vmul.f32 1.0, %v150
  %v152 = vtanh.pop %v132
  %v153 = vmul.f32 %v151, 0.0
  %155 = vrot.lane.b32.xlu0 %v152, 64
  %v156 = vpop.permute.xlu0 %155
  %v158 = vmul.f32 %v151, %v156
  %160 = vrot.lane.b32.xlu0 %v158, 32
  %v161 = vpop.permute.xlu0 %160
  %v163 = vadd.f32 %v153, %v161
  %v164 = vtanh.pop %v163
  %166 = vrot.lane.b32.xlu0 %v164, 64
  %v167 = vpop.permute.xlu0 %166
  %v169 = vmul.f32 %v151, %v167
  %171 = vrot.lane.b32.xlu0 %v169, 32
  %v172 = vpop.permute.xlu0 %171
  %vm174 = vcmask 253952
  %175 = vst.msk [vmem:[#allocation2] sm:$0x1] %vm174, %v172
  %vm176 = vcmask 254977
  %177 = vst.msk [vmem:[#allocation2 + $0x5] sm:$0x2] %vm176, %v172
  %v178 = vsel %vm75, %v172, 0
  %180 = vmatpush.msra.mxu0 0.0
  %181 = vmatpush.msra.mxu0 0.0
  %182 = vmatpush.msra.mxu0 0.0
  %183 = vmatpush.msra.mxu0 0.0
  %184 = vmatpush.msra.mxu0 0.0
  %185 = vmatpush.msra.mxu0 0.0
  %186 = vmatpush.msra.mxu0 0.0
  %187 = vmatpush.msra.mxu0 0.0
  %188 = vmatpush.msra.mxu0 0.0
  %189 = vmatpush.msra.mxu0 0.0
  %190 = vmatpush.msra.mxu0 0.0
  %191 = vmatpush.msra.mxu0 0.0
  %192 = vmatpush.msra.mxu0 %v108
  %193 = vmatpush.msra.mxu0 %v107
  %194 = vmatpush.msra.mxu0 %v106
  %195 = vmatpush.msra.mxu0 %v105
  %196 = vmatmul.f32.gmra.mxu0 %v178
  %v197 = vpop.f32.mrf.mxu0
  %v198 = vadd.f32 0.0, %v197
  %199 = vdwg.mxu0
  %v201 = vrot.slane %v198, 6
  %v203 = vadd.f32 %v100, %v201
  %v204 = vxor.u32 %v203, 2147483648
  %v205 = vmul.f32 %v204, 1.442695
  %v206 = vpow.pop %v205
  %v207 = vadd.f32 %v206, 1.0
  %v208 = vrcp.pop %v207
  %v209 = vmul.f32 %v207, %v208
  %v210 = vsub.f32 1.0, %v209
  %v211 = vmul.f32 %v208, %v210
  %v212 = vadd.f32 %v208, %v211
  %vm213 = vweird.f32 %v207
  %vm214 = vweird.f32 %v208
  %vm215 = vmor %vm213, %vm214
  %v216 = vsel %vm215, %v208, %v212
  %v217 = vand.u32 2147483647, %v207
  %vm218 = vcmp.eq.f32.partialorder %v217, 8.507059e+37
  %v219 = vand.u32 %v207, 2147483648
  %v220 = vor.u32 1.1754944e-38, %v219
  %v221 = vsel %vm218, %v220, %v216
  %v222 = vmul.f32 1.0, %v221
  %v223 = vtanh.pop %v203
  %v225 = vrot.slane %v163, 6
  %v227 = vmul.f32 %v222, %v225
  %229 = vrot.lane.b32.xlu0 %v223, 64
  %v230 = vpop.permute.xlu0 %229
  %v232 = vmul.f32 %v222, %v230
  %234 = vrot.lane.b32.xlu0 %v232, 32
  %v235 = vpop.permute.xlu0 %234
  %v237 = vadd.f32 %v227, %v235
  %v238 = vtanh.pop %v237
  %240 = vrot.lane.b32.xlu0 %v238, 64
  %v241 = vpop.permute.xlu0 %240
  %v243 = vmul.f32 %v222, %v241
  %245 = vrot.lane.b32.xlu0 %v243, 32
  %v246 = vpop.permute.xlu0 %245
  %vm248 = vcmask 256002
  %249 = vst.msk [vmem:[#allocation2 - $0x1] sm:$0x4] %vm248, %v246
  %vm250 = vcmask 257027
  %251 = vst.msk [vmem:[#allocation2 + $0x4] sm:$0x8] %vm250, %v246
  %v252 = vrot.slane %v243, 2
  %253 = vrot.lane.b32.xlu0 %v252, 32
  %v254 = vpop.permute.xlu0 %253
  %v255 = vsel %vm75, %v254, 0
  %257 = vmatpush.msra.mxu0 0.0
  %258 = vmatpush.msra.mxu0 0.0
  %259 = vmatpush.msra.mxu0 0.0
  %260 = vmatpush.msra.mxu0 0.0
  %261 = vmatpush.msra.mxu0 0.0
  %262 = vmatpush.msra.mxu0 0.0
  %263 = vmatpush.msra.mxu0 0.0
  %264 = vmatpush.msra.mxu0 0.0
  %265 = vmatpush.msra.mxu0 0.0
  %266 = vmatpush.msra.mxu0 0.0
  %267 = vmatpush.msra.mxu0 0.0
  %268 = vmatpush.msra.mxu0 0.0
  %269 = vmatpush.msra.mxu0 %v108
  %270 = vmatpush.msra.mxu0 %v107
  %271 = vmatpush.msra.mxu0 %v106
  %272 = vmatpush.msra.mxu0 %v105
  %273 = vmatmul.f32.gmra.mxu0 %v255
  %v274 = vpop.f32.mrf.mxu0
  %v275 = vadd.f32 0.0, %v274
  %276 = vdwg.mxu0
  %v278 = vrot.slane %v275, 4
  %v280 = vadd.f32 %v100, %v278
  %v281 = vxor.u32 %v280, 2147483648
  %v282 = vmul.f32 %v281, 1.442695
  %v283 = vpow.pop %v282
  %v284 = vadd.f32 %v283, 1.0
  %v285 = vrcp.pop %v284
  %v286 = vmul.f32 %v284, %v285
  %v287 = vsub.f32 1.0, %v286
  %v288 = vmul.f32 %v285, %v287
  %v289 = vadd.f32 %v285, %v288
  %vm290 = vweird.f32 %v284
  %vm291 = vweird.f32 %v285
  %vm292 = vmor %vm290, %vm291
  %v293 = vsel %vm292, %v285, %v289
  %v294 = vand.u32 2147483647, %v284
  %vm295 = vcmp.eq.f32.partialorder %v294, 8.507059e+37
  %v296 = vand.u32 %v284, 2147483648
  %v297 = vor.u32 1.1754944e-38, %v296
  %v298 = vsel %vm295, %v297, %v293
  %v299 = vmul.f32 1.0, %v298
  %v300 = vtanh.pop %v280
  %v302 = vrot.slane %v237, 6
  %v304 = vmul.f32 %v299, %v302
  %306 = vrot.lane.b32.xlu0 %v300, 64
  %v307 = vpop.permute.xlu0 %306
  %v309 = vmul.f32 %v299, %v307
  %311 = vrot.lane.b32.xlu0 %v309, 32
  %v312 = vpop.permute.xlu0 %311
  %v314 = vadd.f32 %v304, %v312
  %v315 = vtanh.pop %v314
  %317 = vrot.lane.b32.xlu0 %v315, 64
  %v318 = vpop.permute.xlu0 %317
  %v320 = vmul.f32 %v299, %v318
  %322 = vrot.lane.b32.xlu0 %v320, 32
  %v323 = vpop.permute.xlu0 %322
  %vm325 = vcmask 258052
  %326 = vst.msk [vmem:[#allocation2 - $0x2] sm:$0x10] %vm325, %v323
  %vm327 = vcmask 259077
  %328 = vst.msk [vmem:[#allocation2 + $0x3] sm:$0x20] %vm327, %v323
  %v329 = vrot.slane %v320, 4
  %330 = vrot.lane.b32.xlu0 %v329, 32
  %v331 = vpop.permute.xlu0 %330
  %v332 = vsel %vm75, %v331, 0
  %334 = vmatpush.msra.mxu0 0.0
  %335 = vmatpush.msra.mxu0 0.0
  %336 = vmatpush.msra.mxu0 0.0
  %337 = vmatpush.msra.mxu0 0.0
  %338 = vmatpush.msra.mxu0 0.0
  %339 = vmatpush.msra.mxu0 0.0
  %340 = vmatpush.msra.mxu0 0.0
  %341 = vmatpush.msra.mxu0 0.0
  %342 = vmatpush.msra.mxu0 0.0
  %343 = vmatpush.msra.mxu0 0.0
  %344 = vmatpush.msra.mxu0 0.0
  %345 = vmatpush.msra.mxu0 0.0
  %346 = vmatpush.msra.mxu0 %v108
  %347 = vmatpush.msra.mxu0 %v107
  %348 = vmatpush.msra.mxu0 %v106
  %349 = vmatpush.msra.mxu0 %v105
  %350 = vmatmul.f32.gmra.mxu0 %v332
  %v351 = vpop.f32.mrf.mxu0
  %v352 = vadd.f32 0.0, %v351
  %353 = vdwg.mxu0
  %v355 = vrot.slane %v352, 2
  %v357 = vadd.f32 %v100, %v355
  %v358 = vxor.u32 %v357, 2147483648
  %v359 = vmul.f32 %v358, 1.442695
  %v360 = vpow.pop %v359
  %v361 = vadd.f32 %v360, 1.0
  %v362 = vrcp.pop %v361
  %v363 = vmul.f32 %v361, %v362
  %v364 = vsub.f32 1.0, %v363
  %v365 = vmul.f32 %v362, %v364
  %v366 = vadd.f32 %v362, %v365
  %vm367 = vweird.f32 %v361
  %vm368 = vweird.f32 %v362
  %vm369 = vmor %vm367, %vm368
  %v370 = vsel %vm369, %v362, %v366
  %v371 = vand.u32 2147483647, %v361
  %vm372 = vcmp.eq.f32.partialorder %v371, 8.507059e+37
  %v373 = vand.u32 %v361, 2147483648
  %v374 = vor.u32 1.1754944e-38, %v373
  %v375 = vsel %vm372, %v374, %v370
  %v376 = vmul.f32 1.0, %v375
  %v377 = vtanh.pop %v357
  %v379 = vrot.slane %v314, 6
  %v381 = vmul.f32 %v376, %v379
  %383 = vrot.lane.b32.xlu0 %v377, 64
  %v384 = vpop.permute.xlu0 %383
  %v386 = vmul.f32 %v376, %v384
  %388 = vrot.lane.b32.xlu0 %v386, 32
  %v389 = vpop.permute.xlu0 %388
  %v391 = vadd.f32 %v381, %v389
  %v392 = vtanh.pop %v391
  %394 = vrot.lane.b32.xlu0 %v392, 64
  %v395 = vpop.permute.xlu0 %394
  %v397 = vmul.f32 %v376, %v395
  %399 = vrot.lane.b32.xlu0 %v397, 32
  %v400 = vpop.permute.xlu0 %399
  %vm402 = vcmask 260102
  %403 = vst.msk [vmem:[#allocation2 - $0x3] sm:$0x40] %vm402, %v400
  %vm404 = vcmask 261127
  %405 = vst.msk [vmem:[#allocation2 + $0x2] sm:$0x80] %vm404, %v400
  %v406 = vrot.slane %v397, 6
  %407 = vrot.lane.b32.xlu0 %v406, 32
  %v408 = vpop.permute.xlu0 %407
  %v409 = vsel %vm75, %v408, 0
  %411 = vmatpush.msra.mxu0 0.0
  %412 = vmatpush.msra.mxu0 0.0
  %413 = vmatpush.msra.mxu0 0.0
  %414 = vmatpush.msra.mxu0 0.0
  %415 = vmatpush.msra.mxu0 0.0
  %416 = vmatpush.msra.mxu0 0.0
  %417 = vmatpush.msra.mxu0 0.0
  %418 = vmatpush.msra.mxu0 0.0
  %419 = vmatpush.msra.mxu0 0.0
  %420 = vmatpush.msra.mxu0 0.0
  %421 = vmatpush.msra.mxu0 0.0
  %422 = vmatpush.msra.mxu0 0.0
  %423 = vmatpush.msra.mxu0 %v108
  %424 = vmatpush.msra.mxu0 %v107
  %425 = vmatpush.msra.mxu0 %v106
  %426 = vmatpush.msra.mxu0 %v105
  %427 = vmatmul.f32.gmra.mxu0 %v409
  %v428 = vpop.f32.mrf.mxu0
  %v429 = vadd.f32 0.0, %v428
  %430 = vdwg.mxu0
  %v431 = vadd.f32 %v103, %v429
  %v432 = vxor.u32 %v431, 2147483648
  %v433 = vmul.f32 %v432, 1.442695
  %v434 = vpow.pop %v433
  %v435 = vadd.f32 %v434, 1.0
  %v436 = vrcp.pop %v435
  %v437 = vmul.f32 %v435, %v436
  %v438 = vsub.f32 1.0, %v437
  %v439 = vmul.f32 %v436, %v438
  %v440 = vadd.f32 %v436, %v439
  %vm441 = vweird.f32 %v435
  %vm442 = vweird.f32 %v436
  %vm443 = vmor %vm441, %vm442
  %v444 = vsel %vm443, %v436, %v440
  %v445 = vand.u32 2147483647, %v435
  %vm446 = vcmp.eq.f32.partialorder %v445, 8.507059e+37
  %v447 = vand.u32 %v435, 2147483648
  %v448 = vor.u32 1.1754944e-38, %v447
  %v449 = vsel %vm446, %v448, %v444
  %v450 = vmul.f32 1.0, %v449
  %v451 = vtanh.pop %v431
  %v453 = vrot.slane %v391, 6
  %v455 = vmul.f32 %v450, %v453
  %457 = vrot.lane.b32.xlu0 %v451, 64
  %v458 = vpop.permute.xlu0 %457
  %v460 = vmul.f32 %v450, %v458
  %462 = vrot.lane.b32.xlu0 %v460, 32
  %v463 = vpop.permute.xlu0 %462
  %v465 = vadd.f32 %v455, %v463
  %v466 = vtanh.pop %v465
  %468 = vrot.lane.b32.xlu0 %v466, 64
  %v469 = vpop.permute.xlu0 %468
  %v471 = vmul.f32 %v450, %v469
  %473 = vrot.lane.b32.xlu0 %v471, 32
  %v474 = vpop.permute.xlu0 %473
  %476 = vst.msk [vmem:[#allocation2 + $0x4] sm:$0x1] %vm174, %v474
  %477 = vst.msk [vmem:[#allocation2 + $0x9] sm:$0x2] %vm176, %v474
  %v478 = vsel %vm75, %v474, 0
  %480 = vmatpush.msra.mxu0 0.0
  %481 = vmatpush.msra.mxu0 0.0
  %482 = vmatpush.msra.mxu0 0.0
  %483 = vmatpush.msra.mxu0 0.0
  %484 = vmatpush.msra.mxu0 0.0
  %485 = vmatpush.msra.mxu0 0.0
  %486 = vmatpush.msra.mxu0 0.0
  %487 = vmatpush.msra.mxu0 0.0
  %488 = vmatpush.msra.mxu0 0.0
  %489 = vmatpush.msra.mxu0 0.0
  %490 = vmatpush.msra.mxu0 0.0
  %491 = vmatpush.msra.mxu0 0.0
  %492 = vmatpush.msra.mxu0 %v108
  %493 = vmatpush.msra.mxu0 %v107
  %494 = vmatpush.msra.mxu0 %v106
  %495 = vmatpush.msra.mxu0 %v105
  %496 = vmatmul.f32.gmra.mxu0 %v478
  %v497 = vpop.f32.mrf.mxu0
  %v498 = vadd.f32 0.0, %v497
  %499 = vdwg.mxu0
  %v501 = vrot.slane %v498, 6
  %v503 = vadd.f32 %v103, %v501
  %v504 = vxor.u32 %v503, 2147483648
  %v505 = vmul.f32 %v504, 1.442695
  %v506 = vpow.pop %v505
  %v507 = vadd.f32 %v506, 1.0
  %v508 = vrcp.pop %v507
  %v509 = vmul.f32 %v507, %v508
  %v510 = vsub.f32 1.0, %v509
  %v511 = vmul.f32 %v508, %v510
  %v512 = vadd.f32 %v508, %v511
  %vm513 = vweird.f32 %v507
  %vm514 = vweird.f32 %v508
  %vm515 = vmor %vm513, %vm514
  %v516 = vsel %vm515, %v508, %v512
  %v517 = vand.u32 2147483647, %v507
  %vm518 = vcmp.eq.f32.partialorder %v517, 8.507059e+37
  %v519 = vand.u32 %v507, 2147483648
  %v520 = vor.u32 1.1754944e-38, %v519
  %v521 = vsel %vm518, %v520, %v516
  %v522 = vmul.f32 1.0, %v521
  %v523 = vtanh.pop %v503
  %v525 = vrot.slane %v465, 6
  %v527 = vmul.f32 %v522, %v525
  %529 = vrot.lane.b32.xlu0 %v523, 64
  %v530 = vpop.permute.xlu0 %529
  %v532 = vmul.f32 %v522, %v530
  %534 = vrot.lane.b32.xlu0 %v532, 32
  %v535 = vpop.permute.xlu0 %534
  %v537 = vadd.f32 %v527, %v535
  %v538 = vtanh.pop %v537
  %540 = vrot.lane.b32.xlu0 %v538, 64
  %v541 = vpop.permute.xlu0 %540
  %v543 = vmul.f32 %v522, %v541
  %545 = vrot.lane.b32.xlu0 %v543, 32
  %v546 = vpop.permute.xlu0 %545
  %548 = vst.msk [vmem:[#allocation2 + $0x3] sm:$0x4] %vm248, %v546
  %549 = vst.msk [vmem:[#allocation2 + $0x8] sm:$0x8] %vm250, %v546
  %v550 = vld [vmem:[#allocation2] sm:$0xff]
  %v551 = vld [vmem:[#allocation2 + $0x8] sm:$0xf]
  %v552 = vld [vmem:[%s4] sm:$0xff]
  %v553 = vld [vmem:[%s4 + $0x8] sm:$0xff]
  %v554 = vld [vmem:[%s4 + $0x10] sm:$0x3]
  %v555 = vld [vmem:[%s5] sm:$0xff]
  %v556 = vld [vmem:[%s5 + $0x8] sm:$0xff]
  %v557 = vld [vmem:[%s5 + $0x10] sm:$0xff]
  %v558 = vld [vmem:[%s5 + $0x18] sm:$0xff]
  %v559 = vld [vmem:[%s6] sm:$0x1]
  %v561 = vperm.slane %v559, 0
  %v564 = vsel %vm75, %v550, 0
  %v567 = vsel %vm75, %v551, 0
  %569 = vmatpush.msra.mxu0 0.0
  %570 = vmatpush.msra.mxu0 0.0
  %571 = vmatpush.msra.mxu0 0.0
  %572 = vmatpush.msra.mxu0 0.0
  %573 = vmatpush.msra.mxu0 0.0
  %574 = vmatpush.msra.mxu0 0.0
  %575 = vmatpush.msra.mxu0 0.0
  %576 = vmatpush.msra.mxu0 0.0
  %577 = vmatpush.msra.mxu0 0.0
  %578 = vmatpush.msra.mxu0 0.0
  %579 = vmatpush.msra.mxu0 0.0
  %580 = vmatpush.msra.mxu0 0.0
  %581 = vmatpush.msra.mxu0 %v558
  %582 = vmatpush.msra.mxu0 %v557
  %583 = vmatpush.msra.mxu0 %v556
  %584 = vmatpush.msra.mxu0 %v555
  %585 = vmatmul.f32.gmra.mxu0 %v564
  %v586 = vpop.f32.mrf.mxu0
  %v587 = vadd.f32 %v561, %v586
  %588 = vmatmul.f32.gmra.mxu0 %v567
  %v589 = vpop.f32.mrf.mxu0
  %v590 = vadd.f32 %v561, %v589
  %591 = vdwg.mxu0
  %v592 = vld [vmem:[%s7] sm:$0xff]
  %v593 = vld [vmem:[%s7 + $0x8] sm:$0xff]
  %v594 = vld [vmem:[%s7 + $0x10] sm:$0xff]
  %v595 = vld [vmem:[%s7 + $0x18] sm:$0xff]
  %v596 = vld [vmem:[%s7 + $0x20] sm:$0xff]
  %v597 = vld [vmem:[%s7 + $0x28] sm:$0xff]
  %v598 = vld [vmem:[%s7 + $0x30] sm:$0xff]
  %v599 = vld [vmem:[%s7 + $0x38] sm:$0xff]
  %v600 = vld [vmem:[%s8] sm:$0x1]
  %v602 = vperm.slane %v600, 0
  %vm604 = vcmask 523264
  %v606 = vsel %vm604, %v552, 0
  %v609 = vsel %vm604, %v553, 0
  %v612 = vsel %vm604, %v554, 0
  %614 = vmatpush.msra.mxu0 0.0
  %615 = vmatpush.msra.mxu0 0.0
  %616 = vmatpush.msra.mxu0 0.0
  %617 = vmatpush.msra.mxu0 0.0
  %618 = vmatpush.msra.mxu0 0.0
  %619 = vmatpush.msra.mxu0 0.0
  %620 = vmatpush.msra.mxu0 0.0
  %621 = vmatpush.msra.mxu0 0.0
  %622 = vmatpush.msra.mxu0 %v599
  %623 = vmatpush.msra.mxu0 %v598
  %624 = vmatpush.msra.mxu0 %v597
  %625 = vmatpush.msra.mxu0 %v596
  %626 = vmatpush.msra.mxu0 %v595
  %627 = vmatpush.msra.mxu0 %v594
  %628 = vmatpush.msra.mxu0 %v593
  %629 = vmatpush.msra.mxu0 %v592
  %630 = vmatmul.f32.gmra.mxu0 %v606
  %v631 = vpop.f32.mrf.mxu0
  %v632 = vadd.f32 %v602, %v631
  %633 = vmatmul.f32.gmra.mxu0 %v609
  %v634 = vpop.f32.mrf.mxu0
  %v635 = vadd.f32 %v602, %v634
  %636 = vmatmul.f32.gmra.mxu0 %v612
  %v637 = vpop.f32.mrf.mxu0
  %v638 = vadd.f32 %v602, %v637
  %639 = vdwg.mxu0
  %v640 = vld [vmem:[%s9] sm:$0xff]
  %v641 = vld [vmem:[%s9 + $0x8] sm:$0xff]
  %v642 = vld [vmem:[%s9 + $0x10] sm:$0xff]
  %v643 = vld [vmem:[%s9 + $0x18] sm:$0xff]
  %v644 = vld [vmem:[%s10] sm:$0x1]
  %v646 = vperm.slane %v644, 0
  %v648 = vadd.f32 %v646, 0.0
  %vm649 = vcmask 64512
  %v651 = vsel %vm649, %v587, 0
  %v654 = vsel %vm649, %v632, 0
  %v657 = vsel %vm649, %v635, 0
  %659 = vmatpush.xpose.msra.mxu0 0.0
  %660 = vmatpush.xpose.msra.mxu0 0.0
  %661 = vmatpush.xpose.msra.mxu0 0.0
  %662 = vmatpush.xpose.msra.mxu0 0.0
  %663 = vmatpush.xpose.msra.mxu0 0.0
  %664 = vmatpush.xpose.msra.mxu0 0.0
  %665 = vmatpush.xpose.msra.mxu0 0.0
  %666 = vmatpush.xpose.msra.mxu0 0.0
  %667 = vmatpush.xpose.msra.mxu0 0.0
  %668 = vmatpush.xpose.msra.mxu0 0.0
  %669 = vmatpush.xpose.msra.mxu0 0.0
  %670 = vmatpush.xpose.msra.mxu0 0.0
  %671 = vmatpush.xpose.msra.mxu0 0.0
  %672 = vmatpush.xpose.msra.mxu0 0.0
  %673 = vmatpush.xpose.msra.mxu0 %v657
  %674 = vmatpush.xpose.msra.mxu0 %v654
  %675 = vmatmul.f32.gmra.mxu0 %v651
  %v676 = vpop.f32.mrf.mxu0
  %v677 = vadd.f32 0.0, %v676
  %678 = vdwg.mxu0
  %v679 = vmul.f32 %v677, 0.35355338
  %vm680 = vcmask 70656
  %v681 = vsel %vm680, %v679, -inf
  %682 = vmax.xlane.f32.xlu0 %v681
  %v683 = vpop.xlane.xlu0 %682
  %v684 = vsub.f32 %v679, %v683
  %v685 = vmul.f32 %v684, 1.442695
  %v686 = vpow.pop %v685
  %v687 = vsel %vm680, %v686, 0.0
  %688 = vadd.xlane.f32.xlu0 %v687
  %v689 = vpop.xlane.xlu0 %688
  %v690 = vrcp.pop %v689
  %v691 = vmul.f32 %v686, %v690
  %692 = vrot.lane.b32.xlu0 %v632, 96
  %v693 = vpop.permute.xlu0 %692
  %694 = vrot.lane.b32.xlu0 %v635, 96
  %v695 = vpop.permute.xlu0 %694
  %vm697 = vcmask 72704
  %v699 = vsel %vm697, %v691, 0
  %vm701 = vcmask 1040384
  %v702 = vsel %vm701, %v695, 0
  %704 = vmatpush.msra.mxu0 0.0
  %705 = vmatpush.msra.mxu0 0.0
  %706 = vmatpush.msra.mxu0 0.0
  %707 = vmatpush.msra.mxu0 0.0
  %708 = vmatpush.msra.mxu0 0.0
  %709 = vmatpush.msra.mxu0 0.0
  %710 = vmatpush.msra.mxu0 0.0
  %711 = vmatpush.msra.mxu0 0.0
  %712 = vmatpush.msra.mxu0 0.0
  %713 = vmatpush.msra.mxu0 0.0
  %714 = vmatpush.msra.mxu0 0.0
  %715 = vmatpush.msra.mxu0 0.0
  %716 = vmatpush.msra.mxu0 0.0
  %717 = vmatpush.msra.mxu0 0.0
  %718 = vmatpush.msra.mxu0 %v702
  %719 = vmatpush.msra.mxu0 %v693
  %720 = vmatmul.f32.gmra.mxu0 %v699
  %v721 = vpop.f32.mrf.mxu0
  %v722 = vadd.f32 0.0, %v721
  %723 = vdwg.mxu0
  %v725 = vsel %vm649, %v722, 0
  %727 = vmatpush.msra.mxu0 0.0
  %728 = vmatpush.msra.mxu0 0.0
  %729 = vmatpush.msra.mxu0 0.0
  %730 = vmatpush.msra.mxu0 0.0
  %731 = vmatpush.msra.mxu0 0.0
  %732 = vmatpush.msra.mxu0 0.0
  %733 = vmatpush.msra.mxu0 0.0
  %734 = vmatpush.msra.mxu0 0.0
  %735 = vmatpush.msra.mxu0 0.0
  %736 = vmatpush.msra.mxu0 0.0
  %737 = vmatpush.msra.mxu0 0.0
  %738 = vmatpush.msra.mxu0 0.0
  %739 = vmatpush.msra.mxu0 0.0
  %740 = vmatpush.msra.mxu0 0.0
  %741 = vmatpush.msra.mxu0 0.0
  %742 = vmatpush.msra.mxu0 %v640
  %743 = vmatmul.f32.gmra.mxu0 %v725
  %v744 = vpop.f32.mrf.mxu0
  %v745 = vadd.f32 0.0, %v744
  %746 = vdwg.mxu0
  %v747 = vadd.f32 %v648, %v745
  %748 = vrot.lane.b32.xlu0 %v587, 120
  %v749 = vpop.permute.xlu0 %748
  %750 = vrot.lane.b32.xlu0 %v632, 120
  %v751 = vpop.permute.xlu0 %750
  %752 = vrot.lane.b32.xlu0 %v635, 120
  %v753 = vpop.permute.xlu0 %752
  %v754 = vsel %vm649, %v749, 0
  %v756 = vsel %vm649, %v751, 0
  %v758 = vsel %vm649, %v753, 0
  %760 = vmatpush.xpose.msra.mxu0 0.0
  %761 = vmatpush.xpose.msra.mxu0 0.0
  %762 = vmatpush.xpose.msra.mxu0 0.0
  %763 = vmatpush.xpose.msra.mxu0 0.0
  %764 = vmatpush.xpose.msra.mxu0 0.0
  %765 = vmatpush.xpose.msra.mxu0 0.0
  %766 = vmatpush.xpose.msra.mxu0 0.0
  %767 = vmatpush.xpose.msra.mxu0 0.0
  %768 = vmatpush.xpose.msra.mxu0 0.0
  %769 = vmatpush.xpose.msra.mxu0 0.0
  %770 = vmatpush.xpose.msra.mxu0 0.0
  %771 = vmatpush.xpose.msra.mxu0 0.0
  %772 = vmatpush.xpose.msra.mxu0 0.0
  %773 = vmatpush.xpose.msra.mxu0 0.0
  %774 = vmatpush.xpose.msra.mxu0 %v758
  %775 = vmatpush.xpose.msra.mxu0 %v756
  %776 = vmatmul.f32.gmra.mxu0 %v754
  %v777 = vpop.f32.mrf.mxu0
  %v778 = vadd.f32 0.0, %v777
  %779 = vdwg.mxu0
  %v780 = vmul.f32 %v778, 0.35355338
  %v781 = vsel %vm680, %v780, -inf
  %782 = vmax.xlane.f32.xlu0 %v781
  %v783 = vpop.xlane.xlu0 %782
  %v784 = vsub.f32 %v780, %v783
  %v785 = vmul.f32 %v784, 1.442695
  %v786 = vpow.pop %v785
  %v787 = vsel %vm680, %v786, 0.0
  %788 = vadd.xlane.f32.xlu0 %v787
  %v789 = vpop.xlane.xlu0 %788
  %v790 = vrcp.pop %v789
  %v791 = vmul.f32 %v786, %v790
  %792 = vrot.lane.b32.xlu0 %v632, 88
  %v793 = vpop.permute.xlu0 %792
  %794 = vrot.lane.b32.xlu0 %v635, 88
  %v795 = vpop.permute.xlu0 %794
  %v798 = vsel %vm697, %v791, 0
  %v800 = vsel %vm701, %v795, 0
  %802 = vmatpush.msra.mxu0 0.0
  %803 = vmatpush.msra.mxu0 0.0
  %804 = vmatpush.msra.mxu0 0.0
  %805 = vmatpush.msra.mxu0 0.0
  %806 = vmatpush.msra.mxu0 0.0
  %807 = vmatpush.msra.mxu0 0.0
  %808 = vmatpush.msra.mxu0 0.0
  %809 = vmatpush.msra.mxu0 0.0
  %810 = vmatpush.msra.mxu0 0.0
  %811 = vmatpush.msra.mxu0 0.0
  %812 = vmatpush.msra.mxu0 0.0
  %813 = vmatpush.msra.mxu0 0.0
  %814 = vmatpush.msra.mxu0 0.0
  %815 = vmatpush.msra.mxu0 0.0
  %816 = vmatpush.msra.mxu0 %v800
  %817 = vmatpush.msra.mxu0 %v793
  %818 = vmatmul.f32.gmra.mxu0 %v798
  %v819 = vpop.f32.mrf.mxu0
  %v820 = vadd.f32 0.0, %v819
  %821 = vdwg.mxu0
  %v823 = vsel %vm649, %v820, 0
  %825 = vmatpush.msra.mxu0 0.0
  %826 = vmatpush.msra.mxu0 0.0
  %827 = vmatpush.msra.mxu0 0.0
  %828 = vmatpush.msra.mxu0 0.0
  %829 = vmatpush.msra.mxu0 0.0
  %830 = vmatpush.msra.mxu0 0.0
  %831 = vmatpush.msra.mxu0 0.0
  %832 = vmatpush.msra.mxu0 0.0
  %833 = vmatpush.msra.mxu0 0.0
  %834 = vmatpush.msra.mxu0 0.0
  %835 = vmatpush.msra.mxu0 0.0
  %836 = vmatpush.msra.mxu0 0.0
  %837 = vmatpush.msra.mxu0 0.0
  %838 = vmatpush.msra.mxu0 0.0
  %839 = vmatpush.msra.mxu0 0.0
  %840 = vmatpush.msra.mxu0 %v641
  %841 = vmatmul.f32.gmra.mxu0 %v823
  %v842 = vpop.f32.mrf.mxu0
  %v843 = vadd.f32 0.0, %v842
  %844 = vdwg.mxu0
  %v845 = vadd.f32 %v747, %v843
  %846 = vrot.lane.b32.xlu0 %v587, 112
  %v847 = vpop.permute.xlu0 %846
  %848 = vrot.lane.b32.xlu0 %v632, 112
  %v849 = vpop.permute.xlu0 %848
  %850 = vrot.lane.b32.xlu0 %v635, 112
  %v851 = vpop.permute.xlu0 %850
  %v852 = vsel %vm649, %v847, 0
  %v854 = vsel %vm649, %v849, 0
  %v856 = vsel %vm649, %v851, 0
  %858 = vmatpush.xpose.msra.mxu0 0.0
  %859 = vmatpush.xpose.msra.mxu0 0.0
  %860 = vmatpush.xpose.msra.mxu0 0.0
  %861 = vmatpush.xpose.msra.mxu0 0.0
  %862 = vmatpush.xpose.msra.mxu0 0.0
  %863 = vmatpush.xpose.msra.mxu0 0.0
  %864 = vmatpush.xpose.msra.mxu0 0.0
  %865 = vmatpush.xpose.msra.mxu0 0.0
  %866 = vmatpush.xpose.msra.mxu0 0.0
  %867 = vmatpush.xpose.msra.mxu0 0.0
  %868 = vmatpush.xpose.msra.mxu0 0.0
  %869 = vmatpush.xpose.msra.mxu0 0.0
  %870 = vmatpush.xpose.msra.mxu0 0.0
  %871 = vmatpush.xpose.msra.mxu0 0.0
  %872 = vmatpush.xpose.msra.mxu0 %v856
  %873 = vmatpush.xpose.msra.mxu0 %v854
  %874 = vmatmul.f32.gmra.mxu0 %v852
  %v875 = vpop.f32.mrf.mxu0
  %v876 = vadd.f32 0.0, %v875
  %877 = vdwg.mxu0
  %v878 = vmul.f32 %v876, 0.35355338
  %v879 = vsel %vm680, %v878, -inf
  %880 = vmax.xlane.f32.xlu0 %v879
  %v881 = vpop.xlane.xlu0 %880
  %v882 = vsub.f32 %v878, %v881
  %v883 = vmul.f32 %v882, 1.442695
  %v884 = vpow.pop %v883
  %v885 = vsel %vm680, %v884, 0.0
  %886 = vadd.xlane.f32.xlu0 %v885
  %v887 = vpop.xlane.xlu0 %886
  %v888 = vrcp.pop %v887
  %v889 = vmul.f32 %v884, %v888
  %890 = vrot.lane.b32.xlu0 %v632, 80
  %v891 = vpop.permute.xlu0 %890
  %892 = vrot.lane.b32.xlu0 %v635, 80
  %v893 = vpop.permute.xlu0 %892
  %v896 = vsel %vm697, %v889, 0
  %v898 = vsel %vm701, %v893, 0
  %900 = vmatpush.msra.mxu0 0.0
  %901 = vmatpush.msra.mxu0 0.0
  %902 = vmatpush.msra.mxu0 0.0
  %903 = vmatpush.msra.mxu0 0.0
  %904 = vmatpush.msra.mxu0 0.0
  %905 = vmatpush.msra.mxu0 0.0
  %906 = vmatpush.msra.mxu0 0.0
  %907 = vmatpush.msra.mxu0 0.0
  %908 = vmatpush.msra.mxu0 0.0
  %909 = vmatpush.msra.mxu0 0.0
  %910 = vmatpush.msra.mxu0 0.0
  %911 = vmatpush.msra.mxu0 0.0
  %912 = vmatpush.msra.mxu0 0.0
  %913 = vmatpush.msra.mxu0 0.0
  %914 = vmatpush.msra.mxu0 %v898
  %915 = vmatpush.msra.mxu0 %v891
  %916 = vmatmul.f32.gmra.mxu0 %v896
  %v917 = vpop.f32.mrf.mxu0
  %v918 = vadd.f32 0.0, %v917
  %919 = vdwg.mxu0
  %v921 = vsel %vm649, %v918, 0
  %923 = vmatpush.msra.mxu0 0.0
  %924 = vmatpush.msra.mxu0 0.0
  %925 = vmatpush.msra.mxu0 0.0
  %926 = vmatpush.msra.mxu0 0.0
  %927 = vmatpush.msra.mxu0 0.0
  %928 = vmatpush.msra.mxu0 0.0
  %929 = vmatpush.msra.mxu0 0.0
  %930 = vmatpush.msra.mxu0 0.0
  %931 = vmatpush.msra.mxu0 0.0
  %932 = vmatpush.msra.mxu0 0.0
  %933 = vmatpush.msra.mxu0 0.0
  %934 = vmatpush.msra.mxu0 0.0
  %935 = vmatpush.msra.mxu0 0.0
  %936 = vmatpush.msra.mxu0 0.0
  %937 = vmatpush.msra.mxu0 0.0
  %938 = vmatpush.msra.mxu0 %v642
  %939 = vmatmul.f32.gmra.mxu0 %v921
  %v940 = vpop.f32.mrf.mxu0
  %v941 = vadd.f32 0.0, %v940
  %942 = vdwg.mxu0
  %v943 = vadd.f32 %v845, %v941
  %944 = vrot.lane.b32.xlu0 %v587, 104
  %v945 = vpop.permute.xlu0 %944
  %946 = vrot.lane.b32.xlu0 %v632, 104
  %v947 = vpop.permute.xlu0 %946
  %948 = vrot.lane.b32.xlu0 %v635, 104
  %v949 = vpop.permute.xlu0 %948
  %v950 = vsel %vm649, %v945, 0
  %v952 = vsel %vm649, %v947, 0
  %v954 = vsel %vm649, %v949, 0
  %956 = vmatpush.xpose.msra.mxu0 0.0
  %957 = vmatpush.xpose.msra.mxu0 0.0
  %958 = vmatpush.xpose.msra.mxu0 0.0
  %959 = vmatpush.xpose.msra.mxu0 0.0
  %960 = vmatpush.xpose.msra.mxu0 0.0
  %961 = vmatpush.xpose.msra.mxu0 0.0
  %962 = vmatpush.xpose.msra.mxu0 0.0
  %963 = vmatpush.xpose.msra.mxu0 0.0
  %964 = vmatpush.xpose.msra.mxu0 0.0
  %965 = vmatpush.xpose.msra.mxu0 0.0
  %966 = vmatpush.xpose.msra.mxu0 0.0
  %967 = vmatpush.xpose.msra.mxu0 0.0
  %968 = vmatpush.xpose.msra.mxu0 0.0
  %969 = vmatpush.xpose.msra.mxu0 0.0
  %970 = vmatpush.xpose.msra.mxu0 %v954
  %971 = vmatpush.xpose.msra.mxu0 %v952
  %972 = vmatmul.f32.gmra.mxu0 %v950
  %v973 = vpop.f32.mrf.mxu0
  %v974 = vadd.f32 0.0, %v973
  %975 = vdwg.mxu0
  %v976 = vmul.f32 %v974, 0.35355338
  %v977 = vsel %vm680, %v976, -inf
  %978 = vmax.xlane.f32.xlu0 %v977
  %v979 = vpop.xlane.xlu0 %978
  %v980 = vsub.f32 %v976, %v979
  %v981 = vmul.f32 %v980, 1.442695
  %v982 = vpow.pop %v981
  %v983 = vsel %vm680, %v982, 0.0
  %984 = vadd.xlane.f32.xlu0 %v983
  %v985 = vpop.xlane.xlu0 %984
  %v986 = vrcp.pop %v985
  %v987 = vmul.f32 %v982, %v986
  %988 = vrot.lane.b32.xlu0 %v632, 72
  %v989 = vpop.permute.xlu0 %988
  %990 = vrot.lane.b32.xlu0 %v635, 72
  %v991 = vpop.permute.xlu0 %990
  %v994 = vsel %vm697, %v987, 0
  %v996 = vsel %vm701, %v991, 0
  %998 = vmatpush.msra.mxu0 0.0
  %999 = vmatpush.msra.mxu0 0.0
  %1000 = vmatpush.msra.mxu0 0.0
  %1001 = vmatpush.msra.mxu0 0.0
  %1002 = vmatpush.msra.mxu0 0.0
  %1003 = vmatpush.msra.mxu0 0.0
  %1004 = vmatpush.msra.mxu0 0.0
  %1005 = vmatpush.msra.mxu0 0.0
  %1006 = vmatpush.msra.mxu0 0.0
  %1007 = vmatpush.msra.mxu0 0.0
  %1008 = vmatpush.msra.mxu0 0.0
  %1009 = vmatpush.msra.mxu0 0.0
  %1010 = vmatpush.msra.mxu0 0.0
  %1011 = vmatpush.msra.mxu0 0.0
  %1012 = vmatpush.msra.mxu0 %v996
  %1013 = vmatpush.msra.mxu0 %v989
  %1014 = vmatmul.f32.gmra.mxu0 %v994
  %v1015 = vpop.f32.mrf.mxu0
  %v1016 = vadd.f32 0.0, %v1015
  %1017 = vdwg.mxu0
  %v1019 = vsel %vm649, %v1016, 0
  %1021 = vmatpush.msra.mxu0 0.0
  %1022 = vmatpush.msra.mxu0 0.0
  %1023 = vmatpush.msra.mxu0 0.0
  %1024 = vmatpush.msra.mxu0 0.0
  %1025 = vmatpush.msra.mxu0 0.0
  %1026 = vmatpush.msra.mxu0 0.0
  %1027 = vmatpush.msra.mxu0 0.0
  %1028 = vmatpush.msra.mxu0 0.0
  %1029 = vmatpush.msra.mxu0 0.0
  %1030 = vmatpush.msra.mxu0 0.0
  %1031 = vmatpush.msra.mxu0 0.0
  %1032 = vmatpush.msra.mxu0 0.0
  %1033 = vmatpush.msra.mxu0 0.0
  %1034 = vmatpush.msra.mxu0 0.0
  %1035 = vmatpush.msra.mxu0 0.0
  %1036 = vmatpush.msra.mxu0 %v643
  %1037 = vmatmul.f32.gmra.mxu0 %v1019
  %v1038 = vpop.f32.mrf.mxu0
  %v1039 = vadd.f32 0.0, %v1038
  %1040 = vdwg.mxu0
  %v1041 = vadd.f32 %v943, %v1039
  %vm1042 = vcmask 259072
  %1043 = vst.msk [vmem:[#allocation3] sm:$0x3f] %vm1042, %v1041
  %vm1045 = vcmask 1041408
  %v1046 = vrot.slane %v587, 6
  %v1047 = vrot.slane %v590, 6
  %v1048 = vsel %vm1045, %v1046, %v1047
  %vm1050 = vcmask 1046528
  %v1051 = vrot.slane %v635, 1
  %v1052 = vrot.slane %v638, 1
  %v1053 = vsel %vm1050, %v1051, %v1052
  %v1054 = vsel %vm649, %v1048, 0
  %v1056 = vsel %vm649, %v1053, 0
  %v1058 = vsel %vm649, %v1052, 0
  %1060 = vmatpush.xpose.msra.mxu0 0.0
  %1061 = vmatpush.xpose.msra.mxu0 0.0
  %1062 = vmatpush.xpose.msra.mxu0 0.0
  %1063 = vmatpush.xpose.msra.mxu0 0.0
  %1064 = vmatpush.xpose.msra.mxu0 0.0
  %1065 = vmatpush.xpose.msra.mxu0 0.0
  %1066 = vmatpush.xpose.msra.mxu0 0.0
  %1067 = vmatpush.xpose.msra.mxu0 0.0
  %1068 = vmatpush.xpose.msra.mxu0 0.0
  %1069 = vmatpush.xpose.msra.mxu0 0.0
  %1070 = vmatpush.xpose.msra.mxu0 0.0
  %1071 = vmatpush.xpose.msra.mxu0 0.0
  %1072 = vmatpush.xpose.msra.mxu0 0.0
  %1073 = vmatpush.xpose.msra.mxu0 0.0
  %1074 = vmatpush.xpose.msra.mxu0 %v1058
  %1075 = vmatpush.xpose.msra.mxu0 %v1056
  %1076 = vmatmul.f32.gmra.mxu0 %v1054
  %v1077 = vpop.f32.mrf.mxu0
  %v1078 = vadd.f32 0.0, %v1077
  %1079 = vdwg.mxu0
  %v1080 = vmul.f32 %v1078, 0.35355338
  %v1081 = vsel %vm680, %v1080, -inf
  %1082 = vmax.xlane.f32.xlu0 %v1081
  %v1083 = vpop.xlane.xlu0 %1082
  %v1084 = vsub.f32 %v1080, %v1083
  %v1085 = vmul.f32 %v1084, 1.442695
  %v1086 = vpow.pop %v1085
  %v1087 = vsel %vm680, %v1086, 0.0
  %1088 = vadd.xlane.f32.xlu0 %v1087
  %v1089 = vpop.xlane.xlu0 %1088
  %v1090 = vrcp.pop %v1089
  %v1091 = vmul.f32 %v1086, %v1090
  %1092 = vrot.lane.b32.xlu0 %v1053, 96
  %v1093 = vpop.permute.xlu0 %1092
  %1094 = vrot.lane.b32.xlu0 %v1052, 96
  %v1095 = vpop.permute.xlu0 %1094
  %v1098 = vsel %vm697, %v1091, 0
  %v1100 = vsel %vm701, %v1095, 0
  %1102 = vmatpush.msra.mxu0 0.0
  %1103 = vmatpush.msra.mxu0 0.0
  %1104 = vmatpush.msra.mxu0 0.0
  %1105 = vmatpush.msra.mxu0 0.0
  %1106 = vmatpush.msra.mxu0 0.0
  %1107 = vmatpush.msra.mxu0 0.0
  %1108 = vmatpush.msra.mxu0 0.0
  %1109 = vmatpush.msra.mxu0 0.0
  %1110 = vmatpush.msra.mxu0 0.0
  %1111 = vmatpush.msra.mxu0 0.0
  %1112 = vmatpush.msra.mxu0 0.0
  %1113 = vmatpush.msra.mxu0 0.0
  %1114 = vmatpush.msra.mxu0 0.0
  %1115 = vmatpush.msra.mxu0 0.0
  %1116 = vmatpush.msra.mxu0 %v1100
  %1117 = vmatpush.msra.mxu0 %v1093
  %1118 = vmatmul.f32.gmra.mxu0 %v1098
  %v1119 = vpop.f32.mrf.mxu0
  %v1120 = vadd.f32 0.0, %v1119
  %1121 = vdwg.mxu0
  %v1123 = vsel %vm649, %v1120, 0
  %1125 = vmatpush.msra.mxu0 0.0
  %1126 = vmatpush.msra.mxu0 0.0
  %1127 = vmatpush.msra.mxu0 0.0
  %1128 = vmatpush.msra.mxu0 0.0
  %1129 = vmatpush.msra.mxu0 0.0
  %1130 = vmatpush.msra.mxu0 0.0
  %1131 = vmatpush.msra.mxu0 0.0
  %1132 = vmatpush.msra.mxu0 0.0
  %1133 = vmatpush.msra.mxu0 0.0
  %1134 = vmatpush.msra.mxu0 0.0
  %1135 = vmatpush.msra.mxu0 0.0
  %1136 = vmatpush.msra.mxu0 0.0
  %1137 = vmatpush.msra.mxu0 0.0
  %1138 = vmatpush.msra.mxu0 0.0
  %1139 = vmatpush.msra.mxu0 0.0
  %1140 = vmatpush.msra.mxu0 %v640
  %1141 = vmatmul.f32.gmra.mxu0 %v1123
  %v1142 = vpop.f32.mrf.mxu0
  %v1143 = vadd.f32 0.0, %v1142
  %1144 = vdwg.mxu0
  %v1145 = vadd.f32 %v648, %v1143
  %1146 = vrot.lane.b32.xlu0 %v1048, 120
  %v1147 = vpop.permute.xlu0 %1146
  %1148 = vrot.lane.b32.xlu0 %v1053, 120
  %v1149 = vpop.permute.xlu0 %1148
  %1150 = vrot.lane.b32.xlu0 %v1052, 120
  %v1151 = vpop.permute.xlu0 %1150
  %v1152 = vsel %vm649, %v1147, 0
  %v1154 = vsel %vm649, %v1149, 0
  %v1156 = vsel %vm649, %v1151, 0
  %1158 = vmatpush.xpose.msra.mxu0 0.0
  %1159 = vmatpush.xpose.msra.mxu0 0.0
  %1160 = vmatpush.xpose.msra.mxu0 0.0
  %1161 = vmatpush.xpose.msra.mxu0 0.0
  %1162 = vmatpush.xpose.msra.mxu0 0.0
  %1163 = vmatpush.xpose.msra.mxu0 0.0
  %1164 = vmatpush.xpose.msra.mxu0 0.0
  %1165 = vmatpush.xpose.msra.mxu0 0.0
  %1166 = vmatpush.xpose.msra.mxu0 0.0
  %1167 = vmatpush.xpose.msra.mxu0 0.0
  %1168 = vmatpush.xpose.msra.mxu0 0.0
  %1169 = vmatpush.xpose.msra.mxu0 0.0
  %1170 = vmatpush.xpose.msra.mxu0 0.0
  %1171 = vmatpush.xpose.msra.mxu0 0.0
  %1172 = vmatpush.xpose.msra.mxu0 %v1156
  %1173 = vmatpush.xpose.msra.mxu0 %v1154
  %1174 = vmatmul.f32.gmra.mxu0 %v1152
  %v1175 = vpop.f32.mrf.mxu0
  %v1176 = vadd.f32 0.0, %v1175
  %1177 = vdwg.mxu0
  %v1178 = vmul.f32 %v1176, 0.35355338
  %v1179 = vsel %vm680, %v1178, -inf
  %1180 = vmax.xlane.f32.xlu0 %v1179
  %v1181 = vpop.xlane.xlu0 %1180
  %v1182 = vsub.f32 %v1178, %v1181
  %v1183 = vmul.f32 %v1182, 1.442695
  %v1184 = vpow.pop %v1183
  %v1185 = vsel %vm680, %v1184, 0.0
  %1186 = vadd.xlane.f32.xlu0 %v1185
  %v1187 = vpop.xlane.xlu0 %1186
  %v1188 = vrcp.pop %v1187
  %v1189 = vmul.f32 %v1184, %v1188
  %1190 = vrot.lane.b32.xlu0 %v1053, 88
  %v1191 = vpop.permute.xlu0 %1190
  %1192 = vrot.lane.b32.xlu0 %v1052, 88
  %v1193 = vpop.permute.xlu0 %1192
  %v1196 = vsel %vm697, %v1189, 0
  %v1198 = vsel %vm701, %v1193, 0
  %1200 = vmatpush.msra.mxu0 0.0
  %1201 = vmatpush.msra.mxu0 0.0
  %1202 = vmatpush.msra.mxu0 0.0
  %1203 = vmatpush.msra.mxu0 0.0
  %1204 = vmatpush.msra.mxu0 0.0
  %1205 = vmatpush.msra.mxu0 0.0
  %1206 = vmatpush.msra.mxu0 0.0
  %1207 = vmatpush.msra.mxu0 0.0
  %1208 = vmatpush.msra.mxu0 0.0
  %1209 = vmatpush.msra.mxu0 0.0
  %1210 = vmatpush.msra.mxu0 0.0
  %1211 = vmatpush.msra.mxu0 0.0
  %1212 = vmatpush.msra.mxu0 0.0
  %1213 = vmatpush.msra.mxu0 0.0
  %1214 = vmatpush.msra.mxu0 %v1198
  %1215 = vmatpush.msra.mxu0 %v1191
  %1216 = vmatmul.f32.gmra.mxu0 %v1196
  %v1217 = vpop.f32.mrf.mxu0
  %v1218 = vadd.f32 0.0, %v1217
  %1219 = vdwg.mxu0
  %v1221 = vsel %vm649, %v1218, 0
  %1223 = vmatpush.msra.mxu0 0.0
  %1224 = vmatpush.msra.mxu0 0.0
  %1225 = vmatpush.msra.mxu0 0.0
  %1226 = vmatpush.msra.mxu0 0.0
  %1227 = vmatpush.msra.mxu0 0.0
  %1228 = vmatpush.msra.mxu0 0.0
  %1229 = vmatpush.msra.mxu0 0.0
  %1230 = vmatpush.msra.mxu0 0.0
  %1231 = vmatpush.msra.mxu0 0.0
  %1232 = vmatpush.msra.mxu0 0.0
  %1233 = vmatpush.msra.mxu0 0.0
  %1234 = vmatpush.msra.mxu0 0.0
  %1235 = vmatpush.msra.mxu0 0.0
  %1236 = vmatpush.msra.mxu0 0.0
  %1237 = vmatpush.msra.mxu0 0.0
  %1238 = vmatpush.msra.mxu0 %v641
  %1239 = vmatmul.f32.gmra.mxu0 %v1221
  %v1240 = vpop.f32.mrf.mxu0
  %v1241 = vadd.f32 0.0, %v1240
  %1242 = vdwg.mxu0
  %v1243 = vadd.f32 %v1145, %v1241
  %1244 = vrot.lane.b32.xlu0 %v1048, 112
  %v1245 = vpop.permute.xlu0 %1244
  %1246 = vrot.lane.b32.xlu0 %v1053, 112
  %v1247 = vpop.permute.xlu0 %1246
  %1248 = vrot.lane.b32.xlu0 %v1052, 112
  %v1249 = vpop.permute.xlu0 %1248
  %v1250 = vsel %vm649, %v1245, 0
  %v1252 = vsel %vm649, %v1247, 0
  %v1254 = vsel %vm649, %v1249, 0
  %1256 = vmatpush.xpose.msra.mxu0 0.0
  %1257 = vmatpush.xpose.msra.mxu0 0.0
  %1258 = vmatpush.xpose.msra.mxu0 0.0
  %1259 = vmatpush.xpose.msra.mxu0 0.0
  %1260 = vmatpush.xpose.msra.mxu0 0.0
  %1261 = vmatpush.xpose.msra.mxu0 0.0
  %1262 = vmatpush.xpose.msra.mxu0 0.0
  %1263 = vmatpush.xpose.msra.mxu0 0.0
  %1264 = vmatpush.xpose.msra.mxu0 0.0
  %1265 = vmatpush.xpose.msra.mxu0 0.0
  %1266 = vmatpush.xpose.msra.mxu0 0.0
  %1267 = vmatpush.xpose.msra.mxu0 0.0
  %1268 = vmatpush.xpose.msra.mxu0 0.0
  %1269 = vmatpush.xpose.msra.mxu0 0.0
  %1270 = vmatpush.xpose.msra.mxu0 %v1254
  %1271 = vmatpush.xpose.msra.mxu0 %v1252
  %1272 = vmatmul.f32.gmra.mxu0 %v1250
  %v1273 = vpop.f32.mrf.mxu0
  %v1274 = vadd.f32 0.0, %v1273
  %1275 = vdwg.mxu0
  %v1276 = vmul.f32 %v1274, 0.35355338
  %v1277 = vsel %vm680, %v1276, -inf
  %1278 = vmax.xlane.f32.xlu0 %v1277
  %v1279 = vpop.xlane.xlu0 %1278
  %v1280 = vsub.f32 %v1276, %v1279
  %v1281 = vmul.f32 %v1280, 1.442695
  %v1282 = vpow.pop %v1281
  %v1283 = vsel %vm680, %v1282, 0.0
  %1284 = vadd.xlane.f32.xlu0 %v1283
  %v1285 = vpop.xlane.xlu0 %1284
  %v1286 = vrcp.pop %v1285
  %v1287 = vmul.f32 %v1282, %v1286
  %1288 = vrot.lane.b32.xlu0 %v1053, 80
  %v1289 = vpop.permute.xlu0 %1288
  %1290 = vrot.lane.b32.xlu0 %v1052, 80
  %v1291 = vpop.permute.xlu0 %1290
  %v1294 = vsel %vm697, %v1287, 0
  %v1296 = vsel %vm701, %v1291, 0
  %1298 = vmatpush.msra.mxu0 0.0
  %1299 = vmatpush.msra.mxu0 0.0
  %1300 = vmatpush.msra.mxu0 0.0
  %1301 = vmatpush.msra.mxu0 0.0
  %1302 = vmatpush.msra.mxu0 0.0
  %1303 = vmatpush.msra.mxu0 0.0
  %1304 = vmatpush.msra.mxu0 0.0
  %1305 = vmatpush.msra.mxu0 0.0
  %1306 = vmatpush.msra.mxu0 0.0
  %1307 = vmatpush.msra.mxu0 0.0
  %1308 = vmatpush.msra.mxu0 0.0
  %1309 = vmatpush.msra.mxu0 0.0
  %1310 = vmatpush.msra.mxu0 0.0
  %1311 = vmatpush.msra.mxu0 0.0
  %1312 = vmatpush.msra.mxu0 %v1296
  %1313 = vmatpush.msra.mxu0 %v1289
  %1314 = vmatmul.f32.gmra.mxu0 %v1294
  %v1315 = vpop.f32.mrf.mxu0
  %v1316 = vadd.f32 0.0, %v1315
  %1317 = vdwg.mxu0
  %v1319 = vsel %vm649, %v1316, 0
  %1321 = vmatpush.msra.mxu0 0.0
  %1322 = vmatpush.msra.mxu0 0.0
  %1323 = vmatpush.msra.mxu0 0.0
  %1324 = vmatpush.msra.mxu0 0.0
  %1325 = vmatpush.msra.mxu0 0.0
  %1326 = vmatpush.msra.mxu0 0.0
  %1327 = vmatpush.msra.mxu0 0.0
  %1328 = vmatpush.msra.mxu0 0.0
  %1329 = vmatpush.msra.mxu0 0.0
  %1330 = vmatpush.msra.mxu0 0.0
  %1331 = vmatpush.msra.mxu0 0.0
  %1332 = vmatpush.msra.mxu0 0.0
  %1333 = vmatpush.msra.mxu0 0.0
  %1334 = vmatpush.msra.mxu0 0.0
  %1335 = vmatpush.msra.mxu0 0.0
  %1336 = vmatpush.msra.mxu0 %v642
  %1337 = vmatmul.f32.gmra.mxu0 %v1319
  %v1338 = vpop.f32.mrf.mxu0
  %v1339 = vadd.f32 0.0, %v1338
  %1340 = vdwg.mxu0
  %v1341 = vadd.f32 %v1243, %v1339
  %1342 = vrot.lane.b32.xlu0 %v1048, 104
  %v1343 = vpop.permute.xlu0 %1342
  %1344 = vrot.lane.b32.xlu0 %v1053, 104
  %v1345 = vpop.permute.xlu0 %1344
  %1346 = vrot.lane.b32.xlu0 %v1052, 104
  %v1347 = vpop.permute.xlu0 %1346
  %v1348 = vsel %vm649, %v1343, 0
  %v1350 = vsel %vm649, %v1345, 0
  %v1352 = vsel %vm649, %v1347, 0
  %1354 = vmatpush.xpose.msra.mxu0 0.0
  %1355 = vmatpush.xpose.msra.mxu0 0.0
  %1356 = vmatpush.xpose.msra.mxu0 0.0
  %1357 = vmatpush.xpose.msra.mxu0 0.0
  %1358 = vmatpush.xpose.msra.mxu0 0.0
  %1359 = vmatpush.xpose.msra.mxu0 0.0
  %1360 = vmatpush.xpose.msra.mxu0 0.0
  %1361 = vmatpush.xpose.msra.mxu0 0.0
  %1362 = vmatpush.xpose.msra.mxu0 0.0
  %1363 = vmatpush.xpose.msra.mxu0 0.0
  %1364 = vmatpush.xpose.msra.mxu0 0.0
  %1365 = vmatpush.xpose.msra.mxu0 0.0
  %1366 = vmatpush.xpose.msra.mxu0 0.0
  %1367 = vmatpush.xpose.msra.mxu0 0.0
  %1368 = vmatpush.xpose.msra.mxu0 %v1352
  %1369 = vmatpush.xpose.msra.mxu0 %v1350
  %1370 = vmatmul.f32.gmra.mxu0 %v1348
  %v1371 = vpop.f32.mrf.mxu0
  %v1372 = vadd.f32 0.0, %v1371
  %1373 = vdwg.mxu0
  %v1374 = vmul.f32 %v1372, 0.35355338
  %v1375 = vsel %vm680, %v1374, -inf
  %1376 = vmax.xlane.f32.xlu0 %v1375
  %v1377 = vpop.xlane.xlu0 %1376
  %v1378 = vsub.f32 %v1374, %v1377
  %v1379 = vmul.f32 %v1378, 1.442695
  %v1380 = vpow.pop %v1379
  %v1381 = vsel %vm680, %v1380, 0.0
  %1382 = vadd.xlane.f32.xlu0 %v1381
  %v1383 = vpop.xlane.xlu0 %1382
  %v1384 = vrcp.pop %v1383
  %v1385 = vmul.f32 %v1380, %v1384
  %1386 = vrot.lane.b32.xlu0 %v1053, 72
  %v1387 = vpop.permute.xlu0 %1386
  %1388 = vrot.lane.b32.xlu0 %v1052, 72
  %v1389 = vpop.permute.xlu0 %1388
  %v1392 = vsel %vm697, %v1385, 0
  %v1394 = vsel %vm701, %v1389, 0
  %1396 = vmatpush.msra.mxu0 0.0
  %1397 = vmatpush.msra.mxu0 0.0
  %1398 = vmatpush.msra.mxu0 0.0
  %1399 = vmatpush.msra.mxu0 0.0
  %1400 = vmatpush.msra.mxu0 0.0
  %1401 = vmatpush.msra.mxu0 0.0
  %1402 = vmatpush.msra.mxu0 0.0
  %1403 = vmatpush.msra.mxu0 0.0
  %1404 = vmatpush.msra.mxu0 0.0
  %1405 = vmatpush.msra.mxu0 0.0
  %1406 = vmatpush.msra.mxu0 0.0
  %1407 = vmatpush.msra.mxu0 0.0
  %1408 = vmatpush.msra.mxu0 0.0
  %1409 = vmatpush.msra.mxu0 0.0
  %1410 = vmatpush.msra.mxu0 %v1394
  %1411 = vmatpush.msra.mxu0 %v1387
  %1412 = vmatmul.f32.gmra.mxu0 %v1392
  %v1413 = vpop.f32.mrf.mxu0
  %v1414 = vadd.f32 0.0, %v1413
  %1415 = vdwg.mxu0
  %v1417 = vsel %vm649, %v1414, 0
  %1419 = vmatpush.msra.mxu0 0.0
  %1420 = vmatpush.msra.mxu0 0.0
  %1421 = vmatpush.msra.mxu0 0.0
  %1422 = vmatpush.msra.mxu0 0.0
  %1423 = vmatpush.msra.mxu0 0.0
  %1424 = vmatpush.msra.mxu0 0.0
  %1425 = vmatpush.msra.mxu0 0.0
  %1426 = vmatpush.msra.mxu0 0.0
  %1427 = vmatpush.msra.mxu0 0.0
  %1428 = vmatpush.msra.mxu0 0.0
  %1429 = vmatpush.msra.mxu0 0.0
  %1430 = vmatpush.msra.mxu0 0.0
  %1431 = vmatpush.msra.mxu0 0.0
  %1432 = vmatpush.msra.mxu0 0.0
  %1433 = vmatpush.msra.mxu0 0.0
  %1434 = vmatpush.msra.mxu0 %v643
  %1435 = vmatmul.f32.gmra.mxu0 %v1417
  %v1436 = vpop.f32.mrf.mxu0
  %v1437 = vadd.f32 0.0, %v1436
  %1438 = vdwg.mxu0
  %v1439 = vadd.f32 %v1341, %v1437
  %1440 = vst.msk [vmem:[#allocation3 + $0x6] sm:$0x3f] %vm1042, %v1439
  %v1441 = vld [vmem:[#allocation3] sm:$0xff]
  %v1442 = vld [vmem:[#allocation3 + $0x8] sm:$0xf]
  %v1443 = vld [vmem:[%s11] sm:$0xff]
  %v1444 = vld [vmem:[%s11 + $0x8] sm:$0xff]
  %v1445 = vld [vmem:[%s11 + $0x10] sm:$0xff]
  %v1446 = vld [vmem:[%s11 + $0x18] sm:$0xff]
  %v1447 = vld [vmem:[%s11 + $0x20] sm:$0xff]
  %v1448 = vld [vmem:[%s11 + $0x28] sm:$0xff]
  %v1449 = vld [vmem:[%s11 + $0x30] sm:$0xff]
  %v1450 = vld [vmem:[%s11 + $0x38] sm:$0xff]
  %1451 = vmatpush.msra.mxu0 0.0
  %1452 = vmatpush.msra.mxu0 0.0
  %1453 = vmatpush.msra.mxu0 0.0
  %1454 = vmatpush.msra.mxu0 0.0
  %1455 = vmatpush.msra.mxu0 0.0
  %1456 = vmatpush.msra.mxu0 0.0
  %1457 = vmatpush.msra.mxu0 0.0
  %1458 = vmatpush.msra.mxu0 0.0
  %1459 = vmatpush.msra.mxu0 0.0
  %1460 = vmatpush.msra.mxu0 0.0
  %1461 = vmatpush.msra.mxu0 0.0
  %1462 = vmatpush.msra.mxu0 0.0
  %1463 = vmatpush.msra.mxu0 %v1450
  %1464 = vmatpush.msra.mxu0 %v1449
  %1465 = vmatpush.msra.mxu0 %v1448
  %1466 = vmatpush.msra.mxu0 %v1447
  %1467 = vmatmul.f32.gmra.mxu0 %v564
  %v1468 = vpop.f32.mrf.mxu0
  %v1469 = vadd.f32 0.0, %v1468
  %1470 = vmatmul.f32.gmra.mxu0 %v567
  %v1471 = vpop.f32.mrf.mxu0
  %v1472 = vadd.f32 0.0, %v1471
  %1473 = vdwg.mxu0
  %v1475 = vsel %vm75, %v1441, 0
  %v1478 = vsel %vm75, %v1442, 0
  %1480 = vmatpush.msra.mxu0 0.0
  %1481 = vmatpush.msra.mxu0 0.0
  %1482 = vmatpush.msra.mxu0 0.0
  %1483 = vmatpush.msra.mxu0 0.0
  %1484 = vmatpush.msra.mxu0 0.0
  %1485 = vmatpush.msra.mxu0 0.0
  %1486 = vmatpush.msra.mxu0 0.0
  %1487 = vmatpush.msra.mxu0 0.0
  %1488 = vmatpush.msra.mxu0 0.0
  %1489 = vmatpush.msra.mxu0 0.0
  %1490 = vmatpush.msra.mxu0 0.0
  %1491 = vmatpush.msra.mxu0 0.0
  %1492 = vmatpush.msra.mxu0 %v1446
  %1493 = vmatpush.msra.mxu0 %v1445
  %1494 = vmatpush.msra.mxu0 %v1444
  %1495 = vmatpush.msra.mxu0 %v1443
  %1496 = vmatmul.f32.gmra.mxu0 %v1475
  %v1497 = vpop.f32.mrf.mxu0
  %v1498 = vadd.f32 %v1469, %v1497
  %1499 = vmatmul.f32.gmra.mxu0 %v1478
  %v1500 = vpop.f32.mrf.mxu0
  %v1501 = vadd.f32 %v1472, %v1500
  %1502 = vdwg.mxu0
  %vm1503 = vcmask 359424
  %v1504 = vsel %vm1503, %v1498, -inf
  %1505 = vmax.xlane.f32.xlu0 %v1504
  %v1506 = vpop.xlane.xlu0 %1505
  %vm1507 = vcmask 355328
  %v1508 = vsel %vm1507, %v1501, -inf
  %1509 = vmax.xlane.f32.xlu0 %v1508
  %v1510 = vpop.xlane.xlu0 %1509
  %v1511 = vsub.f32 %v1498, %v1506
  %v1512 = vsub.f32 %v1501, %v1510
  %v1513 = vmul.f32 %v1511, 1.442695
  %v1514 = vpow.pop %v1513
  %v1515 = vmul.f32 %v1512, 1.442695
  %v1516 = vpow.pop %v1515
  %v1517 = vsel %vm1503, %v1514, 0.0
  %1518 = vadd.xlane.f32.xlu0 %v1517
  %v1519 = vpop.xlane.xlu0 %1518
  %v1520 = vsel %vm1507, %v1516, 0.0
  %1521 = vadd.xlane.f32.xlu0 %v1520
  %v1522 = vpop.xlane.xlu0 %1521
  %v1523 = vlog2.pop %v1519
  %v1524 = vmul.f32 %v1523, 0.6931472
  %v1525 = vlog2.pop %v1522
  %v1526 = vmul.f32 %v1525, 0.6931472
  %v1527 = vsub.f32 %v1511, %v1524
  %v1528 = vsub.f32 %v1512, %v1526
  %vm1529 = vcmask 326656
  %1530 = vst.msk [vmem:[%s20] sm:$0xff] %vm1529, %v1527
  %vm1531 = vcmask 322560
  %1532 = vst.msk [vmem:[%s20 + $0x10] sm:$0xf] %vm1531, %v1528
  %v1533 = vld [vmem:[%s12] sm:$0xff]
  %v1534 = vld [vmem:[%s12 + $0x8] sm:$0xff]
  %v1535 = vld [vmem:[%s12 + $0x10] sm:$0xff]
  %v1536 = vld [vmem:[%s12 + $0x18] sm:$0xff]
  %v1537 = vld [vmem:[%s12 + $0x20] sm:$0xff]
  %v1538 = vld [vmem:[%s12 + $0x28] sm:$0xff]
  %v1539 = vld [vmem:[%s12 + $0x30] sm:$0xff]
  %v1540 = vld [vmem:[%s12 + $0x38] sm:$0xff]
  %1541 = vmatpush.msra.mxu0 0.0
  %1542 = vmatpush.msra.mxu0 0.0
  %1543 = vmatpush.msra.mxu0 0.0
  %1544 = vmatpush.msra.mxu0 0.0
  %1545 = vmatpush.msra.mxu0 0.0
  %1546 = vmatpush.msra.mxu0 0.0
  %1547 = vmatpush.msra.mxu0 0.0
  %1548 = vmatpush.msra.mxu0 0.0
  %1549 = vmatpush.msra.mxu0 0.0
  %1550 = vmatpush.msra.mxu0 0.0
  %1551 = vmatpush.msra.mxu0 0.0
  %1552 = vmatpush.msra.mxu0 0.0
  %1553 = vmatpush.msra.mxu0 %v1540
  %1554 = vmatpush.msra.mxu0 %v1539
  %1555 = vmatpush.msra.mxu0 %v1538
  %1556 = vmatpush.msra.mxu0 %v1537
  %1557 = vmatmul.f32.gmra.mxu0 %v564
  %v1558 = vpop.f32.mrf.mxu0
  %v1559 = vadd.f32 0.0, %v1558
  %1560 = vmatmul.f32.gmra.mxu0 %v567
  %v1561 = vpop.f32.mrf.mxu0
  %v1562 = vadd.f32 0.0, %v1561
  %1563 = vdwg.mxu0
  %1564 = vmatpush.msra.mxu0 0.0
  %1565 = vmatpush.msra.mxu0 0.0
  %1566 = vmatpush.msra.mxu0 0.0
  %1567 = vmatpush.msra.mxu0 0.0
  %1568 = vmatpush.msra.mxu0 0.0
  %1569 = vmatpush.msra.mxu0 0.0
  %1570 = vmatpush.msra.mxu0 0.0
  %1571 = vmatpush.msra.mxu0 0.0
  %1572 = vmatpush.msra.mxu0 0.0
  %1573 = vmatpush.msra.mxu0 0.0
  %1574 = vmatpush.msra.mxu0 0.0
  %1575 = vmatpush.msra.mxu0 0.0
  %1576 = vmatpush.msra.mxu0 %v1536
  %1577 = vmatpush.msra.mxu0 %v1535
  %1578 = vmatpush.msra.mxu0 %v1534
  %1579 = vmatpush.msra.mxu0 %v1533
  %1580 = vmatmul.f32.gmra.mxu0 %v1475
  %v1581 = vpop.f32.mrf.mxu0
  %v1582 = vadd.f32 %v1559, %v1581
  %1583 = vmatmul.f32.gmra.mxu0 %v1478
  %v1584 = vpop.f32.mrf.mxu0
  %v1585 = vadd.f32 %v1562, %v1584
  %1586 = vdwg.mxu0
  %v1587 = vld [vmem:[%s13] sm:$0xff]
  %v1588 = vld [vmem:[%s13 + $0x8] sm:$0xff]
  %v1589 = vld [vmem:[%s13 + $0x10] sm:$0xff]
  %v1590 = vld [vmem:[%s13 + $0x18] sm:$0xff]
  %v1592 = vsel %vm75, %v1582, 0
  %v1595 = vsel %vm75, %v1585, 0
  %1597 = vmatpush.msra.mxu0 0.0
  %1598 = vmatpush.msra.mxu0 0.0
  %1599 = vmatpush.msra.mxu0 0.0
  %1600 = vmatpush.msra.mxu0 0.0
  %1601 = vmatpush.msra.mxu0 0.0
  %1602 = vmatpush.msra.mxu0 0.0
  %1603 = vmatpush.msra.mxu0 0.0
  %1604 = vmatpush.msra.mxu0 0.0
  %1605 = vmatpush.msra.mxu0 0.0
  %1606 = vmatpush.msra.mxu0 0.0
  %1607 = vmatpush.msra.mxu0 0.0
  %1608 = vmatpush.msra.mxu0 0.0
  %1609 = vmatpush.msra.mxu0 %v1590
  %1610 = vmatpush.msra.mxu0 %v1589
  %1611 = vmatpush.msra.mxu0 %v1588
  %1612 = vmatpush.msra.mxu0 %v1587
  %1613 = vmatmul.f32.gmra.mxu0 %v1592
  %v1614 = vpop.f32.mrf.mxu0
  %v1615 = vadd.f32 0.0, %v1614
  %1616 = vmatmul.f32.gmra.mxu0 %v1595
  %v1617 = vpop.f32.mrf.mxu0
  %v1618 = vadd.f32 0.0, %v1617
  %1619 = vdwg.mxu0
  %v1620 = vsel %vm1529, %v1615, -inf
  %1621 = vmax.xlane.f32.xlu0 %v1620
  %v1622 = vpop.xlane.xlu0 %1621
  %v1623 = vsel %vm1531, %v1618, -inf
  %1624 = vmax.xlane.f32.xlu0 %v1623
  %v1625 = vpop.xlane.xlu0 %1624
  %v1626 = vsub.f32 %v1615, %v1622
  %v1627 = vsub.f32 %v1618, %v1625
  %v1628 = vmul.f32 %v1626, 1.442695
  %v1629 = vpow.pop %v1628
  %v1630 = vmul.f32 %v1627, 1.442695
  %v1631 = vpow.pop %v1630
  %v1632 = vsel %vm1529, %v1629, 0.0
  %1633 = vadd.xlane.f32.xlu0 %v1632
  %v1634 = vpop.xlane.xlu0 %1633
  %v1635 = vsel %vm1531, %v1631, 0.0
  %1636 = vadd.xlane.f32.xlu0 %v1635
  %v1637 = vpop.xlane.xlu0 %1636
  %v1638 = vlog2.pop %v1634
  %v1639 = vmul.f32 %v1638, 0.6931472
  %v1640 = vlog2.pop %v1637
  %v1641 = vmul.f32 %v1640, 0.6931472
  %v1642 = vsub.f32 %v1626, %v1639
  %v1643 = vsub.f32 %v1627, %v1641
  %1645 = vset.pattern.permute.xlu0 40
  %1646 = vperm.xlu0 %1645, %v1527
  %v1647 = vpop.permute.xlu0 %1646
  %1650 = vset.pattern.permute.xlu0 40
  %1651 = vperm.xlu0 %1650, %v1528
  %v1652 = vpop.permute.xlu0 %1651
  %v1654 = vadd.f32 %v1642, %v1647
  %v1655 = vadd.f32 %v1643, %v1652
  %1658 = vrot.lane.b32.xlu0 %v1654, 40
  %v1659 = vpop.permute.xlu0 %1658
  %1660 = vrot.lane.b32.xlu0 %v1655, 40
  %v1661 = vpop.permute.xlu0 %1660
  %vm1664 = vcmask 654656
  %1665 = vst.msk [vmem:[%s20] sm:$0xff] %vm1664, %v1659
  %vm1666 = vcmask 650560
  %1667 = vst.msk [vmem:[%s20 + $0x10] sm:$0xf] %vm1666, %v1661
  %v1668 = vld [vmem:[%s14] sm:$0xff]
  %v1669 = vld [vmem:[%s14 + $0x8] sm:$0xff]
  %v1670 = vld [vmem:[%s14 + $0x10] sm:$0xff]
  %v1671 = vld [vmem:[%s14 + $0x18] sm:$0xff]
  %v1672 = vld [vmem:[%s14 + $0x20] sm:$0xff]
  %v1673 = vld [vmem:[%s14 + $0x28] sm:$0xff]
  %v1674 = vld [vmem:[%s14 + $0x30] sm:$0xff]
  %v1675 = vld [vmem:[%s14 + $0x38] sm:$0xff]
  %1676 = vmatpush.msra.mxu0 0.0
  %1677 = vmatpush.msra.mxu0 0.0
  %1678 = vmatpush.msra.mxu0 0.0
  %1679 = vmatpush.msra.mxu0 0.0
  %1680 = vmatpush.msra.mxu0 0.0
  %1681 = vmatpush.msra.mxu0 0.0
  %1682 = vmatpush.msra.mxu0 0.0
  %1683 = vmatpush.msra.mxu0 0.0
  %1684 = vmatpush.msra.mxu0 0.0
  %1685 = vmatpush.msra.mxu0 0.0
  %1686 = vmatpush.msra.mxu0 0.0
  %1687 = vmatpush.msra.mxu0 0.0
  %1688 = vmatpush.msra.mxu0 %v1675
  %1689 = vmatpush.msra.mxu0 %v1674
  %1690 = vmatpush.msra.mxu0 %v1673
  %1691 = vmatpush.msra.mxu0 %v1672
  %1692 = vmatmul.f32.gmra.mxu0 %v564
  %v1693 = vpop.f32.mrf.mxu0
  %v1694 = vadd.f32 0.0, %v1693
  %1695 = vmatmul.f32.gmra.mxu0 %v567
  %v1696 = vpop.f32.mrf.mxu0
  %v1697 = vadd.f32 0.0, %v1696
  %1698 = vdwg.mxu0
  %1699 = vmatpush.msra.mxu0 0.0
  %1700 = vmatpush.msra.mxu0 0.0
  %1701 = vmatpush.msra.mxu0 0.0
  %1702 = vmatpush.msra.mxu0 0.0
  %1703 = vmatpush.msra.mxu0 0.0
  %1704 = vmatpush.msra.mxu0 0.0
  %1705 = vmatpush.msra.mxu0 0.0
  %1706 = vmatpush.msra.mxu0 0.0
  %1707 = vmatpush.msra.mxu0 0.0
  %1708 = vmatpush.msra.mxu0 0.0
  %1709 = vmatpush.msra.mxu0 0.0
  %1710 = vmatpush.msra.mxu0 0.0
  %1711 = vmatpush.msra.mxu0 %v1671
  %1712 = vmatpush.msra.mxu0 %v1670
  %1713 = vmatpush.msra.mxu0 %v1669
  %1714 = vmatpush.msra.mxu0 %v1668
  %1715 = vmatmul.f32.gmra.mxu0 %v1475
  %v1716 = vpop.f32.mrf.mxu0
  %v1717 = vadd.f32 %v1694, %v1716
  %1718 = vmatmul.f32.gmra.mxu0 %v1478
  %v1719 = vpop.f32.mrf.mxu0
  %v1720 = vadd.f32 %v1697, %v1719
  %1721 = vdwg.mxu0
  %v1722 = vld [vmem:[%s15] sm:$0xff]
  %v1723 = vld [vmem:[%s15 + $0x8] sm:$0xff]
  %vm1724 = vcmask 130048
  %v1726 = vsel %vm1724, %v1717, 0
  %v1729 = vsel %vm1724, %v1720, 0
  %1731 = vmatpush.msra.mxu0 0.0
  %1732 = vmatpush.msra.mxu0 0.0
  %1733 = vmatpush.msra.mxu0 0.0
  %1734 = vmatpush.msra.mxu0 0.0
  %1735 = vmatpush.msra.mxu0 0.0
  %1736 = vmatpush.msra.mxu0 0.0
  %1737 = vmatpush.msra.mxu0 0.0
  %1738 = vmatpush.msra.mxu0 0.0
  %1739 = vmatpush.msra.mxu0 0.0
  %1740 = vmatpush.msra.mxu0 0.0
  %1741 = vmatpush.msra.mxu0 0.0
  %1742 = vmatpush.msra.mxu0 0.0
  %1743 = vmatpush.msra.mxu0 0.0
  %1744 = vmatpush.msra.mxu0 0.0
  %1745 = vmatpush.msra.mxu0 %v1723
  %1746 = vmatpush.msra.mxu0 %v1722
  %1747 = vmatmul.f32.gmra.mxu0 %v1726
  %v1748 = vpop.f32.mrf.mxu0
  %v1749 = vadd.f32 0.0, %v1748
  %1750 = vmatmul.f32.gmra.mxu0 %v1729
  %v1751 = vpop.f32.mrf.mxu0
  %v1752 = vadd.f32 0.0, %v1751
  %1753 = vdwg.mxu0
  %v1754 = vsel %vm1529, %v1749, -inf
  %1755 = vmax.xlane.f32.xlu0 %v1754
  %v1756 = vpop.xlane.xlu0 %1755
  %v1757 = vsel %vm1531, %v1752, -inf
  %1758 = vmax.xlane.f32.xlu0 %v1757
  %v1759 = vpop.xlane.xlu0 %1758
  %v1760 = vsub.f32 %v1749, %v1756
  %v1761 = vsub.f32 %v1752, %v1759
  %v1762 = vmul.f32 %v1760, 1.442695
  %v1763 = vpow.pop %v1762
  %v1764 = vmul.f32 %v1761, 1.442695
  %v1765 = vpow.pop %v1764
  %v1766 = vsel %vm1529, %v1763, 0.0
  %1767 = vadd.xlane.f32.xlu0 %v1766
  %v1768 = vpop.xlane.xlu0 %1767
  %v1769 = vsel %vm1531, %v1765, 0.0
  %1770 = vadd.xlane.f32.xlu0 %v1769
  %v1771 = vpop.xlane.xlu0 %1770
  %v1772 = vlog2.pop %v1768
  %v1773 = vmul.f32 %v1772, 0.6931472
  %v1774 = vlog2.pop %v1771
  %v1775 = vmul.f32 %v1774, 0.6931472
  %v1776 = vsub.f32 %v1760, %v1773
  %v1777 = vsub.f32 %v1761, %v1775
  %1778 = vset.pattern.permute.xlu0 41
  %1779 = vperm.xlu0 %1778, %v1527
  %v1780 = vpop.permute.xlu0 %1779
  %1782 = vset.pattern.permute.xlu0 41
  %1783 = vperm.xlu0 %1782, %v1528
  %v1784 = vpop.permute.xlu0 %1783
  %v1786 = vadd.f32 %v1776, %v1780
  %v1787 = vadd.f32 %v1777, %v1784
  %1790 = vrot.lane.b32.xlu0 %v1786, 80
  %v1791 = vpop.permute.xlu0 %1790
  %1792 = vrot.lane.b32.xlu0 %v1787, 80
  %v1793 = vpop.permute.xlu0 %1792
  %vm1796 = vcmask 982656
  %1797 = vst.msk [vmem:[%s20] sm:$0xff] %vm1796, %v1791
  %vm1798 = vcmask 978560
  %1799 = vst.msk [vmem:[%s20 + $0x10] sm:$0xf] %vm1798, %v1793
  %v1800 = vld [vmem:[%s16] sm:$0xff]
  %v1801 = vld [vmem:[%s16 + $0x8] sm:$0xff]
  %v1802 = vld [vmem:[%s16 + $0x10] sm:$0xff]
  %v1803 = vld [vmem:[%s16 + $0x18] sm:$0xff]
  %v1804 = vld [vmem:[%s16 + $0x20] sm:$0xff]
  %v1805 = vld [vmem:[%s16 + $0x28] sm:$0xff]
  %v1806 = vld [vmem:[%s16 + $0x30] sm:$0xff]
  %v1807 = vld [vmem:[%s16 + $0x38] sm:$0xff]
  %1808 = vmatpush.msra.mxu0 0.0
  %1809 = vmatpush.msra.mxu0 0.0
  %1810 = vmatpush.msra.mxu0 0.0
  %1811 = vmatpush.msra.mxu0 0.0
  %1812 = vmatpush.msra.mxu0 0.0
  %1813 = vmatpush.msra.mxu0 0.0
  %1814 = vmatpush.msra.mxu0 0.0
  %1815 = vmatpush.msra.mxu0 0.0
  %1816 = vmatpush.msra.mxu0 0.0
  %1817 = vmatpush.msra.mxu0 0.0
  %1818 = vmatpush.msra.mxu0 0.0
  %1819 = vmatpush.msra.mxu0 0.0
  %1820 = vmatpush.msra.mxu0 %v1807
  %1821 = vmatpush.msra.mxu0 %v1806
  %1822 = vmatpush.msra.mxu0 %v1805
  %1823 = vmatpush.msra.mxu0 %v1804
  %1824 = vmatmul.f32.gmra.mxu0 %v564
  %v1825 = vpop.f32.mrf.mxu0
  %v1826 = vadd.f32 0.0, %v1825
  %1827 = vmatmul.f32.gmra.mxu0 %v567
  %v1828 = vpop.f32.mrf.mxu0
  %v1829 = vadd.f32 0.0, %v1828
  %1830 = vdwg.mxu0
  %1831 = vmatpush.msra.mxu0 0.0
  %1832 = vmatpush.msra.mxu0 0.0
  %1833 = vmatpush.msra.mxu0 0.0
  %1834 = vmatpush.msra.mxu0 0.0
  %1835 = vmatpush.msra.mxu0 0.0
  %1836 = vmatpush.msra.mxu0 0.0
  %1837 = vmatpush.msra.mxu0 0.0
  %1838 = vmatpush.msra.mxu0 0.0
  %1839 = vmatpush.msra.mxu0 0.0
  %1840 = vmatpush.msra.mxu0 0.0
  %1841 = vmatpush.msra.mxu0 0.0
  %1842 = vmatpush.msra.mxu0 0.0
  %1843 = vmatpush.msra.mxu0 %v1803
  %1844 = vmatpush.msra.mxu0 %v1802
  %1845 = vmatpush.msra.mxu0 %v1801
  %1846 = vmatpush.msra.mxu0 %v1800
  %1847 = vmatmul.f32.gmra.mxu0 %v1475
  %v1848 = vpop.f32.mrf.mxu0
  %v1849 = vadd.f32 %v1826, %v1848
  %1850 = vmatmul.f32.gmra.mxu0 %v1478
  %v1851 = vpop.f32.mrf.mxu0
  %v1852 = vadd.f32 %v1829, %v1851
  %1853 = vdwg.mxu0
  %v1854 = vld [vmem:[%s17] sm:$0xff]
  %v1856 = vsel %vm649, %v1849, 0
  %v1859 = vsel %vm649, %v1852, 0
  %1861 = vmatpush.msra.mxu0 0.0
  %1862 = vmatpush.msra.mxu0 0.0
  %1863 = vmatpush.msra.mxu0 0.0
  %1864 = vmatpush.msra.mxu0 0.0
  %1865 = vmatpush.msra.mxu0 0.0
  %1866 = vmatpush.msra.mxu0 0.0
  %1867 = vmatpush.msra.mxu0 0.0
  %1868 = vmatpush.msra.mxu0 0.0
  %1869 = vmatpush.msra.mxu0 0.0
  %1870 = vmatpush.msra.mxu0 0.0
  %1871 = vmatpush.msra.mxu0 0.0
  %1872 = vmatpush.msra.mxu0 0.0
  %1873 = vmatpush.msra.mxu0 0.0
  %1874 = vmatpush.msra.mxu0 0.0
  %1875 = vmatpush.msra.mxu0 0.0
  %1876 = vmatpush.msra.mxu0 %v1854
  %1877 = vmatmul.f32.gmra.mxu0 %v1856
  %v1878 = vpop.f32.mrf.mxu0
  %v1879 = vadd.f32 0.0, %v1878
  %1880 = vmatmul.f32.gmra.mxu0 %v1859
  %v1881 = vpop.f32.mrf.mxu0
  %v1882 = vadd.f32 0.0, %v1881
  %1883 = vdwg.mxu0
  %v1884 = vsel %vm1529, %v1879, -inf
  %1885 = vmax.xlane.f32.xlu0 %v1884
  %v1886 = vpop.xlane.xlu0 %1885
  %v1887 = vsel %vm1531, %v1882, -inf
  %1888 = vmax.xlane.f32.xlu0 %v1887
  %v1889 = vpop.xlane.xlu0 %1888
  %v1890 = vsub.f32 %v1879, %v1886
  %v1891 = vsub.f32 %v1882, %v1889
  %v1892 = vmul.f32 %v1890, 1.442695
  %v1893 = vpow.pop %v1892
  %v1894 = vmul.f32 %v1891, 1.442695
  %v1895 = vpow.pop %v1894
  %v1896 = vsel %vm1529, %v1893, 0.0
  %1897 = vadd.xlane.f32.xlu0 %v1896
  %v1898 = vpop.xlane.xlu0 %1897
  %v1899 = vsel %vm1531, %v1895, 0.0
  %1900 = vadd.xlane.f32.xlu0 %v1899
  %v1901 = vpop.xlane.xlu0 %1900
  %v1902 = vlog2.pop %v1898
  %v1903 = vmul.f32 %v1902, 0.6931472
  %v1904 = vlog2.pop %v1901
  %v1905 = vmul.f32 %v1904, 0.6931472
  %v1906 = vsub.f32 %v1890, %v1903
  %v1907 = vsub.f32 %v1891, %v1905
  %1908 = vset.pattern.permute.xlu0 42
  %1909 = vperm.xlu0 %1908, %v1527
  %v1910 = vpop.permute.xlu0 %1909
  %1912 = vset.pattern.permute.xlu0 42
  %1913 = vperm.xlu0 %1912, %v1528
  %v1914 = vpop.permute.xlu0 %1913
  %v1916 = vadd.f32 %v1906, %v1910
  %v1917 = vadd.f32 %v1907, %v1914
  %1920 = vrot.lane.b32.xlu0 %v1916, 120
  %v1921 = vpop.permute.xlu0 %1920
  %1922 = vrot.lane.b32.xlu0 %v1917, 120
  %v1923 = vpop.permute.xlu0 %1922
  %vm1926 = vcmask 1048512
  %1927 = vst.msk [vmem:[%s20] sm:$0xff] %vm1926, %v1921
  %1928 = vst.msk [vmem:[%s20 + $0x8] sm:$0xff] %vm75, %v1921
  %vm1929 = vcmask 1044416
  %1930 = vst.msk [vmem:[%s20 + $0x10] sm:$0xf] %vm1929, %v1923
  %vm1931 = vcmask 257024
  %1932 = vst.msk [vmem:[%s20 + $0x18] sm:$0xf] %vm1931, %v1923
  %v1933 = vld [vmem:[%s18] sm:$0xff]
  %v1934 = vld [vmem:[%s18 + $0x8] sm:$0xff]
  %v1935 = vld [vmem:[%s18 + $0x10] sm:$0xff]
  %v1936 = vld [vmem:[%s18 + $0x18] sm:$0xff]
  %v1937 = vld [vmem:[%s18 + $0x20] sm:$0xff]
  %v1938 = vld [vmem:[%s18 + $0x28] sm:$0xff]
  %v1939 = vld [vmem:[%s18 + $0x30] sm:$0xff]
  %v1940 = vld [vmem:[%s18 + $0x38] sm:$0xff]
  %1941 = vmatpush.msra.mxu0 0.0
  %1942 = vmatpush.msra.mxu0 0.0
  %1943 = vmatpush.msra.mxu0 0.0
  %1944 = vmatpush.msra.mxu0 0.0
  %1945 = vmatpush.msra.mxu0 0.0
  %1946 = vmatpush.msra.mxu0 0.0
  %1947 = vmatpush.msra.mxu0 0.0
  %1948 = vmatpush.msra.mxu0 0.0
  %1949 = vmatpush.msra.mxu0 0.0
  %1950 = vmatpush.msra.mxu0 0.0
  %1951 = vmatpush.msra.mxu0 0.0
  %1952 = vmatpush.msra.mxu0 0.0
  %1953 = vmatpush.msra.mxu0 %v1940
  %1954 = vmatpush.msra.mxu0 %v1939
  %1955 = vmatpush.msra.mxu0 %v1938
  %1956 = vmatpush.msra.mxu0 %v1937
  %1957 = vmatmul.f32.gmra.mxu0 %v564
  %v1958 = vpop.f32.mrf.mxu0
  %v1959 = vadd.f32 0.0, %v1958
  %1960 = vmatmul.f32.gmra.mxu0 %v567
  %v1961 = vpop.f32.mrf.mxu0
  %v1962 = vadd.f32 0.0, %v1961
  %1963 = vdwg.mxu0
  %1964 = vmatpush.msra.mxu0 0.0
  %1965 = vmatpush.msra.mxu0 0.0
  %1966 = vmatpush.msra.mxu0 0.0
  %1967 = vmatpush.msra.mxu0 0.0
  %1968 = vmatpush.msra.mxu0 0.0
  %1969 = vmatpush.msra.mxu0 0.0
  %1970 = vmatpush.msra.mxu0 0.0
  %1971 = vmatpush.msra.mxu0 0.0
  %1972 = vmatpush.msra.mxu0 0.0
  %1973 = vmatpush.msra.mxu0 0.0
  %1974 = vmatpush.msra.mxu0 0.0
  %1975 = vmatpush.msra.mxu0 0.0
  %1976 = vmatpush.msra.mxu0 %v1936
  %1977 = vmatpush.msra.mxu0 %v1935
  %1978 = vmatpush.msra.mxu0 %v1934
  %1979 = vmatpush.msra.mxu0 %v1933
  %1980 = vmatmul.f32.gmra.mxu0 %v1475
  %v1981 = vpop.f32.mrf.mxu0
  %v1982 = vadd.f32 %v1959, %v1981
  %1983 = vmatmul.f32.gmra.mxu0 %v1478
  %v1984 = vpop.f32.mrf.mxu0
  %v1985 = vadd.f32 %v1962, %v1984
  %1986 = vdwg.mxu0
  %v1987 = vld [vmem:[%s19] sm:$0xf]
  %vm1988 = vcmask 31744
  %v1990 = vsel %vm1988, %v1982, 0
  %v1993 = vsel %vm1988, %v1985, 0
  %vm1995 = vcmask 1043456
  %v1997 = vsel %vm1995, %v1987, 0
  %1999 = vmatpush.msra.mxu0 0.0
  %2000 = vmatpush.msra.mxu0 0.0
  %2001 = vmatpush.msra.mxu0 0.0
  %2002 = vmatpush.msra.mxu0 0.0
  %2003 = vmatpush.msra.mxu0 0.0
  %2004 = vmatpush.msra.mxu0 0.0
  %2005 = vmatpush.msra.mxu0 0.0
  %2006 = vmatpush.msra.mxu0 0.0
  %2007 = vmatpush.msra.mxu0 0.0
  %2008 = vmatpush.msra.mxu0 0.0
  %2009 = vmatpush.msra.mxu0 0.0
  %2010 = vmatpush.msra.mxu0 0.0
  %2011 = vmatpush.msra.mxu0 0.0
  %2012 = vmatpush.msra.mxu0 0.0
  %2013 = vmatpush.msra.mxu0 0.0
  %2014 = vmatpush.msra.mxu0 %v1997
  %2015 = vmatmul.f32.gmra.mxu0 %v1990
  %v2016 = vpop.f32.mrf.mxu0
  %v2017 = vadd.f32 0.0, %v2016
  %2018 = vmatmul.f32.gmra.mxu0 %v1993
  %v2019 = vpop.f32.mrf.mxu0
  %v2020 = vadd.f32 0.0, %v2019
  %2021 = vdwg.mxu0
  %v2022 = vsel %vm1529, %v2017, -inf
  %2023 = vmax.xlane.f32.xlu0 %v2022
  %v2024 = vpop.xlane.xlu0 %2023
  %v2025 = vsel %vm1531, %v2020, -inf
  %2026 = vmax.xlane.f32.xlu0 %v2025
  %v2027 = vpop.xlane.xlu0 %2026
  %v2028 = vsub.f32 %v2017, %v2024
  %v2029 = vsub.f32 %v2020, %v2027
  %v2030 = vmul.f32 %v2028, 1.442695
  %v2031 = vpow.pop %v2030
  %v2032 = vmul.f32 %v2029, 1.442695
  %v2033 = vpow.pop %v2032
  %v2034 = vsel %vm1529, %v2031, 0.0
  %2035 = vadd.xlane.f32.xlu0 %v2034
  %v2036 = vpop.xlane.xlu0 %2035
  %v2037 = vsel %vm1531, %v2033, 0.0
  %2038 = vadd.xlane.f32.xlu0 %v2037
  %v2039 = vpop.xlane.xlu0 %2038
  %v2040 = vlog2.pop %v2036
  %v2041 = vmul.f32 %v2040, 0.6931472
  %v2042 = vlog2.pop %v2039
  %v2043 = vmul.f32 %v2042, 0.6931472
  %v2044 = vsub.f32 %v2028, %v2041
  %v2045 = vsub.f32 %v2029, %v2043
  %2046 = vset.pattern.permute.xlu0 43
  %2047 = vperm.xlu0 %2046, %v1527
  %v2048 = vpop.permute.xlu0 %2047
  %2050 = vset.pattern.permute.xlu0 43
  %2051 = vperm.xlu0 %2050, %v1528
  %v2052 = vpop.permute.xlu0 %2051
  %v2054 = vadd.f32 %v2044, %v2048
  %v2055 = vadd.f32 %v2045, %v2052
  %2058 = vrot.lane.b32.xlu0 %v2054, 32
  %v2059 = vpop.permute.xlu0 %2058
  %2060 = vrot.lane.b32.xlu0 %v2055, 32
  %v2061 = vpop.permute.xlu0 %2060
  %vm2064 = vcmask 589056
  %2065 = vst.msk [vmem:[%s20 + $0x8] sm:$0xff] %vm2064, %v2059
  %vm2066 = vcmask 584960
  %2067 = vst.msk [vmem:[%s20 + $0x18] sm:$0xf] %vm2066, %v2061
  // Predicated region
  $region82: #{model_forward.3} parent=0 // pred_check
    _
  $region83: #{model_forward.3} parent=0 // pred_check_branch
    %2069 = sbr.rel (0) target = $region85
  $region84: #{model_forward.3} parent=0 // pred_region
    _
  $region85: #{model_forward.3} parent=0 // pred_fallthru
    _
  // Predicated region
  $region86: #{model_forward.3} parent=0 // pred_check
    _
  $region87: #{model_forward.3} parent=0 // pred_check_branch
    %2071 = sbr.rel (0) target = $region89
  $region88: #{model_forward.3} parent=0 // pred_region
    _
  $region89: #{model_forward.3} parent=0 // pred_fallthru
    _

// kernel: model_forward.2
$region0: #{model_forward.2}
  #allocation0 [shape = 'u32[]', space=smem, size = 0x4, offset = 0x4, fixed_abs, tag = 'smem constant byte address 0x4 - core index']
  #allocation1 [shape = 'u32[72,128]{1,0:T(1,128)}', space=vmem, size = 0x9000, scoped, tag = 'internal scratch']
  %s0 = inlined_call_operand.vmem [shape: f32[18,256], index: 0, kind: input, shape index: {}]
  %s1 = inlined_call_operand.vmem [shape: f32[256,32], index: 1, kind: input, shape index: {}]
  %s2 = inlined_call_operand.vmem [shape: f32[1,32], index: 2, kind: input, shape index: {}]
  %s3 = inlined_call_operand.vmem [shape: f32[32,256], index: 3, kind: input, shape index: {}]
  %s4 = inlined_call_operand.vmem [shape: f32[1,256], index: 4, kind: input, shape index: {}]
  %s5 = inlined_call_operand.vmem [shape: f32[32,128], index: 5, kind: input, shape index: {}]
  %s6 = inlined_call_operand.vmem [shape: f32[32,128], index: 6, kind: input, shape index: {}]
  %s7 = inlined_call_operand.vmem [shape: f32[18,64], index: 7, kind: output, shape index: {}]
  %s8 = sld [smem:[#allocation0]]
  $region38: #{model_forward.2} parent=0
    _
  %s10 = ssub.s32 1, %s8
  %s11 = scalar_select 0, %s10, %s8
  // Predicated region
  $region2: #{model_forward.2} parent=0 // pred_check
    _
  $region3: #{model_forward.2} parent=0 // pred_check_branch
    %13 = sbr.rel (0) target = $region5
  $region4: #{model_forward.2} parent=0 // pred_region
    _
  $region5: #{model_forward.2} parent=0 // pred_fallthru
    _
  // Predicated region
  $region6: #{model_forward.2} parent=0 // pred_check
    _
  $region7: #{model_forward.2} parent=0 // pred_check_branch
    %15 = sbr.rel (0) target = $region9
  $region8: #{model_forward.2} parent=0 // pred_region
    _
  $region9: #{model_forward.2} parent=0 // pred_fallthru
    _
  // Predicated region
  $region10: #{model_forward.2} parent=0 // pred_check
    _
  $region11: #{model_forward.2} parent=0 // pred_check_branch
    %17 = sbr.rel (0) target = $region13
  $region12: #{model_forward.2} parent=0 // pred_region
    _
  $region13: #{model_forward.2} parent=0 // pred_fallthru
    _
  // Predicated region
  $region14: #{model_forward.2} parent=0 // pred_check
    _
  $region15: #{model_forward.2} parent=0 // pred_check_branch
    %19 = sbr.rel (0) target = $region17
  $region16: #{model_forward.2} parent=0 // pred_region
    _
  $region17: #{model_forward.2} parent=0 // pred_fallthru
    _
  // Predicated region
  $region18: #{model_forward.2} parent=0 // pred_check
    _
  $region19: #{model_forward.2} parent=0 // pred_check_branch
    %21 = sbr.rel (0) target = $region21
  $region20: #{model_forward.2} parent=0 // pred_region
    _
  $region21: #{model_forward.2} parent=0 // pred_fallthru
    _
  // Predicated region
  $region22: #{model_forward.2} parent=0 // pred_check
    _
  $region23: #{model_forward.2} parent=0 // pred_check_branch
    %23 = sbr.rel (0) target = $region25
  $region24: #{model_forward.2} parent=0 // pred_region
    _
  $region25: #{model_forward.2} parent=0 // pred_fallthru
    _
  // Predicated region
  $region26: #{model_forward.2} parent=0 // pred_check
    _
  $region27: #{model_forward.2} parent=0 // pred_check_branch
    %25 = sbr.rel (0) target = $region29
  $region28: #{model_forward.2} parent=0 // pred_region
    _
  $region29: #{model_forward.2} parent=0 // pred_fallthru
    _
  %v26 = vld [vmem:[%s0] sm:$0xff]
  %v27 = vld [vmem:[%s0 + $0x8] sm:$0xff]
  %v28 = vld [vmem:[%s0 + $0x10] sm:$0xff]
  %v29 = vld [vmem:[%s0 + $0x18] sm:$0xff]
  %v30 = vld [vmem:[%s0 + $0x20] sm:$0x3]
  %v31 = vld [vmem:[%s0 + $0x28] sm:$0x3]
  %v32 = vld [vmem:[%s1] sm:$0xff]
  %v33 = vld [vmem:[%s1 + $0x8] sm:$0xff]
  %v34 = vld [vmem:[%s1 + $0x10] sm:$0xff]
  %v35 = vld [vmem:[%s1 + $0x18] sm:$0xff]
  %v36 = vld [vmem:[%s1 + $0x20] sm:$0xff]
  %v37 = vld [vmem:[%s1 + $0x28] sm:$0xff]
  %v38 = vld [vmem:[%s1 + $0x30] sm:$0xff]
  %v39 = vld [vmem:[%s1 + $0x38] sm:$0xff]
  %v40 = vld [vmem:[%s1 + $0x40] sm:$0xff]
  %v41 = vld [vmem:[%s1 + $0x48] sm:$0xff]
  %v42 = vld [vmem:[%s1 + $0x50] sm:$0xff]
  %v43 = vld [vmem:[%s1 + $0x58] sm:$0xff]
  %v44 = vld [vmem:[%s1 + $0x60] sm:$0xff]
  %v45 = vld [vmem:[%s1 + $0x68] sm:$0xff]
  %v46 = vld [vmem:[%s1 + $0x70] sm:$0xff]
  %v47 = vld [vmem:[%s1 + $0x78] sm:$0xff]
  %v48 = vld [vmem:[%s1 + $0x80] sm:$0xff]
  %v49 = vld [vmem:[%s1 + $0x88] sm:$0xff]
  %v50 = vld [vmem:[%s1 + $0x90] sm:$0xff]
  %v51 = vld [vmem:[%s1 + $0x98] sm:$0xff]
  %v52 = vld [vmem:[%s1 + $0xa0] sm:$0xff]
  %v53 = vld [vmem:[%s1 + $0xa8] sm:$0xff]
  %v54 = vld [vmem:[%s1 + $0xb0] sm:$0xff]
  %v55 = vld [vmem:[%s1 + $0xb8] sm:$0xff]
  %v56 = vld [vmem:[%s1 + $0xc0] sm:$0xff]
  %v57 = vld [vmem:[%s1 + $0xc8] sm:$0xff]
  %v58 = vld [vmem:[%s1 + $0xd0] sm:$0xff]
  %v59 = vld [vmem:[%s1 + $0xd8] sm:$0xff]
  %v60 = vld [vmem:[%s1 + $0xe0] sm:$0xff]
  %v61 = vld [vmem:[%s1 + $0xe8] sm:$0xff]
  %v62 = vld [vmem:[%s1 + $0xf0] sm:$0xff]
  %v63 = vld [vmem:[%s1 + $0xf8] sm:$0xff]
  %v64 = vld [vmem:[%s2] sm:$0x1]
  %v66 = vperm.slane %v64, 0
  %68 = vmatpush.msra.mxu0 %v47
  %69 = vmatpush.msra.mxu0 %v46
  %70 = vmatpush.msra.mxu0 %v45
  %71 = vmatpush.msra.mxu0 %v44
  %72 = vmatpush.msra.mxu0 %v43
  %73 = vmatpush.msra.mxu0 %v42
  %74 = vmatpush.msra.mxu0 %v41
  %75 = vmatpush.msra.mxu0 %v40
  %76 = vmatpush.msra.mxu0 %v39
  %77 = vmatpush.msra.mxu0 %v38
  %78 = vmatpush.msra.mxu0 %v37
  %79 = vmatpush.msra.mxu0 %v36
  %80 = vmatpush.msra.mxu0 %v35
  %81 = vmatpush.msra.mxu0 %v34
  %82 = vmatpush.msra.mxu0 %v33
  %83 = vmatpush.msra.mxu0 %v32
  %84 = vmatmul.f32.gmra.mxu0 %v26
  %v85 = vpop.f32.mrf.mxu0
  %v86 = vadd.f32 %v66, %v85
  %87 = vmatmul.f32.gmra.mxu0 %v28
  %v88 = vpop.f32.mrf.mxu0
  %v89 = vadd.f32 %v66, %v88
  %90 = vmatmul.f32.gmra.mxu0 %v30
  %v91 = vpop.f32.mrf.mxu0
  %v92 = vadd.f32 %v66, %v91
  %93 = vdwg.mxu0
  %94 = vmatpush.msra.mxu0 %v63
  %95 = vmatpush.msra.mxu0 %v62
  %96 = vmatpush.msra.mxu0 %v61
  %97 = vmatpush.msra.mxu0 %v60
  %98 = vmatpush.msra.mxu0 %v59
  %99 = vmatpush.msra.mxu0 %v58
  %100 = vmatpush.msra.mxu0 %v57
  %101 = vmatpush.msra.mxu0 %v56
  %102 = vmatpush.msra.mxu0 %v55
  %103 = vmatpush.msra.mxu0 %v54
  %104 = vmatpush.msra.mxu0 %v53
  %105 = vmatpush.msra.mxu0 %v52
  %106 = vmatpush.msra.mxu0 %v51
  %107 = vmatpush.msra.mxu0 %v50
  %108 = vmatpush.msra.mxu0 %v49
  %109 = vmatpush.msra.mxu0 %v48
  %110 = vmatmul.f32.gmra.mxu0 %v27
  %v111 = vpop.f32.mrf.mxu0
  %v112 = vadd.f32 %v86, %v111
  %113 = vmatmul.f32.gmra.mxu0 %v29
  %v114 = vpop.f32.mrf.mxu0
  %v115 = vadd.f32 %v89, %v114
  %116 = vmatmul.f32.gmra.mxu0 %v31
  %v117 = vpop.f32.mrf.mxu0
  %v118 = vadd.f32 %v92, %v117
  %119 = vdwg.mxu0
  %v120 = vld [vmem:[%s3] sm:$0xff]
  %v121 = vld [vmem:[%s3 + $0x8] sm:$0xff]
  %v122 = vld [vmem:[%s3 + $0x10] sm:$0xff]
  %v123 = vld [vmem:[%s3 + $0x18] sm:$0xff]
  %v124 = vld [vmem:[%s3 + $0x20] sm:$0xff]
  %v125 = vld [vmem:[%s3 + $0x28] sm:$0xff]
  %v126 = vld [vmem:[%s3 + $0x30] sm:$0xff]
  %v127 = vld [vmem:[%s3 + $0x38] sm:$0xff]
  %v128 = vld [vmem:[%s4] sm:$0x3]
  %v130 = vperm.slane %v128, 0
  %v131 = vperm.slane %v128, 1
  %vm134 = vcmask 261120
  %v136 = vsel %vm134, %v112, 0
  %v139 = vsel %vm134, %v115, 0
  %v142 = vsel %vm134, %v118, 0
  %144 = vmatpush.msra.mxu0 0.0
  %145 = vmatpush.msra.mxu0 0.0
  %146 = vmatpush.msra.mxu0 0.0
  %147 = vmatpush.msra.mxu0 0.0
  %148 = vmatpush.msra.mxu0 0.0
  %149 = vmatpush.msra.mxu0 0.0
  %150 = vmatpush.msra.mxu0 0.0
  %151 = vmatpush.msra.mxu0 0.0
  %152 = vmatpush.msra.mxu0 0.0
  %153 = vmatpush.msra.mxu0 0.0
  %154 = vmatpush.msra.mxu0 0.0
  %155 = vmatpush.msra.mxu0 0.0
  %156 = vmatpush.msra.mxu0 %v126
  %157 = vmatpush.msra.mxu0 %v124
  %158 = vmatpush.msra.mxu0 %v122
  %159 = vmatpush.msra.mxu0 %v120
  %160 = vmatmul.f32.gmra.mxu0 %v136
  %v161 = vpop.f32.mrf.mxu0
  %v162 = vadd.f32 %v130, %v161
  %163 = vmatmul.f32.gmra.mxu0 %v139
  %v164 = vpop.f32.mrf.mxu0
  %v165 = vadd.f32 %v130, %v164
  %166 = vmatmul.f32.gmra.mxu0 %v142
  %v167 = vpop.f32.mrf.mxu0
  %v168 = vadd.f32 %v130, %v167
  %169 = vdwg.mxu0
  %170 = vmatpush.msra.mxu0 0.0
  %171 = vmatpush.msra.mxu0 0.0
  %172 = vmatpush.msra.mxu0 0.0
  %173 = vmatpush.msra.mxu0 0.0
  %174 = vmatpush.msra.mxu0 0.0
  %175 = vmatpush.msra.mxu0 0.0
  %176 = vmatpush.msra.mxu0 0.0
  %177 = vmatpush.msra.mxu0 0.0
  %178 = vmatpush.msra.mxu0 0.0
  %179 = vmatpush.msra.mxu0 0.0
  %180 = vmatpush.msra.mxu0 0.0
  %181 = vmatpush.msra.mxu0 0.0
  %182 = vmatpush.msra.mxu0 %v127
  %183 = vmatpush.msra.mxu0 %v125
  %184 = vmatpush.msra.mxu0 %v123
  %185 = vmatpush.msra.mxu0 %v121
  %186 = vmatmul.f32.gmra.mxu0 %v136
  %v187 = vpop.f32.mrf.mxu0
  %v188 = vadd.f32 %v131, %v187
  %189 = vmatmul.f32.gmra.mxu0 %v139
  %v190 = vpop.f32.mrf.mxu0
  %v191 = vadd.f32 %v131, %v190
  %192 = vmatmul.f32.gmra.mxu0 %v142
  %v193 = vpop.f32.mrf.mxu0
  %v194 = vadd.f32 %v131, %v193
  %195 = vdwg.mxu0
  %v196 = vld [vmem:[%s5] sm:$0xff]
  %v197 = vld [vmem:[%s5 + $0x8] sm:$0xff]
  %v198 = vld [vmem:[%s5 + $0x10] sm:$0xff]
  %v199 = vld [vmem:[%s5 + $0x18] sm:$0xff]
  %v200 = vld [vmem:[%s6] sm:$0xff]
  %v201 = vld [vmem:[%s6 + $0x8] sm:$0xff]
  %v202 = vld [vmem:[%s6 + $0x10] sm:$0xff]
  %v203 = vld [vmem:[%s6 + $0x18] sm:$0xff]
  %v205 = vsel %vm134, 0.0, 0
  %207 = vmatpush.msra.mxu0 0.0
  %208 = vmatpush.msra.mxu0 0.0
  %209 = vmatpush.msra.mxu0 0.0
  %210 = vmatpush.msra.mxu0 0.0
  %211 = vmatpush.msra.mxu0 0.0
  %212 = vmatpush.msra.mxu0 0.0
  %213 = vmatpush.msra.mxu0 0.0
  %214 = vmatpush.msra.mxu0 0.0
  %215 = vmatpush.msra.mxu0 0.0
  %216 = vmatpush.msra.mxu0 0.0
  %217 = vmatpush.msra.mxu0 0.0
  %218 = vmatpush.msra.mxu0 0.0
  %219 = vmatpush.msra.mxu0 %v199
  %220 = vmatpush.msra.mxu0 %v198
  %221 = vmatpush.msra.mxu0 %v197
  %222 = vmatpush.msra.mxu0 %v196
  %223 = vmatmul.f32.gmra.mxu0 %v205
  %v224 = vpop.f32.mrf.mxu0
  %v225 = vadd.f32 0.0, %v224
  %226 = vdwg.mxu0
  %v227 = vadd.f32 %v162, %v225
  %v228 = vxor.u32 %v227, 2147483648
  %v229 = vmul.f32 %v228, 1.442695
  %v230 = vpow.pop %v229
  %v231 = vadd.f32 %v230, 1.0
  %v232 = vrcp.pop %v231
  %v233 = vmul.f32 %v231, %v232
  %v234 = vsub.f32 1.0, %v233
  %v235 = vmul.f32 %v232, %v234
  %v236 = vadd.f32 %v232, %v235
  %vm237 = vweird.f32 %v231
  %vm238 = vweird.f32 %v232
  %vm239 = vmor %vm237, %vm238
  %v240 = vsel %vm239, %v232, %v236
  %v241 = vand.u32 2147483647, %v231
  %vm242 = vcmp.eq.f32.partialorder %v241, 8.507059e+37
  %v243 = vand.u32 %v231, 2147483648
  %v244 = vor.u32 1.1754944e-38, %v243
  %v245 = vsel %vm242, %v244, %v240
  %v246 = vmul.f32 1.0, %v245
  %v247 = vtanh.pop %v227
  %v248 = vmul.f32 %v246, 0.0
  %250 = vrot.lane.b32.xlu0 %v247, 64
  %v251 = vpop.permute.xlu0 %250
  %v253 = vmul.f32 %v246, %v251
  %255 = vrot.lane.b32.xlu0 %v253, 32
  %v256 = vpop.permute.xlu0 %255
  %v258 = vadd.f32 %v248, %v256
  %v259 = vtanh.pop %v258
  %261 = vrot.lane.b32.xlu0 %v259, 64
  %v262 = vpop.permute.xlu0 %261
  %v264 = vmul.f32 %v246, %v262
  %266 = vrot.lane.b32.xlu0 %v264, 32
  %v267 = vpop.permute.xlu0 %266
  %vm269 = vcmask 253952
  %270 = vst.msk [vmem:[%s7] sm:$0x1] %vm269, %v267
  %v271 = vsel %vm134, %v267, 0
  %273 = vmatpush.msra.mxu0 0.0
  %274 = vmatpush.msra.mxu0 0.0
  %275 = vmatpush.msra.mxu0 0.0
  %276 = vmatpush.msra.mxu0 0.0
  %277 = vmatpush.msra.mxu0 0.0
  %278 = vmatpush.msra.mxu0 0.0
  %279 = vmatpush.msra.mxu0 0.0
  %280 = vmatpush.msra.mxu0 0.0
  %281 = vmatpush.msra.mxu0 0.0
  %282 = vmatpush.msra.mxu0 0.0
  %283 = vmatpush.msra.mxu0 0.0
  %284 = vmatpush.msra.mxu0 0.0
  %285 = vmatpush.msra.mxu0 %v199
  %286 = vmatpush.msra.mxu0 %v198
  %287 = vmatpush.msra.mxu0 %v197
  %288 = vmatpush.msra.mxu0 %v196
  %289 = vmatmul.f32.gmra.mxu0 %v271
  %v290 = vpop.f32.mrf.mxu0
  %v291 = vadd.f32 0.0, %v290
  %292 = vdwg.mxu0
  %v294 = vrot.slane %v291, 7
  %v296 = vadd.f32 %v162, %v294
  %v297 = vxor.u32 %v296, 2147483648
  %v298 = vmul.f32 %v297, 1.442695
  %v299 = vpow.pop %v298
  %v300 = vadd.f32 %v299, 1.0
  %v301 = vrcp.pop %v300
  %v302 = vmul.f32 %v300, %v301
  %v303 = vsub.f32 1.0, %v302
  %v304 = vmul.f32 %v301, %v303
  %v305 = vadd.f32 %v301, %v304
  %vm306 = vweird.f32 %v300
  %vm307 = vweird.f32 %v301
  %vm308 = vmor %vm306, %vm307
  %v309 = vsel %vm308, %v301, %v305
  %v310 = vand.u32 2147483647, %v300
  %vm311 = vcmp.eq.f32.partialorder %v310, 8.507059e+37
  %v312 = vand.u32 %v300, 2147483648
  %v313 = vor.u32 1.1754944e-38, %v312
  %v314 = vsel %vm311, %v313, %v309
  %v315 = vmul.f32 1.0, %v314
  %v316 = vtanh.pop %v296
  %v318 = vrot.slane %v258, 7
  %v320 = vmul.f32 %v315, %v318
  %322 = vrot.lane.b32.xlu0 %v316, 64
  %v323 = vpop.permute.xlu0 %322
  %v325 = vmul.f32 %v315, %v323
  %327 = vrot.lane.b32.xlu0 %v325, 32
  %v328 = vpop.permute.xlu0 %327
  %v330 = vadd.f32 %v320, %v328
  %v331 = vtanh.pop %v330
  %333 = vrot.lane.b32.xlu0 %v331, 64
  %v334 = vpop.permute.xlu0 %333
  %v336 = vmul.f32 %v315, %v334
  %338 = vrot.lane.b32.xlu0 %v336, 32
  %v339 = vpop.permute.xlu0 %338
  %vm341 = vcmask 254977
  %342 = vst.msk [vmem:[%s7] sm:$0x2] %vm341, %v339
  %v343 = vrot.slane %v336, 1
  %344 = vrot.lane.b32.xlu0 %v343, 32
  %v345 = vpop.permute.xlu0 %344
  %v346 = vsel %vm134, %v345, 0
  %348 = vmatpush.msra.mxu0 0.0
  %349 = vmatpush.msra.mxu0 0.0
  %350 = vmatpush.msra.mxu0 0.0
  %351 = vmatpush.msra.mxu0 0.0
  %352 = vmatpush.msra.mxu0 0.0
  %353 = vmatpush.msra.mxu0 0.0
  %354 = vmatpush.msra.mxu0 0.0
  %355 = vmatpush.msra.mxu0 0.0
  %356 = vmatpush.msra.mxu0 0.0
  %357 = vmatpush.msra.mxu0 0.0
  %358 = vmatpush.msra.mxu0 0.0
  %359 = vmatpush.msra.mxu0 0.0
  %360 = vmatpush.msra.mxu0 %v199
  %361 = vmatpush.msra.mxu0 %v198
  %362 = vmatpush.msra.mxu0 %v197
  %363 = vmatpush.msra.mxu0 %v196
  %364 = vmatmul.f32.gmra.mxu0 %v346
  %v365 = vpop.f32.mrf.mxu0
  %v366 = vadd.f32 0.0, %v365
  %367 = vdwg.mxu0
  %v369 = vrot.slane %v366, 6
  %v371 = vadd.f32 %v162, %v369
  %v372 = vxor.u32 %v371, 2147483648
  %v373 = vmul.f32 %v372, 1.442695
  %v374 = vpow.pop %v373
  %v375 = vadd.f32 %v374, 1.0
  %v376 = vrcp.pop %v375
  %v377 = vmul.f32 %v375, %v376
  %v378 = vsub.f32 1.0, %v377
  %v379 = vmul.f32 %v376, %v378
  %v380 = vadd.f32 %v376, %v379
  %vm381 = vweird.f32 %v375
  %vm382 = vweird.f32 %v376
  %vm383 = vmor %vm381, %vm382
  %v384 = vsel %vm383, %v376, %v380
  %v385 = vand.u32 2147483647, %v375
  %vm386 = vcmp.eq.f32.partialorder %v385, 8.507059e+37
  %v387 = vand.u32 %v375, 2147483648
  %v388 = vor.u32 1.1754944e-38, %v387
  %v389 = vsel %vm386, %v388, %v384
  %v390 = vmul.f32 1.0, %v389
  %v391 = vtanh.pop %v371
  %v393 = vrot.slane %v330, 7
  %v395 = vmul.f32 %v390, %v393
  %397 = vrot.lane.b32.xlu0 %v391, 64
  %v398 = vpop.permute.xlu0 %397
  %v400 = vmul.f32 %v390, %v398
  %402 = vrot.lane.b32.xlu0 %v400, 32
  %v403 = vpop.permute.xlu0 %402
  %v405 = vadd.f32 %v395, %v403
  %v406 = vtanh.pop %v405
  %408 = vrot.lane.b32.xlu0 %v406, 64
  %v409 = vpop.permute.xlu0 %408
  %v411 = vmul.f32 %v390, %v409
  %413 = vrot.lane.b32.xlu0 %v411, 32
  %v414 = vpop.permute.xlu0 %413
  %vm416 = vcmask 256002
  %417 = vst.msk [vmem:[%s7] sm:$0x4] %vm416, %v414
  %v418 = vrot.slane %v411, 2
  %419 = vrot.lane.b32.xlu0 %v418, 32
  %v420 = vpop.permute.xlu0 %419
  %v421 = vsel %vm134, %v420, 0
  %423 = vmatpush.msra.mxu0 0.0
  %424 = vmatpush.msra.mxu0 0.0
  %425 = vmatpush.msra.mxu0 0.0
  %426 = vmatpush.msra.mxu0 0.0
  %427 = vmatpush.msra.mxu0 0.0
  %428 = vmatpush.msra.mxu0 0.0
  %429 = vmatpush.msra.mxu0 0.0
  %430 = vmatpush.msra.mxu0 0.0
  %431 = vmatpush.msra.mxu0 0.0
  %432 = vmatpush.msra.mxu0 0.0
  %433 = vmatpush.msra.mxu0 0.0
  %434 = vmatpush.msra.mxu0 0.0
  %435 = vmatpush.msra.mxu0 %v199
  %436 = vmatpush.msra.mxu0 %v198
  %437 = vmatpush.msra.mxu0 %v197
  %438 = vmatpush.msra.mxu0 %v196
  %439 = vmatmul.f32.gmra.mxu0 %v421
  %v440 = vpop.f32.mrf.mxu0
  %v441 = vadd.f32 0.0, %v440
  %442 = vdwg.mxu0
  %v444 = vrot.slane %v441, 5
  %v446 = vadd.f32 %v162, %v444
  %v447 = vxor.u32 %v446, 2147483648
  %v448 = vmul.f32 %v447, 1.442695
  %v449 = vpow.pop %v448
  %v450 = vadd.f32 %v449, 1.0
  %v451 = vrcp.pop %v450
  %v452 = vmul.f32 %v450, %v451
  %v453 = vsub.f32 1.0, %v452
  %v454 = vmul.f32 %v451, %v453
  %v455 = vadd.f32 %v451, %v454
  %vm456 = vweird.f32 %v450
  %vm457 = vweird.f32 %v451
  %vm458 = vmor %vm456, %vm457
  %v459 = vsel %vm458, %v451, %v455
  %v460 = vand.u32 2147483647, %v450
  %vm461 = vcmp.eq.f32.partialorder %v460, 8.507059e+37
  %v462 = vand.u32 %v450, 2147483648
  %v463 = vor.u32 1.1754944e-38, %v462
  %v464 = vsel %vm461, %v463, %v459
  %v465 = vmul.f32 1.0, %v464
  %v466 = vtanh.pop %v446
  %v468 = vrot.slane %v405, 7
  %v470 = vmul.f32 %v465, %v468
  %472 = vrot.lane.b32.xlu0 %v466, 64
  %v473 = vpop.permute.xlu0 %472
  %v475 = vmul.f32 %v465, %v473
  %477 = vrot.lane.b32.xlu0 %v475, 32
  %v478 = vpop.permute.xlu0 %477
  %v480 = vadd.f32 %v470, %v478
  %v481 = vtanh.pop %v480
  %483 = vrot.lane.b32.xlu0 %v481, 64
  %v484 = vpop.permute.xlu0 %483
  %v486 = vmul.f32 %v465, %v484
  %488 = vrot.lane.b32.xlu0 %v486, 32
  %v489 = vpop.permute.xlu0 %488
  %vm491 = vcmask 257027
  %492 = vst.msk [vmem:[%s7] sm:$0x8] %vm491, %v489
  %v493 = vrot.slane %v486, 3
  %494 = vrot.lane.b32.xlu0 %v493, 32
  %v495 = vpop.permute.xlu0 %494
  %v496 = vsel %vm134, %v495, 0
  %498 = vmatpush.msra.mxu0 0.0
  %499 = vmatpush.msra.mxu0 0.0
  %500 = vmatpush.msra.mxu0 0.0
  %501 = vmatpush.msra.mxu0 0.0
  %502 = vmatpush.msra.mxu0 0.0
  %503 = vmatpush.msra.mxu0 0.0
  %504 = vmatpush.msra.mxu0 0.0
  %505 = vmatpush.msra.mxu0 0.0
  %506 = vmatpush.msra.mxu0 0.0
  %507 = vmatpush.msra.mxu0 0.0
  %508 = vmatpush.msra.mxu0 0.0
  %509 = vmatpush.msra.mxu0 0.0
  %510 = vmatpush.msra.mxu0 %v199
  %511 = vmatpush.msra.mxu0 %v198
  %512 = vmatpush.msra.mxu0 %v197
  %513 = vmatpush.msra.mxu0 %v196
  %514 = vmatmul.f32.gmra.mxu0 %v496
  %v515 = vpop.f32.mrf.mxu0
  %v516 = vadd.f32 0.0, %v515
  %517 = vdwg.mxu0
  %v519 = vrot.slane %v516, 4
  %v521 = vadd.f32 %v162, %v519
  %v522 = vxor.u32 %v521, 2147483648
  %v523 = vmul.f32 %v522, 1.442695
  %v524 = vpow.pop %v523
  %v525 = vadd.f32 %v524, 1.0
  %v526 = vrcp.pop %v525
  %v527 = vmul.f32 %v525, %v526
  %v528 = vsub.f32 1.0, %v527
  %v529 = vmul.f32 %v526, %v528
  %v530 = vadd.f32 %v526, %v529
  %vm531 = vweird.f32 %v525
  %vm532 = vweird.f32 %v526
  %vm533 = vmor %vm531, %vm532
  %v534 = vsel %vm533, %v526, %v530
  %v535 = vand.u32 2147483647, %v525
  %vm536 = vcmp.eq.f32.partialorder %v535, 8.507059e+37
  %v537 = vand.u32 %v525, 2147483648
  %v538 = vor.u32 1.1754944e-38, %v537
  %v539 = vsel %vm536, %v538, %v534
  %v540 = vmul.f32 1.0, %v539
  %v541 = vtanh.pop %v521
  %v543 = vrot.slane %v480, 7
  %v545 = vmul.f32 %v540, %v543
  %547 = vrot.lane.b32.xlu0 %v541, 64
  %v548 = vpop.permute.xlu0 %547
  %v550 = vmul.f32 %v540, %v548
  %552 = vrot.lane.b32.xlu0 %v550, 32
  %v553 = vpop.permute.xlu0 %552
  %v555 = vadd.f32 %v545, %v553
  %v556 = vtanh.pop %v555
  %558 = vrot.lane.b32.xlu0 %v556, 64
  %v559 = vpop.permute.xlu0 %558
  %v561 = vmul.f32 %v540, %v559
  %563 = vrot.lane.b32.xlu0 %v561, 32
  %v564 = vpop.permute.xlu0 %563
  %vm566 = vcmask 258052
  %567 = vst.msk [vmem:[%s7] sm:$0x10] %vm566, %v564
  %v568 = vrot.slane %v561, 4
  %569 = vrot.lane.b32.xlu0 %v568, 32
  %v570 = vpop.permute.xlu0 %569
  %v571 = vsel %vm134, %v570, 0
  %573 = vmatpush.msra.mxu0 0.0
  %574 = vmatpush.msra.mxu0 0.0
  %575 = vmatpush.msra.mxu0 0.0
  %576 = vmatpush.msra.mxu0 0.0
  %577 = vmatpush.msra.mxu0 0.0
  %578 = vmatpush.msra.mxu0 0.0
  %579 = vmatpush.msra.mxu0 0.0
  %580 = vmatpush.msra.mxu0 0.0
  %581 = vmatpush.msra.mxu0 0.0
  %582 = vmatpush.msra.mxu0 0.0
  %583 = vmatpush.msra.mxu0 0.0
  %584 = vmatpush.msra.mxu0 0.0
  %585 = vmatpush.msra.mxu0 %v199
  %586 = vmatpush.msra.mxu0 %v198
  %587 = vmatpush.msra.mxu0 %v197
  %588 = vmatpush.msra.mxu0 %v196
  %589 = vmatmul.f32.gmra.mxu0 %v571
  %v590 = vpop.f32.mrf.mxu0
  %v591 = vadd.f32 0.0, %v590
  %592 = vdwg.mxu0
  %v594 = vrot.slane %v591, 3
  %v596 = vadd.f32 %v162, %v594
  %v597 = vxor.u32 %v596, 2147483648
  %v598 = vmul.f32 %v597, 1.442695
  %v599 = vpow.pop %v598
  %v600 = vadd.f32 %v599, 1.0
  %v601 = vrcp.pop %v600
  %v602 = vmul.f32 %v600, %v601
  %v603 = vsub.f32 1.0, %v602
  %v604 = vmul.f32 %v601, %v603
  %v605 = vadd.f32 %v601, %v604
  %vm606 = vweird.f32 %v600
  %vm607 = vweird.f32 %v601
  %vm608 = vmor %vm606, %vm607
  %v609 = vsel %vm608, %v601, %v605
  %v610 = vand.u32 2147483647, %v600
  %vm611 = vcmp.eq.f32.partialorder %v610, 8.507059e+37
  %v612 = vand.u32 %v600, 2147483648
  %v613 = vor.u32 1.1754944e-38, %v612
  %v614 = vsel %vm611, %v613, %v609
  %v615 = vmul.f32 1.0, %v614
  %v616 = vtanh.pop %v596
  %v618 = vrot.slane %v555, 7
  %v620 = vmul.f32 %v615, %v618
  %622 = vrot.lane.b32.xlu0 %v616, 64
  %v623 = vpop.permute.xlu0 %622
  %v625 = vmul.f32 %v615, %v623
  %627 = vrot.lane.b32.xlu0 %v625, 32
  %v628 = vpop.permute.xlu0 %627
  %v630 = vadd.f32 %v620, %v628
  %v631 = vtanh.pop %v630
  %633 = vrot.lane.b32.xlu0 %v631, 64
  %v634 = vpop.permute.xlu0 %633
  %v636 = vmul.f32 %v615, %v634
  %638 = vrot.lane.b32.xlu0 %v636, 32
  %v639 = vpop.permute.xlu0 %638
  %vm641 = vcmask 259077
  %642 = vst.msk [vmem:[%s7] sm:$0x20] %vm641, %v639
  %v643 = vrot.slane %v636, 5
  %644 = vrot.lane.b32.xlu0 %v643, 32
  %v645 = vpop.permute.xlu0 %644
  %v646 = vsel %vm134, %v645, 0
  %648 = vmatpush.msra.mxu0 0.0
  %649 = vmatpush.msra.mxu0 0.0
  %650 = vmatpush.msra.mxu0 0.0
  %651 = vmatpush.msra.mxu0 0.0
  %652 = vmatpush.msra.mxu0 0.0
  %653 = vmatpush.msra.mxu0 0.0
  %654 = vmatpush.msra.mxu0 0.0
  %655 = vmatpush.msra.mxu0 0.0
  %656 = vmatpush.msra.mxu0 0.0
  %657 = vmatpush.msra.mxu0 0.0
  %658 = vmatpush.msra.mxu0 0.0
  %659 = vmatpush.msra.mxu0 0.0
  %660 = vmatpush.msra.mxu0 %v199
  %661 = vmatpush.msra.mxu0 %v198
  %662 = vmatpush.msra.mxu0 %v197
  %663 = vmatpush.msra.mxu0 %v196
  %664 = vmatmul.f32.gmra.mxu0 %v646
  %v665 = vpop.f32.mrf.mxu0
  %v666 = vadd.f32 0.0, %v665
  %667 = vdwg.mxu0
  %v669 = vrot.slane %v666, 2
  %v671 = vadd.f32 %v162, %v669
  %v672 = vxor.u32 %v671, 2147483648
  %v673 = vmul.f32 %v672, 1.442695
  %v674 = vpow.pop %v673
  %v675 = vadd.f32 %v674, 1.0
  %v676 = vrcp.pop %v675
  %v677 = vmul.f32 %v675, %v676
  %v678 = vsub.f32 1.0, %v677
  %v679 = vmul.f32 %v676, %v678
  %v680 = vadd.f32 %v676, %v679
  %vm681 = vweird.f32 %v675
  %vm682 = vweird.f32 %v676
  %vm683 = vmor %vm681, %vm682
  %v684 = vsel %vm683, %v676, %v680
  %v685 = vand.u32 2147483647, %v675
  %vm686 = vcmp.eq.f32.partialorder %v685, 8.507059e+37
  %v687 = vand.u32 %v675, 2147483648
  %v688 = vor.u32 1.1754944e-38, %v687
  %v689 = vsel %vm686, %v688, %v684
  %v690 = vmul.f32 1.0, %v689
  %v691 = vtanh.pop %v671
  %v693 = vrot.slane %v630, 7
  %v695 = vmul.f32 %v690, %v693
  %697 = vrot.lane.b32.xlu0 %v691, 64
  %v698 = vpop.permute.xlu0 %697
  %v700 = vmul.f32 %v690, %v698
  %702 = vrot.lane.b32.xlu0 %v700, 32
  %v703 = vpop.permute.xlu0 %702
  %v705 = vadd.f32 %v695, %v703
  %v706 = vtanh.pop %v705
  %708 = vrot.lane.b32.xlu0 %v706, 64
  %v709 = vpop.permute.xlu0 %708
  %v711 = vmul.f32 %v690, %v709
  %713 = vrot.lane.b32.xlu0 %v711, 32
  %v714 = vpop.permute.xlu0 %713
  %vm716 = vcmask 260102
  %717 = vst.msk [vmem:[%s7] sm:$0x40] %vm716, %v714
  %v718 = vrot.slane %v711, 6
  %719 = vrot.lane.b32.xlu0 %v718, 32
  %v720 = vpop.permute.xlu0 %719
  %v721 = vsel %vm134, %v720, 0
  %723 = vmatpush.msra.mxu0 0.0
  %724 = vmatpush.msra.mxu0 0.0
  %725 = vmatpush.msra.mxu0 0.0
  %726 = vmatpush.msra.mxu0 0.0
  %727 = vmatpush.msra.mxu0 0.0
  %728 = vmatpush.msra.mxu0 0.0
  %729 = vmatpush.msra.mxu0 0.0
  %730 = vmatpush.msra.mxu0 0.0
  %731 = vmatpush.msra.mxu0 0.0
  %732 = vmatpush.msra.mxu0 0.0
  %733 = vmatpush.msra.mxu0 0.0
  %734 = vmatpush.msra.mxu0 0.0
  %735 = vmatpush.msra.mxu0 %v199
  %736 = vmatpush.msra.mxu0 %v198
  %737 = vmatpush.msra.mxu0 %v197
  %738 = vmatpush.msra.mxu0 %v196
  %739 = vmatmul.f32.gmra.mxu0 %v721
  %v740 = vpop.f32.mrf.mxu0
  %v741 = vadd.f32 0.0, %v740
  %742 = vdwg.mxu0
  %v744 = vrot.slane %v741, 1
  %v746 = vadd.f32 %v162, %v744
  %v747 = vxor.u32 %v746, 2147483648
  %v748 = vmul.f32 %v747, 1.442695
  %v749 = vpow.pop %v748
  %v750 = vadd.f32 %v749, 1.0
  %v751 = vrcp.pop %v750
  %v752 = vmul.f32 %v750, %v751
  %v753 = vsub.f32 1.0, %v752
  %v754 = vmul.f32 %v751, %v753
  %v755 = vadd.f32 %v751, %v754
  %vm756 = vweird.f32 %v750
  %vm757 = vweird.f32 %v751
  %vm758 = vmor %vm756, %vm757
  %v759 = vsel %vm758, %v751, %v755
  %v760 = vand.u32 2147483647, %v750
  %vm761 = vcmp.eq.f32.partialorder %v760, 8.507059e+37
  %v762 = vand.u32 %v750, 2147483648
  %v763 = vor.u32 1.1754944e-38, %v762
  %v764 = vsel %vm761, %v763, %v759
  %v765 = vmul.f32 1.0, %v764
  %v766 = vtanh.pop %v746
  %v768 = vrot.slane %v705, 7
  %v770 = vmul.f32 %v765, %v768
  %772 = vrot.lane.b32.xlu0 %v766, 64
  %v773 = vpop.permute.xlu0 %772
  %v775 = vmul.f32 %v765, %v773
  %777 = vrot.lane.b32.xlu0 %v775, 32
  %v778 = vpop.permute.xlu0 %777
  %v780 = vadd.f32 %v770, %v778
  %v781 = vtanh.pop %v780
  %783 = vrot.lane.b32.xlu0 %v781, 64
  %v784 = vpop.permute.xlu0 %783
  %v786 = vmul.f32 %v765, %v784
  %788 = vrot.lane.b32.xlu0 %v786, 32
  %v789 = vpop.permute.xlu0 %788
  %vm791 = vcmask 261127
  %792 = vst.msk [vmem:[%s7] sm:$0x80] %vm791, %v789
  %v793 = vrot.slane %v786, 7
  %794 = vrot.lane.b32.xlu0 %v793, 32
  %v795 = vpop.permute.xlu0 %794
  %v796 = vsel %vm134, %v795, 0
  %798 = vmatpush.msra.mxu0 0.0
  %799 = vmatpush.msra.mxu0 0.0
  %800 = vmatpush.msra.mxu0 0.0
  %801 = vmatpush.msra.mxu0 0.0
  %802 = vmatpush.msra.mxu0 0.0
  %803 = vmatpush.msra.mxu0 0.0
  %804 = vmatpush.msra.mxu0 0.0
  %805 = vmatpush.msra.mxu0 0.0
  %806 = vmatpush.msra.mxu0 0.0
  %807 = vmatpush.msra.mxu0 0.0
  %808 = vmatpush.msra.mxu0 0.0
  %809 = vmatpush.msra.mxu0 0.0
  %810 = vmatpush.msra.mxu0 %v199
  %811 = vmatpush.msra.mxu0 %v198
  %812 = vmatpush.msra.mxu0 %v197
  %813 = vmatpush.msra.mxu0 %v196
  %814 = vmatmul.f32.gmra.mxu0 %v796
  %v815 = vpop.f32.mrf.mxu0
  %v816 = vadd.f32 0.0, %v815
  %817 = vdwg.mxu0
  %v818 = vadd.f32 %v165, %v816
  %v819 = vxor.u32 %v818, 2147483648
  %v820 = vmul.f32 %v819, 1.442695
  %v821 = vpow.pop %v820
  %v822 = vadd.f32 %v821, 1.0
  %v823 = vrcp.pop %v822
  %v824 = vmul.f32 %v822, %v823
  %v825 = vsub.f32 1.0, %v824
  %v826 = vmul.f32 %v823, %v825
  %v827 = vadd.f32 %v823, %v826
  %vm828 = vweird.f32 %v822
  %vm829 = vweird.f32 %v823
  %vm830 = vmor %vm828, %vm829
  %v831 = vsel %vm830, %v823, %v827
  %v832 = vand.u32 2147483647, %v822
  %vm833 = vcmp.eq.f32.partialorder %v832, 8.507059e+37
  %v834 = vand.u32 %v822, 2147483648
  %v835 = vor.u32 1.1754944e-38, %v834
  %v836 = vsel %vm833, %v835, %v831
  %v837 = vmul.f32 1.0, %v836
  %v838 = vtanh.pop %v818
  %v840 = vrot.slane %v780, 7
  %v842 = vmul.f32 %v837, %v840
  %844 = vrot.lane.b32.xlu0 %v838, 64
  %v845 = vpop.permute.xlu0 %844
  %v847 = vmul.f32 %v837, %v845
  %849 = vrot.lane.b32.xlu0 %v847, 32
  %v850 = vpop.permute.xlu0 %849
  %v852 = vadd.f32 %v842, %v850
  %v853 = vtanh.pop %v852
  %855 = vrot.lane.b32.xlu0 %v853, 64
  %v856 = vpop.permute.xlu0 %855
  %v858 = vmul.f32 %v837, %v856
  %860 = vrot.lane.b32.xlu0 %v858, 32
  %v861 = vpop.permute.xlu0 %860
  %863 = vst.msk [vmem:[%s7 + $0x8] sm:$0x1] %vm269, %v861
  %864 = vmatpush.msra.mxu0 0.0
  %865 = vmatpush.msra.mxu0 0.0
  %866 = vmatpush.msra.mxu0 0.0
  %867 = vmatpush.msra.mxu0 0.0
  %868 = vmatpush.msra.mxu0 0.0
  %869 = vmatpush.msra.mxu0 0.0
  %870 = vmatpush.msra.mxu0 0.0
  %871 = vmatpush.msra.mxu0 0.0
  %872 = vmatpush.msra.mxu0 0.0
  %873 = vmatpush.msra.mxu0 0.0
  %874 = vmatpush.msra.mxu0 0.0
  %875 = vmatpush.msra.mxu0 0.0
  %876 = vmatpush.msra.mxu0 %v203
  %877 = vmatpush.msra.mxu0 %v202
  %878 = vmatpush.msra.mxu0 %v201
  %879 = vmatpush.msra.mxu0 %v200
  %880 = vmatmul.f32.gmra.mxu0 %v205
  %v881 = vpop.f32.mrf.mxu0
  %v882 = vadd.f32 0.0, %v881
  %883 = vdwg.mxu0
  %v884 = vadd.f32 %v191, %v882
  %v885 = vxor.u32 %v884, 2147483648
  %v886 = vmul.f32 %v885, 1.442695
  %v887 = vpow.pop %v886
  %v888 = vadd.f32 %v887, 1.0
  %v889 = vrcp.pop %v888
  %v890 = vmul.f32 %v888, %v889
  %v891 = vsub.f32 1.0, %v890
  %v892 = vmul.f32 %v889, %v891
  %v893 = vadd.f32 %v889, %v892
  %vm894 = vweird.f32 %v888
  %vm895 = vweird.f32 %v889
  %vm896 = vmor %vm894, %vm895
  %v897 = vsel %vm896, %v889, %v893
  %v898 = vand.u32 2147483647, %v888
  %vm899 = vcmp.eq.f32.partialorder %v898, 8.507059e+37
  %v900 = vand.u32 %v888, 2147483648
  %v901 = vor.u32 1.1754944e-38, %v900
  %v902 = vsel %vm899, %v901, %v897
  %v903 = vmul.f32 1.0, %v902
  %v904 = vtanh.pop %v884
  %v905 = vmul.f32 %v903, 0.0
  %907 = vrot.lane.b32.xlu0 %v904, 64
  %v908 = vpop.permute.xlu0 %907
  %v910 = vmul.f32 %v903, %v908
  %912 = vrot.lane.b32.xlu0 %v910, 32
  %v913 = vpop.permute.xlu0 %912
  %v915 = vadd.f32 %v905, %v913
  %v916 = vtanh.pop %v915
  %918 = vrot.lane.b32.xlu0 %v916, 64
  %v919 = vpop.permute.xlu0 %918
  %v921 = vmul.f32 %v903, %v919
  %923 = vrot.lane.b32.xlu0 %v921, 64
  %v924 = vpop.permute.xlu0 %923
  %vm926 = vcmask 516352
  %927 = vst.msk [vmem:[%s7 + $0x8] sm:$0x1] %vm926, %v924
  %928 = vrot.lane.b32.xlu0 %v921, 32
  %v929 = vpop.permute.xlu0 %928
  %v930 = vsel %vm134, %v929, 0
  %932 = vmatpush.msra.mxu0 0.0
  %933 = vmatpush.msra.mxu0 0.0
  %934 = vmatpush.msra.mxu0 0.0
  %935 = vmatpush.msra.mxu0 0.0
  %936 = vmatpush.msra.mxu0 0.0
  %937 = vmatpush.msra.mxu0 0.0
  %938 = vmatpush.msra.mxu0 0.0
  %939 = vmatpush.msra.mxu0 0.0
  %940 = vmatpush.msra.mxu0 0.0
  %941 = vmatpush.msra.mxu0 0.0
  %942 = vmatpush.msra.mxu0 0.0
  %943 = vmatpush.msra.mxu0 0.0
  %944 = vmatpush.msra.mxu0 %v203
  %945 = vmatpush.msra.mxu0 %v202
  %946 = vmatpush.msra.mxu0 %v201
  %947 = vmatpush.msra.mxu0 %v200
  %948 = vmatmul.f32.gmra.mxu0 %v930
  %v949 = vpop.f32.mrf.mxu0
  %v950 = vadd.f32 0.0, %v949
  %951 = vdwg.mxu0
  %v953 = vrot.slane %v950, 1
  %v955 = vadd.f32 %v188, %v953
  %v956 = vxor.u32 %v955, 2147483648
  %v957 = vmul.f32 %v956, 1.442695
  %v958 = vpow.pop %v957
  %v959 = vadd.f32 %v958, 1.0
  %v960 = vrcp.pop %v959
  %v961 = vmul.f32 %v959, %v960
  %v962 = vsub.f32 1.0, %v961
  %v963 = vmul.f32 %v960, %v962
  %v964 = vadd.f32 %v960, %v963
  %vm965 = vweird.f32 %v959
  %vm966 = vweird.f32 %v960
  %vm967 = vmor %vm965, %vm966
  %v968 = vsel %vm967, %v960, %v964
  %v969 = vand.u32 2147483647, %v959
  %vm970 = vcmp.eq.f32.partialorder %v969, 8.507059e+37
  %v971 = vand.u32 %v959, 2147483648
  %v972 = vor.u32 1.1754944e-38, %v971
  %v973 = vsel %vm970, %v972, %v968
  %v974 = vmul.f32 1.0, %v973
  %v975 = vtanh.pop %v955
  %v977 = vrot.slane %v915, 1
  %v979 = vmul.f32 %v974, %v977
  %981 = vrot.lane.b32.xlu0 %v975, 64
  %v982 = vpop.permute.xlu0 %981
  %v984 = vmul.f32 %v974, %v982
  %986 = vrot.lane.b32.xlu0 %v984, 32
  %v987 = vpop.permute.xlu0 %986
  %v989 = vadd.f32 %v979, %v987
  %v990 = vtanh.pop %v989
  %992 = vrot.lane.b32.xlu0 %v990, 64
  %v993 = vpop.permute.xlu0 %992
  %v995 = vmul.f32 %v974, %v993
  %997 = vrot.lane.b32.xlu0 %v995, 64
  %v998 = vpop.permute.xlu0 %997
  %vm1000 = vcmask 523527
  %1001 = vst.msk [vmem:[%s7] sm:$0x80] %vm1000, %v998
  %v1002 = vrot.slane %v995, 7
  %1003 = vrot.lane.b32.xlu0 %v1002, 32
  %v1004 = vpop.permute.xlu0 %1003
  %v1005 = vsel %vm134, %v1004, 0
  %1007 = vmatpush.msra.mxu0 0.0
  %1008 = vmatpush.msra.mxu0 0.0
  %1009 = vmatpush.msra.mxu0 0.0
  %1010 = vmatpush.msra.mxu0 0.0
  %1011 = vmatpush.msra.mxu0 0.0
  %1012 = vmatpush.msra.mxu0 0.0
  %1013 = vmatpush.msra.mxu0 0.0
  %1014 = vmatpush.msra.mxu0 0.0
  %1015 = vmatpush.msra.mxu0 0.0
  %1016 = vmatpush.msra.mxu0 0.0
  %1017 = vmatpush.msra.mxu0 0.0
  %1018 = vmatpush.msra.mxu0 0.0
  %1019 = vmatpush.msra.mxu0 %v203
  %1020 = vmatpush.msra.mxu0 %v202
  %1021 = vmatpush.msra.mxu0 %v201
  %1022 = vmatpush.msra.mxu0 %v200
  %1023 = vmatmul.f32.gmra.mxu0 %v1005
  %v1024 = vpop.f32.mrf.mxu0
  %v1025 = vadd.f32 0.0, %v1024
  %1026 = vdwg.mxu0
  %v1028 = vrot.slane %v1025, 2
  %v1030 = vadd.f32 %v188, %v1028
  %v1031 = vxor.u32 %v1030, 2147483648
  %v1032 = vmul.f32 %v1031, 1.442695
  %v1033 = vpow.pop %v1032
  %v1034 = vadd.f32 %v1033, 1.0
  %v1035 = vrcp.pop %v1034
  %v1036 = vmul.f32 %v1034, %v1035
  %v1037 = vsub.f32 1.0, %v1036
  %v1038 = vmul.f32 %v1035, %v1037
  %v1039 = vadd.f32 %v1035, %v1038
  %vm1040 = vweird.f32 %v1034
  %vm1041 = vweird.f32 %v1035
  %vm1042 = vmor %vm1040, %vm1041
  %v1043 = vsel %vm1042, %v1035, %v1039
  %v1044 = vand.u32 2147483647, %v1034
  %vm1045 = vcmp.eq.f32.partialorder %v1044, 8.507059e+37
  %v1046 = vand.u32 %v1034, 2147483648
  %v1047 = vor.u32 1.1754944e-38, %v1046
  %v1048 = vsel %vm1045, %v1047, %v1043
  %v1049 = vmul.f32 1.0, %v1048
  %v1050 = vtanh.pop %v1030
  %v1052 = vrot.slane %v989, 1
  %v1054 = vmul.f32 %v1049, %v1052
  %1056 = vrot.lane.b32.xlu0 %v1050, 64
  %v1057 = vpop.permute.xlu0 %1056
  %v1059 = vmul.f32 %v1049, %v1057
  %1061 = vrot.lane.b32.xlu0 %v1059, 32
  %v1062 = vpop.permute.xlu0 %1061
  %v1064 = vadd.f32 %v1054, %v1062
  %v1065 = vtanh.pop %v1064
  %1067 = vrot.lane.b32.xlu0 %v1065, 64
  %v1068 = vpop.permute.xlu0 %1067
  %v1070 = vmul.f32 %v1049, %v1068
  %1072 = vrot.lane.b32.xlu0 %v1070, 64
  %v1073 = vpop.permute.xlu0 %1072
  %vm1075 = vcmask 522502
  %1076 = vst.msk [vmem:[%s7] sm:$0x40] %vm1075, %v1073
  %v1077 = vrot.slane %v1070, 6
  %1078 = vrot.lane.b32.xlu0 %v1077, 32
  %v1079 = vpop.permute.xlu0 %1078
  %v1080 = vsel %vm134, %v1079, 0
  %1082 = vmatpush.msra.mxu0 0.0
  %1083 = vmatpush.msra.mxu0 0.0
  %1084 = vmatpush.msra.mxu0 0.0
  %1085 = vmatpush.msra.mxu0 0.0
  %1086 = vmatpush.msra.mxu0 0.0
  %1087 = vmatpush.msra.mxu0 0.0
  %1088 = vmatpush.msra.mxu0 0.0
  %1089 = vmatpush.msra.mxu0 0.0
  %1090 = vmatpush.msra.mxu0 0.0
  %1091 = vmatpush.msra.mxu0 0.0
  %1092 = vmatpush.msra.mxu0 0.0
  %1093 = vmatpush.msra.mxu0 0.0
  %1094 = vmatpush.msra.mxu0 %v203
  %1095 = vmatpush.msra.mxu0 %v202
  %1096 = vmatpush.msra.mxu0 %v201
  %1097 = vmatpush.msra.mxu0 %v200
  %1098 = vmatmul.f32.gmra.mxu0 %v1080
  %v1099 = vpop.f32.mrf.mxu0
  %v1100 = vadd.f32 0.0, %v1099
  %1101 = vdwg.mxu0
  %v1103 = vrot.slane %v1100, 3
  %v1105 = vadd.f32 %v188, %v1103
  %v1106 = vxor.u32 %v1105, 2147483648
  %v1107 = vmul.f32 %v1106, 1.442695
  %v1108 = vpow.pop %v1107
  %v1109 = vadd.f32 %v1108, 1.0
  %v1110 = vrcp.pop %v1109
  %v1111 = vmul.f32 %v1109, %v1110
  %v1112 = vsub.f32 1.0, %v1111
  %v1113 = vmul.f32 %v1110, %v1112
  %v1114 = vadd.f32 %v1110, %v1113
  %vm1115 = vweird.f32 %v1109
  %vm1116 = vweird.f32 %v1110
  %vm1117 = vmor %vm1115, %vm1116
  %v1118 = vsel %vm1117, %v1110, %v1114
  %v1119 = vand.u32 2147483647, %v1109
  %vm1120 = vcmp.eq.f32.partialorder %v1119, 8.507059e+37
  %v1121 = vand.u32 %v1109, 2147483648
  %v1122 = vor.u32 1.1754944e-38, %v1121
  %v1123 = vsel %vm1120, %v1122, %v1118
  %v1124 = vmul.f32 1.0, %v1123
  %v1125 = vtanh.pop %v1105
  %v1127 = vrot.slane %v1064, 1
  %v1129 = vmul.f32 %v1124, %v1127
  %1131 = vrot.lane.b32.xlu0 %v1125, 64
  %v1132 = vpop.permute.xlu0 %1131
  %v1134 = vmul.f32 %v1124, %v1132
  %1136 = vrot.lane.b32.xlu0 %v1134, 32
  %v1137 = vpop.permute.xlu0 %1136
  %v1139 = vadd.f32 %v1129, %v1137
  %v1140 = vtanh.pop %v1139
  %1142 = vrot.lane.b32.xlu0 %v1140, 64
  %v1143 = vpop.permute.xlu0 %1142
  %v1145 = vmul.f32 %v1124, %v1143
  %1147 = vrot.lane.b32.xlu0 %v1145, 64
  %v1148 = vpop.permute.xlu0 %1147
  %vm1150 = vcmask 521477
  %1151 = vst.msk [vmem:[%s7] sm:$0x20] %vm1150, %v1148
  %v1152 = vrot.slane %v1145, 5
  %1153 = vrot.lane.b32.xlu0 %v1152, 32
  %v1154 = vpop.permute.xlu0 %1153
  %v1155 = vsel %vm134, %v1154, 0
  %1157 = vmatpush.msra.mxu0 0.0
  %1158 = vmatpush.msra.mxu0 0.0
  %1159 = vmatpush.msra.mxu0 0.0
  %1160 = vmatpush.msra.mxu0 0.0
  %1161 = vmatpush.msra.mxu0 0.0
  %1162 = vmatpush.msra.mxu0 0.0
  %1163 = vmatpush.msra.mxu0 0.0
  %1164 = vmatpush.msra.mxu0 0.0
  %1165 = vmatpush.msra.mxu0 0.0
  %1166 = vmatpush.msra.mxu0 0.0
  %1167 = vmatpush.msra.mxu0 0.0
  %1168 = vmatpush.msra.mxu0 0.0
  %1169 = vmatpush.msra.mxu0 %v203
  %1170 = vmatpush.msra.mxu0 %v202
  %1171 = vmatpush.msra.mxu0 %v201
  %1172 = vmatpush.msra.mxu0 %v200
  %1173 = vmatmul.f32.gmra.mxu0 %v1155
  %v1174 = vpop.f32.mrf.mxu0
  %v1175 = vadd.f32 0.0, %v1174
  %1176 = vdwg.mxu0
  %v1178 = vrot.slane %v1175, 4
  %v1180 = vadd.f32 %v188, %v1178
  %v1181 = vxor.u32 %v1180, 2147483648
  %v1182 = vmul.f32 %v1181, 1.442695
  %v1183 = vpow.pop %v1182
  %v1184 = vadd.f32 %v1183, 1.0
  %v1185 = vrcp.pop %v1184
  %v1186 = vmul.f32 %v1184, %v1185
  %v1187 = vsub.f32 1.0, %v1186
  %v1188 = vmul.f32 %v1185, %v1187
  %v1189 = vadd.f32 %v1185, %v1188
  %vm1190 = vweird.f32 %v1184
  %vm1191 = vweird.f32 %v1185
  %vm1192 = vmor %vm1190, %vm1191
  %v1193 = vsel %vm1192, %v1185, %v1189
  %v1194 = vand.u32 2147483647, %v1184
  %vm1195 = vcmp.eq.f32.partialorder %v1194, 8.507059e+37
  %v1196 = vand.u32 %v1184, 2147483648
  %v1197 = vor.u32 1.1754944e-38, %v1196
  %v1198 = vsel %vm1195, %v1197, %v1193
  %v1199 = vmul.f32 1.0, %v1198
  %v1200 = vtanh.pop %v1180
  %v1202 = vrot.slane %v1139, 1
  %v1204 = vmul.f32 %v1199, %v1202
  %1206 = vrot.lane.b32.xlu0 %v1200, 64
  %v1207 = vpop.permute.xlu0 %1206
  %v1209 = vmul.f32 %v1199, %v1207
  %1211 = vrot.lane.b32.xlu0 %v1209, 32
  %v1212 = vpop.permute.xlu0 %1211
  %v1214 = vadd.f32 %v1204, %v1212
  %v1215 = vtanh.pop %v1214
  %1217 = vrot.lane.b32.xlu0 %v1215, 64
  %v1218 = vpop.permute.xlu0 %1217
  %v1220 = vmul.f32 %v1199, %v1218
  %1222 = vrot.lane.b32.xlu0 %v1220, 64
  %v1223 = vpop.permute.xlu0 %1222
  %vm1225 = vcmask 520452
  %1226 = vst.msk [vmem:[%s7] sm:$0x10] %vm1225, %v1223
  %v1227 = vrot.slane %v1220, 4
  %1228 = vrot.lane.b32.xlu0 %v1227, 32
  %v1229 = vpop.permute.xlu0 %1228
  %v1230 = vsel %vm134, %v1229, 0
  %1232 = vmatpush.msra.mxu0 0.0
  %1233 = vmatpush.msra.mxu0 0.0
  %1234 = vmatpush.msra.mxu0 0.0
  %1235 = vmatpush.msra.mxu0 0.0
  %1236 = vmatpush.msra.mxu0 0.0
  %1237 = vmatpush.msra.mxu0 0.0
  %1238 = vmatpush.msra.mxu0 0.0
  %1239 = vmatpush.msra.mxu0 0.0
  %1240 = vmatpush.msra.mxu0 0.0
  %1241 = vmatpush.msra.mxu0 0.0
  %1242 = vmatpush.msra.mxu0 0.0
  %1243 = vmatpush.msra.mxu0 0.0
  %1244 = vmatpush.msra.mxu0 %v203
  %1245 = vmatpush.msra.mxu0 %v202
  %1246 = vmatpush.msra.mxu0 %v201
  %1247 = vmatpush.msra.mxu0 %v200
  %1248 = vmatmul.f32.gmra.mxu0 %v1230
  %v1249 = vpop.f32.mrf.mxu0
  %v1250 = vadd.f32 0.0, %v1249
  %1251 = vdwg.mxu0
  %v1253 = vrot.slane %v1250, 5
  %v1255 = vadd.f32 %v188, %v1253
  %v1256 = vxor.u32 %v1255, 2147483648
  %v1257 = vmul.f32 %v1256, 1.442695
  %v1258 = vpow.pop %v1257
  %v1259 = vadd.f32 %v1258, 1.0
  %v1260 = vrcp.pop %v1259
  %v1261 = vmul.f32 %v1259, %v1260
  %v1262 = vsub.f32 1.0, %v1261
  %v1263 = vmul.f32 %v1260, %v1262
  %v1264 = vadd.f32 %v1260, %v1263
  %vm1265 = vweird.f32 %v1259
  %vm1266 = vweird.f32 %v1260
  %vm1267 = vmor %vm1265, %vm1266
  %v1268 = vsel %vm1267, %v1260, %v1264
  %v1269 = vand.u32 2147483647, %v1259
  %vm1270 = vcmp.eq.f32.partialorder %v1269, 8.507059e+37
  %v1271 = vand.u32 %v1259, 2147483648
  %v1272 = vor.u32 1.1754944e-38, %v1271
  %v1273 = vsel %vm1270, %v1272, %v1268
  %v1274 = vmul.f32 1.0, %v1273
  %v1275 = vtanh.pop %v1255
  %v1277 = vrot.slane %v1214, 1
  %v1279 = vmul.f32 %v1274, %v1277
  %1281 = vrot.lane.b32.xlu0 %v1275, 64
  %v1282 = vpop.permute.xlu0 %1281
  %v1284 = vmul.f32 %v1274, %v1282
  %1286 = vrot.lane.b32.xlu0 %v1284, 32
  %v1287 = vpop.permute.xlu0 %1286
  %v1289 = vadd.f32 %v1279, %v1287
  %v1290 = vtanh.pop %v1289
  %1292 = vrot.lane.b32.xlu0 %v1290, 64
  %v1293 = vpop.permute.xlu0 %1292
  %v1295 = vmul.f32 %v1274, %v1293
  %1297 = vrot.lane.b32.xlu0 %v1295, 64
  %v1298 = vpop.permute.xlu0 %1297
  %vm1300 = vcmask 519427
  %1301 = vst.msk [vmem:[%s7] sm:$0x8] %vm1300, %v1298
  %v1302 = vrot.slane %v1295, 3
  %1303 = vrot.lane.b32.xlu0 %v1302, 32
  %v1304 = vpop.permute.xlu0 %1303
  %v1305 = vsel %vm134, %v1304, 0
  %1307 = vmatpush.msra.mxu0 0.0
  %1308 = vmatpush.msra.mxu0 0.0
  %1309 = vmatpush.msra.mxu0 0.0
  %1310 = vmatpush.msra.mxu0 0.0
  %1311 = vmatpush.msra.mxu0 0.0
  %1312 = vmatpush.msra.mxu0 0.0
  %1313 = vmatpush.msra.mxu0 0.0
  %1314 = vmatpush.msra.mxu0 0.0
  %1315 = vmatpush.msra.mxu0 0.0
  %1316 = vmatpush.msra.mxu0 0.0
  %1317 = vmatpush.msra.mxu0 0.0
  %1318 = vmatpush.msra.mxu0 0.0
  %1319 = vmatpush.msra.mxu0 %v203
  %1320 = vmatpush.msra.mxu0 %v202
  %1321 = vmatpush.msra.mxu0 %v201
  %1322 = vmatpush.msra.mxu0 %v200
  %1323 = vmatmul.f32.gmra.mxu0 %v1305
  %v1324 = vpop.f32.mrf.mxu0
  %v1325 = vadd.f32 0.0, %v1324
  %1326 = vdwg.mxu0
  %v1328 = vrot.slane %v1325, 6
  %v1330 = vadd.f32 %v188, %v1328
  %v1331 = vxor.u32 %v1330, 2147483648
  %v1332 = vmul.f32 %v1331, 1.442695
  %v1333 = vpow.pop %v1332
  %v1334 = vadd.f32 %v1333, 1.0
  %v1335 = vrcp.pop %v1334
  %v1336 = vmul.f32 %v1334, %v1335
  %v1337 = vsub.f32 1.0, %v1336
  %v1338 = vmul.f32 %v1335, %v1337
  %v1339 = vadd.f32 %v1335, %v1338
  %vm1340 = vweird.f32 %v1334
  %vm1341 = vweird.f32 %v1335
  %vm1342 = vmor %vm1340, %vm1341
  %v1343 = vsel %vm1342, %v1335, %v1339
  %v1344 = vand.u32 2147483647, %v1334
  %vm1345 = vcmp.eq.f32.partialorder %v1344, 8.507059e+37
  %v1346 = vand.u32 %v1334, 2147483648
  %v1347 = vor.u32 1.1754944e-38, %v1346
  %v1348 = vsel %vm1345, %v1347, %v1343
  %v1349 = vmul.f32 1.0, %v1348
  %v1350 = vtanh.pop %v1330
  %v1352 = vrot.slane %v1289, 1
  %v1354 = vmul.f32 %v1349, %v1352
  %1356 = vrot.lane.b32.xlu0 %v1350, 64
  %v1357 = vpop.permute.xlu0 %1356
  %v1359 = vmul.f32 %v1349, %v1357
  %1361 = vrot.lane.b32.xlu0 %v1359, 32
  %v1362 = vpop.permute.xlu0 %1361
  %v1364 = vadd.f32 %v1354, %v1362
  %v1365 = vtanh.pop %v1364
  %1367 = vrot.lane.b32.xlu0 %v1365, 64
  %v1368 = vpop.permute.xlu0 %1367
  %v1370 = vmul.f32 %v1349, %v1368
  %1372 = vrot.lane.b32.xlu0 %v1370, 64
  %v1373 = vpop.permute.xlu0 %1372
  %vm1375 = vcmask 518402
  %1376 = vst.msk [vmem:[%s7] sm:$0x4] %vm1375, %v1373
  %v1377 = vrot.slane %v1370, 2
  %1378 = vrot.lane.b32.xlu0 %v1377, 32
  %v1379 = vpop.permute.xlu0 %1378
  %v1380 = vsel %vm134, %v1379, 0
  %1382 = vmatpush.msra.mxu0 0.0
  %1383 = vmatpush.msra.mxu0 0.0
  %1384 = vmatpush.msra.mxu0 0.0
  %1385 = vmatpush.msra.mxu0 0.0
  %1386 = vmatpush.msra.mxu0 0.0
  %1387 = vmatpush.msra.mxu0 0.0
  %1388 = vmatpush.msra.mxu0 0.0
  %1389 = vmatpush.msra.mxu0 0.0
  %1390 = vmatpush.msra.mxu0 0.0
  %1391 = vmatpush.msra.mxu0 0.0
  %1392 = vmatpush.msra.mxu0 0.0
  %1393 = vmatpush.msra.mxu0 0.0
  %1394 = vmatpush.msra.mxu0 %v203
  %1395 = vmatpush.msra.mxu0 %v202
  %1396 = vmatpush.msra.mxu0 %v201
  %1397 = vmatpush.msra.mxu0 %v200
  %1398 = vmatmul.f32.gmra.mxu0 %v1380
  %v1399 = vpop.f32.mrf.mxu0
  %v1400 = vadd.f32 0.0, %v1399
  %1401 = vdwg.mxu0
  %v1403 = vrot.slane %v1400, 7
  %v1405 = vadd.f32 %v188, %v1403
  %v1406 = vxor.u32 %v1405, 2147483648
  %v1407 = vmul.f32 %v1406, 1.442695
  %v1408 = vpow.pop %v1407
  %v1409 = vadd.f32 %v1408, 1.0
  %v1410 = vrcp.pop %v1409
  %v1411 = vmul.f32 %v1409, %v1410
  %v1412 = vsub.f32 1.0, %v1411
  %v1413 = vmul.f32 %v1410, %v1412
  %v1414 = vadd.f32 %v1410, %v1413
  %vm1415 = vweird.f32 %v1409
  %vm1416 = vweird.f32 %v1410
  %vm1417 = vmor %vm1415, %vm1416
  %v1418 = vsel %vm1417, %v1410, %v1414
  %v1419 = vand.u32 2147483647, %v1409
  %vm1420 = vcmp.eq.f32.partialorder %v1419, 8.507059e+37
  %v1421 = vand.u32 %v1409, 2147483648
  %v1422 = vor.u32 1.1754944e-38, %v1421
  %v1423 = vsel %vm1420, %v1422, %v1418
  %v1424 = vmul.f32 1.0, %v1423
  %v1425 = vtanh.pop %v1405
  %v1427 = vrot.slane %v1364, 1
  %v1429 = vmul.f32 %v1424, %v1427
  %1431 = vrot.lane.b32.xlu0 %v1425, 64
  %v1432 = vpop.permute.xlu0 %1431
  %v1434 = vmul.f32 %v1424, %v1432
  %1436 = vrot.lane.b32.xlu0 %v1434, 32
  %v1437 = vpop.permute.xlu0 %1436
  %v1439 = vadd.f32 %v1429, %v1437
  %v1440 = vtanh.pop %v1439
  %1442 = vrot.lane.b32.xlu0 %v1440, 64
  %v1443 = vpop.permute.xlu0 %1442
  %v1445 = vmul.f32 %v1424, %v1443
  %1447 = vrot.lane.b32.xlu0 %v1445, 64
  %v1448 = vpop.permute.xlu0 %1447
  %vm1450 = vcmask 517377
  %1451 = vst.msk [vmem:[%s7] sm:$0x2] %vm1450, %v1448
  %v1452 = vrot.slane %v1445, 1
  %1453 = vrot.lane.b32.xlu0 %v1452, 32
  %v1454 = vpop.permute.xlu0 %1453
  %v1455 = vsel %vm134, %v1454, 0
  %1457 = vmatpush.msra.mxu0 0.0
  %1458 = vmatpush.msra.mxu0 0.0
  %1459 = vmatpush.msra.mxu0 0.0
  %1460 = vmatpush.msra.mxu0 0.0
  %1461 = vmatpush.msra.mxu0 0.0
  %1462 = vmatpush.msra.mxu0 0.0
  %1463 = vmatpush.msra.mxu0 0.0
  %1464 = vmatpush.msra.mxu0 0.0
  %1465 = vmatpush.msra.mxu0 0.0
  %1466 = vmatpush.msra.mxu0 0.0
  %1467 = vmatpush.msra.mxu0 0.0
  %1468 = vmatpush.msra.mxu0 0.0
  %1469 = vmatpush.msra.mxu0 %v203
  %1470 = vmatpush.msra.mxu0 %v202
  %1471 = vmatpush.msra.mxu0 %v201
  %1472 = vmatpush.msra.mxu0 %v200
  %1473 = vmatmul.f32.gmra.mxu0 %v1455
  %v1474 = vpop.f32.mrf.mxu0
  %v1475 = vadd.f32 0.0, %v1474
  %1476 = vdwg.mxu0
  %v1477 = vadd.f32 %v188, %v1475
  %v1478 = vxor.u32 %v1477, 2147483648
  %v1479 = vmul.f32 %v1478, 1.442695
  %v1480 = vpow.pop %v1479
  %v1481 = vadd.f32 %v1480, 1.0
  %v1482 = vrcp.pop %v1481
  %v1483 = vmul.f32 %v1481, %v1482
  %v1484 = vsub.f32 1.0, %v1483
  %v1485 = vmul.f32 %v1482, %v1484
  %v1486 = vadd.f32 %v1482, %v1485
  %vm1487 = vweird.f32 %v1481
  %vm1488 = vweird.f32 %v1482
  %vm1489 = vmor %vm1487, %vm1488
  %v1490 = vsel %vm1489, %v1482, %v1486
  %v1491 = vand.u32 2147483647, %v1481
  %vm1492 = vcmp.eq.f32.partialorder %v1491, 8.507059e+37
  %v1493 = vand.u32 %v1481, 2147483648
  %v1494 = vor.u32 1.1754944e-38, %v1493
  %v1495 = vsel %vm1492, %v1494, %v1490
  %v1496 = vmul.f32 1.0, %v1495
  %v1497 = vtanh.pop %v1477
  %v1499 = vrot.slane %v1439, 1
  %v1501 = vmul.f32 %v1496, %v1499
  %1503 = vrot.lane.b32.xlu0 %v1497, 64
  %v1504 = vpop.permute.xlu0 %1503
  %v1506 = vmul.f32 %v1496, %v1504
  %1508 = vrot.lane.b32.xlu0 %v1506, 32
  %v1509 = vpop.permute.xlu0 %1508
  %v1511 = vadd.f32 %v1501, %v1509
  %v1512 = vtanh.pop %v1511
  %1514 = vrot.lane.b32.xlu0 %v1512, 64
  %v1515 = vpop.permute.xlu0 %1514
  %v1517 = vmul.f32 %v1496, %v1515
  %1519 = vrot.lane.b32.xlu0 %v1517, 64
  %v1520 = vpop.permute.xlu0 %1519
  %1522 = vst.msk [vmem:[%s7] sm:$0x1] %vm926, %v1520
  %v1524 = vrot.slane %v225, 7
  %v1526 = vadd.f32 %v165, %v1524
  %v1527 = vxor.u32 %v1526, 2147483648
  %v1528 = vmul.f32 %v1527, 1.442695
  %v1529 = vpow.pop %v1528
  %v1530 = vadd.f32 %v1529, 1.0
  %v1531 = vrcp.pop %v1530
  %v1532 = vmul.f32 %v1530, %v1531
  %v1533 = vsub.f32 1.0, %v1532
  %v1534 = vmul.f32 %v1531, %v1533
  %v1535 = vadd.f32 %v1531, %v1534
  %vm1536 = vweird.f32 %v1530
  %vm1537 = vweird.f32 %v1531
  %vm1538 = vmor %vm1536, %vm1537
  %v1539 = vsel %vm1538, %v1531, %v1535
  %v1540 = vand.u32 2147483647, %v1530
  %vm1541 = vcmp.eq.f32.partialorder %v1540, 8.507059e+37
  %v1542 = vand.u32 %v1530, 2147483648
  %v1543 = vor.u32 1.1754944e-38, %v1542
  %v1544 = vsel %vm1541, %v1543, %v1539
  %v1545 = vmul.f32 1.0, %v1544
  %v1546 = vtanh.pop %v1526
  %v1547 = vmul.f32 %v1545, 0.0
  %1549 = vrot.lane.b32.xlu0 %v1546, 64
  %v1550 = vpop.permute.xlu0 %1549
  %v1552 = vmul.f32 %v1545, %v1550
  %1554 = vrot.lane.b32.xlu0 %v1552, 32
  %v1555 = vpop.permute.xlu0 %1554
  %v1557 = vadd.f32 %v1547, %v1555
  %v1558 = vtanh.pop %v1557
  %1560 = vrot.lane.b32.xlu0 %v1558, 64
  %v1561 = vpop.permute.xlu0 %1560
  %v1563 = vmul.f32 %v1545, %v1561
  %1565 = vrot.lane.b32.xlu0 %v1563, 32
  %v1566 = vpop.permute.xlu0 %1565
  %1568 = vst.msk [vmem:[%s7 + $0x8] sm:$0x2] %vm341, %v1566
  %v1569 = vrot.slane %v1563, 1
  %1570 = vrot.lane.b32.xlu0 %v1569, 32
  %v1571 = vpop.permute.xlu0 %1570
  %v1572 = vsel %vm134, %v1571, 0
  %1574 = vmatpush.msra.mxu0 0.0
  %1575 = vmatpush.msra.mxu0 0.0
  %1576 = vmatpush.msra.mxu0 0.0
  %1577 = vmatpush.msra.mxu0 0.0
  %1578 = vmatpush.msra.mxu0 0.0
  %1579 = vmatpush.msra.mxu0 0.0
  %1580 = vmatpush.msra.mxu0 0.0
  %1581 = vmatpush.msra.mxu0 0.0
  %1582 = vmatpush.msra.mxu0 0.0
  %1583 = vmatpush.msra.mxu0 0.0
  %1584 = vmatpush.msra.mxu0 0.0
  %1585 = vmatpush.msra.mxu0 0.0
  %1586 = vmatpush.msra.mxu0 %v199
  %1587 = vmatpush.msra.mxu0 %v198
  %1588 = vmatpush.msra.mxu0 %v197
  %1589 = vmatpush.msra.mxu0 %v196
  %1590 = vmatmul.f32.gmra.mxu0 %v1572
  %v1591 = vpop.f32.mrf.mxu0
  %v1592 = vadd.f32 0.0, %v1591
  %1593 = vdwg.mxu0
  %v1595 = vrot.slane %v1592, 6
  %v1597 = vadd.f32 %v165, %v1595
  %v1598 = vxor.u32 %v1597, 2147483648
  %v1599 = vmul.f32 %v1598, 1.442695
  %v1600 = vpow.pop %v1599
  %v1601 = vadd.f32 %v1600, 1.0
  %v1602 = vrcp.pop %v1601
  %v1603 = vmul.f32 %v1601, %v1602
  %v1604 = vsub.f32 1.0, %v1603
  %v1605 = vmul.f32 %v1602, %v1604
  %v1606 = vadd.f32 %v1602, %v1605
  %vm1607 = vweird.f32 %v1601
  %vm1608 = vweird.f32 %v1602
  %vm1609 = vmor %vm1607, %vm1608
  %v1610 = vsel %vm1609, %v1602, %v1606
  %v1611 = vand.u32 2147483647, %v1601
  %vm1612 = vcmp.eq.f32.partialorder %v1611, 8.507059e+37
  %v1613 = vand.u32 %v1601, 2147483648
  %v1614 = vor.u32 1.1754944e-38, %v1613
  %v1615 = vsel %vm1612, %v1614, %v1610
  %v1616 = vmul.f32 1.0, %v1615
  %v1617 = vtanh.pop %v1597
  %v1619 = vrot.slane %v1557, 7
  %v1621 = vmul.f32 %v1616, %v1619
  %1623 = vrot.lane.b32.xlu0 %v1617, 64
  %v1624 = vpop.permute.xlu0 %1623
  %v1626 = vmul.f32 %v1616, %v1624
  %1628 = vrot.lane.b32.xlu0 %v1626, 32
  %v1629 = vpop.permute.xlu0 %1628
  %v1631 = vadd.f32 %v1621, %v1629
  %v1632 = vtanh.pop %v1631
  %1634 = vrot.lane.b32.xlu0 %v1632, 64
  %v1635 = vpop.permute.xlu0 %1634
  %v1637 = vmul.f32 %v1616, %v1635
  %1639 = vrot.lane.b32.xlu0 %v1637, 32
  %v1640 = vpop.permute.xlu0 %1639
  %1642 = vst.msk [vmem:[%s7 + $0x8] sm:$0x4] %vm416, %v1640
  %v1643 = vrot.slane %v1637, 2
  %1644 = vrot.lane.b32.xlu0 %v1643, 32
  %v1645 = vpop.permute.xlu0 %1644
  %v1646 = vsel %vm134, %v1645, 0
  %1648 = vmatpush.msra.mxu0 0.0
  %1649 = vmatpush.msra.mxu0 0.0
  %1650 = vmatpush.msra.mxu0 0.0
  %1651 = vmatpush.msra.mxu0 0.0
  %1652 = vmatpush.msra.mxu0 0.0
  %1653 = vmatpush.msra.mxu0 0.0
  %1654 = vmatpush.msra.mxu0 0.0
  %1655 = vmatpush.msra.mxu0 0.0
  %1656 = vmatpush.msra.mxu0 0.0
  %1657 = vmatpush.msra.mxu0 0.0
  %1658 = vmatpush.msra.mxu0 0.0
  %1659 = vmatpush.msra.mxu0 0.0
  %1660 = vmatpush.msra.mxu0 %v199
  %1661 = vmatpush.msra.mxu0 %v198
  %1662 = vmatpush.msra.mxu0 %v197
  %1663 = vmatpush.msra.mxu0 %v196
  %1664 = vmatmul.f32.gmra.mxu0 %v1646
  %v1665 = vpop.f32.mrf.mxu0
  %v1666 = vadd.f32 0.0, %v1665
  %1667 = vdwg.mxu0
  %v1669 = vrot.slane %v1666, 5
  %v1671 = vadd.f32 %v165, %v1669
  %v1672 = vxor.u32 %v1671, 2147483648
  %v1673 = vmul.f32 %v1672, 1.442695
  %v1674 = vpow.pop %v1673
  %v1675 = vadd.f32 %v1674, 1.0
  %v1676 = vrcp.pop %v1675
  %v1677 = vmul.f32 %v1675, %v1676
  %v1678 = vsub.f32 1.0, %v1677
  %v1679 = vmul.f32 %v1676, %v1678
  %v1680 = vadd.f32 %v1676, %v1679
  %vm1681 = vweird.f32 %v1675
  %vm1682 = vweird.f32 %v1676
  %vm1683 = vmor %vm1681, %vm1682
  %v1684 = vsel %vm1683, %v1676, %v1680
  %v1685 = vand.u32 2147483647, %v1675
  %vm1686 = vcmp.eq.f32.partialorder %v1685, 8.507059e+37
  %v1687 = vand.u32 %v1675, 2147483648
  %v1688 = vor.u32 1.1754944e-38, %v1687
  %v1689 = vsel %vm1686, %v1688, %v1684
  %v1690 = vmul.f32 1.0, %v1689
  %v1691 = vtanh.pop %v1671
  %v1693 = vrot.slane %v1631, 7
  %v1695 = vmul.f32 %v1690, %v1693
  %1697 = vrot.lane.b32.xlu0 %v1691, 64
  %v1698 = vpop.permute.xlu0 %1697
  %v1700 = vmul.f32 %v1690, %v1698
  %1702 = vrot.lane.b32.xlu0 %v1700, 32
  %v1703 = vpop.permute.xlu0 %1702
  %v1705 = vadd.f32 %v1695, %v1703
  %v1706 = vtanh.pop %v1705
  %1708 = vrot.lane.b32.xlu0 %v1706, 64
  %v1709 = vpop.permute.xlu0 %1708
  %v1711 = vmul.f32 %v1690, %v1709
  %1713 = vrot.lane.b32.xlu0 %v1711, 32
  %v1714 = vpop.permute.xlu0 %1713
  %1716 = vst.msk [vmem:[%s7 + $0x8] sm:$0x8] %vm491, %v1714
  %v1717 = vrot.slane %v1711, 3
  %1718 = vrot.lane.b32.xlu0 %v1717, 32
  %v1719 = vpop.permute.xlu0 %1718
  %v1720 = vsel %vm134, %v1719, 0
  %1722 = vmatpush.msra.mxu0 0.0
  %1723 = vmatpush.msra.mxu0 0.0
  %1724 = vmatpush.msra.mxu0 0.0
  %1725 = vmatpush.msra.mxu0 0.0
  %1726 = vmatpush.msra.mxu0 0.0
  %1727 = vmatpush.msra.mxu0 0.0
  %1728 = vmatpush.msra.mxu0 0.0
  %1729 = vmatpush.msra.mxu0 0.0
  %1730 = vmatpush.msra.mxu0 0.0
  %1731 = vmatpush.msra.mxu0 0.0
  %1732 = vmatpush.msra.mxu0 0.0
  %1733 = vmatpush.msra.mxu0 0.0
  %1734 = vmatpush.msra.mxu0 %v199
  %1735 = vmatpush.msra.mxu0 %v198
  %1736 = vmatpush.msra.mxu0 %v197
  %1737 = vmatpush.msra.mxu0 %v196
  %1738 = vmatmul.f32.gmra.mxu0 %v1720
  %v1739 = vpop.f32.mrf.mxu0
  %v1740 = vadd.f32 0.0, %v1739
  %1741 = vdwg.mxu0
  %v1743 = vrot.slane %v1740, 4
  %v1745 = vadd.f32 %v165, %v1743
  %v1746 = vxor.u32 %v1745, 2147483648
  %v1747 = vmul.f32 %v1746, 1.442695
  %v1748 = vpow.pop %v1747
  %v1749 = vadd.f32 %v1748, 1.0
  %v1750 = vrcp.pop %v1749
  %v1751 = vmul.f32 %v1749, %v1750
  %v1752 = vsub.f32 1.0, %v1751
  %v1753 = vmul.f32 %v1750, %v1752
  %v1754 = vadd.f32 %v1750, %v1753
  %vm1755 = vweird.f32 %v1749
  %vm1756 = vweird.f32 %v1750
  %vm1757 = vmor %vm1755, %vm1756
  %v1758 = vsel %vm1757, %v1750, %v1754
  %v1759 = vand.u32 2147483647, %v1749
  %vm1760 = vcmp.eq.f32.partialorder %v1759, 8.507059e+37
  %v1761 = vand.u32 %v1749, 2147483648
  %v1762 = vor.u32 1.1754944e-38, %v1761
  %v1763 = vsel %vm1760, %v1762, %v1758
  %v1764 = vmul.f32 1.0, %v1763
  %v1765 = vtanh.pop %v1745
  %v1767 = vrot.slane %v1705, 7
  %v1769 = vmul.f32 %v1764, %v1767
  %1771 = vrot.lane.b32.xlu0 %v1765, 64
  %v1772 = vpop.permute.xlu0 %1771
  %v1774 = vmul.f32 %v1764, %v1772
  %1776 = vrot.lane.b32.xlu0 %v1774, 32
  %v1777 = vpop.permute.xlu0 %1776
  %v1779 = vadd.f32 %v1769, %v1777
  %v1780 = vtanh.pop %v1779
  %1782 = vrot.lane.b32.xlu0 %v1780, 64
  %v1783 = vpop.permute.xlu0 %1782
  %v1785 = vmul.f32 %v1764, %v1783
  %1787 = vrot.lane.b32.xlu0 %v1785, 32
  %v1788 = vpop.permute.xlu0 %1787
  %1790 = vst.msk [vmem:[%s7 + $0x8] sm:$0x10] %vm566, %v1788
  %v1791 = vrot.slane %v1785, 4
  %1792 = vrot.lane.b32.xlu0 %v1791, 32
  %v1793 = vpop.permute.xlu0 %1792
  %v1794 = vsel %vm134, %v1793, 0
  %1796 = vmatpush.msra.mxu0 0.0
  %1797 = vmatpush.msra.mxu0 0.0
  %1798 = vmatpush.msra.mxu0 0.0
  %1799 = vmatpush.msra.mxu0 0.0
  %1800 = vmatpush.msra.mxu0 0.0
  %1801 = vmatpush.msra.mxu0 0.0
  %1802 = vmatpush.msra.mxu0 0.0
  %1803 = vmatpush.msra.mxu0 0.0
  %1804 = vmatpush.msra.mxu0 0.0
  %1805 = vmatpush.msra.mxu0 0.0
  %1806 = vmatpush.msra.mxu0 0.0
  %1807 = vmatpush.msra.mxu0 0.0
  %1808 = vmatpush.msra.mxu0 %v199
  %1809 = vmatpush.msra.mxu0 %v198
  %1810 = vmatpush.msra.mxu0 %v197
  %1811 = vmatpush.msra.mxu0 %v196
  %1812 = vmatmul.f32.gmra.mxu0 %v1794
  %v1813 = vpop.f32.mrf.mxu0
  %v1814 = vadd.f32 0.0, %v1813
  %1815 = vdwg.mxu0
  %v1817 = vrot.slane %v1814, 3
  %v1819 = vadd.f32 %v165, %v1817
  %v1820 = vxor.u32 %v1819, 2147483648
  %v1821 = vmul.f32 %v1820, 1.442695
  %v1822 = vpow.pop %v1821
  %v1823 = vadd.f32 %v1822, 1.0
  %v1824 = vrcp.pop %v1823
  %v1825 = vmul.f32 %v1823, %v1824
  %v1826 = vsub.f32 1.0, %v1825
  %v1827 = vmul.f32 %v1824, %v1826
  %v1828 = vadd.f32 %v1824, %v1827
  %vm1829 = vweird.f32 %v1823
  %vm1830 = vweird.f32 %v1824
  %vm1831 = vmor %vm1829, %vm1830
  %v1832 = vsel %vm1831, %v1824, %v1828
  %v1833 = vand.u32 2147483647, %v1823
  %vm1834 = vcmp.eq.f32.partialorder %v1833, 8.507059e+37
  %v1835 = vand.u32 %v1823, 2147483648
  %v1836 = vor.u32 1.1754944e-38, %v1835
  %v1837 = vsel %vm1834, %v1836, %v1832
  %v1838 = vmul.f32 1.0, %v1837
  %v1839 = vtanh.pop %v1819
  %v1841 = vrot.slane %v1779, 7
  %v1843 = vmul.f32 %v1838, %v1841
  %1845 = vrot.lane.b32.xlu0 %v1839, 64
  %v1846 = vpop.permute.xlu0 %1845
  %v1848 = vmul.f32 %v1838, %v1846
  %1850 = vrot.lane.b32.xlu0 %v1848, 32
  %v1851 = vpop.permute.xlu0 %1850
  %v1853 = vadd.f32 %v1843, %v1851
  %v1854 = vtanh.pop %v1853
  %1856 = vrot.lane.b32.xlu0 %v1854, 64
  %v1857 = vpop.permute.xlu0 %1856
  %v1859 = vmul.f32 %v1838, %v1857
  %1861 = vrot.lane.b32.xlu0 %v1859, 32
  %v1862 = vpop.permute.xlu0 %1861
  %1864 = vst.msk [vmem:[%s7 + $0x8] sm:$0x20] %vm641, %v1862
  %v1865 = vrot.slane %v1859, 5
  %1866 = vrot.lane.b32.xlu0 %v1865, 32
  %v1867 = vpop.permute.xlu0 %1866
  %v1868 = vsel %vm134, %v1867, 0
  %1870 = vmatpush.msra.mxu0 0.0
  %1871 = vmatpush.msra.mxu0 0.0
  %1872 = vmatpush.msra.mxu0 0.0
  %1873 = vmatpush.msra.mxu0 0.0
  %1874 = vmatpush.msra.mxu0 0.0
  %1875 = vmatpush.msra.mxu0 0.0
  %1876 = vmatpush.msra.mxu0 0.0
  %1877 = vmatpush.msra.mxu0 0.0
  %1878 = vmatpush.msra.mxu0 0.0
  %1879 = vmatpush.msra.mxu0 0.0
  %1880 = vmatpush.msra.mxu0 0.0
  %1881 = vmatpush.msra.mxu0 0.0
  %1882 = vmatpush.msra.mxu0 %v199
  %1883 = vmatpush.msra.mxu0 %v198
  %1884 = vmatpush.msra.mxu0 %v197
  %1885 = vmatpush.msra.mxu0 %v196
  %1886 = vmatmul.f32.gmra.mxu0 %v1868
  %v1887 = vpop.f32.mrf.mxu0
  %v1888 = vadd.f32 0.0, %v1887
  %1889 = vdwg.mxu0
  %v1891 = vrot.slane %v1888, 2
  %v1893 = vadd.f32 %v165, %v1891
  %v1894 = vxor.u32 %v1893, 2147483648
  %v1895 = vmul.f32 %v1894, 1.442695
  %v1896 = vpow.pop %v1895
  %v1897 = vadd.f32 %v1896, 1.0
  %v1898 = vrcp.pop %v1897
  %v1899 = vmul.f32 %v1897, %v1898
  %v1900 = vsub.f32 1.0, %v1899
  %v1901 = vmul.f32 %v1898, %v1900
  %v1902 = vadd.f32 %v1898, %v1901
  %vm1903 = vweird.f32 %v1897
  %vm1904 = vweird.f32 %v1898
  %vm1905 = vmor %vm1903, %vm1904
  %v1906 = vsel %vm1905, %v1898, %v1902
  %v1907 = vand.u32 2147483647, %v1897
  %vm1908 = vcmp.eq.f32.partialorder %v1907, 8.507059e+37
  %v1909 = vand.u32 %v1897, 2147483648
  %v1910 = vor.u32 1.1754944e-38, %v1909
  %v1911 = vsel %vm1908, %v1910, %v1906
  %v1912 = vmul.f32 1.0, %v1911
  %v1913 = vtanh.pop %v1893
  %v1915 = vrot.slane %v1853, 7
  %v1917 = vmul.f32 %v1912, %v1915
  %1919 = vrot.lane.b32.xlu0 %v1913, 64
  %v1920 = vpop.permute.xlu0 %1919
  %v1922 = vmul.f32 %v1912, %v1920
  %1924 = vrot.lane.b32.xlu0 %v1922, 32
  %v1925 = vpop.permute.xlu0 %1924
  %v1927 = vadd.f32 %v1917, %v1925
  %v1928 = vtanh.pop %v1927
  %1930 = vrot.lane.b32.xlu0 %v1928, 64
  %v1931 = vpop.permute.xlu0 %1930
  %v1933 = vmul.f32 %v1912, %v1931
  %1935 = vrot.lane.b32.xlu0 %v1933, 32
  %v1936 = vpop.permute.xlu0 %1935
  %1938 = vst.msk [vmem:[%s7 + $0x8] sm:$0x40] %vm716, %v1936
  %v1939 = vrot.slane %v1933, 6
  %1940 = vrot.lane.b32.xlu0 %v1939, 32
  %v1941 = vpop.permute.xlu0 %1940
  %v1942 = vsel %vm134, %v1941, 0
  %1944 = vmatpush.msra.mxu0 0.0
  %1945 = vmatpush.msra.mxu0 0.0
  %1946 = vmatpush.msra.mxu0 0.0
  %1947 = vmatpush.msra.mxu0 0.0
  %1948 = vmatpush.msra.mxu0 0.0
  %1949 = vmatpush.msra.mxu0 0.0
  %1950 = vmatpush.msra.mxu0 0.0
  %1951 = vmatpush.msra.mxu0 0.0
  %1952 = vmatpush.msra.mxu0 0.0
  %1953 = vmatpush.msra.mxu0 0.0
  %1954 = vmatpush.msra.mxu0 0.0
  %1955 = vmatpush.msra.mxu0 0.0
  %1956 = vmatpush.msra.mxu0 %v199
  %1957 = vmatpush.msra.mxu0 %v198
  %1958 = vmatpush.msra.mxu0 %v197
  %1959 = vmatpush.msra.mxu0 %v196
  %1960 = vmatmul.f32.gmra.mxu0 %v1942
  %v1961 = vpop.f32.mrf.mxu0
  %v1962 = vadd.f32 0.0, %v1961
  %1963 = vdwg.mxu0
  %v1965 = vrot.slane %v1962, 1
  %v1967 = vadd.f32 %v165, %v1965
  %v1968 = vxor.u32 %v1967, 2147483648
  %v1969 = vmul.f32 %v1968, 1.442695
  %v1970 = vpow.pop %v1969
  %v1971 = vadd.f32 %v1970, 1.0
  %v1972 = vrcp.pop %v1971
  %v1973 = vmul.f32 %v1971, %v1972
  %v1974 = vsub.f32 1.0, %v1973
  %v1975 = vmul.f32 %v1972, %v1974
  %v1976 = vadd.f32 %v1972, %v1975
  %vm1977 = vweird.f32 %v1971
  %vm1978 = vweird.f32 %v1972
  %vm1979 = vmor %vm1977, %vm1978
  %v1980 = vsel %vm1979, %v1972, %v1976
  %v1981 = vand.u32 2147483647, %v1971
  %vm1982 = vcmp.eq.f32.partialorder %v1981, 8.507059e+37
  %v1983 = vand.u32 %v1971, 2147483648
  %v1984 = vor.u32 1.1754944e-38, %v1983
  %v1985 = vsel %vm1982, %v1984, %v1980
  %v1986 = vmul.f32 1.0, %v1985
  %v1987 = vtanh.pop %v1967
  %v1989 = vrot.slane %v1927, 7
  %v1991 = vmul.f32 %v1986, %v1989
  %1993 = vrot.lane.b32.xlu0 %v1987, 64
  %v1994 = vpop.permute.xlu0 %1993
  %v1996 = vmul.f32 %v1986, %v1994
  %1998 = vrot.lane.b32.xlu0 %v1996, 32
  %v1999 = vpop.permute.xlu0 %1998
  %v2001 = vadd.f32 %v1991, %v1999
  %v2002 = vtanh.pop %v2001
  %2004 = vrot.lane.b32.xlu0 %v2002, 64
  %v2005 = vpop.permute.xlu0 %2004
  %v2007 = vmul.f32 %v1986, %v2005
  %2009 = vrot.lane.b32.xlu0 %v2007, 32
  %v2010 = vpop.permute.xlu0 %2009
  %2012 = vst.msk [vmem:[%s7 + $0x8] sm:$0x80] %vm791, %v2010
  %v2013 = vrot.slane %v2007, 7
  %2014 = vrot.lane.b32.xlu0 %v2013, 32
  %v2015 = vpop.permute.xlu0 %2014
  %v2016 = vsel %vm134, %v2015, 0
  %2018 = vmatpush.msra.mxu0 0.0
  %2019 = vmatpush.msra.mxu0 0.0
  %2020 = vmatpush.msra.mxu0 0.0
  %2021 = vmatpush.msra.mxu0 0.0
  %2022 = vmatpush.msra.mxu0 0.0
  %2023 = vmatpush.msra.mxu0 0.0
  %2024 = vmatpush.msra.mxu0 0.0
  %2025 = vmatpush.msra.mxu0 0.0
  %2026 = vmatpush.msra.mxu0 0.0
  %2027 = vmatpush.msra.mxu0 0.0
  %2028 = vmatpush.msra.mxu0 0.0
  %2029 = vmatpush.msra.mxu0 0.0
  %2030 = vmatpush.msra.mxu0 %v199
  %2031 = vmatpush.msra.mxu0 %v198
  %2032 = vmatpush.msra.mxu0 %v197
  %2033 = vmatpush.msra.mxu0 %v196
  %2034 = vmatmul.f32.gmra.mxu0 %v2016
  %v2035 = vpop.f32.mrf.mxu0
  %v2036 = vadd.f32 0.0, %v2035
  %2037 = vdwg.mxu0
  %v2038 = vadd.f32 %v168, %v2036
  %v2039 = vxor.u32 %v2038, 2147483648
  %v2040 = vmul.f32 %v2039, 1.442695
  %v2041 = vpow.pop %v2040
  %v2042 = vadd.f32 %v2041, 1.0
  %v2043 = vrcp.pop %v2042
  %v2044 = vmul.f32 %v2042, %v2043
  %v2045 = vsub.f32 1.0, %v2044
  %v2046 = vmul.f32 %v2043, %v2045
  %v2047 = vadd.f32 %v2043, %v2046
  %vm2048 = vweird.f32 %v2042
  %vm2049 = vweird.f32 %v2043
  %vm2050 = vmor %vm2048, %vm2049
  %v2051 = vsel %vm2050, %v2043, %v2047
  %v2052 = vand.u32 2147483647, %v2042
  %vm2053 = vcmp.eq.f32.partialorder %v2052, 8.507059e+37
  %v2054 = vand.u32 %v2042, 2147483648
  %v2055 = vor.u32 1.1754944e-38, %v2054
  %v2056 = vsel %vm2053, %v2055, %v2051
  %v2057 = vmul.f32 1.0, %v2056
  %v2058 = vtanh.pop %v2038
  %v2060 = vrot.slane %v2001, 7
  %v2062 = vmul.f32 %v2057, %v2060
  %2064 = vrot.lane.b32.xlu0 %v2058, 64
  %v2065 = vpop.permute.xlu0 %2064
  %v2067 = vmul.f32 %v2057, %v2065
  %2069 = vrot.lane.b32.xlu0 %v2067, 32
  %v2070 = vpop.permute.xlu0 %2069
  %v2072 = vadd.f32 %v2062, %v2070
  %v2073 = vtanh.pop %v2072
  %2075 = vrot.lane.b32.xlu0 %v2073, 64
  %v2076 = vpop.permute.xlu0 %2075
  %v2078 = vmul.f32 %v2057, %v2076
  %2080 = vrot.lane.b32.xlu0 %v2078, 32
  %v2081 = vpop.permute.xlu0 %2080
  %2083 = vst.msk [vmem:[%s7 + $0x10] sm:$0x1] %vm269, %v2081
  %v2084 = vsel %vm134, %v2081, 0
  %2086 = vmatpush.msra.mxu0 0.0
  %2087 = vmatpush.msra.mxu0 0.0
  %2088 = vmatpush.msra.mxu0 0.0
  %2089 = vmatpush.msra.mxu0 0.0
  %2090 = vmatpush.msra.mxu0 0.0
  %2091 = vmatpush.msra.mxu0 0.0
  %2092 = vmatpush.msra.mxu0 0.0
  %2093 = vmatpush.msra.mxu0 0.0
  %2094 = vmatpush.msra.mxu0 0.0
  %2095 = vmatpush.msra.mxu0 0.0
  %2096 = vmatpush.msra.mxu0 0.0
  %2097 = vmatpush.msra.mxu0 0.0
  %2098 = vmatpush.msra.mxu0 %v199
  %2099 = vmatpush.msra.mxu0 %v198
  %2100 = vmatpush.msra.mxu0 %v197
  %2101 = vmatpush.msra.mxu0 %v196
  %2102 = vmatmul.f32.gmra.mxu0 %v2084
  %v2103 = vpop.f32.mrf.mxu0
  %v2104 = vadd.f32 0.0, %v2103
  %2105 = vdwg.mxu0
  %v2107 = vrot.slane %v2104, 7
  %v2109 = vadd.f32 %v168, %v2107
  %v2110 = vxor.u32 %v2109, 2147483648
  %v2111 = vmul.f32 %v2110, 1.442695
  %v2112 = vpow.pop %v2111
  %v2113 = vadd.f32 %v2112, 1.0
  %v2114 = vrcp.pop %v2113
  %v2115 = vmul.f32 %v2113, %v2114
  %v2116 = vsub.f32 1.0, %v2115
  %v2117 = vmul.f32 %v2114, %v2116
  %v2118 = vadd.f32 %v2114, %v2117
  %vm2119 = vweird.f32 %v2113
  %vm2120 = vweird.f32 %v2114
  %vm2121 = vmor %vm2119, %vm2120
  %v2122 = vsel %vm2121, %v2114, %v2118
  %v2123 = vand.u32 2147483647, %v2113
  %vm2124 = vcmp.eq.f32.partialorder %v2123, 8.507059e+37
  %v2125 = vand.u32 %v2113, 2147483648
  %v2126 = vor.u32 1.1754944e-38, %v2125
  %v2127 = vsel %vm2124, %v2126, %v2122
  %v2128 = vmul.f32 1.0, %v2127
  %v2129 = vtanh.pop %v2109
  %v2131 = vrot.slane %v2072, 7
  %v2133 = vmul.f32 %v2128, %v2131
  %2135 = vrot.lane.b32.xlu0 %v2129, 64
  %v2136 = vpop.permute.xlu0 %2135
  %v2138 = vmul.f32 %v2128, %v2136
  %2140 = vrot.lane.b32.xlu0 %v2138, 32
  %v2141 = vpop.permute.xlu0 %2140
  %v2143 = vadd.f32 %v2133, %v2141
  %v2144 = vtanh.pop %v2143
  %2146 = vrot.lane.b32.xlu0 %v2144, 64
  %v2147 = vpop.permute.xlu0 %2146
  %v2149 = vmul.f32 %v2128, %v2147
  %2151 = vrot.lane.b32.xlu0 %v2149, 32
  %v2152 = vpop.permute.xlu0 %2151
  %2154 = vst.msk [vmem:[%s7 + $0x10] sm:$0x2] %vm341, %v2152
  %v2156 = vrot.slane %v882, 7
  %v2158 = vadd.f32 %v194, %v2156
  %v2159 = vxor.u32 %v2158, 2147483648
  %v2160 = vmul.f32 %v2159, 1.442695
  %v2161 = vpow.pop %v2160
  %v2162 = vadd.f32 %v2161, 1.0
  %v2163 = vrcp.pop %v2162
  %v2164 = vmul.f32 %v2162, %v2163
  %v2165 = vsub.f32 1.0, %v2164
  %v2166 = vmul.f32 %v2163, %v2165
  %v2167 = vadd.f32 %v2163, %v2166
  %vm2168 = vweird.f32 %v2162
  %vm2169 = vweird.f32 %v2163
  %vm2170 = vmor %vm2168, %vm2169
  %v2171 = vsel %vm2170, %v2163, %v2167
  %v2172 = vand.u32 2147483647, %v2162
  %vm2173 = vcmp.eq.f32.partialorder %v2172, 8.507059e+37
  %v2174 = vand.u32 %v2162, 2147483648
  %v2175 = vor.u32 1.1754944e-38, %v2174
  %v2176 = vsel %vm2173, %v2175, %v2171
  %v2177 = vmul.f32 1.0, %v2176
  %v2178 = vtanh.pop %v2158
  %v2179 = vmul.f32 %v2177, 0.0
  %2181 = vrot.lane.b32.xlu0 %v2178, 64
  %v2182 = vpop.permute.xlu0 %2181
  %v2184 = vmul.f32 %v2177, %v2182
  %2186 = vrot.lane.b32.xlu0 %v2184, 32
  %v2187 = vpop.permute.xlu0 %2186
  %v2189 = vadd.f32 %v2179, %v2187
  %v2190 = vtanh.pop %v2189
  %2192 = vrot.lane.b32.xlu0 %v2190, 64
  %v2193 = vpop.permute.xlu0 %2192
  %v2195 = vmul.f32 %v2177, %v2193
  %2197 = vrot.lane.b32.xlu0 %v2195, 64
  %v2198 = vpop.permute.xlu0 %2197
  %2200 = vst.msk [vmem:[%s7 + $0x10] sm:$0x2] %vm1450, %v2198
  %v2201 = vrot.slane %v2195, 1
  %2202 = vrot.lane.b32.xlu0 %v2201, 32
  %v2203 = vpop.permute.xlu0 %2202
  %v2204 = vsel %vm134, %v2203, 0
  %2206 = vmatpush.msra.mxu0 0.0
  %2207 = vmatpush.msra.mxu0 0.0
  %2208 = vmatpush.msra.mxu0 0.0
  %2209 = vmatpush.msra.mxu0 0.0
  %2210 = vmatpush.msra.mxu0 0.0
  %2211 = vmatpush.msra.mxu0 0.0
  %2212 = vmatpush.msra.mxu0 0.0
  %2213 = vmatpush.msra.mxu0 0.0
  %2214 = vmatpush.msra.mxu0 0.0
  %2215 = vmatpush.msra.mxu0 0.0
  %2216 = vmatpush.msra.mxu0 0.0
  %2217 = vmatpush.msra.mxu0 0.0
  %2218 = vmatpush.msra.mxu0 %v203
  %2219 = vmatpush.msra.mxu0 %v202
  %2220 = vmatpush.msra.mxu0 %v201
  %2221 = vmatpush.msra.mxu0 %v200
  %2222 = vmatmul.f32.gmra.mxu0 %v2204
  %v2223 = vpop.f32.mrf.mxu0
  %v2224 = vadd.f32 0.0, %v2223
  %2225 = vdwg.mxu0
  %v2226 = vadd.f32 %v194, %v2224
  %v2227 = vxor.u32 %v2226, 2147483648
  %v2228 = vmul.f32 %v2227, 1.442695
  %v2229 = vpow.pop %v2228
  %v2230 = vadd.f32 %v2229, 1.0
  %v2231 = vrcp.pop %v2230
  %v2232 = vmul.f32 %v2230, %v2231
  %v2233 = vsub.f32 1.0, %v2232
  %v2234 = vmul.f32 %v2231, %v2233
  %v2235 = vadd.f32 %v2231, %v2234
  %vm2236 = vweird.f32 %v2230
  %vm2237 = vweird.f32 %v2231
  %vm2238 = vmor %vm2236, %vm2237
  %v2239 = vsel %vm2238, %v2231, %v2235
  %v2240 = vand.u32 2147483647, %v2230
  %vm2241 = vcmp.eq.f32.partialorder %v2240, 8.507059e+37
  %v2242 = vand.u32 %v2230, 2147483648
  %v2243 = vor.u32 1.1754944e-38, %v2242
  %v2244 = vsel %vm2241, %v2243, %v2239
  %v2245 = vmul.f32 1.0, %v2244
  %v2246 = vtanh.pop %v2226
  %v2248 = vrot.slane %v2189, 1
  %v2250 = vmul.f32 %v2245, %v2248
  %2252 = vrot.lane.b32.xlu0 %v2246, 64
  %v2253 = vpop.permute.xlu0 %2252
  %v2255 = vmul.f32 %v2245, %v2253
  %2257 = vrot.lane.b32.xlu0 %v2255, 32
  %v2258 = vpop.permute.xlu0 %2257
  %v2260 = vadd.f32 %v2250, %v2258
  %v2261 = vtanh.pop %v2260
  %2263 = vrot.lane.b32.xlu0 %v2261, 64
  %v2264 = vpop.permute.xlu0 %2263
  %v2266 = vmul.f32 %v2245, %v2264
  %2268 = vrot.lane.b32.xlu0 %v2266, 64
  %v2269 = vpop.permute.xlu0 %2268
  %2271 = vst.msk [vmem:[%s7 + $0x10] sm:$0x1] %vm926, %v2269
  %2272 = vrot.lane.b32.xlu0 %v2266, 32
  %v2273 = vpop.permute.xlu0 %2272
  %v2274 = vsel %vm134, %v2273, 0
  %2276 = vmatpush.msra.mxu0 0.0
  %2277 = vmatpush.msra.mxu0 0.0
  %2278 = vmatpush.msra.mxu0 0.0
  %2279 = vmatpush.msra.mxu0 0.0
  %2280 = vmatpush.msra.mxu0 0.0
  %2281 = vmatpush.msra.mxu0 0.0
  %2282 = vmatpush.msra.mxu0 0.0
  %2283 = vmatpush.msra.mxu0 0.0
  %2284 = vmatpush.msra.mxu0 0.0
  %2285 = vmatpush.msra.mxu0 0.0
  %2286 = vmatpush.msra.mxu0 0.0
  %2287 = vmatpush.msra.mxu0 0.0
  %2288 = vmatpush.msra.mxu0 %v203
  %2289 = vmatpush.msra.mxu0 %v202
  %2290 = vmatpush.msra.mxu0 %v201
  %2291 = vmatpush.msra.mxu0 %v200
  %2292 = vmatmul.f32.gmra.mxu0 %v2274
  %v2293 = vpop.f32.mrf.mxu0
  %v2294 = vadd.f32 0.0, %v2293
  %2295 = vdwg.mxu0
  %v2297 = vrot.slane %v2294, 1
  %v2299 = vadd.f32 %v191, %v2297
  %v2300 = vxor.u32 %v2299, 2147483648
  %v2301 = vmul.f32 %v2300, 1.442695
  %v2302 = vpow.pop %v2301
  %v2303 = vadd.f32 %v2302, 1.0
  %v2304 = vrcp.pop %v2303
  %v2305 = vmul.f32 %v2303, %v2304
  %v2306 = vsub.f32 1.0, %v2305
  %v2307 = vmul.f32 %v2304, %v2306
  %v2308 = vadd.f32 %v2304, %v2307
  %vm2309 = vweird.f32 %v2303
  %vm2310 = vweird.f32 %v2304
  %vm2311 = vmor %vm2309, %vm2310
  %v2312 = vsel %vm2311, %v2304, %v2308
  %v2313 = vand.u32 2147483647, %v2303
  %vm2314 = vcmp.eq.f32.partialorder %v2313, 8.507059e+37
  %v2315 = vand.u32 %v2303, 2147483648
  %v2316 = vor.u32 1.1754944e-38, %v2315
  %v2317 = vsel %vm2314, %v2316, %v2312
  %v2318 = vmul.f32 1.0, %v2317
  %v2319 = vtanh.pop %v2299
  %v2321 = vrot.slane %v2260, 1
  %v2323 = vmul.f32 %v2318, %v2321
  %2325 = vrot.lane.b32.xlu0 %v2319, 64
  %v2326 = vpop.permute.xlu0 %2325
  %v2328 = vmul.f32 %v2318, %v2326
  %2330 = vrot.lane.b32.xlu0 %v2328, 32
  %v2331 = vpop.permute.xlu0 %2330
  %v2333 = vadd.f32 %v2323, %v2331
  %v2334 = vtanh.pop %v2333
  %2336 = vrot.lane.b32.xlu0 %v2334, 64
  %v2337 = vpop.permute.xlu0 %2336
  %v2339 = vmul.f32 %v2318, %v2337
  %2341 = vrot.lane.b32.xlu0 %v2339, 64
  %v2342 = vpop.permute.xlu0 %2341
  %2344 = vst.msk [vmem:[%s7 + $0x8] sm:$0x80] %vm1000, %v2342
  %v2345 = vrot.slane %v2339, 7
  %2346 = vrot.lane.b32.xlu0 %v2345, 32
  %v2347 = vpop.permute.xlu0 %2346
  %v2348 = vsel %vm134, %v2347, 0
  %2350 = vmatpush.msra.mxu0 0.0
  %2351 = vmatpush.msra.mxu0 0.0
  %2352 = vmatpush.msra.mxu0 0.0
  %2353 = vmatpush.msra.mxu0 0.0
  %2354 = vmatpush.msra.mxu0 0.0
  %2355 = vmatpush.msra.mxu0 0.0
  %2356 = vmatpush.msra.mxu0 0.0
  %2357 = vmatpush.msra.mxu0 0.0
  %2358 = vmatpush.msra.mxu0 0.0
  %2359 = vmatpush.msra.mxu0 0.0
  %2360 = vmatpush.msra.mxu0 0.0
  %2361 = vmatpush.msra.mxu0 0.0
  %2362 = vmatpush.msra.mxu0 %v203
  %2363 = vmatpush.msra.mxu0 %v202
  %2364 = vmatpush.msra.mxu0 %v201
  %2365 = vmatpush.msra.mxu0 %v200
  %2366 = vmatmul.f32.gmra.mxu0 %v2348
  %v2367 = vpop.f32.mrf.mxu0
  %v2368 = vadd.f32 0.0, %v2367
  %2369 = vdwg.mxu0
  %v2371 = vrot.slane %v2368, 2
  %v2373 = vadd.f32 %v191, %v2371
  %v2374 = vxor.u32 %v2373, 2147483648
  %v2375 = vmul.f32 %v2374, 1.442695
  %v2376 = vpow.pop %v2375
  %v2377 = vadd.f32 %v2376, 1.0
  %v2378 = vrcp.pop %v2377
  %v2379 = vmul.f32 %v2377, %v2378
  %v2380 = vsub.f32 1.0, %v2379
  %v2381 = vmul.f32 %v2378, %v2380
  %v2382 = vadd.f32 %v2378, %v2381
  %vm2383 = vweird.f32 %v2377
  %vm2384 = vweird.f32 %v2378
  %vm2385 = vmor %vm2383, %vm2384
  %v2386 = vsel %vm2385, %v2378, %v2382
  %v2387 = vand.u32 2147483647, %v2377
  %vm2388 = vcmp.eq.f32.partialorder %v2387, 8.507059e+37
  %v2389 = vand.u32 %v2377, 2147483648
  %v2390 = vor.u32 1.1754944e-38, %v2389
  %v2391 = vsel %vm2388, %v2390, %v2386
  %v2392 = vmul.f32 1.0, %v2391
  %v2393 = vtanh.pop %v2373
  %v2395 = vrot.slane %v2333, 1
  %v2397 = vmul.f32 %v2392, %v2395
  %2399 = vrot.lane.b32.xlu0 %v2393, 64
  %v2400 = vpop.permute.xlu0 %2399
  %v2402 = vmul.f32 %v2392, %v2400
  %2404 = vrot.lane.b32.xlu0 %v2402, 32
  %v2405 = vpop.permute.xlu0 %2404
  %v2407 = vadd.f32 %v2397, %v2405
  %v2408 = vtanh.pop %v2407
  %2410 = vrot.lane.b32.xlu0 %v2408, 64
  %v2411 = vpop.permute.xlu0 %2410
  %v2413 = vmul.f32 %v2392, %v2411
  %2415 = vrot.lane.b32.xlu0 %v2413, 64
  %v2416 = vpop.permute.xlu0 %2415
  %2418 = vst.msk [vmem:[%s7 + $0x8] sm:$0x40] %vm1075, %v2416
  %v2419 = vrot.slane %v2413, 6
  %2420 = vrot.lane.b32.xlu0 %v2419, 32
  %v2421 = vpop.permute.xlu0 %2420
  %v2422 = vsel %vm134, %v2421, 0
  %2424 = vmatpush.msra.mxu0 0.0
  %2425 = vmatpush.msra.mxu0 0.0
  %2426 = vmatpush.msra.mxu0 0.0
  %2427 = vmatpush.msra.mxu0 0.0
  %2428 = vmatpush.msra.mxu0 0.0
  %2429 = vmatpush.msra.mxu0 0.0
  %2430 = vmatpush.msra.mxu0 0.0
  %2431 = vmatpush.msra.mxu0 0.0
  %2432 = vmatpush.msra.mxu0 0.0
  %2433 = vmatpush.msra.mxu0 0.0
  %2434 = vmatpush.msra.mxu0 0.0
  %2435 = vmatpush.msra.mxu0 0.0
  %2436 = vmatpush.msra.mxu0 %v203
  %2437 = vmatpush.msra.mxu0 %v202
  %2438 = vmatpush.msra.mxu0 %v201
  %2439 = vmatpush.msra.mxu0 %v200
  %2440 = vmatmul.f32.gmra.mxu0 %v2422
  %v2441 = vpop.f32.mrf.mxu0
  %v2442 = vadd.f32 0.0, %v2441
  %2443 = vdwg.mxu0
  %v2445 = vrot.slane %v2442, 3
  %v2447 = vadd.f32 %v191, %v2445
  %v2448 = vxor.u32 %v2447, 2147483648
  %v2449 = vmul.f32 %v2448, 1.442695
  %v2450 = vpow.pop %v2449
  %v2451 = vadd.f32 %v2450, 1.0
  %v2452 = vrcp.pop %v2451
  %v2453 = vmul.f32 %v2451, %v2452
  %v2454 = vsub.f32 1.0, %v2453
  %v2455 = vmul.f32 %v2452, %v2454
  %v2456 = vadd.f32 %v2452, %v2455
  %vm2457 = vweird.f32 %v2451
  %vm2458 = vweird.f32 %v2452
  %vm2459 = vmor %vm2457, %vm2458
  %v2460 = vsel %vm2459, %v2452, %v2456
  %v2461 = vand.u32 2147483647, %v2451
  %vm2462 = vcmp.eq.f32.partialorder %v2461, 8.507059e+37
  %v2463 = vand.u32 %v2451, 2147483648
  %v2464 = vor.u32 1.1754944e-38, %v2463
  %v2465 = vsel %vm2462, %v2464, %v2460
  %v2466 = vmul.f32 1.0, %v2465
  %v2467 = vtanh.pop %v2447
  %v2469 = vrot.slane %v2407, 1
  %v2471 = vmul.f32 %v2466, %v2469
  %2473 = vrot.lane.b32.xlu0 %v2467, 64
  %v2474 = vpop.permute.xlu0 %2473
  %v2476 = vmul.f32 %v2466, %v2474
  %2478 = vrot.lane.b32.xlu0 %v2476, 32
  %v2479 = vpop.permute.xlu0 %2478
  %v2481 = vadd.f32 %v2471, %v2479
  %v2482 = vtanh.pop %v2481
  %2484 = vrot.lane.b32.xlu0 %v2482, 64
  %v2485 = vpop.permute.xlu0 %2484
  %v2487 = vmul.f32 %v2466, %v2485
  %2489 = vrot.lane.b32.xlu0 %v2487, 64
  %v2490 = vpop.permute.xlu0 %2489
  %2492 = vst.msk [vmem:[%s7 + $0x8] sm:$0x20] %vm1150, %v2490
  %v2493 = vrot.slane %v2487, 5
  %2494 = vrot.lane.b32.xlu0 %v2493, 32
  %v2495 = vpop.permute.xlu0 %2494
  %v2496 = vsel %vm134, %v2495, 0
  %2498 = vmatpush.msra.mxu0 0.0
  %2499 = vmatpush.msra.mxu0 0.0
  %2500 = vmatpush.msra.mxu0 0.0
  %2501 = vmatpush.msra.mxu0 0.0
  %2502 = vmatpush.msra.mxu0 0.0
  %2503 = vmatpush.msra.mxu0 0.0
  %2504 = vmatpush.msra.mxu0 0.0
  %2505 = vmatpush.msra.mxu0 0.0
  %2506 = vmatpush.msra.mxu0 0.0
  %2507 = vmatpush.msra.mxu0 0.0
  %2508 = vmatpush.msra.mxu0 0.0
  %2509 = vmatpush.msra.mxu0 0.0
  %2510 = vmatpush.msra.mxu0 %v203
  %2511 = vmatpush.msra.mxu0 %v202
  %2512 = vmatpush.msra.mxu0 %v201
  %2513 = vmatpush.msra.mxu0 %v200
  %2514 = vmatmul.f32.gmra.mxu0 %v2496
  %v2515 = vpop.f32.mrf.mxu0
  %v2516 = vadd.f32 0.0, %v2515
  %2517 = vdwg.mxu0
  %v2519 = vrot.slane %v2516, 4
  %v2521 = vadd.f32 %v191, %v2519
  %v2522 = vxor.u32 %v2521, 2147483648
  %v2523 = vmul.f32 %v2522, 1.442695
  %v2524 = vpow.pop %v2523
  %v2525 = vadd.f32 %v2524, 1.0
  %v2526 = vrcp.pop %v2525
  %v2527 = vmul.f32 %v2525, %v2526
  %v2528 = vsub.f32 1.0, %v2527
  %v2529 = vmul.f32 %v2526, %v2528
  %v2530 = vadd.f32 %v2526, %v2529
  %vm2531 = vweird.f32 %v2525
  %vm2532 = vweird.f32 %v2526
  %vm2533 = vmor %vm2531, %vm2532
  %v2534 = vsel %vm2533, %v2526, %v2530
  %v2535 = vand.u32 2147483647, %v2525
  %vm2536 = vcmp.eq.f32.partialorder %v2535, 8.507059e+37
  %v2537 = vand.u32 %v2525, 2147483648
  %v2538 = vor.u32 1.1754944e-38, %v2537
  %v2539 = vsel %vm2536, %v2538, %v2534
  %v2540 = vmul.f32 1.0, %v2539
  %v2541 = vtanh.pop %v2521
  %v2543 = vrot.slane %v2481, 1
  %v2545 = vmul.f32 %v2540, %v2543
  %2547 = vrot.lane.b32.xlu0 %v2541, 64
  %v2548 = vpop.permute.xlu0 %2547
  %v2550 = vmul.f32 %v2540, %v2548
  %2552 = vrot.lane.b32.xlu0 %v2550, 32
  %v2553 = vpop.permute.xlu0 %2552
  %v2555 = vadd.f32 %v2545, %v2553
  %v2556 = vtanh.pop %v2555
  %2558 = vrot.lane.b32.xlu0 %v2556, 64
  %v2559 = vpop.permute.xlu0 %2558
  %v2561 = vmul.f32 %v2540, %v2559
  %2563 = vrot.lane.b32.xlu0 %v2561, 64
  %v2564 = vpop.permute.xlu0 %2563
  %2566 = vst.msk [vmem:[%s7 + $0x8] sm:$0x10] %vm1225, %v2564
  %v2567 = vrot.slane %v2561, 4
  %2568 = vrot.lane.b32.xlu0 %v2567, 32
  %v2569 = vpop.permute.xlu0 %2568
  %v2570 = vsel %vm134, %v2569, 0
  %2572 = vmatpush.msra.mxu0 0.0
  %2573 = vmatpush.msra.mxu0 0.0
  %2574 = vmatpush.msra.mxu0 0.0
  %2575 = vmatpush.msra.mxu0 0.0
  %2576 = vmatpush.msra.mxu0 0.0
  %2577 = vmatpush.msra.mxu0 0.0
  %2578 = vmatpush.msra.mxu0 0.0
  %2579 = vmatpush.msra.mxu0 0.0
  %2580 = vmatpush.msra.mxu0 0.0
  %2581 = vmatpush.msra.mxu0 0.0
  %2582 = vmatpush.msra.mxu0 0.0
  %2583 = vmatpush.msra.mxu0 0.0
  %2584 = vmatpush.msra.mxu0 %v203
  %2585 = vmatpush.msra.mxu0 %v202
  %2586 = vmatpush.msra.mxu0 %v201
  %2587 = vmatpush.msra.mxu0 %v200
  %2588 = vmatmul.f32.gmra.mxu0 %v2570
  %v2589 = vpop.f32.mrf.mxu0
  %v2590 = vadd.f32 0.0, %v2589
  %2591 = vdwg.mxu0
  %v2593 = vrot.slane %v2590, 5
  %v2595 = vadd.f32 %v191, %v2593
  %v2596 = vxor.u32 %v2595, 2147483648
  %v2597 = vmul.f32 %v2596, 1.442695
  %v2598 = vpow.pop %v2597
  %v2599 = vadd.f32 %v2598, 1.0
  %v2600 = vrcp.pop %v2599
  %v2601 = vmul.f32 %v2599, %v2600
  %v2602 = vsub.f32 1.0, %v2601
  %v2603 = vmul.f32 %v2600, %v2602
  %v2604 = vadd.f32 %v2600, %v2603
  %vm2605 = vweird.f32 %v2599
  %vm2606 = vweird.f32 %v2600
  %vm2607 = vmor %vm2605, %vm2606
  %v2608 = vsel %vm2607, %v2600, %v2604
  %v2609 = vand.u32 2147483647, %v2599
  %vm2610 = vcmp.eq.f32.partialorder %v2609, 8.507059e+37
  %v2611 = vand.u32 %v2599, 2147483648
  %v2612 = vor.u32 1.1754944e-38, %v2611
  %v2613 = vsel %vm2610, %v2612, %v2608
  %v2614 = vmul.f32 1.0, %v2613
  %v2615 = vtanh.pop %v2595
  %v2617 = vrot.slane %v2555, 1
  %v2619 = vmul.f32 %v2614, %v2617
  %2621 = vrot.lane.b32.xlu0 %v2615, 64
  %v2622 = vpop.permute.xlu0 %2621
  %v2624 = vmul.f32 %v2614, %v2622
  %2626 = vrot.lane.b32.xlu0 %v2624, 32
  %v2627 = vpop.permute.xlu0 %2626
  %v2629 = vadd.f32 %v2619, %v2627
  %v2630 = vtanh.pop %v2629
  %2632 = vrot.lane.b32.xlu0 %v2630, 64
  %v2633 = vpop.permute.xlu0 %2632
  %v2635 = vmul.f32 %v2614, %v2633
  %2637 = vrot.lane.b32.xlu0 %v2635, 64
  %v2638 = vpop.permute.xlu0 %2637
  %2640 = vst.msk [vmem:[%s7 + $0x8] sm:$0x8] %vm1300, %v2638
  %v2641 = vrot.slane %v2635, 3
  %2642 = vrot.lane.b32.xlu0 %v2641, 32
  %v2643 = vpop.permute.xlu0 %2642
  %v2644 = vsel %vm134, %v2643, 0
  %2646 = vmatpush.msra.mxu0 0.0
  %2647 = vmatpush.msra.mxu0 0.0
  %2648 = vmatpush.msra.mxu0 0.0
  %2649 = vmatpush.msra.mxu0 0.0
  %2650 = vmatpush.msra.mxu0 0.0
  %2651 = vmatpush.msra.mxu0 0.0
  %2652 = vmatpush.msra.mxu0 0.0
  %2653 = vmatpush.msra.mxu0 0.0
  %2654 = vmatpush.msra.mxu0 0.0
  %2655 = vmatpush.msra.mxu0 0.0
  %2656 = vmatpush.msra.mxu0 0.0
  %2657 = vmatpush.msra.mxu0 0.0
  %2658 = vmatpush.msra.mxu0 %v203
  %2659 = vmatpush.msra.mxu0 %v202
  %2660 = vmatpush.msra.mxu0 %v201
  %2661 = vmatpush.msra.mxu0 %v200
  %2662 = vmatmul.f32.gmra.mxu0 %v2644
  %v2663 = vpop.f32.mrf.mxu0
  %v2664 = vadd.f32 0.0, %v2663
  %2665 = vdwg.mxu0
  %v2667 = vrot.slane %v2664, 6
  %v2669 = vadd.f32 %v191, %v2667
  %v2670 = vxor.u32 %v2669, 2147483648
  %v2671 = vmul.f32 %v2670, 1.442695
  %v2672 = vpow.pop %v2671
  %v2673 = vadd.f32 %v2672, 1.0
  %v2674 = vrcp.pop %v2673
  %v2675 = vmul.f32 %v2673, %v2674
  %v2676 = vsub.f32 1.0, %v2675
  %v2677 = vmul.f32 %v2674, %v2676
  %v2678 = vadd.f32 %v2674, %v2677
  %vm2679 = vweird.f32 %v2673
  %vm2680 = vweird.f32 %v2674
  %vm2681 = vmor %vm2679, %vm2680
  %v2682 = vsel %vm2681, %v2674, %v2678
  %v2683 = vand.u32 2147483647, %v2673
  %vm2684 = vcmp.eq.f32.partialorder %v2683, 8.507059e+37
  %v2685 = vand.u32 %v2673, 2147483648
  %v2686 = vor.u32 1.1754944e-38, %v2685
  %v2687 = vsel %vm2684, %v2686, %v2682
  %v2688 = vmul.f32 1.0, %v2687
  %v2689 = vtanh.pop %v2669
  %v2691 = vrot.slane %v2629, 1
  %v2693 = vmul.f32 %v2688, %v2691
  %2695 = vrot.lane.b32.xlu0 %v2689, 64
  %v2696 = vpop.permute.xlu0 %2695
  %v2698 = vmul.f32 %v2688, %v2696
  %2700 = vrot.lane.b32.xlu0 %v2698, 32
  %v2701 = vpop.permute.xlu0 %2700
  %v2703 = vadd.f32 %v2693, %v2701
  %v2704 = vtanh.pop %v2703
  %2706 = vrot.lane.b32.xlu0 %v2704, 64
  %v2707 = vpop.permute.xlu0 %2706
  %v2709 = vmul.f32 %v2688, %v2707
  %2711 = vrot.lane.b32.xlu0 %v2709, 64
  %v2712 = vpop.permute.xlu0 %2711
  %2714 = vst.msk [vmem:[%s7 + $0x8] sm:$0x4] %vm1375, %v2712
  %v2715 = vrot.slane %v2709, 2
  %2716 = vrot.lane.b32.xlu0 %v2715, 32
  %v2717 = vpop.permute.xlu0 %2716
  %v2718 = vsel %vm134, %v2717, 0
  %2720 = vmatpush.msra.mxu0 0.0
  %2721 = vmatpush.msra.mxu0 0.0
  %2722 = vmatpush.msra.mxu0 0.0
  %2723 = vmatpush.msra.mxu0 0.0
  %2724 = vmatpush.msra.mxu0 0.0
  %2725 = vmatpush.msra.mxu0 0.0
  %2726 = vmatpush.msra.mxu0 0.0
  %2727 = vmatpush.msra.mxu0 0.0
  %2728 = vmatpush.msra.mxu0 0.0
  %2729 = vmatpush.msra.mxu0 0.0
  %2730 = vmatpush.msra.mxu0 0.0
  %2731 = vmatpush.msra.mxu0 0.0
  %2732 = vmatpush.msra.mxu0 %v203
  %2733 = vmatpush.msra.mxu0 %v202
  %2734 = vmatpush.msra.mxu0 %v201
  %2735 = vmatpush.msra.mxu0 %v200
  %2736 = vmatmul.f32.gmra.mxu0 %v2718
  %v2737 = vpop.f32.mrf.mxu0
  %v2738 = vadd.f32 0.0, %v2737
  %2739 = vdwg.mxu0
  %v2741 = vrot.slane %v2738, 7
  %v2743 = vadd.f32 %v191, %v2741
  %v2744 = vxor.u32 %v2743, 2147483648
  %v2745 = vmul.f32 %v2744, 1.442695
  %v2746 = vpow.pop %v2745
  %v2747 = vadd.f32 %v2746, 1.0
  %v2748 = vrcp.pop %v2747
  %v2749 = vmul.f32 %v2747, %v2748
  %v2750 = vsub.f32 1.0, %v2749
  %v2751 = vmul.f32 %v2748, %v2750
  %v2752 = vadd.f32 %v2748, %v2751
  %vm2753 = vweird.f32 %v2747
  %vm2754 = vweird.f32 %v2748
  %vm2755 = vmor %vm2753, %vm2754
  %v2756 = vsel %vm2755, %v2748, %v2752
  %v2757 = vand.u32 2147483647, %v2747
  %vm2758 = vcmp.eq.f32.partialorder %v2757, 8.507059e+37
  %v2759 = vand.u32 %v2747, 2147483648
  %v2760 = vor.u32 1.1754944e-38, %v2759
  %v2761 = vsel %vm2758, %v2760, %v2756
  %v2762 = vmul.f32 1.0, %v2761
  %v2763 = vtanh.pop %v2743
  %v2765 = vrot.slane %v2703, 1
  %v2767 = vmul.f32 %v2762, %v2765
  %2769 = vrot.lane.b32.xlu0 %v2763, 64
  %v2770 = vpop.permute.xlu0 %2769
  %v2772 = vmul.f32 %v2762, %v2770
  %2774 = vrot.lane.b32.xlu0 %v2772, 32
  %v2775 = vpop.permute.xlu0 %2774
  %v2777 = vadd.f32 %v2767, %v2775
  %v2778 = vtanh.pop %v2777
  %2780 = vrot.lane.b32.xlu0 %v2778, 64
  %v2781 = vpop.permute.xlu0 %2780
  %v2783 = vmul.f32 %v2762, %v2781
  %2785 = vrot.lane.b32.xlu0 %v2783, 64
  %v2786 = vpop.permute.xlu0 %2785
  %2788 = vst.msk [vmem:[%s7 + $0x8] sm:$0x2] %vm1450, %v2786
  // Predicated region
  $region30: #{model_forward.2} parent=0 // pred_check
    _
  $region31: #{model_forward.2} parent=0 // pred_check_branch
    %2790 = sbr.rel (0) target = $region33
  $region32: #{model_forward.2} parent=0 // pred_region
    _
  $region33: #{model_forward.2} parent=0 // pred_fallthru
    _
  // Predicated region
  $region34: #{model_forward.2} parent=0 // pred_check
    _
  $region35: #{model_forward.2} parent=0 // pred_check_branch
    %2792 = sbr.rel (0) target = $region37
  $region36: #{model_forward.2} parent=0 // pred_region
    _
  $region37: #{model_forward.2} parent=0 // pred_fallthru
    _

</llo_original>
